<compile_context>
chip_gen: v6e
topology: v6e:2x2x1
jax: 0.10.0
libtpu: 0.0.40
codegen_flags: <defaults>
</compile_context>

<pallas_src>
import functools

import jax
import jax.numpy as jnp
from jax.experimental import pallas as pl
from jax.experimental.pallas import tpu as pltpu

_BN_EPS = 1e-5


def _round_up(x, m):
    return (x + m - 1) // m * m


def _conv_tile(x_ref, w_ref, acc_ref, *, k, stride, dilation, TH, Wo, Cin):
    """Accumulate the conv result for one (TH*Wo, Cout_pad) tile into acc_ref (f32)."""
    span_h = (TH - 1) * stride + 1
    span_w = (Wo - 1) * stride + 1
    for kk in range(k * k):
        kh, kw = kk // k, kk % k
        r0 = kh * dilation
        c0 = kw * dilation
        win = x_ref[r0:r0 + span_h, c0:c0 + span_w, :]   # (span_h, span_w, Cin) bf16
        if stride > 1:
            # TODO(synk): stride>1 uses in-kernel strided value slicing; functional but untuned.
            win = win[::stride, ::stride, :]
        lhs = win.reshape(TH * Wo, Cin)
        partial = jnp.dot(lhs, w_ref[kk], preferred_element_type=jnp.float32)
        if kk == 0:
            acc_ref[...] = partial
        else:
            acc_ref[...] += partial


def _stats_kernel(x_ref, w_ref, sum_ref, sq_ref, acc_ref, *,
                  k, stride, dilation, TH, Wo, Cin, Ho, nrt, Cout_pad):
    t = pl.program_id(0)

    @pl.when(t == 0)
    def _init():
        sum_ref[...] = jnp.zeros_like(sum_ref)
        sq_ref[...] = jnp.zeros_like(sq_ref)

    _conv_tile(x_ref, w_ref, acc_ref,
               k=k, stride=stride, dilation=dilation, TH=TH, Wo=Wo, Cin=Cin)
    y = acc_ref[...]
    if nrt * TH != Ho:
        # The last row-tile of each image carries (Ho_pad - Ho) padded output rows whose
        # receptive field overlaps real data; mask them out of the batch statistics.
        rt = t % nrt
        valid = jnp.minimum(TH, Ho - rt * TH) * Wo
        rows = jax.lax.broadcasted_iota(jnp.int32, (TH * Wo, Cout_pad), 0)
        y = jnp.where(rows < valid, y, 0.0)
    sum_ref[...] += jnp.sum(y, axis=0, keepdims=True)
    sq_ref[...] += jnp.sum(y * y, axis=0, keepdims=True)


def _apply_kernel(x_ref, w_ref, scale_ref, shift_ref, o_ref, *,
                  k, stride, dilation, TH, Wo, Cin):
    _conv_tile(x_ref, w_ref, o_ref,
               k=k, stride=stride, dilation=dilation, TH=TH, Wo=Wo, Cin=Cin)
    # Folded BN affine + ReLU: single FMA + max per element.
    o_ref[...] = jnp.maximum(o_ref[...] * scale_ref[...] + shift_ref[...], 0.0)


@functools.partial(jax.jit, static_argnames=("kernel_size", "stride", "dilation"))
def conv_block_forward(x_nchw, weight_oikk, gamma, beta,
                       kernel_size=1, stride=1, dilation=1):
    """ConvBlock forward: conv (no bias) -> BatchNorm2d (train-mode batch stats) -> ReLU.

    x_nchw:      (N, Cin, H, W)    float32
    weight_oikk: (Cout, Cin, k, k) float32   (PyTorch Conv2d layout)
    gamma, beta: (Cout,)           float32   (BatchNorm2d affine)
    Returns (N, Cout, Ho, Wo) in NCHW.
    """
    k = int(kernel_size)
    stride = int(stride)
    dilation = int(dilation)
    padding = (k + (k - 1) * (dilation - 1)) // 2        # as in ConvBlock.__init__
    eff = dilation * (k - 1) + 1

    N, Cin, H, W = x_nchw.shape
    Cout = weight_oikk.shape[0]
    Ho = (H + 2 * padding - eff) // stride + 1
    Wo = (W + 2 * padding - eff) // stride + 1
    Wp = W + 2 * padding

    # ---- static tiling choices -------------------------------------------------
    Cout_pad = _round_up(Cout, 128)                      # lane-dense MXU cols & stores
    TH = _round_up(max(1, 512 // max(1, Wo)), 8)         # ~512-row M-tiles, TH multiple of 8
    TH = min(TH, _round_up(Ho, 8))
    nrt = -(-Ho // TH)                                   # row-tiles per image
    Ho_pad = nrt * TH
    TM = TH * Wo                                         # rows per tile (multiple of 8)
    T = N * nrt                                          # grid size
    TH_in = (TH - 1) * stride + eff                      # input rows per slab
    M = N * Ho * Wo                                      # true count for BN statistics
    KK = k * k

    # ---- host-side glue: NCHW -> padded NHWC row-slabs (bf16), weight prep ------
    x_nhwc = jnp.transpose(x_nchw, (0, 2, 3, 1)).astype(jnp.bfloat16)
    rows_needed = (Ho_pad - 1) * stride + eff
    pad_bottom = max(0, rows_needed - padding - H)
    xp = jnp.pad(x_nhwc, ((0, 0), (padding, pad_bottom), (padding, padding), (0, 0)))
    if nrt == 1:
        slabs = xp[:, :TH_in]                            # (N, TH_in, Wp, Cin)
    else:
        row_idx = (jnp.arange(nrt) * (TH * stride))[:, None] + jnp.arange(TH_in)[None, :]
        slabs = xp[:, row_idx]                           # (N, nrt, TH_in, Wp, Cin) (halo dup only)
    slabs = slabs.reshape(T * TH_in, Wp, Cin)

    w = jnp.transpose(weight_oikk, (2, 3, 1, 0)).reshape(KK, Cin, Cout)
    w = jnp.pad(w, ((0, 0), (0, 0), (0, Cout_pad - Cout))).astype(jnp.bfloat16)

    # ---- specs & compiler budget -------------------------------------------------
    slab_spec = pl.BlockSpec((TH_in, Wp, Cin), lambda t: (t, 0, 0))
    w_spec = pl.BlockSpec((KK, Cin, Cout_pad), lambda t: (0, 0, 0))
    vec_spec = pl.BlockSpec((1, Cout_pad), lambda t: (0, 0))

    slab_tile_b = TH_in * Wp * Cin * 2
    w_b = KK * Cin * Cout_pad * 2
    tile_b = TM * Cout_pad * 4
    needed = 2 * slab_tile_b + 2 * w_b + 3 * tile_b + 8 * Cout_pad * 4
    vmem_limit = int(min(max(needed + (16 << 20), 32 << 20), 48 << 20))

    conv_flops = 2 * T * TM * (KK * Cin) * Cout_pad

    # ---- pass 1: per-channel sum / sum-of-squares over batch*spatial --------------
    sums, sqs = pl.pallas_call(
        functools.partial(_stats_kernel, k=k, stride=stride, dilation=dilation,
                          TH=TH, Wo=Wo, Cin=Cin, Ho=Ho, nrt=nrt, Cout_pad=Cout_pad),
        grid=(T,),
        in_specs=[slab_spec, w_spec],
        out_specs=(vec_spec, vec_spec),
        out_shape=(jax.ShapeDtypeStruct((1, Cout_pad), jnp.float32),
                   jax.ShapeDtypeStruct((1, Cout_pad), jnp.float32)),
        scratch_shapes=[pltpu.VMEM((TM, Cout_pad), jnp.float32)],
        compiler_params=pltpu.CompilerParams(
            dimension_semantics=("arbitrary",),          # stats accumulate across tiles
            vmem_limit_bytes=vmem_limit),
        cost_estimate=pl.CostEstimate(
            flops=conv_flops, transcendentals=0,
            bytes_accessed=slabs.size * 2 + w.size * 2 + 2 * Cout_pad * 4),
    )(slabs, w)

    # ---- fold BN (biased var, eps=1e-5) + affine into scale/shift (f32) -----------
    mean = sums[0] / M
    var = jnp.maximum(sqs[0] / M - mean * mean, 0.0)     # f32 accumulators; clamp tiny negatives
    inv = jax.lax.rsqrt(var + _BN_EPS)
    gamma_p = jnp.pad(gamma.astype(jnp.float32), (0, Cout_pad - Cout))
    beta_p = jnp.pad(beta.astype(jnp.float32), (0, Cout_pad - Cout))
    scale = (gamma_p * inv).reshape(1, Cout_pad)
    shift = (beta_p - mean * gamma_p * inv).reshape(1, Cout_pad)

    # ---- pass 2: recompute conv tile (cheap, avoids an HBM temp) + FMA + ReLU ------
    out2d = pl.pallas_call(
        functools.partial(_apply_kernel, k=k, stride=stride, dilation=dilation,
                          TH=TH, Wo=Wo, Cin=Cin),
        grid=(T,),
        in_specs=[slab_spec, w_spec, vec_spec, vec_spec],
        out_specs=pl.BlockSpec((TM, Cout_pad), lambda t: (t, 0)),
        out_shape=jax.ShapeDtypeStruct((T * TM, Cout_pad), jnp.float32),
        compiler_params=pltpu.CompilerParams(
            dimension_semantics=("parallel",),           # independent tiles (v7x: 2 TCs)
            vmem_limit_bytes=vmem_limit),
        cost_estimate=pl.CostEstimate(
            flops=conv_flops + 3 * T * TM * Cout_pad, transcendentals=0,
            bytes_accessed=slabs.size * 2 + w.size * 2 + T * TM * Cout_pad * 4),
    )(slabs, w, scale, shift)

    # Lane-dense (M_pad, Cout_pad) -> NHWC -> single deferred transpose to NCHW.
    out = out2d.reshape(N, Ho_pad, Wo, Cout_pad)[:, :Ho, :, :Cout]
    return jnp.transpose(out, (0, 3, 1, 2))


if __name__ == "__main__":
    # Small, deterministic example consistent with the module.
    N, Cin, H, W = 2, 4, 16, 16
    Cout, ksize, stride, dilation = 8, 3, 1, 1

    key = jax.random.PRNGKey(0)
    kx, kw = jax.random.split(key)
    x = jax.random.normal(kx, (N, Cin, H, W), dtype=jnp.float32)

    # Deterministic "kaiming-uniform-like" conv weight init (bias=False in the module).
    fan_in = Cin * ksize * ksize
    bound = 1.0 / (fan_in ** 0.5)
    weight = jax.random.uniform(kw, (Cout, Cin, ksize, ksize),
                                minval=-bound, maxval=bound, dtype=jnp.float32)

    # BatchNorm2d default affine init: weight=1, bias=0.
    gamma = jnp.ones((Cout,), dtype=jnp.float32)
    beta = jnp.zeros((Cout,), dtype=jnp.float32)

    out = conv_block_forward(x, weight, gamma, beta,
                             kernel_size=ksize, stride=stride, dilation=dilation)
    out = jax.block_until_ready(out)

    assert out.shape == (N, Cout, H, W), out.shape
    assert bool(jnp.all(jnp.isfinite(out)))
    print("KERNEL_OK")
</pallas_src>

<mosaic_0001>
module attributes {stable_mosaic.version = 11 : i64} {
  func.func @_apply_kernel(%arg0: i32, %arg1: memref<18x18x4xbf16, #tpu.memory_space<vmem>>, %arg2: memref<9x4x128xbf16, #tpu.memory_space<vmem>>, %arg3: memref<1x128xf32, #tpu.memory_space<vmem>>, %arg4: memref<1x128xf32, #tpu.memory_space<vmem>>, %arg5: memref<256x128xf32, #tpu.memory_space<vmem>>) attributes {dimension_semantics = [#tpu.dimension_semantics<parallel>], iteration_bounds = array<i64: 2>, scalar_prefetch = 0 : i64, scratch_operands = 0 : i64, tpu.core_type = #tpu.core_type<tc>, window_params = [{transform_indices = @transform_0, window_bounds = array<i64: 18, 18, 4>}, {pipeline_mode = #tpu.pipeline_mode<synchronous>, transform_indices = @transform_1, window_bounds = array<i64: 9, 4, 128>}, {pipeline_mode = #tpu.pipeline_mode<synchronous>, transform_indices = @transform_2, window_bounds = array<i64: 1, 128>}, {pipeline_mode = #tpu.pipeline_mode<synchronous>, transform_indices = @transform_3, window_bounds = array<i64: 1, 128>}, {transform_indices = @transform_4, window_bounds = array<i64: 256, 128>}]} {
    %c0 = arith.constant 0 : index
    %c0_0 = arith.constant 0 : index
    %c0_1 = arith.constant 0 : index
    %0 = vector.load %arg1[%c0, %c0_0, %c0_1] : memref<18x18x4xbf16, #tpu.memory_space<vmem>>, vector<16x16x4xbf16>
    %1 = vector.shape_cast %0 : vector<16x16x4xbf16> to vector<256x4xbf16>
    %c0_2 = arith.constant 0 : index
    %c0_3 = arith.constant 0 : index
    %c0_4 = arith.constant 0 : index
    %2 = vector.load %arg2[%c0_2, %c0_3, %c0_4] : memref<9x4x128xbf16, #tpu.memory_space<vmem>>, vector<1x4x128xbf16>
    %3 = vector.shape_cast %2 : vector<1x4x128xbf16> to vector<4x128xbf16>
    %cst = arith.constant dense<0.000000e+00> : vector<256x128xf32>
    %4 = tpu.matmul %1, %3, %cst {dimension_numbers = #tpu.dot_dimension_numbers<[1], [0], [0], [1], [0, 0, 1, 1], [], []>} : vector<256x4xbf16>, vector<4x128xbf16>, vector<256x128xf32> -> vector<256x128xf32>
    %c0_5 = arith.constant 0 : index
    %c0_6 = arith.constant 0 : index
    %5 = vector.load %arg5[%c0_5, %c0_6] : memref<256x128xf32, #tpu.memory_space<vmem>>, vector<256x128xf32>
    tpu.vector_store %arg5[%c0_5, %c0_6], %4 {strides = array<i32>} : memref<256x128xf32, #tpu.memory_space<vmem>>, vector<256x128xf32>,
    %c0_7 = arith.constant 0 : index
    %c1 = arith.constant 1 : index
    %c0_8 = arith.constant 0 : index
    %6 = vector.load %arg1[%c0_7, %c1, %c0_8] : memref<18x18x4xbf16, #tpu.memory_space<vmem>>, vector<16x16x4xbf16>
    %7 = vector.shape_cast %6 : vector<16x16x4xbf16> to vector<256x4xbf16>
    %c1_9 = arith.constant 1 : index
    %c0_10 = arith.constant 0 : index
    %c0_11 = arith.constant 0 : index
    %8 = vector.load %arg2[%c1_9, %c0_10, %c0_11] : memref<9x4x128xbf16, #tpu.memory_space<vmem>>, vector<1x4x128xbf16>
    %9 = vector.shape_cast %8 : vector<1x4x128xbf16> to vector<4x128xbf16>
    %cst_12 = arith.constant dense<0.000000e+00> : vector<256x128xf32>
    %10 = tpu.matmul %7, %9, %cst_12 {dimension_numbers = #tpu.dot_dimension_numbers<[1], [0], [0], [1], [0, 0, 1, 1], [], []>} : vector<256x4xbf16>, vector<4x128xbf16>, vector<256x128xf32> -> vector<256x128xf32>
    %c0_13 = arith.constant 0 : index
    %c0_14 = arith.constant 0 : index
    %11 = vector.load %arg5[%c0_13, %c0_14] : memref<256x128xf32, #tpu.memory_space<vmem>>, vector<256x128xf32>
    %12 = arith.addf %11, %10 : vector<256x128xf32>
    %c0_15 = arith.constant 0 : index
    %c0_16 = arith.constant 0 : index
    %13 = vector.load %arg5[%c0_15, %c0_16] : memref<256x128xf32, #tpu.memory_space<vmem>>, vector<256x128xf32>
    tpu.vector_store %arg5[%c0_15, %c0_16], %12 {strides = array<i32>} : memref<256x128xf32, #tpu.memory_space<vmem>>, vector<256x128xf32>,
    %c0_17 = arith.constant 0 : index
    %c2 = arith.constant 2 : index
    %c0_18 = arith.constant 0 : index
    %14 = vector.load %arg1[%c0_17, %c2, %c0_18] : memref<18x18x4xbf16, #tpu.memory_space<vmem>>, vector<16x16x4xbf16>
    %15 = vector.shape_cast %14 : vector<16x16x4xbf16> to vector<256x4xbf16>
    %c2_19 = arith.constant 2 : index
    %c0_20 = arith.constant 0 : index
    %c0_21 = arith.constant 0 : index
    %16 = vector.load %arg2[%c2_19, %c0_20, %c0_21] : memref<9x4x128xbf16, #tpu.memory_space<vmem>>, vector<1x4x128xbf16>
    %17 = vector.shape_cast %16 : vector<1x4x128xbf16> to vector<4x128xbf16>
    %cst_22 = arith.constant dense<0.000000e+00> : vector<256x128xf32>
    %18 = tpu.matmul %15, %17, %cst_22 {dimension_numbers = #tpu.dot_dimension_numbers<[1], [0], [0], [1], [0, 0, 1, 1], [], []>} : vector<256x4xbf16>, vector<4x128xbf16>, vector<256x128xf32> -> vector<256x128xf32>
    %c0_23 = arith.constant 0 : index
    %c0_24 = arith.constant 0 : index
    %19 = vector.load %arg5[%c0_23, %c0_24] : memref<256x128xf32, #tpu.memory_space<vmem>>, vector<256x128xf32>
    %20 = arith.addf %19, %18 : vector<256x128xf32>
    %c0_25 = arith.constant 0 : index
    %c0_26 = arith.constant 0 : index
    %21 = vector.load %arg5[%c0_25, %c0_26] : memref<256x128xf32, #tpu.memory_space<vmem>>, vector<256x128xf32>
    tpu.vector_store %arg5[%c0_25, %c0_26], %20 {strides = array<i32>} : memref<256x128xf32, #tpu.memory_space<vmem>>, vector<256x128xf32>,
    %c1_27 = arith.constant 1 : index
    %c0_28 = arith.constant 0 : index
    %c0_29 = arith.constant 0 : index
    %22 = vector.load %arg1[%c1_27, %c0_28, %c0_29] : memref<18x18x4xbf16, #tpu.memory_space<vmem>>, vector<16x16x4xbf16>
    %23 = vector.shape_cast %22 : vector<16x16x4xbf16> to vector<256x4xbf16>
    %c3 = arith.constant 3 : index
    %c0_30 = arith.constant 0 : index
    %c0_31 = arith.constant 0 : index
    %24 = vector.load %arg2[%c3, %c0_30, %c0_31] : memref<9x4x128xbf16, #tpu.memory_space<vmem>>, vector<1x4x128xbf16>
    %25 = vector.shape_cast %24 : vector<1x4x128xbf16> to vector<4x128xbf16>
    %cst_32 = arith.constant dense<0.000000e+00> : vector<256x128xf32>
    %26 = tpu.matmul %23, %25, %cst_32 {dimension_numbers = #tpu.dot_dimension_numbers<[1], [0], [0], [1], [0, 0, 1, 1], [], []>} : vector<256x4xbf16>, vector<4x128xbf16>, vector<256x128xf32> -> vector<256x128xf32>
    %c0_33 = arith.constant 0 : index
    %c0_34 = arith.constant 0 : index
    %27 = vector.load %arg5[%c0_33, %c0_34] : memref<256x128xf32, #tpu.memory_space<vmem>>, vector<256x128xf32>
    %28 = arith.addf %27, %26 : vector<256x128xf32>
    %c0_35 = arith.constant 0 : index
    %c0_36 = arith.constant 0 : index
    %29 = vector.load %arg5[%c0_35, %c0_36] : memref<256x128xf32, #tpu.memory_space<vmem>>, vector<256x128xf32>
    tpu.vector_store %arg5[%c0_35, %c0_36], %28 {strides = array<i32>} : memref<256x128xf32, #tpu.memory_space<vmem>>, vector<256x128xf32>,
    %c1_37 = arith.constant 1 : index
    %c1_38 = arith.constant 1 : index
    %c0_39 = arith.constant 0 : index
    %30 = vector.load %arg1[%c1_37, %c1_38, %c0_39] : memref<18x18x4xbf16, #tpu.memory_space<vmem>>, vector<16x16x4xbf16>
    %31 = vector.shape_cast %30 : vector<16x16x4xbf16> to vector<256x4xbf16>
    %c4 = arith.constant 4 : index
    %c0_40 = arith.constant 0 : index
    %c0_41 = arith.constant 0 : index
    %32 = vector.load %arg2[%c4, %c0_40, %c0_41] : memref<9x4x128xbf16, #tpu.memory_space<vmem>>, vector<1x4x128xbf16>
    %33 = vector.shape_cast %32 : vector<1x4x128xbf16> to vector<4x128xbf16>
    %cst_42 = arith.constant dense<0.000000e+00> : vector<256x128xf32>
    %34 = tpu.matmul %31, %33, %cst_42 {dimension_numbers = #tpu.dot_dimension_numbers<[1], [0], [0], [1], [0, 0, 1, 1], [], []>} : vector<256x4xbf16>, vector<4x128xbf16>, vector<256x128xf32> -> vector<256x128xf32>
    %c0_43 = arith.constant 0 : index
    %c0_44 = arith.constant 0 : index
    %35 = vector.load %arg5[%c0_43, %c0_44] : memref<256x128xf32, #tpu.memory_space<vmem>>, vector<256x128xf32>
    %36 = arith.addf %35, %34 : vector<256x128xf32>
    %c0_45 = arith.constant 0 : index
    %c0_46 = arith.constant 0 : index
    %37 = vector.load %arg5[%c0_45, %c0_46] : memref<256x128xf32, #tpu.memory_space<vmem>>, vector<256x128xf32>
    tpu.vector_store %arg5[%c0_45, %c0_46], %36 {strides = array<i32>} : memref<256x128xf32, #tpu.memory_space<vmem>>, vector<256x128xf32>,
    %c1_47 = arith.constant 1 : index
    %c2_48 = arith.constant 2 : index
    %c0_49 = arith.constant 0 : index
    %38 = vector.load %arg1[%c1_47, %c2_48, %c0_49] : memref<18x18x4xbf16, #tpu.memory_space<vmem>>, vector<16x16x4xbf16>
    %39 = vector.shape_cast %38 : vector<16x16x4xbf16> to vector<256x4xbf16>
    %c5 = arith.constant 5 : index
    %c0_50 = arith.constant 0 : index
    %c0_51 = arith.constant 0 : index
    %40 = vector.load %arg2[%c5, %c0_50, %c0_51] : memref<9x4x128xbf16, #tpu.memory_space<vmem>>, vector<1x4x128xbf16>
    %41 = vector.shape_cast %40 : vector<1x4x128xbf16> to vector<4x128xbf16>
    %cst_52 = arith.constant dense<0.000000e+00> : vector<256x128xf32>
    %42 = tpu.matmul %39, %41, %cst_52 {dimension_numbers = #tpu.dot_dimension_numbers<[1], [0], [0], [1], [0, 0, 1, 1], [], []>} : vector<256x4xbf16>, vector<4x128xbf16>, vector<256x128xf32> -> vector<256x128xf32>
    %c0_53 = arith.constant 0 : index
    %c0_54 = arith.constant 0 : index
    %43 = vector.load %arg5[%c0_53, %c0_54] : memref<256x128xf32, #tpu.memory_space<vmem>>, vector<256x128xf32>
    %44 = arith.addf %43, %42 : vector<256x128xf32>
    %c0_55 = arith.constant 0 : index
    %c0_56 = arith.constant 0 : index
    %45 = vector.load %arg5[%c0_55, %c0_56] : memref<256x128xf32, #tpu.memory_space<vmem>>, vector<256x128xf32>
    tpu.vector_store %arg5[%c0_55, %c0_56], %44 {strides = array<i32>} : memref<256x128xf32, #tpu.memory_space<vmem>>, vector<256x128xf32>,
    %c2_57 = arith.constant 2 : index
    %c0_58 = arith.constant 0 : index
    %c0_59 = arith.constant 0 : index
    %46 = vector.load %arg1[%c2_57, %c0_58, %c0_59] : memref<18x18x4xbf16, #tpu.memory_space<vmem>>, vector<16x16x4xbf16>
    %47 = vector.shape_cast %46 : vector<16x16x4xbf16> to vector<256x4xbf16>
    %c6 = arith.constant 6 : index
    %c0_60 = arith.constant 0 : index
    %c0_61 = arith.constant 0 : index
    %48 = vector.load %arg2[%c6, %c0_60, %c0_61] : memref<9x4x128xbf16, #tpu.memory_space<vmem>>, vector<1x4x128xbf16>
    %49 = vector.shape_cast %48 : vector<1x4x128xbf16> to vector<4x128xbf16>
    %cst_62 = arith.constant dense<0.000000e+00> : vector<256x128xf32>
    %50 = tpu.matmul %47, %49, %cst_62 {dimension_numbers = #tpu.dot_dimension_numbers<[1], [0], [0], [1], [0, 0, 1, 1], [], []>} : vector<256x4xbf16>, vector<4x128xbf16>, vector<256x128xf32> -> vector<256x128xf32>
    %c0_63 = arith.constant 0 : index
    %c0_64 = arith.constant 0 : index
    %51 = vector.load %arg5[%c0_63, %c0_64] : memref<256x128xf32, #tpu.memory_space<vmem>>, vector<256x128xf32>
    %52 = arith.addf %51, %50 : vector<256x128xf32>
    %c0_65 = arith.constant 0 : index
    %c0_66 = arith.constant 0 : index
    %53 = vector.load %arg5[%c0_65, %c0_66] : memref<256x128xf32, #tpu.memory_space<vmem>>, vector<256x128xf32>
    tpu.vector_store %arg5[%c0_65, %c0_66], %52 {strides = array<i32>} : memref<256x128xf32, #tpu.memory_space<vmem>>, vector<256x128xf32>,
    %c2_67 = arith.constant 2 : index
    %c1_68 = arith.constant 1 : index
    %c0_69 = arith.constant 0 : index
    %54 = vector.load %arg1[%c2_67, %c1_68, %c0_69] : memref<18x18x4xbf16, #tpu.memory_space<vmem>>, vector<16x16x4xbf16>
    %55 = vector.shape_cast %54 : vector<16x16x4xbf16> to vector<256x4xbf16>
    %c7 = arith.constant 7 : index
    %c0_70 = arith.constant 0 : index
    %c0_71 = arith.constant 0 : index
    %56 = vector.load %arg2[%c7, %c0_70, %c0_71] : memref<9x4x128xbf16, #tpu.memory_space<vmem>>, vector<1x4x128xbf16>
    %57 = vector.shape_cast %56 : vector<1x4x128xbf16> to vector<4x128xbf16>
    %cst_72 = arith.constant dense<0.000000e+00> : vector<256x128xf32>
    %58 = tpu.matmul %55, %57, %cst_72 {dimension_numbers = #tpu.dot_dimension_numbers<[1], [0], [0], [1], [0, 0, 1, 1], [], []>} : vector<256x4xbf16>, vector<4x128xbf16>, vector<256x128xf32> -> vector<256x128xf32>
    %c0_73 = arith.constant 0 : index
    %c0_74 = arith.constant 0 : index
    %59 = vector.load %arg5[%c0_73, %c0_74] : memref<256x128xf32, #tpu.memory_space<vmem>>, vector<256x128xf32>
    %60 = arith.addf %59, %58 : vector<256x128xf32>
    %c0_75 = arith.constant 0 : index
    %c0_76 = arith.constant 0 : index
    %61 = vector.load %arg5[%c0_75, %c0_76] : memref<256x128xf32, #tpu.memory_space<vmem>>, vector<256x128xf32>
    tpu.vector_store %arg5[%c0_75, %c0_76], %60 {strides = array<i32>} : memref<256x128xf32, #tpu.memory_space<vmem>>, vector<256x128xf32>,
    %c2_77 = arith.constant 2 : index
    %c2_78 = arith.constant 2 : index
    %c0_79 = arith.constant 0 : index
    %62 = vector.load %arg1[%c2_77, %c2_78, %c0_79] : memref<18x18x4xbf16, #tpu.memory_space<vmem>>, vector<16x16x4xbf16>
    %63 = vector.shape_cast %62 : vector<16x16x4xbf16> to vector<256x4xbf16>
    %c8 = arith.constant 8 : index
    %c0_80 = arith.constant 0 : index
    %c0_81 = arith.constant 0 : index
    %64 = vector.load %arg2[%c8, %c0_80, %c0_81] : memref<9x4x128xbf16, #tpu.memory_space<vmem>>, vector<1x4x128xbf16>
    %65 = vector.shape_cast %64 : vector<1x4x128xbf16> to vector<4x128xbf16>
    %cst_82 = arith.constant dense<0.000000e+00> : vector<256x128xf32>
    %66 = tpu.matmul %63, %65, %cst_82 {dimension_numbers = #tpu.dot_dimension_numbers<[1], [0], [0], [1], [0, 0, 1, 1], [], []>} : vector<256x4xbf16>, vector<4x128xbf16>, vector<256x128xf32> -> vector<256x128xf32>
    %c0_83 = arith.constant 0 : index
    %c0_84 = arith.constant 0 : index
    %67 = vector.load %arg5[%c0_83, %c0_84] : memref<256x128xf32, #tpu.memory_space<vmem>>, vector<256x128xf32>
    %68 = arith.addf %67, %66 : vector<256x128xf32>
    %c0_85 = arith.constant 0 : index
    %c0_86 = arith.constant 0 : index
    %69 = vector.load %arg5[%c0_85, %c0_86] : memref<256x128xf32, #tpu.memory_space<vmem>>, vector<256x128xf32>
    tpu.vector_store %arg5[%c0_85, %c0_86], %68 {strides = array<i32>} : memref<256x128xf32, #tpu.memory_space<vmem>>, vector<256x128xf32>,
    %c0_87 = arith.constant 0 : index
    %c0_88 = arith.constant 0 : index
    %70 = vector.load %arg5[%c0_87, %c0_88] : memref<256x128xf32, #tpu.memory_space<vmem>>, vector<256x128xf32>
    %c0_89 = arith.constant 0 : index
    %c0_90 = arith.constant 0 : index
    %71 = vector.load %arg3[%c0_89, %c0_90] : memref<1x128xf32, #tpu.memory_space<vmem>>, vector<1x128xf32>
    %72 = vector.broadcast %71 : vector<1x128xf32> to vector<256x128xf32>
    %73 = arith.mulf %70, %72 : vector<256x128xf32>
    %c0_91 = arith.constant 0 : index
    %c0_92 = arith.constant 0 : index
    %74 = vector.load %arg4[%c0_91, %c0_92] : memref<1x128xf32, #tpu.memory_space<vmem>>, vector<1x128xf32>
    %75 = vector.broadcast %74 : vector<1x128xf32> to vector<256x128xf32>
    %76 = arith.addf %73, %75 : vector<256x128xf32>
    %cst_93 = arith.constant 0.000000e+00 : f32
    %77 = vector.broadcast %cst_93 : f32 to vector<256x128xf32>
    %78 = arith.maximumf %76, %77 : vector<256x128xf32>
    %c0_94 = arith.constant 0 : index
    %c0_95 = arith.constant 0 : index
    %79 = vector.load %arg5[%c0_94, %c0_95] : memref<256x128xf32, #tpu.memory_space<vmem>>, vector<256x128xf32>
    tpu.vector_store %arg5[%c0_94, %c0_95], %78 {strides = array<i32>} : memref<256x128xf32, #tpu.memory_space<vmem>>, vector<256x128xf32>,
    return
  }
  func.func @transform_0(%arg0: i32) -> (i32, i32, i32) {
    %c0_i32 = arith.constant 0 : i32
    %c0_i32_0 = arith.constant 0 : i32
    %c0_i32_1 = arith.constant 0 : i32
    return %arg0, %c0_i32, %c0_i32_0 : i32, i32, i32
  }
  func.func @transform_1(%arg0: i32) -> (i32, i32, i32) {
    %c0_i32 = arith.constant 0 : i32
    %c0_i32_0 = arith.constant 0 : i32
    %c0_i32_1 = arith.constant 0 : i32
    %c0_i32_2 = arith.constant 0 : i32
    return %c0_i32, %c0_i32_0, %c0_i32_1 : i32, i32, i32
  }
  func.func @transform_2(%arg0: i32) -> (i32, i32) {
    %c0_i32 = arith.constant 0 : i32
    %c0_i32_0 = arith.constant 0 : i32
    %c0_i32_1 = arith.constant 0 : i32
    return %c0_i32, %c0_i32_0 : i32, i32
  }
  func.func @transform_3(%arg0: i32) -> (i32, i32) {
    %c0_i32 = arith.constant 0 : i32
    %c0_i32_0 = arith.constant 0 : i32
    %c0_i32_1 = arith.constant 0 : i32
    return %c0_i32, %c0_i32_0 : i32, i32
  }
  func.func @transform_4(%arg0: i32) -> (i32, i32) {
    %c0_i32 = arith.constant 0 : i32
    %c0_i32_0 = arith.constant 0 : i32
    return %arg0, %c0_i32 : i32, i32
  }
}

module attributes {stable_mosaic.version = 11 : i64} {
  func.func @_stats_kernel(%arg0: i32, %arg1: memref<18x18x4xbf16, #tpu.memory_space<vmem>>, %arg2: memref<9x4x128xbf16, #tpu.memory_space<vmem>>, %arg3: memref<1x128xf32, #tpu.memory_space<vmem>>, %arg4: memref<1x128xf32, #tpu.memory_space<vmem>>, %arg5: memref<256x128xf32, #tpu.memory_space<vmem>>) attributes {dimension_semantics = [#tpu.dimension_semantics<arbitrary>], iteration_bounds = array<i64: 2>, scalar_prefetch = 0 : i64, scratch_operands = 1 : i64, tpu.core_type = #tpu.core_type<tc>, window_params = [{transform_indices = @transform_0, window_bounds = array<i64: 18, 18, 4>}, {pipeline_mode = #tpu.pipeline_mode<synchronous>, transform_indices = @transform_1, window_bounds = array<i64: 9, 4, 128>}, {pipeline_mode = #tpu.pipeline_mode<synchronous>, transform_indices = @transform_2, window_bounds = array<i64: 1, 128>}, {pipeline_mode = #tpu.pipeline_mode<synchronous>, transform_indices = @transform_3, window_bounds = array<i64: 1, 128>}]} {
    %c0_i32 = arith.constant 0 : i32
    %0 = arith.cmpi eq, %arg0, %c0_i32 : i32
    %1 = arith.extui %0 : i1 to i32
    %c0_i32_0 = arith.constant 0 : i32
    %2 = arith.cmpi ne, %1, %c0_i32_0 : i32
    scf.if %2 {
      %cst_100 = arith.constant 0.000000e+00 : f32
      %85 = vector.broadcast %cst_100 : f32 to vector<1x128xf32>
      %c0_101 = arith.constant 0 : index
      %c0_102 = arith.constant 0 : index
      %86 = vector.load %arg3[%c0_101, %c0_102] : memref<1x128xf32, #tpu.memory_space<vmem>>, vector<1x128xf32>
      tpu.vector_store %arg3[%c0_101, %c0_102], %85 {strides = array<i32>} : memref<1x128xf32, #tpu.memory_space<vmem>>, vector<1x128xf32>,
      %cst_103 = arith.constant 0.000000e+00 : f32
      %87 = vector.broadcast %cst_103 : f32 to vector<1x128xf32>
      %c0_104 = arith.constant 0 : index
      %c0_105 = arith.constant 0 : index
      %88 = vector.load %arg4[%c0_104, %c0_105] : memref<1x128xf32, #tpu.memory_space<vmem>>, vector<1x128xf32>
      tpu.vector_store %arg4[%c0_104, %c0_105], %87 {strides = array<i32>} : memref<1x128xf32, #tpu.memory_space<vmem>>, vector<1x128xf32>,
    } else {
    }
    %c0 = arith.constant 0 : index
    %c0_1 = arith.constant 0 : index
    %c0_2 = arith.constant 0 : index
    %3 = vector.load %arg1[%c0, %c0_1, %c0_2] : memref<18x18x4xbf16, #tpu.memory_space<vmem>>, vector<16x16x4xbf16>
    %4 = vector.shape_cast %3 : vector<16x16x4xbf16> to vector<256x4xbf16>
    %c0_3 = arith.constant 0 : index
    %c0_4 = arith.constant 0 : index
    %c0_5 = arith.constant 0 : index
    %5 = vector.load %arg2[%c0_3, %c0_4, %c0_5] : memref<9x4x128xbf16, #tpu.memory_space<vmem>>, vector<1x4x128xbf16>
    %6 = vector.shape_cast %5 : vector<1x4x128xbf16> to vector<4x128xbf16>
    %cst = arith.constant dense<0.000000e+00> : vector<256x128xf32>
    %7 = tpu.matmul %4, %6, %cst {dimension_numbers = #tpu.dot_dimension_numbers<[1], [0], [0], [1], [0, 0, 1, 1], [], []>} : vector<256x4xbf16>, vector<4x128xbf16>, vector<256x128xf32> -> vector<256x128xf32>
    %c0_6 = arith.constant 0 : index
    %c0_7 = arith.constant 0 : index
    %8 = vector.load %arg5[%c0_6, %c0_7] : memref<256x128xf32, #tpu.memory_space<vmem>>, vector<256x128xf32>
    tpu.vector_store %arg5[%c0_6, %c0_7], %7 {strides = array<i32>} : memref<256x128xf32, #tpu.memory_space<vmem>>, vector<256x128xf32>,
    %c0_8 = arith.constant 0 : index
    %c1 = arith.constant 1 : index
    %c0_9 = arith.constant 0 : index
    %9 = vector.load %arg1[%c0_8, %c1, %c0_9] : memref<18x18x4xbf16, #tpu.memory_space<vmem>>, vector<16x16x4xbf16>
    %10 = vector.shape_cast %9 : vector<16x16x4xbf16> to vector<256x4xbf16>
    %c1_10 = arith.constant 1 : index
    %c0_11 = arith.constant 0 : index
    %c0_12 = arith.constant 0 : index
    %11 = vector.load %arg2[%c1_10, %c0_11, %c0_12] : memref<9x4x128xbf16, #tpu.memory_space<vmem>>, vector<1x4x128xbf16>
    %12 = vector.shape_cast %11 : vector<1x4x128xbf16> to vector<4x128xbf16>
    %cst_13 = arith.constant dense<0.000000e+00> : vector<256x128xf32>
    %13 = tpu.matmul %10, %12, %cst_13 {dimension_numbers = #tpu.dot_dimension_numbers<[1], [0], [0], [1], [0, 0, 1, 1], [], []>} : vector<256x4xbf16>, vector<4x128xbf16>, vector<256x128xf32> -> vector<256x128xf32>
    %c0_14 = arith.constant 0 : index
    %c0_15 = arith.constant 0 : index
    %14 = vector.load %arg5[%c0_14, %c0_15] : memref<256x128xf32, #tpu.memory_space<vmem>>, vector<256x128xf32>
    %15 = arith.addf %14, %13 : vector<256x128xf32>
    %c0_16 = arith.constant 0 : index
    %c0_17 = arith.constant 0 : index
    %16 = vector.load %arg5[%c0_16, %c0_17] : memref<256x128xf32, #tpu.memory_space<vmem>>, vector<256x128xf32>
    tpu.vector_store %arg5[%c0_16, %c0_17], %15 {strides = array<i32>} : memref<256x128xf32, #tpu.memory_space<vmem>>, vector<256x128xf32>,
    %c0_18 = arith.constant 0 : index
    %c2 = arith.constant 2 : index
    %c0_19 = arith.constant 0 : index
    %17 = vector.load %arg1[%c0_18, %c2, %c0_19] : memref<18x18x4xbf16, #tpu.memory_space<vmem>>, vector<16x16x4xbf16>
    %18 = vector.shape_cast %17 : vector<16x16x4xbf16> to vector<256x4xbf16>
    %c2_20 = arith.constant 2 : index
    %c0_21 = arith.constant 0 : index
    %c0_22 = arith.constant 0 : index
    %19 = vector.load %arg2[%c2_20, %c0_21, %c0_22] : memref<9x4x128xbf16, #tpu.memory_space<vmem>>, vector<1x4x128xbf16>
    %20 = vector.shape_cast %19 : vector<1x4x128xbf16> to vector<4x128xbf16>
    %cst_23 = arith.constant dense<0.000000e+00> : vector<256x128xf32>
    %21 = tpu.matmul %18, %20, %cst_23 {dimension_numbers = #tpu.dot_dimension_numbers<[1], [0], [0], [1], [0, 0, 1, 1], [], []>} : vector<256x4xbf16>, vector<4x128xbf16>, vector<256x128xf32> -> vector<256x128xf32>
    %c0_24 = arith.constant 0 : index
    %c0_25 = arith.constant 0 : index
    %22 = vector.load %arg5[%c0_24, %c0_25] : memref<256x128xf32, #tpu.memory_space<vmem>>, vector<256x128xf32>
    %23 = arith.addf %22, %21 : vector<256x128xf32>
    %c0_26 = arith.constant 0 : index
    %c0_27 = arith.constant 0 : index
    %24 = vector.load %arg5[%c0_26, %c0_27] : memref<256x128xf32, #tpu.memory_space<vmem>>, vector<256x128xf32>
    tpu.vector_store %arg5[%c0_26, %c0_27], %23 {strides = array<i32>} : memref<256x128xf32, #tpu.memory_space<vmem>>, vector<256x128xf32>,
    %c1_28 = arith.constant 1 : index
    %c0_29 = arith.constant 0 : index
    %c0_30 = arith.constant 0 : index
    %25 = vector.load %arg1[%c1_28, %c0_29, %c0_30] : memref<18x18x4xbf16, #tpu.memory_space<vmem>>, vector<16x16x4xbf16>
    %26 = vector.shape_cast %25 : vector<16x16x4xbf16> to vector<256x4xbf16>
    %c3 = arith.constant 3 : index
    %c0_31 = arith.constant 0 : index
    %c0_32 = arith.constant 0 : index
    %27 = vector.load %arg2[%c3, %c0_31, %c0_32] : memref<9x4x128xbf16, #tpu.memory_space<vmem>>, vector<1x4x128xbf16>
    %28 = vector.shape_cast %27 : vector<1x4x128xbf16> to vector<4x128xbf16>
    %cst_33 = arith.constant dense<0.000000e+00> : vector<256x128xf32>
    %29 = tpu.matmul %26, %28, %cst_33 {dimension_numbers = #tpu.dot_dimension_numbers<[1], [0], [0], [1], [0, 0, 1, 1], [], []>} : vector<256x4xbf16>, vector<4x128xbf16>, vector<256x128xf32> -> vector<256x128xf32>
    %c0_34 = arith.constant 0 : index
    %c0_35 = arith.constant 0 : index
    %30 = vector.load %arg5[%c0_34, %c0_35] : memref<256x128xf32, #tpu.memory_space<vmem>>, vector<256x128xf32>
    %31 = arith.addf %30, %29 : vector<256x128xf32>
    %c0_36 = arith.constant 0 : index
    %c0_37 = arith.constant 0 : index
    %32 = vector.load %arg5[%c0_36, %c0_37] : memref<256x128xf32, #tpu.memory_space<vmem>>, vector<256x128xf32>
    tpu.vector_store %arg5[%c0_36, %c0_37], %31 {strides = array<i32>} : memref<256x128xf32, #tpu.memory_space<vmem>>, vector<256x128xf32>,
    %c1_38 = arith.constant 1 : index
    %c1_39 = arith.constant 1 : index
    %c0_40 = arith.constant 0 : index
    %33 = vector.load %arg1[%c1_38, %c1_39, %c0_40] : memref<18x18x4xbf16, #tpu.memory_space<vmem>>, vector<16x16x4xbf16>
    %34 = vector.shape_cast %33 : vector<16x16x4xbf16> to vector<256x4xbf16>
    %c4 = arith.constant 4 : index
    %c0_41 = arith.constant 0 : index
    %c0_42 = arith.constant 0 : index
    %35 = vector.load %arg2[%c4, %c0_41, %c0_42] : memref<9x4x128xbf16, #tpu.memory_space<vmem>>, vector<1x4x128xbf16>
    %36 = vector.shape_cast %35 : vector<1x4x128xbf16> to vector<4x128xbf16>
    %cst_43 = arith.constant dense<0.000000e+00> : vector<256x128xf32>
    %37 = tpu.matmul %34, %36, %cst_43 {dimension_numbers = #tpu.dot_dimension_numbers<[1], [0], [0], [1], [0, 0, 1, 1], [], []>} : vector<256x4xbf16>, vector<4x128xbf16>, vector<256x128xf32> -> vector<256x128xf32>
    %c0_44 = arith.constant 0 : index
    %c0_45 = arith.constant 0 : index
    %38 = vector.load %arg5[%c0_44, %c0_45] : memref<256x128xf32, #tpu.memory_space<vmem>>, vector<256x128xf32>
    %39 = arith.addf %38, %37 : vector<256x128xf32>
    %c0_46 = arith.constant 0 : index
    %c0_47 = arith.constant 0 : index
    %40 = vector.load %arg5[%c0_46, %c0_47] : memref<256x128xf32, #tpu.memory_space<vmem>>, vector<256x128xf32>
    tpu.vector_store %arg5[%c0_46, %c0_47], %39 {strides = array<i32>} : memref<256x128xf32, #tpu.memory_space<vmem>>, vector<256x128xf32>,
    %c1_48 = arith.constant 1 : index
    %c2_49 = arith.constant 2 : index
    %c0_50 = arith.constant 0 : index
    %41 = vector.load %arg1[%c1_48, %c2_49, %c0_50] : memref<18x18x4xbf16, #tpu.memory_space<vmem>>, vector<16x16x4xbf16>
    %42 = vector.shape_cast %41 : vector<16x16x4xbf16> to vector<256x4xbf16>
    %c5 = arith.constant 5 : index
    %c0_51 = arith.constant 0 : index
    %c0_52 = arith.constant 0 : index
    %43 = vector.load %arg2[%c5, %c0_51, %c0_52] : memref<9x4x128xbf16, #tpu.memory_space<vmem>>, vector<1x4x128xbf16>
    %44 = vector.shape_cast %43 : vector<1x4x128xbf16> to vector<4x128xbf16>
    %cst_53 = arith.constant dense<0.000000e+00> : vector<256x128xf32>
    %45 = tpu.matmul %42, %44, %cst_53 {dimension_numbers = #tpu.dot_dimension_numbers<[1], [0], [0], [1], [0, 0, 1, 1], [], []>} : vector<256x4xbf16>, vector<4x128xbf16>, vector<256x128xf32> -> vector<256x128xf32>
    %c0_54 = arith.constant 0 : index
    %c0_55 = arith.constant 0 : index
    %46 = vector.load %arg5[%c0_54, %c0_55] : memref<256x128xf32, #tpu.memory_space<vmem>>, vector<256x128xf32>
    %47 = arith.addf %46, %45 : vector<256x128xf32>
    %c0_56 = arith.constant 0 : index
    %c0_57 = arith.constant 0 : index
    %48 = vector.load %arg5[%c0_56, %c0_57] : memref<256x128xf32, #tpu.memory_space<vmem>>, vector<256x128xf32>
    tpu.vector_store %arg5[%c0_56, %c0_57], %47 {strides = array<i32>} : memref<256x128xf32, #tpu.memory_space<vmem>>, vector<256x128xf32>,
    %c2_58 = arith.constant 2 : index
    %c0_59 = arith.constant 0 : index
    %c0_60 = arith.constant 0 : index
    %49 = vector.load %arg1[%c2_58, %c0_59, %c0_60] : memref<18x18x4xbf16, #tpu.memory_space<vmem>>, vector<16x16x4xbf16>
    %50 = vector.shape_cast %49 : vector<16x16x4xbf16> to vector<256x4xbf16>
    %c6 = arith.constant 6 : index
    %c0_61 = arith.constant 0 : index
    %c0_62 = arith.constant 0 : index
    %51 = vector.load %arg2[%c6, %c0_61, %c0_62] : memref<9x4x128xbf16, #tpu.memory_space<vmem>>, vector<1x4x128xbf16>
    %52 = vector.shape_cast %51 : vector<1x4x128xbf16> to vector<4x128xbf16>
    %cst_63 = arith.constant dense<0.000000e+00> : vector<256x128xf32>
    %53 = tpu.matmul %50, %52, %cst_63 {dimension_numbers = #tpu.dot_dimension_numbers<[1], [0], [0], [1], [0, 0, 1, 1], [], []>} : vector<256x4xbf16>, vector<4x128xbf16>, vector<256x128xf32> -> vector<256x128xf32>
    %c0_64 = arith.constant 0 : index
    %c0_65 = arith.constant 0 : index
    %54 = vector.load %arg5[%c0_64, %c0_65] : memref<256x128xf32, #tpu.memory_space<vmem>>, vector<256x128xf32>
    %55 = arith.addf %54, %53 : vector<256x128xf32>
    %c0_66 = arith.constant 0 : index
    %c0_67 = arith.constant 0 : index
    %56 = vector.load %arg5[%c0_66, %c0_67] : memref<256x128xf32, #tpu.memory_space<vmem>>, vector<256x128xf32>
    tpu.vector_store %arg5[%c0_66, %c0_67], %55 {strides = array<i32>} : memref<256x128xf32, #tpu.memory_space<vmem>>, vector<256x128xf32>,
    %c2_68 = arith.constant 2 : index
    %c1_69 = arith.constant 1 : index
    %c0_70 = arith.constant 0 : index
    %57 = vector.load %arg1[%c2_68, %c1_69, %c0_70] : memref<18x18x4xbf16, #tpu.memory_space<vmem>>, vector<16x16x4xbf16>
    %58 = vector.shape_cast %57 : vector<16x16x4xbf16> to vector<256x4xbf16>
    %c7 = arith.constant 7 : index
    %c0_71 = arith.constant 0 : index
    %c0_72 = arith.constant 0 : index
    %59 = vector.load %arg2[%c7, %c0_71, %c0_72] : memref<9x4x128xbf16, #tpu.memory_space<vmem>>, vector<1x4x128xbf16>
    %60 = vector.shape_cast %59 : vector<1x4x128xbf16> to vector<4x128xbf16>
    %cst_73 = arith.constant dense<0.000000e+00> : vector<256x128xf32>
    %61 = tpu.matmul %58, %60, %cst_73 {dimension_numbers = #tpu.dot_dimension_numbers<[1], [0], [0], [1], [0, 0, 1, 1], [], []>} : vector<256x4xbf16>, vector<4x128xbf16>, vector<256x128xf32> -> vector<256x128xf32>
    %c0_74 = arith.constant 0 : index
    %c0_75 = arith.constant 0 : index
    %62 = vector.load %arg5[%c0_74, %c0_75] : memref<256x128xf32, #tpu.memory_space<vmem>>, vector<256x128xf32>
    %63 = arith.addf %62, %61 : vector<256x128xf32>
    %c0_76 = arith.constant 0 : index
    %c0_77 = arith.constant 0 : index
    %64 = vector.load %arg5[%c0_76, %c0_77] : memref<256x128xf32, #tpu.memory_space<vmem>>, vector<256x128xf32>
    tpu.vector_store %arg5[%c0_76, %c0_77], %63 {strides = array<i32>} : memref<256x128xf32, #tpu.memory_space<vmem>>, vector<256x128xf32>,
    %c2_78 = arith.constant 2 : index
    %c2_79 = arith.constant 2 : index
    %c0_80 = arith.constant 0 : index
    %65 = vector.load %arg1[%c2_78, %c2_79, %c0_80] : memref<18x18x4xbf16, #tpu.memory_space<vmem>>, vector<16x16x4xbf16>
    %66 = vector.shape_cast %65 : vector<16x16x4xbf16> to vector<256x4xbf16>
    %c8 = arith.constant 8 : index
    %c0_81 = arith.constant 0 : index
    %c0_82 = arith.constant 0 : index
    %67 = vector.load %arg2[%c8, %c0_81, %c0_82] : memref<9x4x128xbf16, #tpu.memory_space<vmem>>, vector<1x4x128xbf16>
    %68 = vector.shape_cast %67 : vector<1x4x128xbf16> to vector<4x128xbf16>
    %cst_83 = arith.constant dense<0.000000e+00> : vector<256x128xf32>
    %69 = tpu.matmul %66, %68, %cst_83 {dimension_numbers = #tpu.dot_dimension_numbers<[1], [0], [0], [1], [0, 0, 1, 1], [], []>} : vector<256x4xbf16>, vector<4x128xbf16>, vector<256x128xf32> -> vector<256x128xf32>
    %c0_84 = arith.constant 0 : index
    %c0_85 = arith.constant 0 : index
    %70 = vector.load %arg5[%c0_84, %c0_85] : memref<256x128xf32, #tpu.memory_space<vmem>>, vector<256x128xf32>
    %71 = arith.addf %70, %69 : vector<256x128xf32>
    %c0_86 = arith.constant 0 : index
    %c0_87 = arith.constant 0 : index
    %72 = vector.load %arg5[%c0_86, %c0_87] : memref<256x128xf32, #tpu.memory_space<vmem>>, vector<256x128xf32>
    tpu.vector_store %arg5[%c0_86, %c0_87], %71 {strides = array<i32>} : memref<256x128xf32, #tpu.memory_space<vmem>>, vector<256x128xf32>,
    %c0_88 = arith.constant 0 : index
    %c0_89 = arith.constant 0 : index
    %73 = vector.load %arg5[%c0_88, %c0_89] : memref<256x128xf32, #tpu.memory_space<vmem>>, vector<256x128xf32>
    %c0_90 = arith.constant 0 : index
    %c0_91 = arith.constant 0 : index
    %74 = vector.load %arg3[%c0_90, %c0_91] : memref<1x128xf32, #tpu.memory_space<vmem>>, vector<1x128xf32>
    %cst_92 = arith.constant dense<0.000000e+00> : vector<128xf32>
    %75 = vector.multi_reduction <add>, %73, %cst_92 [0] : vector<256x128xf32> to vector<128xf32>
    %76 = vector.shape_cast %75 : vector<128xf32> to vector<1x128xf32>
    %77 = arith.addf %74, %76 : vector<1x128xf32>
    %c0_93 = arith.constant 0 : index
    %c0_94 = arith.constant 0 : index
    %78 = vector.load %arg3[%c0_93, %c0_94] : memref<1x128xf32, #tpu.memory_space<vmem>>, vector<1x128xf32>
    tpu.vector_store %arg3[%c0_93, %c0_94], %77 {strides = array<i32>} : memref<1x128xf32, #tpu.memory_space<vmem>>, vector<1x128xf32>,
    %c0_95 = arith.constant 0 : index
    %c0_96 = arith.constant 0 : index
    %79 = vector.load %arg4[%c0_95, %c0_96] : memref<1x128xf32, #tpu.memory_space<vmem>>, vector<1x128xf32>
    %80 = arith.mulf %73, %73 : vector<256x128xf32>
    %cst_97 = arith.constant dense<0.000000e+00> : vector<128xf32>
    %81 = vector.multi_reduction <add>, %80, %cst_97 [0] : vector<256x128xf32> to vector<128xf32>
    %82 = vector.shape_cast %81 : vector<128xf32> to vector<1x128xf32>
    %83 = arith.addf %79, %82 : vector<1x128xf32>
    %c0_98 = arith.constant 0 : index
    %c0_99 = arith.constant 0 : index
    %84 = vector.load %arg4[%c0_98, %c0_99] : memref<1x128xf32, #tpu.memory_space<vmem>>, vector<1x128xf32>
    tpu.vector_store %arg4[%c0_98, %c0_99], %83 {strides = array<i32>} : memref<1x128xf32, #tpu.memory_space<vmem>>, vector<1x128xf32>,
    return
  }
  func.func @transform_0(%arg0: i32) -> (i32, i32, i32) {
    %c0_i32 = arith.constant 0 : i32
    %c0_i32_0 = arith.constant 0 : i32
    %c0_i32_1 = arith.constant 0 : i32
    return %arg0, %c0_i32, %c0_i32_0 : i32, i32, i32
  }
  func.func @transform_1(%arg0: i32) -> (i32, i32, i32) {
    %c0_i32 = arith.constant 0 : i32
    %c0_i32_0 = arith.constant 0 : i32
    %c0_i32_1 = arith.constant 0 : i32
    %c0_i32_2 = arith.constant 0 : i32
    return %c0_i32, %c0_i32_0, %c0_i32_1 : i32, i32, i32
  }
  func.func @transform_2(%arg0: i32) -> (i32, i32) {
    %c0_i32 = arith.constant 0 : i32
    %c0_i32_0 = arith.constant 0 : i32
    %c0_i32_1 = arith.constant 0 : i32
    return %c0_i32, %c0_i32_0 : i32, i32
  }
  func.func @transform_3(%arg0: i32) -> (i32, i32) {
    %c0_i32 = arith.constant 0 : i32
    %c0_i32_0 = arith.constant 0 : i32
    %c0_i32_1 = arith.constant 0 : i32
    return %c0_i32, %c0_i32_0 : i32, i32
  }
}

</mosaic_0001>

<llo_original>
// kernel: conv_block_forward.2
$region0: #{conv_block_forward.2}
  #allocation0 [shape = 'u32[]', space=smem, size = 0x4, offset = 0x4, fixed_abs, tag = 'smem constant byte address 0x4 - core index']
  #allocation1 [shape = 'u32[144,128]{1,0:T(1,128)}', space=vmem, size = 0x12000, scoped, tag = 'internal scratch']
  #allocation2 [shape = 'f32[256,128]{1,0:T(8,128)}', space=vmem, size = 0x20000, scoped, tag = 'scratch operand']
  %s0 = inlined_call_operand.vmem [shape: bf16[36,18,4], index: 0, kind: input, shape index: {}]
  %s1 = inlined_call_operand.vmem [shape: bf16[9,4,128], index: 1, kind: input, shape index: {}]
  %s2 = inlined_call_operand.vmem [shape: f32[1,128], index: 2, kind: output, shape index: {0}]
  %s3 = inlined_call_operand.vmem [shape: f32[1,128], index: 3, kind: output, shape index: {1}]
  %4 = xla_tuple %s2, %s3
  %s5 = sld [smem:[#allocation0]]
  $region53: #{conv_block_forward.2} parent=0
    _
  %s7 = ssub.s32 1, %s5
  %s8 = scalar_select 0, %s7, %s5
  loop: start=0, step=1, limit=4
  $region2: #{conv_block_forward.2} parent=0 // loop_pre_header
    _
  $region3: #{conv_block_forward.2} parent=0 // loop_header
    %s10 = sphi 0, %s14
    %p11 = scmp.ge.s32.totalorder %s10, 4
    %s20 = sphi 0, %s22
    %s23 = sphi 0, %s20
    %s24 = sphi 0, %s23
    %s40 = sphi 0, %s24
    %s44 = sphi 0, %s44
    %s46 = sphi 0, %s44
    %s47 = sphi 0, %s46
    %s61 = sphi 0, %s47
    %s65 = sphi 0, %s65
    %s67 = sphi 0, %s65
    %s68 = sphi 0, %s67
    %s82 = sphi 0, %s68
    %s86 = sphi 0, %s86
    %s88 = sphi 0, %s86
    %s89 = sphi 0, %s88
    %s103 = sphi 0, %s89
  $region4: #{conv_block_forward.2} parent=0 // loop_header_branch
    %13 = sbr.rel (%p11) target = $region8
  $region5: #{conv_block_forward.2} parent=0 // loop_body
    %s15 = ssub.s32 %s10, 1
    %s16 = ssub.s32 %s10, 2
    %s17 = sadd.s32 %s10, 1
    %s18 = ssub.s32 %s10, %s17
    %p19 = scmp.eq.s32.totalorder %s18, 0
    %s21 = sadd.s32 %s20, 1
    %s22 = scalar_select %p19, %s20, %s21
    %p25 = pneg %p19
    %p26 = scmp.eq.s32.totalorder %s10, 1
    %p27 = por %p25, %p26
    %p28 = scmp.ne.s32.totalorder %s20, %s23
    %p29 = scmp.eq.s32.totalorder %s10, 0
    %p30 = por %p28, %p29
    %p31 = scmp.ne.s32.totalorder %s20, %s23
    %p32 = scmp.eq.s32.totalorder %s15, 1
    %p33 = por %p31, %p32
    %p34 = scmp.ne.s32.totalorder %s23, %s24
    %p35 = scmp.eq.s32.totalorder %s15, 0
    %p36 = por %p34, %p35
    %p37 = scmp.ne.s32.totalorder %s23, %s24
    %p38 = scmp.eq.s32.totalorder %s16, 1
    %p39 = por %p37, %p38
    %p41 = scmp.ne.s32.totalorder %s24, %s40
    %p42 = scmp.eq.s32.totalorder %s16, 0
    %p43 = por %p41, %p42
    %s45 = sadd.s32 %s44, 1
    %p48 = scmp.eq.s32.totalorder %s10, 1
    %p49 = scmp.ne.s32.totalorder %s44, %s46
    %p50 = scmp.eq.s32.totalorder %s10, 0
    %p51 = por %p49, %p50
    %p52 = scmp.ne.s32.totalorder %s44, %s46
    %p53 = scmp.eq.s32.totalorder %s15, 1
    %p54 = por %p52, %p53
    %p55 = scmp.ne.s32.totalorder %s46, %s47
    %p56 = scmp.eq.s32.totalorder %s15, 0
    %p57 = por %p55, %p56
    %p58 = scmp.ne.s32.totalorder %s46, %s47
    %p59 = scmp.eq.s32.totalorder %s16, 1
    %p60 = por %p58, %p59
    %p62 = scmp.ne.s32.totalorder %s47, %s61
    %p63 = scmp.eq.s32.totalorder %s16, 0
    %p64 = por %p62, %p63
    %s66 = sadd.s32 %s65, 1
    %p69 = scmp.eq.s32.totalorder %s10, 1
    %p70 = scmp.ne.s32.totalorder %s65, %s67
    %p71 = scmp.eq.s32.totalorder %s10, 0
    %p72 = por %p70, %p71
    %p73 = scmp.ne.s32.totalorder %s65, %s67
    %p74 = scmp.eq.s32.totalorder %s15, 1
    %p75 = por %p73, %p74
    %p76 = scmp.ne.s32.totalorder %s67, %s68
    %p77 = scmp.eq.s32.totalorder %s15, 0
    %p78 = por %p76, %p77
    %p79 = scmp.ne.s32.totalorder %s67, %s68
    %p80 = scmp.eq.s32.totalorder %s16, 1
    %p81 = por %p79, %p80
    %p83 = scmp.ne.s32.totalorder %s68, %s82
    %p84 = scmp.eq.s32.totalorder %s16, 0
    %p85 = por %p83, %p84
    %s87 = sadd.s32 %s86, 1
    %p90 = scmp.eq.s32.totalorder %s10, 1
    %p91 = scmp.ne.s32.totalorder %s86, %s88
    %p92 = scmp.eq.s32.totalorder %s10, 0
    %p93 = por %p91, %p92
    %p94 = scmp.ne.s32.totalorder %s86, %s88
    %p95 = scmp.eq.s32.totalorder %s15, 1
    %p96 = por %p94, %p95
    %p97 = scmp.ne.s32.totalorder %s88, %s89
    %p98 = scmp.eq.s32.totalorder %s15, 0
    %p99 = por %p97, %p98
    %p100 = scmp.ne.s32.totalorder %s88, %s89
    %p101 = scmp.eq.s32.totalorder %s16, 1
    %p102 = por %p100, %p101
    %p104 = scmp.ne.s32.totalorder %s89, %s103
    %p105 = scmp.eq.s32.totalorder %s16, 0
    %p106 = por %p104, %p105
    %p107 = scmp.le.s32.totalorder 1, %s10
    %p108 = scmp.lt.s32.totalorder %s10, 3
    %p109 = pnand %p107, %p108
    %p110 = pneg %p109
    // Predicated region
    $region9: #{conv_block_forward.2} parent=5 // pred_check
      _
    $region10: #{conv_block_forward.2} parent=5 // pred_check_branch
      %112 = sbr.rel (%p109) target = $region12
    $region11: #{conv_block_forward.2} parent=5 // pred_region
      %s113 = ssub.s32 %s10, 1
      // Predicated region
      $region13: #{conv_block_forward.2} parent=11 // pred_check
        %p114 = pneg %p57
      $region14: #{conv_block_forward.2} parent=11 // pred_check_branch
        %116 = sbr.rel (%p114) target = $region16
      $region15: #{conv_block_forward.2} parent=11 // pred_region
        _
      $region16: #{conv_block_forward.2} parent=11 // pred_fallthru
        _
    $region12: #{conv_block_forward.2} parent=5 // pred_fallthru
      _
    %p117 = scmp.lt.s32.totalorder %s10, 2
    // Predicated region
    $region17: #{conv_block_forward.2} parent=5 // pred_check
      %p118 = pneg %p117
    $region18: #{conv_block_forward.2} parent=5 // pred_check_branch
      %120 = sbr.rel (%p118) target = $region20
    $region19: #{conv_block_forward.2} parent=5 // pred_region
      // Predicated region
      $region21: #{conv_block_forward.2} parent=19 // pred_check
        %p121 = pneg %p30
      $region22: #{conv_block_forward.2} parent=19 // pred_check_branch
        %123 = sbr.rel (%p121) target = $region24
      $region23: #{conv_block_forward.2} parent=19 // pred_region
        %s124 = smul.u32 18, %s10
        %p125 = scmp.lt.s32.totalorder %s124, 35
        %s126 = scalar_select %p125, %s124, 35
        %s127 = smul.addr %s126, 3
        %s128 = smul.addr %s127, 4
        %s129 = scalar_lea.vmem %s0, %s128
        %s130 = smul.u32 18, %s10
      $region24: #{conv_block_forward.2} parent=19 // pred_fallthru
        _
    $region20: #{conv_block_forward.2} parent=5 // pred_fallthru
      _
    %p131 = scmp.le.s32.totalorder 1, %s10
    %p132 = scmp.lt.s32.totalorder %s10, 3
    %p133 = pnand %p131, %p132
    %p134 = pneg %p133
    // Predicated region
    $region25: #{conv_block_forward.2} parent=5 // pred_check
      _
    $region26: #{conv_block_forward.2} parent=5 // pred_check_branch
      %136 = sbr.rel (%p133) target = $region28
    $region27: #{conv_block_forward.2} parent=5 // pred_region
      %s137 = ssub.s32 %s10, 1
      %s138 = smul.u32 18, %s15
      %p139 = scmp.lt.s32.totalorder %s138, 35
      %s140 = scalar_select %p139, %s138, 35
      %s141 = smul.addr %s140, 3
      %s142 = smul.addr %s141, 4
      %s143 = scalar_lea.vmem %s0, %s142
      %p144 = pneg %p36
      %p145 = pneg %p33
      %p146 = pneg %p57
      %p147 = pneg %p54
      %p148 = pneg %p78
      %p149 = pneg %p75
      %p150 = pneg %p99
      %p151 = pneg %p96
      %s152 = smul.u32 18, %s15
      %p153 = scmp.lt.s32.totalorder %s152, 35
      %s154 = scalar_select %p153, %s152, 35
      %s155 = smul.addr %s154, 3
      %s156 = smul.addr %s155, 4
      %s157 = scalar_lea.vmem %s0, %s156
      %s158 = smul.u32 18, %s15
      %p160 = scmp.eq.s32.totalorder %s15, 0
      // Predicated region
      $region29: #{conv_block_forward.2} parent=27 // pred_check
        %p161 = pneg %p160
      $region30: #{conv_block_forward.2} parent=27 // pred_check_branch
        %163 = sbr.rel (%p161) target = $region32
      $region31: #{conv_block_forward.2} parent=27 // pred_region
        %164 = vst [vmem:[%s2] sm:$0x1] 0.0
        %165 = vst [vmem:[%s3] sm:$0x1] 0.0
      $region32: #{conv_block_forward.2} parent=27 // pred_fallthru
        _
      %v166 = vld [vmem:[%s157] sm:$0xf]
      %v167 = vld [vmem:[%s157 + $0x4] sm:$0xf]
      %v168 = vld [vmem:[%s157 + $0xc] sm:$0xf]
      %v169 = vld [vmem:[%s157 + $0x10] sm:$0xf]
      %v170 = vld [vmem:[%s157 + $0x18] sm:$0xf]
      %v171 = vld [vmem:[%s157 + $0x1c] sm:$0xf]
      %v172 = vld [vmem:[%s157 + $0x24] sm:$0xf]
      %v173 = vld [vmem:[%s157 + $0x28] sm:$0xf]
      %v174 = vld [vmem:[%s157 + $0x30] sm:$0xf]
      %v175 = vld [vmem:[%s157 + $0x34] sm:$0xf]
      %v176 = vld [vmem:[%s157 + $0x3c] sm:$0xf]
      %v177 = vld [vmem:[%s157 + $0x40] sm:$0xf]
      %v178 = vld [vmem:[%s157 + $0x48] sm:$0xf]
      %v179 = vld [vmem:[%s157 + $0x4c] sm:$0xf]
      %v180 = vld [vmem:[%s157 + $0x54] sm:$0xf]
      %v181 = vld [vmem:[%s157 + $0x58] sm:$0xf]
      %v182 = vld [vmem:[%s157 + $0x60] sm:$0xf]
      %v183 = vld [vmem:[%s157 + $0x64] sm:$0xf]
      %v184 = vld [vmem:[%s157 + $0x6c] sm:$0xf]
      %v185 = vld [vmem:[%s157 + $0x70] sm:$0xf]
      %v186 = vld [vmem:[%s157 + $0x78] sm:$0xf]
      %v187 = vld [vmem:[%s157 + $0x7c] sm:$0xf]
      %v188 = vld [vmem:[%s157 + $0x84] sm:$0xf]
      %v189 = vld [vmem:[%s157 + $0x88] sm:$0xf]
      %v190 = vld [vmem:[%s157 + $0x90] sm:$0xf]
      %v191 = vld [vmem:[%s157 + $0x94] sm:$0xf]
      %v192 = vld [vmem:[%s157 + $0x9c] sm:$0xf]
      %v193 = vld [vmem:[%s157 + $0xa0] sm:$0xf]
      %v194 = vld [vmem:[%s157 + $0xa8] sm:$0xf]
      %v195 = vld [vmem:[%s157 + $0xac] sm:$0xf]
      %v196 = vld [vmem:[%s157 + $0xb4] sm:$0xf]
      %v197 = vld [vmem:[%s157 + $0xb8] sm:$0xf]
      %v198 = vld [vmem:[%s1] sm:$0x3]
      %v231 = vunpack.c.l.b16 %v166
      %v232 = vunpack.c.l.b16 %v167
      %v233 = vunpack.c.l.b16 %v168
      %v234 = vunpack.c.l.b16 %v169
      %v235 = vunpack.c.l.b16 %v170
      %v236 = vunpack.c.l.b16 %v171
      %v237 = vunpack.c.l.b16 %v172
      %v238 = vunpack.c.l.b16 %v173
      %v239 = vunpack.c.l.b16 %v174
      %v240 = vunpack.c.l.b16 %v175
      %v241 = vunpack.c.l.b16 %v176
      %v242 = vunpack.c.l.b16 %v177
      %v243 = vunpack.c.l.b16 %v178
      %v244 = vunpack.c.l.b16 %v179
      %v245 = vunpack.c.l.b16 %v180
      %v246 = vunpack.c.l.b16 %v181
      %v247 = vunpack.c.l.b16 %v182
      %v248 = vunpack.c.l.b16 %v183
      %v249 = vunpack.c.l.b16 %v184
      %v250 = vunpack.c.l.b16 %v185
      %v251 = vunpack.c.l.b16 %v186
      %v252 = vunpack.c.l.b16 %v187
      %v253 = vunpack.c.l.b16 %v188
      %v254 = vunpack.c.l.b16 %v189
      %v255 = vunpack.c.l.b16 %v190
      %v256 = vunpack.c.l.b16 %v191
      %v257 = vunpack.c.l.b16 %v192
      %v258 = vunpack.c.l.b16 %v193
      %v259 = vunpack.c.l.b16 %v194
      %v260 = vunpack.c.l.b16 %v195
      %v261 = vunpack.c.l.b16 %v196
      %v262 = vunpack.c.l.b16 %v197
      %v263 = vpack.c.b16 %v232, %v231
      %v264 = vpack.c.b16 %v234, %v233
      %v265 = vpack.c.b16 %v236, %v235
      %v266 = vpack.c.b16 %v238, %v237
      %v267 = vpack.c.b16 %v240, %v239
      %v268 = vpack.c.b16 %v242, %v241
      %v269 = vpack.c.b16 %v244, %v243
      %v270 = vpack.c.b16 %v246, %v245
      %v271 = vpack.c.b16 %v248, %v247
      %v272 = vpack.c.b16 %v250, %v249
      %v273 = vpack.c.b16 %v252, %v251
      %v274 = vpack.c.b16 %v254, %v253
      %v275 = vpack.c.b16 %v256, %v255
      %v276 = vpack.c.b16 %v258, %v257
      %v277 = vpack.c.b16 %v260, %v259
      %v278 = vpack.c.b16 %v262, %v261
      %vm279 = vcmask 31744
      %v281 = vsel %vm279, %v263, 0
      %v284 = vsel %vm279, %v264, 0
      %v287 = vsel %vm279, %v265, 0
      %v290 = vsel %vm279, %v266, 0
      %v293 = vsel %vm279, %v267, 0
      %v296 = vsel %vm279, %v268, 0
      %v299 = vsel %vm279, %v269, 0
      %v302 = vsel %vm279, %v270, 0
      %v305 = vsel %vm279, %v271, 0
      %v308 = vsel %vm279, %v272, 0
      %v311 = vsel %vm279, %v273, 0
      %v314 = vsel %vm279, %v274, 0
      %v317 = vsel %vm279, %v275, 0
      %v320 = vsel %vm279, %v276, 0
      %v323 = vsel %vm279, %v277, 0
      %v326 = vsel %vm279, %v278, 0
      %vm328 = vcmask 1041408
      %v330 = vsel %vm328, %v198, 0
      %332 = vmatprep.subr.bf16.mxu0 0
      %333 = vmatpush1.bf16.msra.mxu0 0
      %334 = vmatprep.subr.bf16.mxu0 0
      %335 = vmatpush1.bf16.msra.mxu0 0
      %336 = vmatprep.subr.bf16.mxu0 0
      %337 = vmatpush1.bf16.msra.mxu0 0
      %338 = vmatprep.subr.bf16.mxu0 0
      %339 = vmatpush1.bf16.msra.mxu0 0
      %340 = vmatprep.subr.bf16.mxu0 0
      %341 = vmatpush1.bf16.msra.mxu0 0
      %342 = vmatprep.subr.bf16.mxu0 0
      %343 = vmatpush1.bf16.msra.mxu0 0
      %344 = vmatprep.subr.bf16.mxu0 0
      %345 = vmatpush1.bf16.msra.mxu0 0
      %346 = vmatprep.subr.bf16.mxu0 0
      %347 = vmatpush1.bf16.msra.mxu0 %v330
      %348 = vmatprep.subr.bf16.mxu0 0
      %349 = vmatpush2.bf16.msra.mxu0 0
      %350 = vmatprep.subr.bf16.mxu0 0
      %351 = vmatpush2.bf16.msra.mxu0 0
      %352 = vmatprep.subr.bf16.mxu0 0
      %353 = vmatpush2.bf16.msra.mxu0 0
      %354 = vmatprep.subr.bf16.mxu0 0
      %355 = vmatpush2.bf16.msra.mxu0 0
      %356 = vmatprep.subr.bf16.mxu0 0
      %357 = vmatpush2.bf16.msra.mxu0 0
      %358 = vmatprep.subr.bf16.mxu0 0
      %359 = vmatpush2.bf16.msra.mxu0 0
      %360 = vmatprep.subr.bf16.mxu0 0
      %361 = vmatpush2.bf16.msra.mxu0 0
      %362 = vmatprep.subr.bf16.mxu0 0
      %363 = vmatpush2.bf16.msra.mxu0 0
      %364 = vmatprep.mubr.bf16.mxu0 0
      %365 = vmatmul.mubr.bf16.gmra.mxu0 %v281
      %v366 = vpop.f32.mrf.mxu0
      %v367 = vadd.f32 0.0, %v366
      %v368 = vpop.f32.mrf.mxu0
      %v369 = vpop.f32.mrf.mxu0
      %v370 = vadd.f32 0.0, %v369
      %v371 = vpop.f32.mrf.mxu0
      %372 = vmatprep.mubr.bf16.mxu0 0
      %373 = vmatmul.mubr.bf16.gmra.mxu0 %v284
      %v374 = vpop.f32.mrf.mxu0
      %v375 = vadd.f32 0.0, %v374
      %v376 = vpop.f32.mrf.mxu0
      %v377 = vpop.f32.mrf.mxu0
      %v378 = vadd.f32 0.0, %v377
      %v379 = vpop.f32.mrf.mxu0
      %380 = vmatprep.mubr.bf16.mxu0 0
      %381 = vmatmul.mubr.bf16.gmra.mxu0 %v287
      %v382 = vpop.f32.mrf.mxu0
      %v383 = vadd.f32 0.0, %v382
      %v384 = vpop.f32.mrf.mxu0
      %v385 = vpop.f32.mrf.mxu0
      %v386 = vadd.f32 0.0, %v385
      %v387 = vpop.f32.mrf.mxu0
      %388 = vmatprep.mubr.bf16.mxu0 0
      %389 = vmatmul.mubr.bf16.gmra.mxu0 %v290
      %v390 = vpop.f32.mrf.mxu0
      %v391 = vadd.f32 0.0, %v390
      %v392 = vpop.f32.mrf.mxu0
      %v393 = vpop.f32.mrf.mxu0
      %v394 = vadd.f32 0.0, %v393
      %v395 = vpop.f32.mrf.mxu0
      %396 = vmatprep.mubr.bf16.mxu0 0
      %397 = vmatmul.mubr.bf16.gmra.mxu0 %v293
      %v398 = vpop.f32.mrf.mxu0
      %v399 = vadd.f32 0.0, %v398
      %v400 = vpop.f32.mrf.mxu0
      %v401 = vpop.f32.mrf.mxu0
      %v402 = vadd.f32 0.0, %v401
      %v403 = vpop.f32.mrf.mxu0
      %404 = vmatprep.mubr.bf16.mxu0 0
      %405 = vmatmul.mubr.bf16.gmra.mxu0 %v296
      %v406 = vpop.f32.mrf.mxu0
      %v407 = vadd.f32 0.0, %v406
      %v408 = vpop.f32.mrf.mxu0
      %v409 = vpop.f32.mrf.mxu0
      %v410 = vadd.f32 0.0, %v409
      %v411 = vpop.f32.mrf.mxu0
      %412 = vmatprep.mubr.bf16.mxu0 0
      %413 = vmatmul.mubr.bf16.gmra.mxu0 %v299
      %v414 = vpop.f32.mrf.mxu0
      %v415 = vadd.f32 0.0, %v414
      %v416 = vpop.f32.mrf.mxu0
      %v417 = vpop.f32.mrf.mxu0
      %v418 = vadd.f32 0.0, %v417
      %v419 = vpop.f32.mrf.mxu0
      %420 = vmatprep.mubr.bf16.mxu0 0
      %421 = vmatmul.mubr.bf16.gmra.mxu0 %v302
      %v422 = vpop.f32.mrf.mxu0
      %v423 = vadd.f32 0.0, %v422
      %v424 = vpop.f32.mrf.mxu0
      %v425 = vpop.f32.mrf.mxu0
      %v426 = vadd.f32 0.0, %v425
      %v427 = vpop.f32.mrf.mxu0
      %428 = vmatprep.mubr.bf16.mxu0 0
      %429 = vmatmul.mubr.bf16.gmra.mxu0 %v305
      %v430 = vpop.f32.mrf.mxu0
      %v431 = vadd.f32 0.0, %v430
      %v432 = vpop.f32.mrf.mxu0
      %v433 = vpop.f32.mrf.mxu0
      %v434 = vadd.f32 0.0, %v433
      %v435 = vpop.f32.mrf.mxu0
      %436 = vmatprep.mubr.bf16.mxu0 0
      %437 = vmatmul.mubr.bf16.gmra.mxu0 %v308
      %v438 = vpop.f32.mrf.mxu0
      %v439 = vadd.f32 0.0, %v438
      %v440 = vpop.f32.mrf.mxu0
      %v441 = vpop.f32.mrf.mxu0
      %v442 = vadd.f32 0.0, %v441
      %v443 = vpop.f32.mrf.mxu0
      %444 = vmatprep.mubr.bf16.mxu0 0
      %445 = vmatmul.mubr.bf16.gmra.mxu0 %v311
      %v446 = vpop.f32.mrf.mxu0
      %v447 = vadd.f32 0.0, %v446
      %v448 = vpop.f32.mrf.mxu0
      %v449 = vpop.f32.mrf.mxu0
      %v450 = vadd.f32 0.0, %v449
      %v451 = vpop.f32.mrf.mxu0
      %452 = vmatprep.mubr.bf16.mxu0 0
      %453 = vmatmul.mubr.bf16.gmra.mxu0 %v314
      %v454 = vpop.f32.mrf.mxu0
      %v455 = vadd.f32 0.0, %v454
      %v456 = vpop.f32.mrf.mxu0
      %v457 = vpop.f32.mrf.mxu0
      %v458 = vadd.f32 0.0, %v457
      %v459 = vpop.f32.mrf.mxu0
      %460 = vmatprep.mubr.bf16.mxu0 0
      %461 = vmatmul.mubr.bf16.gmra.mxu0 %v317
      %v462 = vpop.f32.mrf.mxu0
      %v463 = vadd.f32 0.0, %v462
      %v464 = vpop.f32.mrf.mxu0
      %v465 = vpop.f32.mrf.mxu0
      %v466 = vadd.f32 0.0, %v465
      %v467 = vpop.f32.mrf.mxu0
      %468 = vmatprep.mubr.bf16.mxu0 0
      %469 = vmatmul.mubr.bf16.gmra.mxu0 %v320
      %v470 = vpop.f32.mrf.mxu0
      %v471 = vadd.f32 0.0, %v470
      %v472 = vpop.f32.mrf.mxu0
      %v473 = vpop.f32.mrf.mxu0
      %v474 = vadd.f32 0.0, %v473
      %v475 = vpop.f32.mrf.mxu0
      %476 = vmatprep.mubr.bf16.mxu0 0
      %477 = vmatmul.mubr.bf16.gmra.mxu0 %v323
      %v478 = vpop.f32.mrf.mxu0
      %v479 = vadd.f32 0.0, %v478
      %v480 = vpop.f32.mrf.mxu0
      %v481 = vpop.f32.mrf.mxu0
      %v482 = vadd.f32 0.0, %v481
      %v483 = vpop.f32.mrf.mxu0
      %484 = vmatprep.mubr.bf16.mxu0 0
      %485 = vmatmul.mubr.bf16.gmra.mxu0 %v326
      %v486 = vpop.f32.mrf.mxu0
      %v487 = vadd.f32 0.0, %v486
      %v488 = vpop.f32.mrf.mxu0
      %v489 = vpop.f32.mrf.mxu0
      %v490 = vadd.f32 0.0, %v489
      %v491 = vpop.f32.mrf.mxu0
      %492 = vdwg.mxu0
      %493 = vst [vmem:[#allocation2] sm:$0xff] %v367
      %494 = vst [vmem:[#allocation2 + $0x8] sm:$0xff] %v370
      %495 = vst [vmem:[#allocation2 + $0x10] sm:$0xff] %v375
      %496 = vst [vmem:[#allocation2 + $0x18] sm:$0xff] %v378
      %497 = vst [vmem:[#allocation2 + $0x20] sm:$0xff] %v383
      %498 = vst [vmem:[#allocation2 + $0x28] sm:$0xff] %v386
      %499 = vst [vmem:[#allocation2 + $0x30] sm:$0xff] %v391
      %500 = vst [vmem:[#allocation2 + $0x38] sm:$0xff] %v394
      %501 = vst [vmem:[#allocation2 + $0x40] sm:$0xff] %v399
      %502 = vst [vmem:[#allocation2 + $0x48] sm:$0xff] %v402
      %503 = vst [vmem:[#allocation2 + $0x50] sm:$0xff] %v407
      %504 = vst [vmem:[#allocation2 + $0x58] sm:$0xff] %v410
      %505 = vst [vmem:[#allocation2 + $0x60] sm:$0xff] %v415
      %506 = vst [vmem:[#allocation2 + $0x68] sm:$0xff] %v418
      %507 = vst [vmem:[#allocation2 + $0x70] sm:$0xff] %v423
      %508 = vst [vmem:[#allocation2 + $0x78] sm:$0xff] %v426
      %509 = vst [vmem:[#allocation2 + $0x80] sm:$0xff] %v431
      %510 = vst [vmem:[#allocation2 + $0x88] sm:$0xff] %v434
      %511 = vst [vmem:[#allocation2 + $0x90] sm:$0xff] %v439
      %512 = vst [vmem:[#allocation2 + $0x98] sm:$0xff] %v442
      %513 = vst [vmem:[#allocation2 + $0xa0] sm:$0xff] %v447
      %514 = vst [vmem:[#allocation2 + $0xa8] sm:$0xff] %v450
      %515 = vst [vmem:[#allocation2 + $0xb0] sm:$0xff] %v455
      %516 = vst [vmem:[#allocation2 + $0xb8] sm:$0xff] %v458
      %517 = vst [vmem:[#allocation2 + $0xc0] sm:$0xff] %v463
      %518 = vst [vmem:[#allocation2 + $0xc8] sm:$0xff] %v466
      %519 = vst [vmem:[#allocation2 + $0xd0] sm:$0xff] %v471
      %520 = vst [vmem:[#allocation2 + $0xd8] sm:$0xff] %v474
      %521 = vst [vmem:[#allocation2 + $0xe0] sm:$0xff] %v479
      %522 = vst [vmem:[#allocation2 + $0xe8] sm:$0xff] %v482
      %523 = vst [vmem:[#allocation2 + $0xf0] sm:$0xff] %v487
      %524 = vst [vmem:[#allocation2 + $0xf8] sm:$0xff] %v490
      %v525 = vld [vmem:[%s157] sm:$0xf]
      %v526 = vld [vmem:[%s157 + $0x4] sm:$0xf]
      %v527 = vld [vmem:[%s157 + $0x8] sm:$0x1]
      %v528 = vld [vmem:[%s157 + $0xc] sm:$0xf]
      %v529 = vld [vmem:[%s157 + $0x10] sm:$0xf]
      %v530 = vld [vmem:[%s157 + $0x14] sm:$0x1]
      %v531 = vld [vmem:[%s157 + $0x18] sm:$0xf]
      %v532 = vld [vmem:[%s157 + $0x1c] sm:$0xf]
      %v533 = vld [vmem:[%s157 + $0x20] sm:$0x1]
      %v534 = vld [vmem:[%s157 + $0x24] sm:$0xf]
      %v535 = vld [vmem:[%s157 + $0x28] sm:$0xf]
      %v536 = vld [vmem:[%s157 + $0x2c] sm:$0x1]
      %v537 = vld [vmem:[%s157 + $0x30] sm:$0xf]
      %v538 = vld [vmem:[%s157 + $0x34] sm:$0xf]
      %v539 = vld [vmem:[%s157 + $0x38] sm:$0x1]
      %v540 = vld [vmem:[%s157 + $0x3c] sm:$0xf]
      %v541 = vld [vmem:[%s157 + $0x40] sm:$0xf]
      %v542 = vld [vmem:[%s157 + $0x44] sm:$0x1]
      %v543 = vld [vmem:[%s157 + $0x48] sm:$0xf]
      %v544 = vld [vmem:[%s157 + $0x4c] sm:$0xf]
      %v545 = vld [vmem:[%s157 + $0x50] sm:$0x1]
      %v546 = vld [vmem:[%s157 + $0x54] sm:$0xf]
      %v547 = vld [vmem:[%s157 + $0x58] sm:$0xf]
      %v548 = vld [vmem:[%s157 + $0x5c] sm:$0x1]
      %v549 = vld [vmem:[%s157 + $0x60] sm:$0xf]
      %v550 = vld [vmem:[%s157 + $0x64] sm:$0xf]
      %v551 = vld [vmem:[%s157 + $0x68] sm:$0x1]
      %v552 = vld [vmem:[%s157 + $0x6c] sm:$0xf]
      %v553 = vld [vmem:[%s157 + $0x70] sm:$0xf]
      %v554 = vld [vmem:[%s157 + $0x74] sm:$0x1]
      %v555 = vld [vmem:[%s157 + $0x78] sm:$0xf]
      %v556 = vld [vmem:[%s157 + $0x7c] sm:$0xf]
      %v557 = vld [vmem:[%s157 + $0x80] sm:$0x1]
      %v558 = vld [vmem:[%s157 + $0x84] sm:$0xf]
      %v559 = vld [vmem:[%s157 + $0x88] sm:$0xf]
      %v560 = vld [vmem:[%s157 + $0x8c] sm:$0x1]
      %v561 = vld [vmem:[%s157 + $0x90] sm:$0xf]
      %v562 = vld [vmem:[%s157 + $0x94] sm:$0xf]
      %v563 = vld [vmem:[%s157 + $0x98] sm:$0x1]
      %v564 = vld [vmem:[%s157 + $0x9c] sm:$0xf]
      %v565 = vld [vmem:[%s157 + $0xa0] sm:$0xf]
      %v566 = vld [vmem:[%s157 + $0xa4] sm:$0x1]
      %v567 = vld [vmem:[%s157 + $0xa8] sm:$0xf]
      %v568 = vld [vmem:[%s157 + $0xac] sm:$0xf]
      %v569 = vld [vmem:[%s157 + $0xb0] sm:$0x1]
      %v570 = vld [vmem:[%s157 + $0xb4] sm:$0xf]
      %v571 = vld [vmem:[%s157 + $0xb8] sm:$0xf]
      %v572 = vld [vmem:[%s157 + $0xbc] sm:$0x1]
      %vm573 = vsmask.f32 3328
      %vm574 = vsmask.f32 7440
      %vm575 = vmor %vm573, %vm574
      %v577 = vshrl.u32 %v525, 16
      %v579 = vrot.slane %v577, 4
      %v580 = vshll.u32 %v525, 16
      %v582 = vrot.slane %v580, 5
      %v583 = vor.u32 %v579, %v582
      %v584 = vrot.slane %v583, 4
      %v586 = vshll.u32 %v526, 16
      %v588 = vrot.slane %v586, 5
      %v589 = vsel %vm575, %v584, %v588
      %v590 = vshrl.u32 %v526, 16
      %v592 = vrot.slane %v590, 4
      %v593 = vor.u32 %v592, %v588
      %v594 = vrot.slane %v593, 4
      %v596 = vshll.u32 %v527, 16
      %v598 = vrot.slane %v596, 5
      %v599 = vsel %vm575, %v594, %v598
      %v601 = vshrl.u32 %v528, 16
      %v603 = vrot.slane %v601, 4
      %v604 = vshll.u32 %v528, 16
      %v606 = vrot.slane %v604, 5
      %v607 = vor.u32 %v603, %v606
      %v608 = vrot.slane %v607, 4
      %v610 = vshll.u32 %v529, 16
      %v612 = vrot.slane %v610, 5
      %v613 = vsel %vm575, %v608, %v612
      %v614 = vshrl.u32 %v529, 16
      %v616 = vrot.slane %v614, 4
      %v617 = vor.u32 %v616, %v612
      %v618 = vrot.slane %v617, 4
      %v620 = vshll.u32 %v530, 16
      %v622 = vrot.slane %v620, 5
      %v623 = vsel %vm575, %v618, %v622
      %v625 = vshrl.u32 %v531, 16
      %v627 = vrot.slane %v625, 4
      %v628 = vshll.u32 %v531, 16
      %v630 = vrot.slane %v628, 5
      %v631 = vor.u32 %v627, %v630
      %v632 = vrot.slane %v631, 4
      %v634 = vshll.u32 %v532, 16
      %v636 = vrot.slane %v634, 5
      %v637 = vsel %vm575, %v632, %v636
      %v638 = vshrl.u32 %v532, 16
      %v640 = vrot.slane %v638, 4
      %v641 = vor.u32 %v640, %v636
      %v642 = vrot.slane %v641, 4
      %v644 = vshll.u32 %v533, 16
      %v646 = vrot.slane %v644, 5
      %v647 = vsel %vm575, %v642, %v646
      %v649 = vshrl.u32 %v534, 16
      %v651 = vrot.slane %v649, 4
      %v652 = vshll.u32 %v534, 16
      %v654 = vrot.slane %v652, 5
      %v655 = vor.u32 %v651, %v654
      %v656 = vrot.slane %v655, 4
      %v658 = vshll.u32 %v535, 16
      %v660 = vrot.slane %v658, 5
      %v661 = vsel %vm575, %v656, %v660
      %v662 = vshrl.u32 %v535, 16
      %v664 = vrot.slane %v662, 4
      %v665 = vor.u32 %v664, %v660
      %v666 = vrot.slane %v665, 4
      %v668 = vshll.u32 %v536, 16
      %v670 = vrot.slane %v668, 5
      %v671 = vsel %vm575, %v666, %v670
      %v673 = vshrl.u32 %v537, 16
      %v675 = vrot.slane %v673, 4
      %v676 = vshll.u32 %v537, 16
      %v678 = vrot.slane %v676, 5
      %v679 = vor.u32 %v675, %v678
      %v680 = vrot.slane %v679, 4
      %v682 = vshll.u32 %v538, 16
      %v684 = vrot.slane %v682, 5
      %v685 = vsel %vm575, %v680, %v684
      %v686 = vshrl.u32 %v538, 16
      %v688 = vrot.slane %v686, 4
      %v689 = vor.u32 %v688, %v684
      %v690 = vrot.slane %v689, 4
      %v692 = vshll.u32 %v539, 16
      %v694 = vrot.slane %v692, 5
      %v695 = vsel %vm575, %v690, %v694
      %v697 = vshrl.u32 %v540, 16
      %v699 = vrot.slane %v697, 4
      %v700 = vshll.u32 %v540, 16
      %v702 = vrot.slane %v700, 5
      %v703 = vor.u32 %v699, %v702
      %v704 = vrot.slane %v703, 4
      %v706 = vshll.u32 %v541, 16
      %v708 = vrot.slane %v706, 5
      %v709 = vsel %vm575, %v704, %v708
      %v710 = vshrl.u32 %v541, 16
      %v712 = vrot.slane %v710, 4
      %v713 = vor.u32 %v712, %v708
      %v714 = vrot.slane %v713, 4
      %v716 = vshll.u32 %v542, 16
      %v718 = vrot.slane %v716, 5
      %v719 = vsel %vm575, %v714, %v718
      %v721 = vshrl.u32 %v543, 16
      %v723 = vrot.slane %v721, 4
      %v724 = vshll.u32 %v543, 16
      %v726 = vrot.slane %v724, 5
      %v727 = vor.u32 %v723, %v726
      %v728 = vrot.slane %v727, 4
      %v730 = vshll.u32 %v544, 16
      %v732 = vrot.slane %v730, 5
      %v733 = vsel %vm575, %v728, %v732
      %v734 = vshrl.u32 %v544, 16
      %v736 = vrot.slane %v734, 4
      %v737 = vor.u32 %v736, %v732
      %v738 = vrot.slane %v737, 4
      %v740 = vshll.u32 %v545, 16
      %v742 = vrot.slane %v740, 5
      %v743 = vsel %vm575, %v738, %v742
      %v745 = vshrl.u32 %v546, 16
      %v747 = vrot.slane %v745, 4
      %v748 = vshll.u32 %v546, 16
      %v750 = vrot.slane %v748, 5
      %v751 = vor.u32 %v747, %v750
      %v752 = vrot.slane %v751, 4
      %v754 = vshll.u32 %v547, 16
      %v756 = vrot.slane %v754, 5
      %v757 = vsel %vm575, %v752, %v756
      %v758 = vshrl.u32 %v547, 16
      %v760 = vrot.slane %v758, 4
      %v761 = vor.u32 %v760, %v756
      %v762 = vrot.slane %v761, 4
      %v764 = vshll.u32 %v548, 16
      %v766 = vrot.slane %v764, 5
      %v767 = vsel %vm575, %v762, %v766
      %v769 = vshrl.u32 %v549, 16
      %v771 = vrot.slane %v769, 4
      %v772 = vshll.u32 %v549, 16
      %v774 = vrot.slane %v772, 5
      %v775 = vor.u32 %v771, %v774
      %v776 = vrot.slane %v775, 4
      %v778 = vshll.u32 %v550, 16
      %v780 = vrot.slane %v778, 5
      %v781 = vsel %vm575, %v776, %v780
      %v782 = vshrl.u32 %v550, 16
      %v784 = vrot.slane %v782, 4
      %v785 = vor.u32 %v784, %v780
      %v786 = vrot.slane %v785, 4
      %v788 = vshll.u32 %v551, 16
      %v790 = vrot.slane %v788, 5
      %v791 = vsel %vm575, %v786, %v790
      %v793 = vshrl.u32 %v552, 16
      %v795 = vrot.slane %v793, 4
      %v796 = vshll.u32 %v552, 16
      %v798 = vrot.slane %v796, 5
      %v799 = vor.u32 %v795, %v798
      %v800 = vrot.slane %v799, 4
      %v802 = vshll.u32 %v553, 16
      %v804 = vrot.slane %v802, 5
      %v805 = vsel %vm575, %v800, %v804
      %v806 = vshrl.u32 %v553, 16
      %v808 = vrot.slane %v806, 4
      %v809 = vor.u32 %v808, %v804
      %v810 = vrot.slane %v809, 4
      %v812 = vshll.u32 %v554, 16
      %v814 = vrot.slane %v812, 5
      %v815 = vsel %vm575, %v810, %v814
      %v817 = vshrl.u32 %v555, 16
      %v819 = vrot.slane %v817, 4
      %v820 = vshll.u32 %v555, 16
      %v822 = vrot.slane %v820, 5
      %v823 = vor.u32 %v819, %v822
      %v824 = vrot.slane %v823, 4
      %v826 = vshll.u32 %v556, 16
      %v828 = vrot.slane %v826, 5
      %v829 = vsel %vm575, %v824, %v828
      %v830 = vshrl.u32 %v556, 16
      %v832 = vrot.slane %v830, 4
      %v833 = vor.u32 %v832, %v828
      %v834 = vrot.slane %v833, 4
      %v836 = vshll.u32 %v557, 16
      %v838 = vrot.slane %v836, 5
      %v839 = vsel %vm575, %v834, %v838
      %v841 = vshrl.u32 %v558, 16
      %v843 = vrot.slane %v841, 4
      %v844 = vshll.u32 %v558, 16
      %v846 = vrot.slane %v844, 5
      %v847 = vor.u32 %v843, %v846
      %v848 = vrot.slane %v847, 4
      %v850 = vshll.u32 %v559, 16
      %v852 = vrot.slane %v850, 5
      %v853 = vsel %vm575, %v848, %v852
      %v854 = vshrl.u32 %v559, 16
      %v856 = vrot.slane %v854, 4
      %v857 = vor.u32 %v856, %v852
      %v858 = vrot.slane %v857, 4
      %v860 = vshll.u32 %v560, 16
      %v862 = vrot.slane %v860, 5
      %v863 = vsel %vm575, %v858, %v862
      %v865 = vshrl.u32 %v561, 16
      %v867 = vrot.slane %v865, 4
      %v868 = vshll.u32 %v561, 16
      %v870 = vrot.slane %v868, 5
      %v871 = vor.u32 %v867, %v870
      %v872 = vrot.slane %v871, 4
      %v874 = vshll.u32 %v562, 16
      %v876 = vrot.slane %v874, 5
      %v877 = vsel %vm575, %v872, %v876
      %v878 = vshrl.u32 %v562, 16
      %v880 = vrot.slane %v878, 4
      %v881 = vor.u32 %v880, %v876
      %v882 = vrot.slane %v881, 4
      %v884 = vshll.u32 %v563, 16
      %v886 = vrot.slane %v884, 5
      %v887 = vsel %vm575, %v882, %v886
      %v889 = vshrl.u32 %v564, 16
      %v891 = vrot.slane %v889, 4
      %v892 = vshll.u32 %v564, 16
      %v894 = vrot.slane %v892, 5
      %v895 = vor.u32 %v891, %v894
      %v896 = vrot.slane %v895, 4
      %v898 = vshll.u32 %v565, 16
      %v900 = vrot.slane %v898, 5
      %v901 = vsel %vm575, %v896, %v900
      %v902 = vshrl.u32 %v565, 16
      %v904 = vrot.slane %v902, 4
      %v905 = vor.u32 %v904, %v900
      %v906 = vrot.slane %v905, 4
      %v908 = vshll.u32 %v566, 16
      %v910 = vrot.slane %v908, 5
      %v911 = vsel %vm575, %v906, %v910
      %v913 = vshrl.u32 %v567, 16
      %v915 = vrot.slane %v913, 4
      %v916 = vshll.u32 %v567, 16
      %v918 = vrot.slane %v916, 5
      %v919 = vor.u32 %v915, %v918
      %v920 = vrot.slane %v919, 4
      %v922 = vshll.u32 %v568, 16
      %v924 = vrot.slane %v922, 5
      %v925 = vsel %vm575, %v920, %v924
      %v926 = vshrl.u32 %v568, 16
      %v928 = vrot.slane %v926, 4
      %v929 = vor.u32 %v928, %v924
      %v930 = vrot.slane %v929, 4
      %v932 = vshll.u32 %v569, 16
      %v934 = vrot.slane %v932, 5
      %v935 = vsel %vm575, %v930, %v934
      %v937 = vshrl.u32 %v570, 16
      %v939 = vrot.slane %v937, 4
      %v940 = vshll.u32 %v570, 16
      %v942 = vrot.slane %v940, 5
      %v943 = vor.u32 %v939, %v942
      %v944 = vrot.slane %v943, 4
      %v946 = vshll.u32 %v571, 16
      %v948 = vrot.slane %v946, 5
      %v949 = vsel %vm575, %v944, %v948
      %v950 = vshrl.u32 %v571, 16
      %v952 = vrot.slane %v950, 4
      %v953 = vor.u32 %v952, %v948
      %v954 = vrot.slane %v953, 4
      %v956 = vshll.u32 %v572, 16
      %v958 = vrot.slane %v956, 5
      %v959 = vsel %vm575, %v954, %v958
      %s960 = scalar_lea.vmem %s1, 2
      %v961 = vld [vmem:[%s960] sm:$0x3]
      %v962 = vunpack.c.l.b16 %v589
      %v963 = vunpack.c.l.b16 %v599
      %v964 = vunpack.c.l.b16 %v613
      %v965 = vunpack.c.l.b16 %v623
      %v966 = vunpack.c.l.b16 %v637
      %v967 = vunpack.c.l.b16 %v647
      %v968 = vunpack.c.l.b16 %v661
      %v969 = vunpack.c.l.b16 %v671
      %v970 = vunpack.c.l.b16 %v685
      %v971 = vunpack.c.l.b16 %v695
      %v972 = vunpack.c.l.b16 %v709
      %v973 = vunpack.c.l.b16 %v719
      %v974 = vunpack.c.l.b16 %v733
      %v975 = vunpack.c.l.b16 %v743
      %v976 = vunpack.c.l.b16 %v757
      %v977 = vunpack.c.l.b16 %v767
      %v978 = vunpack.c.l.b16 %v781
      %v979 = vunpack.c.l.b16 %v791
      %v980 = vunpack.c.l.b16 %v805
      %v981 = vunpack.c.l.b16 %v815
      %v982 = vunpack.c.l.b16 %v829
      %v983 = vunpack.c.l.b16 %v839
      %v984 = vunpack.c.l.b16 %v853
      %v985 = vunpack.c.l.b16 %v863
      %v986 = vunpack.c.l.b16 %v877
      %v987 = vunpack.c.l.b16 %v887
      %v988 = vunpack.c.l.b16 %v901
      %v989 = vunpack.c.l.b16 %v911
      %v990 = vunpack.c.l.b16 %v925
      %v991 = vunpack.c.l.b16 %v935
      %v992 = vunpack.c.l.b16 %v949
      %v993 = vunpack.c.l.b16 %v959
      %v994 = vpack.c.b16 %v963, %v962
      %v995 = vpack.c.b16 %v965, %v964
      %v996 = vpack.c.b16 %v967, %v966
      %v997 = vpack.c.b16 %v969, %v968
      %v998 = vpack.c.b16 %v971, %v970
      %v999 = vpack.c.b16 %v973, %v972
      %v1000 = vpack.c.b16 %v975, %v974
      %v1001 = vpack.c.b16 %v977, %v976
      %v1002 = vpack.c.b16 %v979, %v978
      %v1003 = vpack.c.b16 %v981, %v980
      %v1004 = vpack.c.b16 %v983, %v982
      %v1005 = vpack.c.b16 %v985, %v984
      %v1006 = vpack.c.b16 %v987, %v986
      %v1007 = vpack.c.b16 %v989, %v988
      %v1008 = vpack.c.b16 %v991, %v990
      %v1009 = vpack.c.b16 %v993, %v992
      %v1011 = vsel %vm279, %v994, 0
      %v1014 = vsel %vm279, %v995, 0
      %v1017 = vsel %vm279, %v996, 0
      %v1020 = vsel %vm279, %v997, 0
      %v1023 = vsel %vm279, %v998, 0
      %v1026 = vsel %vm279, %v999, 0
      %v1029 = vsel %vm279, %v1000, 0
      %v1032 = vsel %vm279, %v1001, 0
      %v1035 = vsel %vm279, %v1002, 0
      %v1038 = vsel %vm279, %v1003, 0
      %v1041 = vsel %vm279, %v1004, 0
      %v1044 = vsel %vm279, %v1005, 0
      %v1047 = vsel %vm279, %v1006, 0
      %v1050 = vsel %vm279, %v1007, 0
      %v1053 = vsel %vm279, %v1008, 0
      %v1056 = vsel %vm279, %v1009, 0
      %v1059 = vsel %vm328, %v961, 0
      %1061 = vmatprep.subr.bf16.mxu0 0
      %1062 = vmatpush1.bf16.msra.mxu0 0
      %1063 = vmatprep.subr.bf16.mxu0 0
      %1064 = vmatpush1.bf16.msra.mxu0 0
      %1065 = vmatprep.subr.bf16.mxu0 0
      %1066 = vmatpush1.bf16.msra.mxu0 0
      %1067 = vmatprep.subr.bf16.mxu0 0
      %1068 = vmatpush1.bf16.msra.mxu0 0
      %1069 = vmatprep.subr.bf16.mxu0 0
      %1070 = vmatpush1.bf16.msra.mxu0 0
      %1071 = vmatprep.subr.bf16.mxu0 0
      %1072 = vmatpush1.bf16.msra.mxu0 0
      %1073 = vmatprep.subr.bf16.mxu0 0
      %1074 = vmatpush1.bf16.msra.mxu0 0
      %1075 = vmatprep.subr.bf16.mxu0 0
      %1076 = vmatpush1.bf16.msra.mxu0 %v1059
      %1077 = vmatprep.subr.bf16.mxu0 0
      %1078 = vmatpush2.bf16.msra.mxu0 0
      %1079 = vmatprep.subr.bf16.mxu0 0
      %1080 = vmatpush2.bf16.msra.mxu0 0
      %1081 = vmatprep.subr.bf16.mxu0 0
      %1082 = vmatpush2.bf16.msra.mxu0 0
      %1083 = vmatprep.subr.bf16.mxu0 0
      %1084 = vmatpush2.bf16.msra.mxu0 0
      %1085 = vmatprep.subr.bf16.mxu0 0
      %1086 = vmatpush2.bf16.msra.mxu0 0
      %1087 = vmatprep.subr.bf16.mxu0 0
      %1088 = vmatpush2.bf16.msra.mxu0 0
      %1089 = vmatprep.subr.bf16.mxu0 0
      %1090 = vmatpush2.bf16.msra.mxu0 0
      %1091 = vmatprep.subr.bf16.mxu0 0
      %1092 = vmatpush2.bf16.msra.mxu0 0
      %1093 = vmatprep.mubr.bf16.mxu0 0
      %1094 = vmatmul.mubr.bf16.gmra.mxu0 %v1011
      %v1095 = vpop.f32.mrf.mxu0
      %v1096 = vadd.f32 0.0, %v1095
      %v1097 = vpop.f32.mrf.mxu0
      %v1098 = vpop.f32.mrf.mxu0
      %v1099 = vadd.f32 0.0, %v1098
      %v1100 = vpop.f32.mrf.mxu0
      %1101 = vmatprep.mubr.bf16.mxu0 0
      %1102 = vmatmul.mubr.bf16.gmra.mxu0 %v1014
      %v1103 = vpop.f32.mrf.mxu0
      %v1104 = vadd.f32 0.0, %v1103
      %v1105 = vpop.f32.mrf.mxu0
      %v1106 = vpop.f32.mrf.mxu0
      %v1107 = vadd.f32 0.0, %v1106
      %v1108 = vpop.f32.mrf.mxu0
      %1109 = vmatprep.mubr.bf16.mxu0 0
      %1110 = vmatmul.mubr.bf16.gmra.mxu0 %v1017
      %v1111 = vpop.f32.mrf.mxu0
      %v1112 = vadd.f32 0.0, %v1111
      %v1113 = vpop.f32.mrf.mxu0
      %v1114 = vpop.f32.mrf.mxu0
      %v1115 = vadd.f32 0.0, %v1114
      %v1116 = vpop.f32.mrf.mxu0
      %1117 = vmatprep.mubr.bf16.mxu0 0
      %1118 = vmatmul.mubr.bf16.gmra.mxu0 %v1020
      %v1119 = vpop.f32.mrf.mxu0
      %v1120 = vadd.f32 0.0, %v1119
      %v1121 = vpop.f32.mrf.mxu0
      %v1122 = vpop.f32.mrf.mxu0
      %v1123 = vadd.f32 0.0, %v1122
      %v1124 = vpop.f32.mrf.mxu0
      %1125 = vmatprep.mubr.bf16.mxu0 0
      %1126 = vmatmul.mubr.bf16.gmra.mxu0 %v1023
      %v1127 = vpop.f32.mrf.mxu0
      %v1128 = vadd.f32 0.0, %v1127
      %v1129 = vpop.f32.mrf.mxu0
      %v1130 = vpop.f32.mrf.mxu0
      %v1131 = vadd.f32 0.0, %v1130
      %v1132 = vpop.f32.mrf.mxu0
      %1133 = vmatprep.mubr.bf16.mxu0 0
      %1134 = vmatmul.mubr.bf16.gmra.mxu0 %v1026
      %v1135 = vpop.f32.mrf.mxu0
      %v1136 = vadd.f32 0.0, %v1135
      %v1137 = vpop.f32.mrf.mxu0
      %v1138 = vpop.f32.mrf.mxu0
      %v1139 = vadd.f32 0.0, %v1138
      %v1140 = vpop.f32.mrf.mxu0
      %1141 = vmatprep.mubr.bf16.mxu0 0
      %1142 = vmatmul.mubr.bf16.gmra.mxu0 %v1029
      %v1143 = vpop.f32.mrf.mxu0
      %v1144 = vadd.f32 0.0, %v1143
      %v1145 = vpop.f32.mrf.mxu0
      %v1146 = vpop.f32.mrf.mxu0
      %v1147 = vadd.f32 0.0, %v1146
      %v1148 = vpop.f32.mrf.mxu0
      %1149 = vmatprep.mubr.bf16.mxu0 0
      %1150 = vmatmul.mubr.bf16.gmra.mxu0 %v1032
      %v1151 = vpop.f32.mrf.mxu0
      %v1152 = vadd.f32 0.0, %v1151
      %v1153 = vpop.f32.mrf.mxu0
      %v1154 = vpop.f32.mrf.mxu0
      %v1155 = vadd.f32 0.0, %v1154
      %v1156 = vpop.f32.mrf.mxu0
      %1157 = vmatprep.mubr.bf16.mxu0 0
      %1158 = vmatmul.mubr.bf16.gmra.mxu0 %v1035
      %v1159 = vpop.f32.mrf.mxu0
      %v1160 = vadd.f32 0.0, %v1159
      %v1161 = vpop.f32.mrf.mxu0
      %v1162 = vpop.f32.mrf.mxu0
      %v1163 = vadd.f32 0.0, %v1162
      %v1164 = vpop.f32.mrf.mxu0
      %1165 = vmatprep.mubr.bf16.mxu0 0
      %1166 = vmatmul.mubr.bf16.gmra.mxu0 %v1038
      %v1167 = vpop.f32.mrf.mxu0
      %v1168 = vadd.f32 0.0, %v1167
      %v1169 = vpop.f32.mrf.mxu0
      %v1170 = vpop.f32.mrf.mxu0
      %v1171 = vadd.f32 0.0, %v1170
      %v1172 = vpop.f32.mrf.mxu0
      %1173 = vmatprep.mubr.bf16.mxu0 0
      %1174 = vmatmul.mubr.bf16.gmra.mxu0 %v1041
      %v1175 = vpop.f32.mrf.mxu0
      %v1176 = vadd.f32 0.0, %v1175
      %v1177 = vpop.f32.mrf.mxu0
      %v1178 = vpop.f32.mrf.mxu0
      %v1179 = vadd.f32 0.0, %v1178
      %v1180 = vpop.f32.mrf.mxu0
      %1181 = vmatprep.mubr.bf16.mxu0 0
      %1182 = vmatmul.mubr.bf16.gmra.mxu0 %v1044
      %v1183 = vpop.f32.mrf.mxu0
      %v1184 = vadd.f32 0.0, %v1183
      %v1185 = vpop.f32.mrf.mxu0
      %v1186 = vpop.f32.mrf.mxu0
      %v1187 = vadd.f32 0.0, %v1186
      %v1188 = vpop.f32.mrf.mxu0
      %1189 = vmatprep.mubr.bf16.mxu0 0
      %1190 = vmatmul.mubr.bf16.gmra.mxu0 %v1047
      %v1191 = vpop.f32.mrf.mxu0
      %v1192 = vadd.f32 0.0, %v1191
      %v1193 = vpop.f32.mrf.mxu0
      %v1194 = vpop.f32.mrf.mxu0
      %v1195 = vadd.f32 0.0, %v1194
      %v1196 = vpop.f32.mrf.mxu0
      %1197 = vmatprep.mubr.bf16.mxu0 0
      %1198 = vmatmul.mubr.bf16.gmra.mxu0 %v1050
      %v1199 = vpop.f32.mrf.mxu0
      %v1200 = vadd.f32 0.0, %v1199
      %v1201 = vpop.f32.mrf.mxu0
      %v1202 = vpop.f32.mrf.mxu0
      %v1203 = vadd.f32 0.0, %v1202
      %v1204 = vpop.f32.mrf.mxu0
      %1205 = vmatprep.mubr.bf16.mxu0 0
      %1206 = vmatmul.mubr.bf16.gmra.mxu0 %v1053
      %v1207 = vpop.f32.mrf.mxu0
      %v1208 = vadd.f32 0.0, %v1207
      %v1209 = vpop.f32.mrf.mxu0
      %v1210 = vpop.f32.mrf.mxu0
      %v1211 = vadd.f32 0.0, %v1210
      %v1212 = vpop.f32.mrf.mxu0
      %1213 = vmatprep.mubr.bf16.mxu0 0
      %1214 = vmatmul.mubr.bf16.gmra.mxu0 %v1056
      %v1215 = vpop.f32.mrf.mxu0
      %v1216 = vadd.f32 0.0, %v1215
      %v1217 = vpop.f32.mrf.mxu0
      %v1218 = vpop.f32.mrf.mxu0
      %v1219 = vadd.f32 0.0, %v1218
      %v1220 = vpop.f32.mrf.mxu0
      %1221 = vdwg.mxu0
      %v1222 = vld [vmem:[#allocation2] sm:$0xff]
      %v1223 = vld [vmem:[#allocation2 + $0x8] sm:$0xff]
      %v1224 = vld [vmem:[#allocation2 + $0x10] sm:$0xff]
      %v1225 = vld [vmem:[#allocation2 + $0x18] sm:$0xff]
      %v1226 = vld [vmem:[#allocation2 + $0x20] sm:$0xff]
      %v1227 = vld [vmem:[#allocation2 + $0x28] sm:$0xff]
      %v1228 = vld [vmem:[#allocation2 + $0x30] sm:$0xff]
      %v1229 = vld [vmem:[#allocation2 + $0x38] sm:$0xff]
      %v1230 = vld [vmem:[#allocation2 + $0x40] sm:$0xff]
      %v1231 = vld [vmem:[#allocation2 + $0x48] sm:$0xff]
      %v1232 = vld [vmem:[#allocation2 + $0x50] sm:$0xff]
      %v1233 = vld [vmem:[#allocation2 + $0x58] sm:$0xff]
      %v1234 = vld [vmem:[#allocation2 + $0x60] sm:$0xff]
      %v1235 = vld [vmem:[#allocation2 + $0x68] sm:$0xff]
      %v1236 = vld [vmem:[#allocation2 + $0x70] sm:$0xff]
      %v1237 = vld [vmem:[#allocation2 + $0x78] sm:$0xff]
      %v1238 = vld [vmem:[#allocation2 + $0x80] sm:$0xff]
      %v1239 = vld [vmem:[#allocation2 + $0x88] sm:$0xff]
      %v1240 = vld [vmem:[#allocation2 + $0x90] sm:$0xff]
      %v1241 = vld [vmem:[#allocation2 + $0x98] sm:$0xff]
      %v1242 = vld [vmem:[#allocation2 + $0xa0] sm:$0xff]
      %v1243 = vld [vmem:[#allocation2 + $0xa8] sm:$0xff]
      %v1244 = vld [vmem:[#allocation2 + $0xb0] sm:$0xff]
      %v1245 = vld [vmem:[#allocation2 + $0xb8] sm:$0xff]
      %v1246 = vld [vmem:[#allocation2 + $0xc0] sm:$0xff]
      %v1247 = vld [vmem:[#allocation2 + $0xc8] sm:$0xff]
      %v1248 = vld [vmem:[#allocation2 + $0xd0] sm:$0xff]
      %v1249 = vld [vmem:[#allocation2 + $0xd8] sm:$0xff]
      %v1250 = vld [vmem:[#allocation2 + $0xe0] sm:$0xff]
      %v1251 = vld [vmem:[#allocation2 + $0xe8] sm:$0xff]
      %v1252 = vld [vmem:[#allocation2 + $0xf0] sm:$0xff]
      %v1253 = vld [vmem:[#allocation2 + $0xf8] sm:$0xff]
      %v1254 = vadd.f32 %v1222, %v1096
      %v1255 = vadd.f32 %v1223, %v1099
      %v1256 = vadd.f32 %v1224, %v1104
      %v1257 = vadd.f32 %v1225, %v1107
      %v1258 = vadd.f32 %v1226, %v1112
      %v1259 = vadd.f32 %v1227, %v1115
      %v1260 = vadd.f32 %v1228, %v1120
      %v1261 = vadd.f32 %v1229, %v1123
      %v1262 = vadd.f32 %v1230, %v1128
      %v1263 = vadd.f32 %v1231, %v1131
      %v1264 = vadd.f32 %v1232, %v1136
      %v1265 = vadd.f32 %v1233, %v1139
      %v1266 = vadd.f32 %v1234, %v1144
      %v1267 = vadd.f32 %v1235, %v1147
      %v1268 = vadd.f32 %v1236, %v1152
      %v1269 = vadd.f32 %v1237, %v1155
      %v1270 = vadd.f32 %v1238, %v1160
      %v1271 = vadd.f32 %v1239, %v1163
      %v1272 = vadd.f32 %v1240, %v1168
      %v1273 = vadd.f32 %v1241, %v1171
      %v1274 = vadd.f32 %v1242, %v1176
      %v1275 = vadd.f32 %v1243, %v1179
      %v1276 = vadd.f32 %v1244, %v1184
      %v1277 = vadd.f32 %v1245, %v1187
      %v1278 = vadd.f32 %v1246, %v1192
      %v1279 = vadd.f32 %v1247, %v1195
      %v1280 = vadd.f32 %v1248, %v1200
      %v1281 = vadd.f32 %v1249, %v1203
      %v1282 = vadd.f32 %v1250, %v1208
      %v1283 = vadd.f32 %v1251, %v1211
      %v1284 = vadd.f32 %v1252, %v1216
      %v1285 = vadd.f32 %v1253, %v1219
      %1286 = vst [vmem:[#allocation2] sm:$0xff] %v1254
      %1287 = vst [vmem:[#allocation2 + $0x8] sm:$0xff] %v1255
      %1288 = vst [vmem:[#allocation2 + $0x10] sm:$0xff] %v1256
      %1289 = vst [vmem:[#allocation2 + $0x18] sm:$0xff] %v1257
      %1290 = vst [vmem:[#allocation2 + $0x20] sm:$0xff] %v1258
      %1291 = vst [vmem:[#allocation2 + $0x28] sm:$0xff] %v1259
      %1292 = vst [vmem:[#allocation2 + $0x30] sm:$0xff] %v1260
      %1293 = vst [vmem:[#allocation2 + $0x38] sm:$0xff] %v1261
      %1294 = vst [vmem:[#allocation2 + $0x40] sm:$0xff] %v1262
      %1295 = vst [vmem:[#allocation2 + $0x48] sm:$0xff] %v1263
      %1296 = vst [vmem:[#allocation2 + $0x50] sm:$0xff] %v1264
      %1297 = vst [vmem:[#allocation2 + $0x58] sm:$0xff] %v1265
      %1298 = vst [vmem:[#allocation2 + $0x60] sm:$0xff] %v1266
      %1299 = vst [vmem:[#allocation2 + $0x68] sm:$0xff] %v1267
      %1300 = vst [vmem:[#allocation2 + $0x70] sm:$0xff] %v1268
      %1301 = vst [vmem:[#allocation2 + $0x78] sm:$0xff] %v1269
      %1302 = vst [vmem:[#allocation2 + $0x80] sm:$0xff] %v1270
      %1303 = vst [vmem:[#allocation2 + $0x88] sm:$0xff] %v1271
      %1304 = vst [vmem:[#allocation2 + $0x90] sm:$0xff] %v1272
      %1305 = vst [vmem:[#allocation2 + $0x98] sm:$0xff] %v1273
      %1306 = vst [vmem:[#allocation2 + $0xa0] sm:$0xff] %v1274
      %1307 = vst [vmem:[#allocation2 + $0xa8] sm:$0xff] %v1275
      %1308 = vst [vmem:[#allocation2 + $0xb0] sm:$0xff] %v1276
      %1309 = vst [vmem:[#allocation2 + $0xb8] sm:$0xff] %v1277
      %1310 = vst [vmem:[#allocation2 + $0xc0] sm:$0xff] %v1278
      %1311 = vst [vmem:[#allocation2 + $0xc8] sm:$0xff] %v1279
      %1312 = vst [vmem:[#allocation2 + $0xd0] sm:$0xff] %v1280
      %1313 = vst [vmem:[#allocation2 + $0xd8] sm:$0xff] %v1281
      %1314 = vst [vmem:[#allocation2 + $0xe0] sm:$0xff] %v1282
      %1315 = vst [vmem:[#allocation2 + $0xe8] sm:$0xff] %v1283
      %1316 = vst [vmem:[#allocation2 + $0xf0] sm:$0xff] %v1284
      %1317 = vst [vmem:[#allocation2 + $0xf8] sm:$0xff] %v1285
      %v1318 = vld [vmem:[%s157] sm:$0xe]
      %v1319 = vld [vmem:[%s157 + $0x4] sm:$0xf]
      %v1320 = vld [vmem:[%s157 + $0x8] sm:$0x1]
      %v1321 = vld [vmem:[%s157 + $0xc] sm:$0xe]
      %v1322 = vld [vmem:[%s157 + $0x10] sm:$0xf]
      %v1323 = vld [vmem:[%s157 + $0x14] sm:$0x1]
      %v1324 = vld [vmem:[%s157 + $0x18] sm:$0xe]
      %v1325 = vld [vmem:[%s157 + $0x1c] sm:$0xf]
      %v1326 = vld [vmem:[%s157 + $0x20] sm:$0x1]
      %v1327 = vld [vmem:[%s157 + $0x24] sm:$0xe]
      %v1328 = vld [vmem:[%s157 + $0x28] sm:$0xf]
      %v1329 = vld [vmem:[%s157 + $0x2c] sm:$0x1]
      %v1330 = vld [vmem:[%s157 + $0x30] sm:$0xe]
      %v1331 = vld [vmem:[%s157 + $0x34] sm:$0xf]
      %v1332 = vld [vmem:[%s157 + $0x38] sm:$0x1]
      %v1333 = vld [vmem:[%s157 + $0x3c] sm:$0xe]
      %v1334 = vld [vmem:[%s157 + $0x40] sm:$0xf]
      %v1335 = vld [vmem:[%s157 + $0x44] sm:$0x1]
      %v1336 = vld [vmem:[%s157 + $0x48] sm:$0xe]
      %v1337 = vld [vmem:[%s157 + $0x4c] sm:$0xf]
      %v1338 = vld [vmem:[%s157 + $0x50] sm:$0x1]
      %v1339 = vld [vmem:[%s157 + $0x54] sm:$0xe]
      %v1340 = vld [vmem:[%s157 + $0x58] sm:$0xf]
      %v1341 = vld [vmem:[%s157 + $0x5c] sm:$0x1]
      %v1342 = vld [vmem:[%s157 + $0x60] sm:$0xe]
      %v1343 = vld [vmem:[%s157 + $0x64] sm:$0xf]
      %v1344 = vld [vmem:[%s157 + $0x68] sm:$0x1]
      %v1345 = vld [vmem:[%s157 + $0x6c] sm:$0xe]
      %v1346 = vld [vmem:[%s157 + $0x70] sm:$0xf]
      %v1347 = vld [vmem:[%s157 + $0x74] sm:$0x1]
      %v1348 = vld [vmem:[%s157 + $0x78] sm:$0xe]
      %v1349 = vld [vmem:[%s157 + $0x7c] sm:$0xf]
      %v1350 = vld [vmem:[%s157 + $0x80] sm:$0x1]
      %v1351 = vld [vmem:[%s157 + $0x84] sm:$0xe]
      %v1352 = vld [vmem:[%s157 + $0x88] sm:$0xf]
      %v1353 = vld [vmem:[%s157 + $0x8c] sm:$0x1]
      %v1354 = vld [vmem:[%s157 + $0x90] sm:$0xe]
      %v1355 = vld [vmem:[%s157 + $0x94] sm:$0xf]
      %v1356 = vld [vmem:[%s157 + $0x98] sm:$0x1]
      %v1357 = vld [vmem:[%s157 + $0x9c] sm:$0xe]
      %v1358 = vld [vmem:[%s157 + $0xa0] sm:$0xf]
      %v1359 = vld [vmem:[%s157 + $0xa4] sm:$0x1]
      %v1360 = vld [vmem:[%s157 + $0xa8] sm:$0xe]
      %v1361 = vld [vmem:[%s157 + $0xac] sm:$0xf]
      %v1362 = vld [vmem:[%s157 + $0xb0] sm:$0x1]
      %v1363 = vld [vmem:[%s157 + $0xb4] sm:$0xe]
      %v1364 = vld [vmem:[%s157 + $0xb8] sm:$0xf]
      %v1365 = vld [vmem:[%s157 + $0xbc] sm:$0x1]
      %vm1414 = vcmask 1042432
      %vm1415 = vcmask 1046532
      %vm1416 = vmor %vm1414, %vm1415
      %v1417 = vrot.slane %v1318, 5
      %v1418 = vrot.slane %v1417, 4
      %v1419 = vrot.slane %v1319, 5
      %v1420 = vsel %vm1416, %v1418, %v1419
      %v1421 = vrot.slane %v1419, 4
      %v1422 = vrot.slane %v1320, 5
      %v1423 = vsel %vm1416, %v1421, %v1422
      %v1424 = vrot.slane %v1321, 5
      %v1425 = vrot.slane %v1424, 4
      %v1426 = vrot.slane %v1322, 5
      %v1427 = vsel %vm1416, %v1425, %v1426
      %v1428 = vrot.slane %v1426, 4
      %v1429 = vrot.slane %v1323, 5
      %v1430 = vsel %vm1416, %v1428, %v1429
      %v1431 = vrot.slane %v1324, 5
      %v1432 = vrot.slane %v1431, 4
      %v1433 = vrot.slane %v1325, 5
      %v1434 = vsel %vm1416, %v1432, %v1433
      %v1435 = vrot.slane %v1433, 4
      %v1436 = vrot.slane %v1326, 5
      %v1437 = vsel %vm1416, %v1435, %v1436
      %v1438 = vrot.slane %v1327, 5
      %v1439 = vrot.slane %v1438, 4
      %v1440 = vrot.slane %v1328, 5
      %v1441 = vsel %vm1416, %v1439, %v1440
      %v1442 = vrot.slane %v1440, 4
      %v1443 = vrot.slane %v1329, 5
      %v1444 = vsel %vm1416, %v1442, %v1443
      %v1445 = vrot.slane %v1330, 5
      %v1446 = vrot.slane %v1445, 4
      %v1447 = vrot.slane %v1331, 5
      %v1448 = vsel %vm1416, %v1446, %v1447
      %v1449 = vrot.slane %v1447, 4
      %v1450 = vrot.slane %v1332, 5
      %v1451 = vsel %vm1416, %v1449, %v1450
      %v1452 = vrot.slane %v1333, 5
      %v1453 = vrot.slane %v1452, 4
      %v1454 = vrot.slane %v1334, 5
      %v1455 = vsel %vm1416, %v1453, %v1454
      %v1456 = vrot.slane %v1454, 4
      %v1457 = vrot.slane %v1335, 5
      %v1458 = vsel %vm1416, %v1456, %v1457
      %v1459 = vrot.slane %v1336, 5
      %v1460 = vrot.slane %v1459, 4
      %v1461 = vrot.slane %v1337, 5
      %v1462 = vsel %vm1416, %v1460, %v1461
      %v1463 = vrot.slane %v1461, 4
      %v1464 = vrot.slane %v1338, 5
      %v1465 = vsel %vm1416, %v1463, %v1464
      %v1466 = vrot.slane %v1339, 5
      %v1467 = vrot.slane %v1466, 4
      %v1468 = vrot.slane %v1340, 5
      %v1469 = vsel %vm1416, %v1467, %v1468
      %v1470 = vrot.slane %v1468, 4
      %v1471 = vrot.slane %v1341, 5
      %v1472 = vsel %vm1416, %v1470, %v1471
      %v1473 = vrot.slane %v1342, 5
      %v1474 = vrot.slane %v1473, 4
      %v1475 = vrot.slane %v1343, 5
      %v1476 = vsel %vm1416, %v1474, %v1475
      %v1477 = vrot.slane %v1475, 4
      %v1478 = vrot.slane %v1344, 5
      %v1479 = vsel %vm1416, %v1477, %v1478
      %v1480 = vrot.slane %v1345, 5
      %v1481 = vrot.slane %v1480, 4
      %v1482 = vrot.slane %v1346, 5
      %v1483 = vsel %vm1416, %v1481, %v1482
      %v1484 = vrot.slane %v1482, 4
      %v1485 = vrot.slane %v1347, 5
      %v1486 = vsel %vm1416, %v1484, %v1485
      %v1487 = vrot.slane %v1348, 5
      %v1488 = vrot.slane %v1487, 4
      %v1489 = vrot.slane %v1349, 5
      %v1490 = vsel %vm1416, %v1488, %v1489
      %v1491 = vrot.slane %v1489, 4
      %v1492 = vrot.slane %v1350, 5
      %v1493 = vsel %vm1416, %v1491, %v1492
      %v1494 = vrot.slane %v1351, 5
      %v1495 = vrot.slane %v1494, 4
      %v1496 = vrot.slane %v1352, 5
      %v1497 = vsel %vm1416, %v1495, %v1496
      %v1498 = vrot.slane %v1496, 4
      %v1499 = vrot.slane %v1353, 5
      %v1500 = vsel %vm1416, %v1498, %v1499
      %v1501 = vrot.slane %v1354, 5
      %v1502 = vrot.slane %v1501, 4
      %v1503 = vrot.slane %v1355, 5
      %v1504 = vsel %vm1416, %v1502, %v1503
      %v1505 = vrot.slane %v1503, 4
      %v1506 = vrot.slane %v1356, 5
      %v1507 = vsel %vm1416, %v1505, %v1506
      %v1508 = vrot.slane %v1357, 5
      %v1509 = vrot.slane %v1508, 4
      %v1510 = vrot.slane %v1358, 5
      %v1511 = vsel %vm1416, %v1509, %v1510
      %v1512 = vrot.slane %v1510, 4
      %v1513 = vrot.slane %v1359, 5
      %v1514 = vsel %vm1416, %v1512, %v1513
      %v1515 = vrot.slane %v1360, 5
      %v1516 = vrot.slane %v1515, 4
      %v1517 = vrot.slane %v1361, 5
      %v1518 = vsel %vm1416, %v1516, %v1517
      %v1519 = vrot.slane %v1517, 4
      %v1520 = vrot.slane %v1362, 5
      %v1521 = vsel %vm1416, %v1519, %v1520
      %v1522 = vrot.slane %v1363, 5
      %v1523 = vrot.slane %v1522, 4
      %v1524 = vrot.slane %v1364, 5
      %v1525 = vsel %vm1416, %v1523, %v1524
      %v1526 = vrot.slane %v1524, 4
      %v1527 = vrot.slane %v1365, 5
      %v1528 = vsel %vm1416, %v1526, %v1527
      %s1529 = scalar_lea.vmem %s1, 4
      %v1530 = vld [vmem:[%s1529] sm:$0x3]
      %v1531 = vunpack.c.l.b16 %v1420
      %v1532 = vunpack.c.l.b16 %v1423
      %v1533 = vunpack.c.l.b16 %v1427
      %v1534 = vunpack.c.l.b16 %v1430
      %v1535 = vunpack.c.l.b16 %v1434
      %v1536 = vunpack.c.l.b16 %v1437
      %v1537 = vunpack.c.l.b16 %v1441
      %v1538 = vunpack.c.l.b16 %v1444
      %v1539 = vunpack.c.l.b16 %v1448
      %v1540 = vunpack.c.l.b16 %v1451
      %v1541 = vunpack.c.l.b16 %v1455
      %v1542 = vunpack.c.l.b16 %v1458
      %v1543 = vunpack.c.l.b16 %v1462
      %v1544 = vunpack.c.l.b16 %v1465
      %v1545 = vunpack.c.l.b16 %v1469
      %v1546 = vunpack.c.l.b16 %v1472
      %v1547 = vunpack.c.l.b16 %v1476
      %v1548 = vunpack.c.l.b16 %v1479
      %v1549 = vunpack.c.l.b16 %v1483
      %v1550 = vunpack.c.l.b16 %v1486
      %v1551 = vunpack.c.l.b16 %v1490
      %v1552 = vunpack.c.l.b16 %v1493
      %v1553 = vunpack.c.l.b16 %v1497
      %v1554 = vunpack.c.l.b16 %v1500
      %v1555 = vunpack.c.l.b16 %v1504
      %v1556 = vunpack.c.l.b16 %v1507
      %v1557 = vunpack.c.l.b16 %v1511
      %v1558 = vunpack.c.l.b16 %v1514
      %v1559 = vunpack.c.l.b16 %v1518
      %v1560 = vunpack.c.l.b16 %v1521
      %v1561 = vunpack.c.l.b16 %v1525
      %v1562 = vunpack.c.l.b16 %v1528
      %v1563 = vpack.c.b16 %v1532, %v1531
      %v1564 = vpack.c.b16 %v1534, %v1533
      %v1565 = vpack.c.b16 %v1536, %v1535
      %v1566 = vpack.c.b16 %v1538, %v1537
      %v1567 = vpack.c.b16 %v1540, %v1539
      %v1568 = vpack.c.b16 %v1542, %v1541
      %v1569 = vpack.c.b16 %v1544, %v1543
      %v1570 = vpack.c.b16 %v1546, %v1545
      %v1571 = vpack.c.b16 %v1548, %v1547
      %v1572 = vpack.c.b16 %v1550, %v1549
      %v1573 = vpack.c.b16 %v1552, %v1551
      %v1574 = vpack.c.b16 %v1554, %v1553
      %v1575 = vpack.c.b16 %v1556, %v1555
      %v1576 = vpack.c.b16 %v1558, %v1557
      %v1577 = vpack.c.b16 %v1560, %v1559
      %v1578 = vpack.c.b16 %v1562, %v1561
      %v1580 = vsel %vm279, %v1563, 0
      %v1583 = vsel %vm279, %v1564, 0
      %v1586 = vsel %vm279, %v1565, 0
      %v1589 = vsel %vm279, %v1566, 0
      %v1592 = vsel %vm279, %v1567, 0
      %v1595 = vsel %vm279, %v1568, 0
      %v1598 = vsel %vm279, %v1569, 0
      %v1601 = vsel %vm279, %v1570, 0
      %v1604 = vsel %vm279, %v1571, 0
      %v1607 = vsel %vm279, %v1572, 0
      %v1610 = vsel %vm279, %v1573, 0
      %v1613 = vsel %vm279, %v1574, 0
      %v1616 = vsel %vm279, %v1575, 0
      %v1619 = vsel %vm279, %v1576, 0
      %v1622 = vsel %vm279, %v1577, 0
      %v1625 = vsel %vm279, %v1578, 0
      %v1628 = vsel %vm328, %v1530, 0
      %1630 = vmatprep.subr.bf16.mxu0 0
      %1631 = vmatpush1.bf16.msra.mxu0 0
      %1632 = vmatprep.subr.bf16.mxu0 0
      %1633 = vmatpush1.bf16.msra.mxu0 0
      %1634 = vmatprep.subr.bf16.mxu0 0
      %1635 = vmatpush1.bf16.msra.mxu0 0
      %1636 = vmatprep.subr.bf16.mxu0 0
      %1637 = vmatpush1.bf16.msra.mxu0 0
      %1638 = vmatprep.subr.bf16.mxu0 0
      %1639 = vmatpush1.bf16.msra.mxu0 0
      %1640 = vmatprep.subr.bf16.mxu0 0
      %1641 = vmatpush1.bf16.msra.mxu0 0
      %1642 = vmatprep.subr.bf16.mxu0 0
      %1643 = vmatpush1.bf16.msra.mxu0 0
      %1644 = vmatprep.subr.bf16.mxu0 0
      %1645 = vmatpush1.bf16.msra.mxu0 %v1628
      %1646 = vmatprep.subr.bf16.mxu0 0
      %1647 = vmatpush2.bf16.msra.mxu0 0
      %1648 = vmatprep.subr.bf16.mxu0 0
      %1649 = vmatpush2.bf16.msra.mxu0 0
      %1650 = vmatprep.subr.bf16.mxu0 0
      %1651 = vmatpush2.bf16.msra.mxu0 0
      %1652 = vmatprep.subr.bf16.mxu0 0
      %1653 = vmatpush2.bf16.msra.mxu0 0
      %1654 = vmatprep.subr.bf16.mxu0 0
      %1655 = vmatpush2.bf16.msra.mxu0 0
      %1656 = vmatprep.subr.bf16.mxu0 0
      %1657 = vmatpush2.bf16.msra.mxu0 0
      %1658 = vmatprep.subr.bf16.mxu0 0
      %1659 = vmatpush2.bf16.msra.mxu0 0
      %1660 = vmatprep.subr.bf16.mxu0 0
      %1661 = vmatpush2.bf16.msra.mxu0 0
      %1662 = vmatprep.mubr.bf16.mxu0 0
      %1663 = vmatmul.mubr.bf16.gmra.mxu0 %v1580
      %v1664 = vpop.f32.mrf.mxu0
      %v1665 = vadd.f32 0.0, %v1664
      %v1666 = vpop.f32.mrf.mxu0
      %v1667 = vpop.f32.mrf.mxu0
      %v1668 = vadd.f32 0.0, %v1667
      %v1669 = vpop.f32.mrf.mxu0
      %1670 = vmatprep.mubr.bf16.mxu0 0
      %1671 = vmatmul.mubr.bf16.gmra.mxu0 %v1583
      %v1672 = vpop.f32.mrf.mxu0
      %v1673 = vadd.f32 0.0, %v1672
      %v1674 = vpop.f32.mrf.mxu0
      %v1675 = vpop.f32.mrf.mxu0
      %v1676 = vadd.f32 0.0, %v1675
      %v1677 = vpop.f32.mrf.mxu0
      %1678 = vmatprep.mubr.bf16.mxu0 0
      %1679 = vmatmul.mubr.bf16.gmra.mxu0 %v1586
      %v1680 = vpop.f32.mrf.mxu0
      %v1681 = vadd.f32 0.0, %v1680
      %v1682 = vpop.f32.mrf.mxu0
      %v1683 = vpop.f32.mrf.mxu0
      %v1684 = vadd.f32 0.0, %v1683
      %v1685 = vpop.f32.mrf.mxu0
      %1686 = vmatprep.mubr.bf16.mxu0 0
      %1687 = vmatmul.mubr.bf16.gmra.mxu0 %v1589
      %v1688 = vpop.f32.mrf.mxu0
      %v1689 = vadd.f32 0.0, %v1688
      %v1690 = vpop.f32.mrf.mxu0
      %v1691 = vpop.f32.mrf.mxu0
      %v1692 = vadd.f32 0.0, %v1691
      %v1693 = vpop.f32.mrf.mxu0
      %1694 = vmatprep.mubr.bf16.mxu0 0
      %1695 = vmatmul.mubr.bf16.gmra.mxu0 %v1592
      %v1696 = vpop.f32.mrf.mxu0
      %v1697 = vadd.f32 0.0, %v1696
      %v1698 = vpop.f32.mrf.mxu0
      %v1699 = vpop.f32.mrf.mxu0
      %v1700 = vadd.f32 0.0, %v1699
      %v1701 = vpop.f32.mrf.mxu0
      %1702 = vmatprep.mubr.bf16.mxu0 0
      %1703 = vmatmul.mubr.bf16.gmra.mxu0 %v1595
      %v1704 = vpop.f32.mrf.mxu0
      %v1705 = vadd.f32 0.0, %v1704
      %v1706 = vpop.f32.mrf.mxu0
      %v1707 = vpop.f32.mrf.mxu0
      %v1708 = vadd.f32 0.0, %v1707
      %v1709 = vpop.f32.mrf.mxu0
      %1710 = vmatprep.mubr.bf16.mxu0 0
      %1711 = vmatmul.mubr.bf16.gmra.mxu0 %v1598
      %v1712 = vpop.f32.mrf.mxu0
      %v1713 = vadd.f32 0.0, %v1712
      %v1714 = vpop.f32.mrf.mxu0
      %v1715 = vpop.f32.mrf.mxu0
      %v1716 = vadd.f32 0.0, %v1715
      %v1717 = vpop.f32.mrf.mxu0
      %1718 = vmatprep.mubr.bf16.mxu0 0
      %1719 = vmatmul.mubr.bf16.gmra.mxu0 %v1601
      %v1720 = vpop.f32.mrf.mxu0
      %v1721 = vadd.f32 0.0, %v1720
      %v1722 = vpop.f32.mrf.mxu0
      %v1723 = vpop.f32.mrf.mxu0
      %v1724 = vadd.f32 0.0, %v1723
      %v1725 = vpop.f32.mrf.mxu0
      %1726 = vmatprep.mubr.bf16.mxu0 0
      %1727 = vmatmul.mubr.bf16.gmra.mxu0 %v1604
      %v1728 = vpop.f32.mrf.mxu0
      %v1729 = vadd.f32 0.0, %v1728
      %v1730 = vpop.f32.mrf.mxu0
      %v1731 = vpop.f32.mrf.mxu0
      %v1732 = vadd.f32 0.0, %v1731
      %v1733 = vpop.f32.mrf.mxu0
      %1734 = vmatprep.mubr.bf16.mxu0 0
      %1735 = vmatmul.mubr.bf16.gmra.mxu0 %v1607
      %v1736 = vpop.f32.mrf.mxu0
      %v1737 = vadd.f32 0.0, %v1736
      %v1738 = vpop.f32.mrf.mxu0
      %v1739 = vpop.f32.mrf.mxu0
      %v1740 = vadd.f32 0.0, %v1739
      %v1741 = vpop.f32.mrf.mxu0
      %1742 = vmatprep.mubr.bf16.mxu0 0
      %1743 = vmatmul.mubr.bf16.gmra.mxu0 %v1610
      %v1744 = vpop.f32.mrf.mxu0
      %v1745 = vadd.f32 0.0, %v1744
      %v1746 = vpop.f32.mrf.mxu0
      %v1747 = vpop.f32.mrf.mxu0
      %v1748 = vadd.f32 0.0, %v1747
      %v1749 = vpop.f32.mrf.mxu0
      %1750 = vmatprep.mubr.bf16.mxu0 0
      %1751 = vmatmul.mubr.bf16.gmra.mxu0 %v1613
      %v1752 = vpop.f32.mrf.mxu0
      %v1753 = vadd.f32 0.0, %v1752
      %v1754 = vpop.f32.mrf.mxu0
      %v1755 = vpop.f32.mrf.mxu0
      %v1756 = vadd.f32 0.0, %v1755
      %v1757 = vpop.f32.mrf.mxu0
      %1758 = vmatprep.mubr.bf16.mxu0 0
      %1759 = vmatmul.mubr.bf16.gmra.mxu0 %v1616
      %v1760 = vpop.f32.mrf.mxu0
      %v1761 = vadd.f32 0.0, %v1760
      %v1762 = vpop.f32.mrf.mxu0
      %v1763 = vpop.f32.mrf.mxu0
      %v1764 = vadd.f32 0.0, %v1763
      %v1765 = vpop.f32.mrf.mxu0
      %1766 = vmatprep.mubr.bf16.mxu0 0
      %1767 = vmatmul.mubr.bf16.gmra.mxu0 %v1619
      %v1768 = vpop.f32.mrf.mxu0
      %v1769 = vadd.f32 0.0, %v1768
      %v1770 = vpop.f32.mrf.mxu0
      %v1771 = vpop.f32.mrf.mxu0
      %v1772 = vadd.f32 0.0, %v1771
      %v1773 = vpop.f32.mrf.mxu0
      %1774 = vmatprep.mubr.bf16.mxu0 0
      %1775 = vmatmul.mubr.bf16.gmra.mxu0 %v1622
      %v1776 = vpop.f32.mrf.mxu0
      %v1777 = vadd.f32 0.0, %v1776
      %v1778 = vpop.f32.mrf.mxu0
      %v1779 = vpop.f32.mrf.mxu0
      %v1780 = vadd.f32 0.0, %v1779
      %v1781 = vpop.f32.mrf.mxu0
      %1782 = vmatprep.mubr.bf16.mxu0 0
      %1783 = vmatmul.mubr.bf16.gmra.mxu0 %v1625
      %v1784 = vpop.f32.mrf.mxu0
      %v1785 = vadd.f32 0.0, %v1784
      %v1786 = vpop.f32.mrf.mxu0
      %v1787 = vpop.f32.mrf.mxu0
      %v1788 = vadd.f32 0.0, %v1787
      %v1789 = vpop.f32.mrf.mxu0
      %1790 = vdwg.mxu0
      %v1791 = vld [vmem:[#allocation2] sm:$0xff]
      %v1792 = vld [vmem:[#allocation2 + $0x8] sm:$0xff]
      %v1793 = vld [vmem:[#allocation2 + $0x10] sm:$0xff]
      %v1794 = vld [vmem:[#allocation2 + $0x18] sm:$0xff]
      %v1795 = vld [vmem:[#allocation2 + $0x20] sm:$0xff]
      %v1796 = vld [vmem:[#allocation2 + $0x28] sm:$0xff]
      %v1797 = vld [vmem:[#allocation2 + $0x30] sm:$0xff]
      %v1798 = vld [vmem:[#allocation2 + $0x38] sm:$0xff]
      %v1799 = vld [vmem:[#allocation2 + $0x40] sm:$0xff]
      %v1800 = vld [vmem:[#allocation2 + $0x48] sm:$0xff]
      %v1801 = vld [vmem:[#allocation2 + $0x50] sm:$0xff]
      %v1802 = vld [vmem:[#allocation2 + $0x58] sm:$0xff]
      %v1803 = vld [vmem:[#allocation2 + $0x60] sm:$0xff]
      %v1804 = vld [vmem:[#allocation2 + $0x68] sm:$0xff]
      %v1805 = vld [vmem:[#allocation2 + $0x70] sm:$0xff]
      %v1806 = vld [vmem:[#allocation2 + $0x78] sm:$0xff]
      %v1807 = vld [vmem:[#allocation2 + $0x80] sm:$0xff]
      %v1808 = vld [vmem:[#allocation2 + $0x88] sm:$0xff]
      %v1809 = vld [vmem:[#allocation2 + $0x90] sm:$0xff]
      %v1810 = vld [vmem:[#allocation2 + $0x98] sm:$0xff]
      %v1811 = vld [vmem:[#allocation2 + $0xa0] sm:$0xff]
      %v1812 = vld [vmem:[#allocation2 + $0xa8] sm:$0xff]
      %v1813 = vld [vmem:[#allocation2 + $0xb0] sm:$0xff]
      %v1814 = vld [vmem:[#allocation2 + $0xb8] sm:$0xff]
      %v1815 = vld [vmem:[#allocation2 + $0xc0] sm:$0xff]
      %v1816 = vld [vmem:[#allocation2 + $0xc8] sm:$0xff]
      %v1817 = vld [vmem:[#allocation2 + $0xd0] sm:$0xff]
      %v1818 = vld [vmem:[#allocation2 + $0xd8] sm:$0xff]
      %v1819 = vld [vmem:[#allocation2 + $0xe0] sm:$0xff]
      %v1820 = vld [vmem:[#allocation2 + $0xe8] sm:$0xff]
      %v1821 = vld [vmem:[#allocation2 + $0xf0] sm:$0xff]
      %v1822 = vld [vmem:[#allocation2 + $0xf8] sm:$0xff]
      %v1823 = vadd.f32 %v1791, %v1665
      %v1824 = vadd.f32 %v1792, %v1668
      %v1825 = vadd.f32 %v1793, %v1673
      %v1826 = vadd.f32 %v1794, %v1676
      %v1827 = vadd.f32 %v1795, %v1681
      %v1828 = vadd.f32 %v1796, %v1684
      %v1829 = vadd.f32 %v1797, %v1689
      %v1830 = vadd.f32 %v1798, %v1692
      %v1831 = vadd.f32 %v1799, %v1697
      %v1832 = vadd.f32 %v1800, %v1700
      %v1833 = vadd.f32 %v1801, %v1705
      %v1834 = vadd.f32 %v1802, %v1708
      %v1835 = vadd.f32 %v1803, %v1713
      %v1836 = vadd.f32 %v1804, %v1716
      %v1837 = vadd.f32 %v1805, %v1721
      %v1838 = vadd.f32 %v1806, %v1724
      %v1839 = vadd.f32 %v1807, %v1729
      %v1840 = vadd.f32 %v1808, %v1732
      %v1841 = vadd.f32 %v1809, %v1737
      %v1842 = vadd.f32 %v1810, %v1740
      %v1843 = vadd.f32 %v1811, %v1745
      %v1844 = vadd.f32 %v1812, %v1748
      %v1845 = vadd.f32 %v1813, %v1753
      %v1846 = vadd.f32 %v1814, %v1756
      %v1847 = vadd.f32 %v1815, %v1761
      %v1848 = vadd.f32 %v1816, %v1764
      %v1849 = vadd.f32 %v1817, %v1769
      %v1850 = vadd.f32 %v1818, %v1772
      %v1851 = vadd.f32 %v1819, %v1777
      %v1852 = vadd.f32 %v1820, %v1780
      %v1853 = vadd.f32 %v1821, %v1785
      %v1854 = vadd.f32 %v1822, %v1788
      %1855 = vst [vmem:[#allocation2] sm:$0xff] %v1823
      %1856 = vst [vmem:[#allocation2 + $0x8] sm:$0xff] %v1824
      %1857 = vst [vmem:[#allocation2 + $0x10] sm:$0xff] %v1825
      %1858 = vst [vmem:[#allocation2 + $0x18] sm:$0xff] %v1826
      %1859 = vst [vmem:[#allocation2 + $0x20] sm:$0xff] %v1827
      %1860 = vst [vmem:[#allocation2 + $0x28] sm:$0xff] %v1828
      %1861 = vst [vmem:[#allocation2 + $0x30] sm:$0xff] %v1829
      %1862 = vst [vmem:[#allocation2 + $0x38] sm:$0xff] %v1830
      %1863 = vst [vmem:[#allocation2 + $0x40] sm:$0xff] %v1831
      %1864 = vst [vmem:[#allocation2 + $0x48] sm:$0xff] %v1832
      %1865 = vst [vmem:[#allocation2 + $0x50] sm:$0xff] %v1833
      %1866 = vst [vmem:[#allocation2 + $0x58] sm:$0xff] %v1834
      %1867 = vst [vmem:[#allocation2 + $0x60] sm:$0xff] %v1835
      %1868 = vst [vmem:[#allocation2 + $0x68] sm:$0xff] %v1836
      %1869 = vst [vmem:[#allocation2 + $0x70] sm:$0xff] %v1837
      %1870 = vst [vmem:[#allocation2 + $0x78] sm:$0xff] %v1838
      %1871 = vst [vmem:[#allocation2 + $0x80] sm:$0xff] %v1839
      %1872 = vst [vmem:[#allocation2 + $0x88] sm:$0xff] %v1840
      %1873 = vst [vmem:[#allocation2 + $0x90] sm:$0xff] %v1841
      %1874 = vst [vmem:[#allocation2 + $0x98] sm:$0xff] %v1842
      %1875 = vst [vmem:[#allocation2 + $0xa0] sm:$0xff] %v1843
      %1876 = vst [vmem:[#allocation2 + $0xa8] sm:$0xff] %v1844
      %1877 = vst [vmem:[#allocation2 + $0xb0] sm:$0xff] %v1845
      %1878 = vst [vmem:[#allocation2 + $0xb8] sm:$0xff] %v1846
      %1879 = vst [vmem:[#allocation2 + $0xc0] sm:$0xff] %v1847
      %1880 = vst [vmem:[#allocation2 + $0xc8] sm:$0xff] %v1848
      %1881 = vst [vmem:[#allocation2 + $0xd0] sm:$0xff] %v1849
      %1882 = vst [vmem:[#allocation2 + $0xd8] sm:$0xff] %v1850
      %1883 = vst [vmem:[#allocation2 + $0xe0] sm:$0xff] %v1851
      %1884 = vst [vmem:[#allocation2 + $0xe8] sm:$0xff] %v1852
      %1885 = vst [vmem:[#allocation2 + $0xf0] sm:$0xff] %v1853
      %1886 = vst [vmem:[#allocation2 + $0xf8] sm:$0xff] %v1854
      %s1887 = scalar_lea.vmem %s157, 12
      %v1888 = vld [vmem:[%s1887] sm:$0xf]
      %v1889 = vld [vmem:[%s1887 + $0x4] sm:$0xf]
      %v1890 = vld [vmem:[%s1887 + $0xc] sm:$0xf]
      %v1891 = vld [vmem:[%s1887 + $0x10] sm:$0xf]
      %v1892 = vld [vmem:[%s1887 + $0x18] sm:$0xf]
      %v1893 = vld [vmem:[%s1887 + $0x1c] sm:$0xf]
      %v1894 = vld [vmem:[%s1887 + $0x24] sm:$0xf]
      %v1895 = vld [vmem:[%s1887 + $0x28] sm:$0xf]
      %v1896 = vld [vmem:[%s1887 + $0x30] sm:$0xf]
      %v1897 = vld [vmem:[%s1887 + $0x34] sm:$0xf]
      %v1898 = vld [vmem:[%s1887 + $0x3c] sm:$0xf]
      %v1899 = vld [vmem:[%s1887 + $0x40] sm:$0xf]
      %v1900 = vld [vmem:[%s1887 + $0x48] sm:$0xf]
      %v1901 = vld [vmem:[%s1887 + $0x4c] sm:$0xf]
      %v1902 = vld [vmem:[%s1887 + $0x54] sm:$0xf]
      %v1903 = vld [vmem:[%s1887 + $0x58] sm:$0xf]
      %v1904 = vld [vmem:[%s1887 + $0x60] sm:$0xf]
      %v1905 = vld [vmem:[%s1887 + $0x64] sm:$0xf]
      %v1906 = vld [vmem:[%s1887 + $0x6c] sm:$0xf]
      %v1907 = vld [vmem:[%s1887 + $0x70] sm:$0xf]
      %v1908 = vld [vmem:[%s1887 + $0x78] sm:$0xf]
      %v1909 = vld [vmem:[%s1887 + $0x7c] sm:$0xf]
      %v1910 = vld [vmem:[%s1887 + $0x84] sm:$0xf]
      %v1911 = vld [vmem:[%s1887 + $0x88] sm:$0xf]
      %v1912 = vld [vmem:[%s1887 + $0x90] sm:$0xf]
      %v1913 = vld [vmem:[%s1887 + $0x94] sm:$0xf]
      %v1914 = vld [vmem:[%s1887 + $0x9c] sm:$0xf]
      %v1915 = vld [vmem:[%s1887 + $0xa0] sm:$0xf]
      %v1916 = vld [vmem:[%s1887 + $0xa8] sm:$0xf]
      %v1917 = vld [vmem:[%s1887 + $0xac] sm:$0xf]
      %v1918 = vld [vmem:[%s1887 + $0xb4] sm:$0xf]
      %v1919 = vld [vmem:[%s1887 + $0xb8] sm:$0xf]
      %s1920 = scalar_lea.vmem %s1, 6
      %v1921 = vld [vmem:[%s1920] sm:$0x3]
      %v1954 = vunpack.c.l.b16 %v1888
      %v1955 = vunpack.c.l.b16 %v1889
      %v1956 = vunpack.c.l.b16 %v1890
      %v1957 = vunpack.c.l.b16 %v1891
      %v1958 = vunpack.c.l.b16 %v1892
      %v1959 = vunpack.c.l.b16 %v1893
      %v1960 = vunpack.c.l.b16 %v1894
      %v1961 = vunpack.c.l.b16 %v1895
      %v1962 = vunpack.c.l.b16 %v1896
      %v1963 = vunpack.c.l.b16 %v1897
      %v1964 = vunpack.c.l.b16 %v1898
      %v1965 = vunpack.c.l.b16 %v1899
      %v1966 = vunpack.c.l.b16 %v1900
      %v1967 = vunpack.c.l.b16 %v1901
      %v1968 = vunpack.c.l.b16 %v1902
      %v1969 = vunpack.c.l.b16 %v1903
      %v1970 = vunpack.c.l.b16 %v1904
      %v1971 = vunpack.c.l.b16 %v1905
      %v1972 = vunpack.c.l.b16 %v1906
      %v1973 = vunpack.c.l.b16 %v1907
      %v1974 = vunpack.c.l.b16 %v1908
      %v1975 = vunpack.c.l.b16 %v1909
      %v1976 = vunpack.c.l.b16 %v1910
      %v1977 = vunpack.c.l.b16 %v1911
      %v1978 = vunpack.c.l.b16 %v1912
      %v1979 = vunpack.c.l.b16 %v1913
      %v1980 = vunpack.c.l.b16 %v1914
      %v1981 = vunpack.c.l.b16 %v1915
      %v1982 = vunpack.c.l.b16 %v1916
      %v1983 = vunpack.c.l.b16 %v1917
      %v1984 = vunpack.c.l.b16 %v1918
      %v1985 = vunpack.c.l.b16 %v1919
      %v1986 = vpack.c.b16 %v1955, %v1954
      %v1987 = vpack.c.b16 %v1957, %v1956
      %v1988 = vpack.c.b16 %v1959, %v1958
      %v1989 = vpack.c.b16 %v1961, %v1960
      %v1990 = vpack.c.b16 %v1963, %v1962
      %v1991 = vpack.c.b16 %v1965, %v1964
      %v1992 = vpack.c.b16 %v1967, %v1966
      %v1993 = vpack.c.b16 %v1969, %v1968
      %v1994 = vpack.c.b16 %v1971, %v1970
      %v1995 = vpack.c.b16 %v1973, %v1972
      %v1996 = vpack.c.b16 %v1975, %v1974
      %v1997 = vpack.c.b16 %v1977, %v1976
      %v1998 = vpack.c.b16 %v1979, %v1978
      %v1999 = vpack.c.b16 %v1981, %v1980
      %v2000 = vpack.c.b16 %v1983, %v1982
      %v2001 = vpack.c.b16 %v1985, %v1984
      %v2003 = vsel %vm279, %v1986, 0
      %v2006 = vsel %vm279, %v1987, 0
      %v2009 = vsel %vm279, %v1988, 0
      %v2012 = vsel %vm279, %v1989, 0
      %v2015 = vsel %vm279, %v1990, 0
      %v2018 = vsel %vm279, %v1991, 0
      %v2021 = vsel %vm279, %v1992, 0
      %v2024 = vsel %vm279, %v1993, 0
      %v2027 = vsel %vm279, %v1994, 0
      %v2030 = vsel %vm279, %v1995, 0
      %v2033 = vsel %vm279, %v1996, 0
      %v2036 = vsel %vm279, %v1997, 0
      %v2039 = vsel %vm279, %v1998, 0
      %v2042 = vsel %vm279, %v1999, 0
      %v2045 = vsel %vm279, %v2000, 0
      %v2048 = vsel %vm279, %v2001, 0
      %v2051 = vsel %vm328, %v1921, 0
      %2053 = vmatprep.subr.bf16.mxu0 0
      %2054 = vmatpush1.bf16.msra.mxu0 0
      %2055 = vmatprep.subr.bf16.mxu0 0
      %2056 = vmatpush1.bf16.msra.mxu0 0
      %2057 = vmatprep.subr.bf16.mxu0 0
      %2058 = vmatpush1.bf16.msra.mxu0 0
      %2059 = vmatprep.subr.bf16.mxu0 0
      %2060 = vmatpush1.bf16.msra.mxu0 0
      %2061 = vmatprep.subr.bf16.mxu0 0
      %2062 = vmatpush1.bf16.msra.mxu0 0
      %2063 = vmatprep.subr.bf16.mxu0 0
      %2064 = vmatpush1.bf16.msra.mxu0 0
      %2065 = vmatprep.subr.bf16.mxu0 0
      %2066 = vmatpush1.bf16.msra.mxu0 0
      %2067 = vmatprep.subr.bf16.mxu0 0
      %2068 = vmatpush1.bf16.msra.mxu0 %v2051
      %2069 = vmatprep.subr.bf16.mxu0 0
      %2070 = vmatpush2.bf16.msra.mxu0 0
      %2071 = vmatprep.subr.bf16.mxu0 0
      %2072 = vmatpush2.bf16.msra.mxu0 0
      %2073 = vmatprep.subr.bf16.mxu0 0
      %2074 = vmatpush2.bf16.msra.mxu0 0
      %2075 = vmatprep.subr.bf16.mxu0 0
      %2076 = vmatpush2.bf16.msra.mxu0 0
      %2077 = vmatprep.subr.bf16.mxu0 0
      %2078 = vmatpush2.bf16.msra.mxu0 0
      %2079 = vmatprep.subr.bf16.mxu0 0
      %2080 = vmatpush2.bf16.msra.mxu0 0
      %2081 = vmatprep.subr.bf16.mxu0 0
      %2082 = vmatpush2.bf16.msra.mxu0 0
      %2083 = vmatprep.subr.bf16.mxu0 0
      %2084 = vmatpush2.bf16.msra.mxu0 0
      %2085 = vmatprep.mubr.bf16.mxu0 0
      %2086 = vmatmul.mubr.bf16.gmra.mxu0 %v2003
      %v2087 = vpop.f32.mrf.mxu0
      %v2088 = vadd.f32 0.0, %v2087
      %v2089 = vpop.f32.mrf.mxu0
      %v2090 = vpop.f32.mrf.mxu0
      %v2091 = vadd.f32 0.0, %v2090
      %v2092 = vpop.f32.mrf.mxu0
      %2093 = vmatprep.mubr.bf16.mxu0 0
      %2094 = vmatmul.mubr.bf16.gmra.mxu0 %v2006
      %v2095 = vpop.f32.mrf.mxu0
      %v2096 = vadd.f32 0.0, %v2095
      %v2097 = vpop.f32.mrf.mxu0
      %v2098 = vpop.f32.mrf.mxu0
      %v2099 = vadd.f32 0.0, %v2098
      %v2100 = vpop.f32.mrf.mxu0
      %2101 = vmatprep.mubr.bf16.mxu0 0
      %2102 = vmatmul.mubr.bf16.gmra.mxu0 %v2009
      %v2103 = vpop.f32.mrf.mxu0
      %v2104 = vadd.f32 0.0, %v2103
      %v2105 = vpop.f32.mrf.mxu0
      %v2106 = vpop.f32.mrf.mxu0
      %v2107 = vadd.f32 0.0, %v2106
      %v2108 = vpop.f32.mrf.mxu0
      %2109 = vmatprep.mubr.bf16.mxu0 0
      %2110 = vmatmul.mubr.bf16.gmra.mxu0 %v2012
      %v2111 = vpop.f32.mrf.mxu0
      %v2112 = vadd.f32 0.0, %v2111
      %v2113 = vpop.f32.mrf.mxu0
      %v2114 = vpop.f32.mrf.mxu0
      %v2115 = vadd.f32 0.0, %v2114
      %v2116 = vpop.f32.mrf.mxu0
      %2117 = vmatprep.mubr.bf16.mxu0 0
      %2118 = vmatmul.mubr.bf16.gmra.mxu0 %v2015
      %v2119 = vpop.f32.mrf.mxu0
      %v2120 = vadd.f32 0.0, %v2119
      %v2121 = vpop.f32.mrf.mxu0
      %v2122 = vpop.f32.mrf.mxu0
      %v2123 = vadd.f32 0.0, %v2122
      %v2124 = vpop.f32.mrf.mxu0
      %2125 = vmatprep.mubr.bf16.mxu0 0
      %2126 = vmatmul.mubr.bf16.gmra.mxu0 %v2018
      %v2127 = vpop.f32.mrf.mxu0
      %v2128 = vadd.f32 0.0, %v2127
      %v2129 = vpop.f32.mrf.mxu0
      %v2130 = vpop.f32.mrf.mxu0
      %v2131 = vadd.f32 0.0, %v2130
      %v2132 = vpop.f32.mrf.mxu0
      %2133 = vmatprep.mubr.bf16.mxu0 0
      %2134 = vmatmul.mubr.bf16.gmra.mxu0 %v2021
      %v2135 = vpop.f32.mrf.mxu0
      %v2136 = vadd.f32 0.0, %v2135
      %v2137 = vpop.f32.mrf.mxu0
      %v2138 = vpop.f32.mrf.mxu0
      %v2139 = vadd.f32 0.0, %v2138
      %v2140 = vpop.f32.mrf.mxu0
      %2141 = vmatprep.mubr.bf16.mxu0 0
      %2142 = vmatmul.mubr.bf16.gmra.mxu0 %v2024
      %v2143 = vpop.f32.mrf.mxu0
      %v2144 = vadd.f32 0.0, %v2143
      %v2145 = vpop.f32.mrf.mxu0
      %v2146 = vpop.f32.mrf.mxu0
      %v2147 = vadd.f32 0.0, %v2146
      %v2148 = vpop.f32.mrf.mxu0
      %2149 = vmatprep.mubr.bf16.mxu0 0
      %2150 = vmatmul.mubr.bf16.gmra.mxu0 %v2027
      %v2151 = vpop.f32.mrf.mxu0
      %v2152 = vadd.f32 0.0, %v2151
      %v2153 = vpop.f32.mrf.mxu0
      %v2154 = vpop.f32.mrf.mxu0
      %v2155 = vadd.f32 0.0, %v2154
      %v2156 = vpop.f32.mrf.mxu0
      %2157 = vmatprep.mubr.bf16.mxu0 0
      %2158 = vmatmul.mubr.bf16.gmra.mxu0 %v2030
      %v2159 = vpop.f32.mrf.mxu0
      %v2160 = vadd.f32 0.0, %v2159
      %v2161 = vpop.f32.mrf.mxu0
      %v2162 = vpop.f32.mrf.mxu0
      %v2163 = vadd.f32 0.0, %v2162
      %v2164 = vpop.f32.mrf.mxu0
      %2165 = vmatprep.mubr.bf16.mxu0 0
      %2166 = vmatmul.mubr.bf16.gmra.mxu0 %v2033
      %v2167 = vpop.f32.mrf.mxu0
      %v2168 = vadd.f32 0.0, %v2167
      %v2169 = vpop.f32.mrf.mxu0
      %v2170 = vpop.f32.mrf.mxu0
      %v2171 = vadd.f32 0.0, %v2170
      %v2172 = vpop.f32.mrf.mxu0
      %2173 = vmatprep.mubr.bf16.mxu0 0
      %2174 = vmatmul.mubr.bf16.gmra.mxu0 %v2036
      %v2175 = vpop.f32.mrf.mxu0
      %v2176 = vadd.f32 0.0, %v2175
      %v2177 = vpop.f32.mrf.mxu0
      %v2178 = vpop.f32.mrf.mxu0
      %v2179 = vadd.f32 0.0, %v2178
      %v2180 = vpop.f32.mrf.mxu0
      %2181 = vmatprep.mubr.bf16.mxu0 0
      %2182 = vmatmul.mubr.bf16.gmra.mxu0 %v2039
      %v2183 = vpop.f32.mrf.mxu0
      %v2184 = vadd.f32 0.0, %v2183
      %v2185 = vpop.f32.mrf.mxu0
      %v2186 = vpop.f32.mrf.mxu0
      %v2187 = vadd.f32 0.0, %v2186
      %v2188 = vpop.f32.mrf.mxu0
      %2189 = vmatprep.mubr.bf16.mxu0 0
      %2190 = vmatmul.mubr.bf16.gmra.mxu0 %v2042
      %v2191 = vpop.f32.mrf.mxu0
      %v2192 = vadd.f32 0.0, %v2191
      %v2193 = vpop.f32.mrf.mxu0
      %v2194 = vpop.f32.mrf.mxu0
      %v2195 = vadd.f32 0.0, %v2194
      %v2196 = vpop.f32.mrf.mxu0
      %2197 = vmatprep.mubr.bf16.mxu0 0
      %2198 = vmatmul.mubr.bf16.gmra.mxu0 %v2045
      %v2199 = vpop.f32.mrf.mxu0
      %v2200 = vadd.f32 0.0, %v2199
      %v2201 = vpop.f32.mrf.mxu0
      %v2202 = vpop.f32.mrf.mxu0
      %v2203 = vadd.f32 0.0, %v2202
      %v2204 = vpop.f32.mrf.mxu0
      %2205 = vmatprep.mubr.bf16.mxu0 0
      %2206 = vmatmul.mubr.bf16.gmra.mxu0 %v2048
      %v2207 = vpop.f32.mrf.mxu0
      %v2208 = vadd.f32 0.0, %v2207
      %v2209 = vpop.f32.mrf.mxu0
      %v2210 = vpop.f32.mrf.mxu0
      %v2211 = vadd.f32 0.0, %v2210
      %v2212 = vpop.f32.mrf.mxu0
      %2213 = vdwg.mxu0
      %v2214 = vld [vmem:[#allocation2] sm:$0xff]
      %v2215 = vld [vmem:[#allocation2 + $0x8] sm:$0xff]
      %v2216 = vld [vmem:[#allocation2 + $0x10] sm:$0xff]
      %v2217 = vld [vmem:[#allocation2 + $0x18] sm:$0xff]
      %v2218 = vld [vmem:[#allocation2 + $0x20] sm:$0xff]
      %v2219 = vld [vmem:[#allocation2 + $0x28] sm:$0xff]
      %v2220 = vld [vmem:[#allocation2 + $0x30] sm:$0xff]
      %v2221 = vld [vmem:[#allocation2 + $0x38] sm:$0xff]
      %v2222 = vld [vmem:[#allocation2 + $0x40] sm:$0xff]
      %v2223 = vld [vmem:[#allocation2 + $0x48] sm:$0xff]
      %v2224 = vld [vmem:[#allocation2 + $0x50] sm:$0xff]
      %v2225 = vld [vmem:[#allocation2 + $0x58] sm:$0xff]
      %v2226 = vld [vmem:[#allocation2 + $0x60] sm:$0xff]
      %v2227 = vld [vmem:[#allocation2 + $0x68] sm:$0xff]
      %v2228 = vld [vmem:[#allocation2 + $0x70] sm:$0xff]
      %v2229 = vld [vmem:[#allocation2 + $0x78] sm:$0xff]
      %v2230 = vld [vmem:[#allocation2 + $0x80] sm:$0xff]
      %v2231 = vld [vmem:[#allocation2 + $0x88] sm:$0xff]
      %v2232 = vld [vmem:[#allocation2 + $0x90] sm:$0xff]
      %v2233 = vld [vmem:[#allocation2 + $0x98] sm:$0xff]
      %v2234 = vld [vmem:[#allocation2 + $0xa0] sm:$0xff]
      %v2235 = vld [vmem:[#allocation2 + $0xa8] sm:$0xff]
      %v2236 = vld [vmem:[#allocation2 + $0xb0] sm:$0xff]
      %v2237 = vld [vmem:[#allocation2 + $0xb8] sm:$0xff]
      %v2238 = vld [vmem:[#allocation2 + $0xc0] sm:$0xff]
      %v2239 = vld [vmem:[#allocation2 + $0xc8] sm:$0xff]
      %v2240 = vld [vmem:[#allocation2 + $0xd0] sm:$0xff]
      %v2241 = vld [vmem:[#allocation2 + $0xd8] sm:$0xff]
      %v2242 = vld [vmem:[#allocation2 + $0xe0] sm:$0xff]
      %v2243 = vld [vmem:[#allocation2 + $0xe8] sm:$0xff]
      %v2244 = vld [vmem:[#allocation2 + $0xf0] sm:$0xff]
      %v2245 = vld [vmem:[#allocation2 + $0xf8] sm:$0xff]
      %v2246 = vadd.f32 %v2214, %v2088
      %v2247 = vadd.f32 %v2215, %v2091
      %v2248 = vadd.f32 %v2216, %v2096
      %v2249 = vadd.f32 %v2217, %v2099
      %v2250 = vadd.f32 %v2218, %v2104
      %v2251 = vadd.f32 %v2219, %v2107
      %v2252 = vadd.f32 %v2220, %v2112
      %v2253 = vadd.f32 %v2221, %v2115
      %v2254 = vadd.f32 %v2222, %v2120
      %v2255 = vadd.f32 %v2223, %v2123
      %v2256 = vadd.f32 %v2224, %v2128
      %v2257 = vadd.f32 %v2225, %v2131
      %v2258 = vadd.f32 %v2226, %v2136
      %v2259 = vadd.f32 %v2227, %v2139
      %v2260 = vadd.f32 %v2228, %v2144
      %v2261 = vadd.f32 %v2229, %v2147
      %v2262 = vadd.f32 %v2230, %v2152
      %v2263 = vadd.f32 %v2231, %v2155
      %v2264 = vadd.f32 %v2232, %v2160
      %v2265 = vadd.f32 %v2233, %v2163
      %v2266 = vadd.f32 %v2234, %v2168
      %v2267 = vadd.f32 %v2235, %v2171
      %v2268 = vadd.f32 %v2236, %v2176
      %v2269 = vadd.f32 %v2237, %v2179
      %v2270 = vadd.f32 %v2238, %v2184
      %v2271 = vadd.f32 %v2239, %v2187
      %v2272 = vadd.f32 %v2240, %v2192
      %v2273 = vadd.f32 %v2241, %v2195
      %v2274 = vadd.f32 %v2242, %v2200
      %v2275 = vadd.f32 %v2243, %v2203
      %v2276 = vadd.f32 %v2244, %v2208
      %v2277 = vadd.f32 %v2245, %v2211
      %2278 = vst [vmem:[#allocation2] sm:$0xff] %v2246
      %2279 = vst [vmem:[#allocation2 + $0x8] sm:$0xff] %v2247
      %2280 = vst [vmem:[#allocation2 + $0x10] sm:$0xff] %v2248
      %2281 = vst [vmem:[#allocation2 + $0x18] sm:$0xff] %v2249
      %2282 = vst [vmem:[#allocation2 + $0x20] sm:$0xff] %v2250
      %2283 = vst [vmem:[#allocation2 + $0x28] sm:$0xff] %v2251
      %2284 = vst [vmem:[#allocation2 + $0x30] sm:$0xff] %v2252
      %2285 = vst [vmem:[#allocation2 + $0x38] sm:$0xff] %v2253
      %2286 = vst [vmem:[#allocation2 + $0x40] sm:$0xff] %v2254
      %2287 = vst [vmem:[#allocation2 + $0x48] sm:$0xff] %v2255
      %2288 = vst [vmem:[#allocation2 + $0x50] sm:$0xff] %v2256
      %2289 = vst [vmem:[#allocation2 + $0x58] sm:$0xff] %v2257
      %2290 = vst [vmem:[#allocation2 + $0x60] sm:$0xff] %v2258
      %2291 = vst [vmem:[#allocation2 + $0x68] sm:$0xff] %v2259
      %2292 = vst [vmem:[#allocation2 + $0x70] sm:$0xff] %v2260
      %2293 = vst [vmem:[#allocation2 + $0x78] sm:$0xff] %v2261
      %2294 = vst [vmem:[#allocation2 + $0x80] sm:$0xff] %v2262
      %2295 = vst [vmem:[#allocation2 + $0x88] sm:$0xff] %v2263
      %2296 = vst [vmem:[#allocation2 + $0x90] sm:$0xff] %v2264
      %2297 = vst [vmem:[#allocation2 + $0x98] sm:$0xff] %v2265
      %2298 = vst [vmem:[#allocation2 + $0xa0] sm:$0xff] %v2266
      %2299 = vst [vmem:[#allocation2 + $0xa8] sm:$0xff] %v2267
      %2300 = vst [vmem:[#allocation2 + $0xb0] sm:$0xff] %v2268
      %2301 = vst [vmem:[#allocation2 + $0xb8] sm:$0xff] %v2269
      %2302 = vst [vmem:[#allocation2 + $0xc0] sm:$0xff] %v2270
      %2303 = vst [vmem:[#allocation2 + $0xc8] sm:$0xff] %v2271
      %2304 = vst [vmem:[#allocation2 + $0xd0] sm:$0xff] %v2272
      %2305 = vst [vmem:[#allocation2 + $0xd8] sm:$0xff] %v2273
      %2306 = vst [vmem:[#allocation2 + $0xe0] sm:$0xff] %v2274
      %2307 = vst [vmem:[#allocation2 + $0xe8] sm:$0xff] %v2275
      %2308 = vst [vmem:[#allocation2 + $0xf0] sm:$0xff] %v2276
      %2309 = vst [vmem:[#allocation2 + $0xf8] sm:$0xff] %v2277
      %v2310 = vld [vmem:[%s1887] sm:$0xf]
      %v2311 = vld [vmem:[%s1887 + $0x4] sm:$0xf]
      %v2312 = vld [vmem:[%s1887 + $0x8] sm:$0x1]
      %v2313 = vld [vmem:[%s1887 + $0xc] sm:$0xf]
      %v2314 = vld [vmem:[%s1887 + $0x10] sm:$0xf]
      %v2315 = vld [vmem:[%s1887 + $0x14] sm:$0x1]
      %v2316 = vld [vmem:[%s1887 + $0x18] sm:$0xf]
      %v2317 = vld [vmem:[%s1887 + $0x1c] sm:$0xf]
      %v2318 = vld [vmem:[%s1887 + $0x20] sm:$0x1]
      %v2319 = vld [vmem:[%s1887 + $0x24] sm:$0xf]
      %v2320 = vld [vmem:[%s1887 + $0x28] sm:$0xf]
      %v2321 = vld [vmem:[%s1887 + $0x2c] sm:$0x1]
      %v2322 = vld [vmem:[%s1887 + $0x30] sm:$0xf]
      %v2323 = vld [vmem:[%s1887 + $0x34] sm:$0xf]
      %v2324 = vld [vmem:[%s1887 + $0x38] sm:$0x1]
      %v2325 = vld [vmem:[%s1887 + $0x3c] sm:$0xf]
      %v2326 = vld [vmem:[%s1887 + $0x40] sm:$0xf]
      %v2327 = vld [vmem:[%s1887 + $0x44] sm:$0x1]
      %v2328 = vld [vmem:[%s1887 + $0x48] sm:$0xf]
      %v2329 = vld [vmem:[%s1887 + $0x4c] sm:$0xf]
      %v2330 = vld [vmem:[%s1887 + $0x50] sm:$0x1]
      %v2331 = vld [vmem:[%s1887 + $0x54] sm:$0xf]
      %v2332 = vld [vmem:[%s1887 + $0x58] sm:$0xf]
      %v2333 = vld [vmem:[%s1887 + $0x5c] sm:$0x1]
      %v2334 = vld [vmem:[%s1887 + $0x60] sm:$0xf]
      %v2335 = vld [vmem:[%s1887 + $0x64] sm:$0xf]
      %v2336 = vld [vmem:[%s1887 + $0x68] sm:$0x1]
      %v2337 = vld [vmem:[%s1887 + $0x6c] sm:$0xf]
      %v2338 = vld [vmem:[%s1887 + $0x70] sm:$0xf]
      %v2339 = vld [vmem:[%s1887 + $0x74] sm:$0x1]
      %v2340 = vld [vmem:[%s1887 + $0x78] sm:$0xf]
      %v2341 = vld [vmem:[%s1887 + $0x7c] sm:$0xf]
      %v2342 = vld [vmem:[%s1887 + $0x80] sm:$0x1]
      %v2343 = vld [vmem:[%s1887 + $0x84] sm:$0xf]
      %v2344 = vld [vmem:[%s1887 + $0x88] sm:$0xf]
      %v2345 = vld [vmem:[%s1887 + $0x8c] sm:$0x1]
      %v2346 = vld [vmem:[%s1887 + $0x90] sm:$0xf]
      %v2347 = vld [vmem:[%s1887 + $0x94] sm:$0xf]
      %v2348 = vld [vmem:[%s1887 + $0x98] sm:$0x1]
      %v2349 = vld [vmem:[%s1887 + $0x9c] sm:$0xf]
      %v2350 = vld [vmem:[%s1887 + $0xa0] sm:$0xf]
      %v2351 = vld [vmem:[%s1887 + $0xa4] sm:$0x1]
      %v2352 = vld [vmem:[%s1887 + $0xa8] sm:$0xf]
      %v2353 = vld [vmem:[%s1887 + $0xac] sm:$0xf]
      %v2354 = vld [vmem:[%s1887 + $0xb0] sm:$0x1]
      %v2355 = vld [vmem:[%s1887 + $0xb4] sm:$0xf]
      %v2356 = vld [vmem:[%s1887 + $0xb8] sm:$0xf]
      %v2357 = vld [vmem:[%s1887 + $0xbc] sm:$0x1]
      %v2359 = vshrl.u32 %v2310, 16
      %v2361 = vrot.slane %v2359, 4
      %v2362 = vshll.u32 %v2310, 16
      %v2364 = vrot.slane %v2362, 5
      %v2365 = vor.u32 %v2361, %v2364
      %v2366 = vrot.slane %v2365, 4
      %v2368 = vshll.u32 %v2311, 16
      %v2370 = vrot.slane %v2368, 5
      %v2371 = vsel %vm575, %v2366, %v2370
      %v2372 = vshrl.u32 %v2311, 16
      %v2374 = vrot.slane %v2372, 4
      %v2375 = vor.u32 %v2374, %v2370
      %v2376 = vrot.slane %v2375, 4
      %v2378 = vshll.u32 %v2312, 16
      %v2380 = vrot.slane %v2378, 5
      %v2381 = vsel %vm575, %v2376, %v2380
      %v2383 = vshrl.u32 %v2313, 16
      %v2385 = vrot.slane %v2383, 4
      %v2386 = vshll.u32 %v2313, 16
      %v2388 = vrot.slane %v2386, 5
      %v2389 = vor.u32 %v2385, %v2388
      %v2390 = vrot.slane %v2389, 4
      %v2392 = vshll.u32 %v2314, 16
      %v2394 = vrot.slane %v2392, 5
      %v2395 = vsel %vm575, %v2390, %v2394
      %v2396 = vshrl.u32 %v2314, 16
      %v2398 = vrot.slane %v2396, 4
      %v2399 = vor.u32 %v2398, %v2394
      %v2400 = vrot.slane %v2399, 4
      %v2402 = vshll.u32 %v2315, 16
      %v2404 = vrot.slane %v2402, 5
      %v2405 = vsel %vm575, %v2400, %v2404
      %v2407 = vshrl.u32 %v2316, 16
      %v2409 = vrot.slane %v2407, 4
      %v2410 = vshll.u32 %v2316, 16
      %v2412 = vrot.slane %v2410, 5
      %v2413 = vor.u32 %v2409, %v2412
      %v2414 = vrot.slane %v2413, 4
      %v2416 = vshll.u32 %v2317, 16
      %v2418 = vrot.slane %v2416, 5
      %v2419 = vsel %vm575, %v2414, %v2418
      %v2420 = vshrl.u32 %v2317, 16
      %v2422 = vrot.slane %v2420, 4
      %v2423 = vor.u32 %v2422, %v2418
      %v2424 = vrot.slane %v2423, 4
      %v2426 = vshll.u32 %v2318, 16
      %v2428 = vrot.slane %v2426, 5
      %v2429 = vsel %vm575, %v2424, %v2428
      %v2431 = vshrl.u32 %v2319, 16
      %v2433 = vrot.slane %v2431, 4
      %v2434 = vshll.u32 %v2319, 16
      %v2436 = vrot.slane %v2434, 5
      %v2437 = vor.u32 %v2433, %v2436
      %v2438 = vrot.slane %v2437, 4
      %v2440 = vshll.u32 %v2320, 16
      %v2442 = vrot.slane %v2440, 5
      %v2443 = vsel %vm575, %v2438, %v2442
      %v2444 = vshrl.u32 %v2320, 16
      %v2446 = vrot.slane %v2444, 4
      %v2447 = vor.u32 %v2446, %v2442
      %v2448 = vrot.slane %v2447, 4
      %v2450 = vshll.u32 %v2321, 16
      %v2452 = vrot.slane %v2450, 5
      %v2453 = vsel %vm575, %v2448, %v2452
      %v2455 = vshrl.u32 %v2322, 16
      %v2457 = vrot.slane %v2455, 4
      %v2458 = vshll.u32 %v2322, 16
      %v2460 = vrot.slane %v2458, 5
      %v2461 = vor.u32 %v2457, %v2460
      %v2462 = vrot.slane %v2461, 4
      %v2464 = vshll.u32 %v2323, 16
      %v2466 = vrot.slane %v2464, 5
      %v2467 = vsel %vm575, %v2462, %v2466
      %v2468 = vshrl.u32 %v2323, 16
      %v2470 = vrot.slane %v2468, 4
      %v2471 = vor.u32 %v2470, %v2466
      %v2472 = vrot.slane %v2471, 4
      %v2474 = vshll.u32 %v2324, 16
      %v2476 = vrot.slane %v2474, 5
      %v2477 = vsel %vm575, %v2472, %v2476
      %v2479 = vshrl.u32 %v2325, 16
      %v2481 = vrot.slane %v2479, 4
      %v2482 = vshll.u32 %v2325, 16
      %v2484 = vrot.slane %v2482, 5
      %v2485 = vor.u32 %v2481, %v2484
      %v2486 = vrot.slane %v2485, 4
      %v2488 = vshll.u32 %v2326, 16
      %v2490 = vrot.slane %v2488, 5
      %v2491 = vsel %vm575, %v2486, %v2490
      %v2492 = vshrl.u32 %v2326, 16
      %v2494 = vrot.slane %v2492, 4
      %v2495 = vor.u32 %v2494, %v2490
      %v2496 = vrot.slane %v2495, 4
      %v2498 = vshll.u32 %v2327, 16
      %v2500 = vrot.slane %v2498, 5
      %v2501 = vsel %vm575, %v2496, %v2500
      %v2503 = vshrl.u32 %v2328, 16
      %v2505 = vrot.slane %v2503, 4
      %v2506 = vshll.u32 %v2328, 16
      %v2508 = vrot.slane %v2506, 5
      %v2509 = vor.u32 %v2505, %v2508
      %v2510 = vrot.slane %v2509, 4
      %v2512 = vshll.u32 %v2329, 16
      %v2514 = vrot.slane %v2512, 5
      %v2515 = vsel %vm575, %v2510, %v2514
      %v2516 = vshrl.u32 %v2329, 16
      %v2518 = vrot.slane %v2516, 4
      %v2519 = vor.u32 %v2518, %v2514
      %v2520 = vrot.slane %v2519, 4
      %v2522 = vshll.u32 %v2330, 16
      %v2524 = vrot.slane %v2522, 5
      %v2525 = vsel %vm575, %v2520, %v2524
      %v2527 = vshrl.u32 %v2331, 16
      %v2529 = vrot.slane %v2527, 4
      %v2530 = vshll.u32 %v2331, 16
      %v2532 = vrot.slane %v2530, 5
      %v2533 = vor.u32 %v2529, %v2532
      %v2534 = vrot.slane %v2533, 4
      %v2536 = vshll.u32 %v2332, 16
      %v2538 = vrot.slane %v2536, 5
      %v2539 = vsel %vm575, %v2534, %v2538
      %v2540 = vshrl.u32 %v2332, 16
      %v2542 = vrot.slane %v2540, 4
      %v2543 = vor.u32 %v2542, %v2538
      %v2544 = vrot.slane %v2543, 4
      %v2546 = vshll.u32 %v2333, 16
      %v2548 = vrot.slane %v2546, 5
      %v2549 = vsel %vm575, %v2544, %v2548
      %v2551 = vshrl.u32 %v2334, 16
      %v2553 = vrot.slane %v2551, 4
      %v2554 = vshll.u32 %v2334, 16
      %v2556 = vrot.slane %v2554, 5
      %v2557 = vor.u32 %v2553, %v2556
      %v2558 = vrot.slane %v2557, 4
      %v2560 = vshll.u32 %v2335, 16
      %v2562 = vrot.slane %v2560, 5
      %v2563 = vsel %vm575, %v2558, %v2562
      %v2564 = vshrl.u32 %v2335, 16
      %v2566 = vrot.slane %v2564, 4
      %v2567 = vor.u32 %v2566, %v2562
      %v2568 = vrot.slane %v2567, 4
      %v2570 = vshll.u32 %v2336, 16
      %v2572 = vrot.slane %v2570, 5
      %v2573 = vsel %vm575, %v2568, %v2572
      %v2575 = vshrl.u32 %v2337, 16
      %v2577 = vrot.slane %v2575, 4
      %v2578 = vshll.u32 %v2337, 16
      %v2580 = vrot.slane %v2578, 5
      %v2581 = vor.u32 %v2577, %v2580
      %v2582 = vrot.slane %v2581, 4
      %v2584 = vshll.u32 %v2338, 16
      %v2586 = vrot.slane %v2584, 5
      %v2587 = vsel %vm575, %v2582, %v2586
      %v2588 = vshrl.u32 %v2338, 16
      %v2590 = vrot.slane %v2588, 4
      %v2591 = vor.u32 %v2590, %v2586
      %v2592 = vrot.slane %v2591, 4
      %v2594 = vshll.u32 %v2339, 16
      %v2596 = vrot.slane %v2594, 5
      %v2597 = vsel %vm575, %v2592, %v2596
      %v2599 = vshrl.u32 %v2340, 16
      %v2601 = vrot.slane %v2599, 4
      %v2602 = vshll.u32 %v2340, 16
      %v2604 = vrot.slane %v2602, 5
      %v2605 = vor.u32 %v2601, %v2604
      %v2606 = vrot.slane %v2605, 4
      %v2608 = vshll.u32 %v2341, 16
      %v2610 = vrot.slane %v2608, 5
      %v2611 = vsel %vm575, %v2606, %v2610
      %v2612 = vshrl.u32 %v2341, 16
      %v2614 = vrot.slane %v2612, 4
      %v2615 = vor.u32 %v2614, %v2610
      %v2616 = vrot.slane %v2615, 4
      %v2618 = vshll.u32 %v2342, 16
      %v2620 = vrot.slane %v2618, 5
      %v2621 = vsel %vm575, %v2616, %v2620
      %v2623 = vshrl.u32 %v2343, 16
      %v2625 = vrot.slane %v2623, 4
      %v2626 = vshll.u32 %v2343, 16
      %v2628 = vrot.slane %v2626, 5
      %v2629 = vor.u32 %v2625, %v2628
      %v2630 = vrot.slane %v2629, 4
      %v2632 = vshll.u32 %v2344, 16
      %v2634 = vrot.slane %v2632, 5
      %v2635 = vsel %vm575, %v2630, %v2634
      %v2636 = vshrl.u32 %v2344, 16
      %v2638 = vrot.slane %v2636, 4
      %v2639 = vor.u32 %v2638, %v2634
      %v2640 = vrot.slane %v2639, 4
      %v2642 = vshll.u32 %v2345, 16
      %v2644 = vrot.slane %v2642, 5
      %v2645 = vsel %vm575, %v2640, %v2644
      %v2647 = vshrl.u32 %v2346, 16
      %v2649 = vrot.slane %v2647, 4
      %v2650 = vshll.u32 %v2346, 16
      %v2652 = vrot.slane %v2650, 5
      %v2653 = vor.u32 %v2649, %v2652
      %v2654 = vrot.slane %v2653, 4
      %v2656 = vshll.u32 %v2347, 16
      %v2658 = vrot.slane %v2656, 5
      %v2659 = vsel %vm575, %v2654, %v2658
      %v2660 = vshrl.u32 %v2347, 16
      %v2662 = vrot.slane %v2660, 4
      %v2663 = vor.u32 %v2662, %v2658
      %v2664 = vrot.slane %v2663, 4
      %v2666 = vshll.u32 %v2348, 16
      %v2668 = vrot.slane %v2666, 5
      %v2669 = vsel %vm575, %v2664, %v2668
      %v2671 = vshrl.u32 %v2349, 16
      %v2673 = vrot.slane %v2671, 4
      %v2674 = vshll.u32 %v2349, 16
      %v2676 = vrot.slane %v2674, 5
      %v2677 = vor.u32 %v2673, %v2676
      %v2678 = vrot.slane %v2677, 4
      %v2680 = vshll.u32 %v2350, 16
      %v2682 = vrot.slane %v2680, 5
      %v2683 = vsel %vm575, %v2678, %v2682
      %v2684 = vshrl.u32 %v2350, 16
      %v2686 = vrot.slane %v2684, 4
      %v2687 = vor.u32 %v2686, %v2682
      %v2688 = vrot.slane %v2687, 4
      %v2690 = vshll.u32 %v2351, 16
      %v2692 = vrot.slane %v2690, 5
      %v2693 = vsel %vm575, %v2688, %v2692
      %v2695 = vshrl.u32 %v2352, 16
      %v2697 = vrot.slane %v2695, 4
      %v2698 = vshll.u32 %v2352, 16
      %v2700 = vrot.slane %v2698, 5
      %v2701 = vor.u32 %v2697, %v2700
      %v2702 = vrot.slane %v2701, 4
      %v2704 = vshll.u32 %v2353, 16
      %v2706 = vrot.slane %v2704, 5
      %v2707 = vsel %vm575, %v2702, %v2706
      %v2708 = vshrl.u32 %v2353, 16
      %v2710 = vrot.slane %v2708, 4
      %v2711 = vor.u32 %v2710, %v2706
      %v2712 = vrot.slane %v2711, 4
      %v2714 = vshll.u32 %v2354, 16
      %v2716 = vrot.slane %v2714, 5
      %v2717 = vsel %vm575, %v2712, %v2716
      %v2719 = vshrl.u32 %v2355, 16
      %v2721 = vrot.slane %v2719, 4
      %v2722 = vshll.u32 %v2355, 16
      %v2724 = vrot.slane %v2722, 5
      %v2725 = vor.u32 %v2721, %v2724
      %v2726 = vrot.slane %v2725, 4
      %v2728 = vshll.u32 %v2356, 16
      %v2730 = vrot.slane %v2728, 5
      %v2731 = vsel %vm575, %v2726, %v2730
      %v2732 = vshrl.u32 %v2356, 16
      %v2734 = vrot.slane %v2732, 4
      %v2735 = vor.u32 %v2734, %v2730
      %v2736 = vrot.slane %v2735, 4
      %v2738 = vshll.u32 %v2357, 16
      %v2740 = vrot.slane %v2738, 5
      %v2741 = vsel %vm575, %v2736, %v2740
      %s2742 = scalar_lea.vmem %s1, 8
      %v2743 = vld [vmem:[%s2742] sm:$0x3]
      %v2744 = vunpack.c.l.b16 %v2371
      %v2745 = vunpack.c.l.b16 %v2381
      %v2746 = vunpack.c.l.b16 %v2395
      %v2747 = vunpack.c.l.b16 %v2405
      %v2748 = vunpack.c.l.b16 %v2419
      %v2749 = vunpack.c.l.b16 %v2429
      %v2750 = vunpack.c.l.b16 %v2443
      %v2751 = vunpack.c.l.b16 %v2453
      %v2752 = vunpack.c.l.b16 %v2467
      %v2753 = vunpack.c.l.b16 %v2477
      %v2754 = vunpack.c.l.b16 %v2491
      %v2755 = vunpack.c.l.b16 %v2501
      %v2756 = vunpack.c.l.b16 %v2515
      %v2757 = vunpack.c.l.b16 %v2525
      %v2758 = vunpack.c.l.b16 %v2539
      %v2759 = vunpack.c.l.b16 %v2549
      %v2760 = vunpack.c.l.b16 %v2563
      %v2761 = vunpack.c.l.b16 %v2573
      %v2762 = vunpack.c.l.b16 %v2587
      %v2763 = vunpack.c.l.b16 %v2597
      %v2764 = vunpack.c.l.b16 %v2611
      %v2765 = vunpack.c.l.b16 %v2621
      %v2766 = vunpack.c.l.b16 %v2635
      %v2767 = vunpack.c.l.b16 %v2645
      %v2768 = vunpack.c.l.b16 %v2659
      %v2769 = vunpack.c.l.b16 %v2669
      %v2770 = vunpack.c.l.b16 %v2683
      %v2771 = vunpack.c.l.b16 %v2693
      %v2772 = vunpack.c.l.b16 %v2707
      %v2773 = vunpack.c.l.b16 %v2717
      %v2774 = vunpack.c.l.b16 %v2731
      %v2775 = vunpack.c.l.b16 %v2741
      %v2776 = vpack.c.b16 %v2745, %v2744
      %v2777 = vpack.c.b16 %v2747, %v2746
      %v2778 = vpack.c.b16 %v2749, %v2748
      %v2779 = vpack.c.b16 %v2751, %v2750
      %v2780 = vpack.c.b16 %v2753, %v2752
      %v2781 = vpack.c.b16 %v2755, %v2754
      %v2782 = vpack.c.b16 %v2757, %v2756
      %v2783 = vpack.c.b16 %v2759, %v2758
      %v2784 = vpack.c.b16 %v2761, %v2760
      %v2785 = vpack.c.b16 %v2763, %v2762
      %v2786 = vpack.c.b16 %v2765, %v2764
      %v2787 = vpack.c.b16 %v2767, %v2766
      %v2788 = vpack.c.b16 %v2769, %v2768
      %v2789 = vpack.c.b16 %v2771, %v2770
      %v2790 = vpack.c.b16 %v2773, %v2772
      %v2791 = vpack.c.b16 %v2775, %v2774
      %v2793 = vsel %vm279, %v2776, 0
      %v2796 = vsel %vm279, %v2777, 0
      %v2799 = vsel %vm279, %v2778, 0
      %v2802 = vsel %vm279, %v2779, 0
      %v2805 = vsel %vm279, %v2780, 0
      %v2808 = vsel %vm279, %v2781, 0
      %v2811 = vsel %vm279, %v2782, 0
      %v2814 = vsel %vm279, %v2783, 0
      %v2817 = vsel %vm279, %v2784, 0
      %v2820 = vsel %vm279, %v2785, 0
      %v2823 = vsel %vm279, %v2786, 0
      %v2826 = vsel %vm279, %v2787, 0
      %v2829 = vsel %vm279, %v2788, 0
      %v2832 = vsel %vm279, %v2789, 0
      %v2835 = vsel %vm279, %v2790, 0
      %v2838 = vsel %vm279, %v2791, 0
      %v2841 = vsel %vm328, %v2743, 0
      %2843 = vmatprep.subr.bf16.mxu0 0
      %2844 = vmatpush1.bf16.msra.mxu0 0
      %2845 = vmatprep.subr.bf16.mxu0 0
      %2846 = vmatpush1.bf16.msra.mxu0 0
      %2847 = vmatprep.subr.bf16.mxu0 0
      %2848 = vmatpush1.bf16.msra.mxu0 0
      %2849 = vmatprep.subr.bf16.mxu0 0
      %2850 = vmatpush1.bf16.msra.mxu0 0
      %2851 = vmatprep.subr.bf16.mxu0 0
      %2852 = vmatpush1.bf16.msra.mxu0 0
      %2853 = vmatprep.subr.bf16.mxu0 0
      %2854 = vmatpush1.bf16.msra.mxu0 0
      %2855 = vmatprep.subr.bf16.mxu0 0
      %2856 = vmatpush1.bf16.msra.mxu0 0
      %2857 = vmatprep.subr.bf16.mxu0 0
      %2858 = vmatpush1.bf16.msra.mxu0 %v2841
      %2859 = vmatprep.subr.bf16.mxu0 0
      %2860 = vmatpush2.bf16.msra.mxu0 0
      %2861 = vmatprep.subr.bf16.mxu0 0
      %2862 = vmatpush2.bf16.msra.mxu0 0
      %2863 = vmatprep.subr.bf16.mxu0 0
      %2864 = vmatpush2.bf16.msra.mxu0 0
      %2865 = vmatprep.subr.bf16.mxu0 0
      %2866 = vmatpush2.bf16.msra.mxu0 0
      %2867 = vmatprep.subr.bf16.mxu0 0
      %2868 = vmatpush2.bf16.msra.mxu0 0
      %2869 = vmatprep.subr.bf16.mxu0 0
      %2870 = vmatpush2.bf16.msra.mxu0 0
      %2871 = vmatprep.subr.bf16.mxu0 0
      %2872 = vmatpush2.bf16.msra.mxu0 0
      %2873 = vmatprep.subr.bf16.mxu0 0
      %2874 = vmatpush2.bf16.msra.mxu0 0
      %2875 = vmatprep.mubr.bf16.mxu0 0
      %2876 = vmatmul.mubr.bf16.gmra.mxu0 %v2793
      %v2877 = vpop.f32.mrf.mxu0
      %v2878 = vadd.f32 0.0, %v2877
      %v2879 = vpop.f32.mrf.mxu0
      %v2880 = vpop.f32.mrf.mxu0
      %v2881 = vadd.f32 0.0, %v2880
      %v2882 = vpop.f32.mrf.mxu0
      %2883 = vmatprep.mubr.bf16.mxu0 0
      %2884 = vmatmul.mubr.bf16.gmra.mxu0 %v2796
      %v2885 = vpop.f32.mrf.mxu0
      %v2886 = vadd.f32 0.0, %v2885
      %v2887 = vpop.f32.mrf.mxu0
      %v2888 = vpop.f32.mrf.mxu0
      %v2889 = vadd.f32 0.0, %v2888
      %v2890 = vpop.f32.mrf.mxu0
      %2891 = vmatprep.mubr.bf16.mxu0 0
      %2892 = vmatmul.mubr.bf16.gmra.mxu0 %v2799
      %v2893 = vpop.f32.mrf.mxu0
      %v2894 = vadd.f32 0.0, %v2893
      %v2895 = vpop.f32.mrf.mxu0
      %v2896 = vpop.f32.mrf.mxu0
      %v2897 = vadd.f32 0.0, %v2896
      %v2898 = vpop.f32.mrf.mxu0
      %2899 = vmatprep.mubr.bf16.mxu0 0
      %2900 = vmatmul.mubr.bf16.gmra.mxu0 %v2802
      %v2901 = vpop.f32.mrf.mxu0
      %v2902 = vadd.f32 0.0, %v2901
      %v2903 = vpop.f32.mrf.mxu0
      %v2904 = vpop.f32.mrf.mxu0
      %v2905 = vadd.f32 0.0, %v2904
      %v2906 = vpop.f32.mrf.mxu0
      %2907 = vmatprep.mubr.bf16.mxu0 0
      %2908 = vmatmul.mubr.bf16.gmra.mxu0 %v2805
      %v2909 = vpop.f32.mrf.mxu0
      %v2910 = vadd.f32 0.0, %v2909
      %v2911 = vpop.f32.mrf.mxu0
      %v2912 = vpop.f32.mrf.mxu0
      %v2913 = vadd.f32 0.0, %v2912
      %v2914 = vpop.f32.mrf.mxu0
      %2915 = vmatprep.mubr.bf16.mxu0 0
      %2916 = vmatmul.mubr.bf16.gmra.mxu0 %v2808
      %v2917 = vpop.f32.mrf.mxu0
      %v2918 = vadd.f32 0.0, %v2917
      %v2919 = vpop.f32.mrf.mxu0
      %v2920 = vpop.f32.mrf.mxu0
      %v2921 = vadd.f32 0.0, %v2920
      %v2922 = vpop.f32.mrf.mxu0
      %2923 = vmatprep.mubr.bf16.mxu0 0
      %2924 = vmatmul.mubr.bf16.gmra.mxu0 %v2811
      %v2925 = vpop.f32.mrf.mxu0
      %v2926 = vadd.f32 0.0, %v2925
      %v2927 = vpop.f32.mrf.mxu0
      %v2928 = vpop.f32.mrf.mxu0
      %v2929 = vadd.f32 0.0, %v2928
      %v2930 = vpop.f32.mrf.mxu0
      %2931 = vmatprep.mubr.bf16.mxu0 0
      %2932 = vmatmul.mubr.bf16.gmra.mxu0 %v2814
      %v2933 = vpop.f32.mrf.mxu0
      %v2934 = vadd.f32 0.0, %v2933
      %v2935 = vpop.f32.mrf.mxu0
      %v2936 = vpop.f32.mrf.mxu0
      %v2937 = vadd.f32 0.0, %v2936
      %v2938 = vpop.f32.mrf.mxu0
      %2939 = vmatprep.mubr.bf16.mxu0 0
      %2940 = vmatmul.mubr.bf16.gmra.mxu0 %v2817
      %v2941 = vpop.f32.mrf.mxu0
      %v2942 = vadd.f32 0.0, %v2941
      %v2943 = vpop.f32.mrf.mxu0
      %v2944 = vpop.f32.mrf.mxu0
      %v2945 = vadd.f32 0.0, %v2944
      %v2946 = vpop.f32.mrf.mxu0
      %2947 = vmatprep.mubr.bf16.mxu0 0
      %2948 = vmatmul.mubr.bf16.gmra.mxu0 %v2820
      %v2949 = vpop.f32.mrf.mxu0
      %v2950 = vadd.f32 0.0, %v2949
      %v2951 = vpop.f32.mrf.mxu0
      %v2952 = vpop.f32.mrf.mxu0
      %v2953 = vadd.f32 0.0, %v2952
      %v2954 = vpop.f32.mrf.mxu0
      %2955 = vmatprep.mubr.bf16.mxu0 0
      %2956 = vmatmul.mubr.bf16.gmra.mxu0 %v2823
      %v2957 = vpop.f32.mrf.mxu0
      %v2958 = vadd.f32 0.0, %v2957
      %v2959 = vpop.f32.mrf.mxu0
      %v2960 = vpop.f32.mrf.mxu0
      %v2961 = vadd.f32 0.0, %v2960
      %v2962 = vpop.f32.mrf.mxu0
      %2963 = vmatprep.mubr.bf16.mxu0 0
      %2964 = vmatmul.mubr.bf16.gmra.mxu0 %v2826
      %v2965 = vpop.f32.mrf.mxu0
      %v2966 = vadd.f32 0.0, %v2965
      %v2967 = vpop.f32.mrf.mxu0
      %v2968 = vpop.f32.mrf.mxu0
      %v2969 = vadd.f32 0.0, %v2968
      %v2970 = vpop.f32.mrf.mxu0
      %2971 = vmatprep.mubr.bf16.mxu0 0
      %2972 = vmatmul.mubr.bf16.gmra.mxu0 %v2829
      %v2973 = vpop.f32.mrf.mxu0
      %v2974 = vadd.f32 0.0, %v2973
      %v2975 = vpop.f32.mrf.mxu0
      %v2976 = vpop.f32.mrf.mxu0
      %v2977 = vadd.f32 0.0, %v2976
      %v2978 = vpop.f32.mrf.mxu0
      %2979 = vmatprep.mubr.bf16.mxu0 0
      %2980 = vmatmul.mubr.bf16.gmra.mxu0 %v2832
      %v2981 = vpop.f32.mrf.mxu0
      %v2982 = vadd.f32 0.0, %v2981
      %v2983 = vpop.f32.mrf.mxu0
      %v2984 = vpop.f32.mrf.mxu0
      %v2985 = vadd.f32 0.0, %v2984
      %v2986 = vpop.f32.mrf.mxu0
      %2987 = vmatprep.mubr.bf16.mxu0 0
      %2988 = vmatmul.mubr.bf16.gmra.mxu0 %v2835
      %v2989 = vpop.f32.mrf.mxu0
      %v2990 = vadd.f32 0.0, %v2989
      %v2991 = vpop.f32.mrf.mxu0
      %v2992 = vpop.f32.mrf.mxu0
      %v2993 = vadd.f32 0.0, %v2992
      %v2994 = vpop.f32.mrf.mxu0
      %2995 = vmatprep.mubr.bf16.mxu0 0
      %2996 = vmatmul.mubr.bf16.gmra.mxu0 %v2838
      %v2997 = vpop.f32.mrf.mxu0
      %v2998 = vadd.f32 0.0, %v2997
      %v2999 = vpop.f32.mrf.mxu0
      %v3000 = vpop.f32.mrf.mxu0
      %v3001 = vadd.f32 0.0, %v3000
      %v3002 = vpop.f32.mrf.mxu0
      %3003 = vdwg.mxu0
      %v3004 = vld [vmem:[#allocation2] sm:$0xff]
      %v3005 = vld [vmem:[#allocation2 + $0x8] sm:$0xff]
      %v3006 = vld [vmem:[#allocation2 + $0x10] sm:$0xff]
      %v3007 = vld [vmem:[#allocation2 + $0x18] sm:$0xff]
      %v3008 = vld [vmem:[#allocation2 + $0x20] sm:$0xff]
      %v3009 = vld [vmem:[#allocation2 + $0x28] sm:$0xff]
      %v3010 = vld [vmem:[#allocation2 + $0x30] sm:$0xff]
      %v3011 = vld [vmem:[#allocation2 + $0x38] sm:$0xff]
      %v3012 = vld [vmem:[#allocation2 + $0x40] sm:$0xff]
      %v3013 = vld [vmem:[#allocation2 + $0x48] sm:$0xff]
      %v3014 = vld [vmem:[#allocation2 + $0x50] sm:$0xff]
      %v3015 = vld [vmem:[#allocation2 + $0x58] sm:$0xff]
      %v3016 = vld [vmem:[#allocation2 + $0x60] sm:$0xff]
      %v3017 = vld [vmem:[#allocation2 + $0x68] sm:$0xff]
      %v3018 = vld [vmem:[#allocation2 + $0x70] sm:$0xff]
      %v3019 = vld [vmem:[#allocation2 + $0x78] sm:$0xff]
      %v3020 = vld [vmem:[#allocation2 + $0x80] sm:$0xff]
      %v3021 = vld [vmem:[#allocation2 + $0x88] sm:$0xff]
      %v3022 = vld [vmem:[#allocation2 + $0x90] sm:$0xff]
      %v3023 = vld [vmem:[#allocation2 + $0x98] sm:$0xff]
      %v3024 = vld [vmem:[#allocation2 + $0xa0] sm:$0xff]
      %v3025 = vld [vmem:[#allocation2 + $0xa8] sm:$0xff]
      %v3026 = vld [vmem:[#allocation2 + $0xb0] sm:$0xff]
      %v3027 = vld [vmem:[#allocation2 + $0xb8] sm:$0xff]
      %v3028 = vld [vmem:[#allocation2 + $0xc0] sm:$0xff]
      %v3029 = vld [vmem:[#allocation2 + $0xc8] sm:$0xff]
      %v3030 = vld [vmem:[#allocation2 + $0xd0] sm:$0xff]
      %v3031 = vld [vmem:[#allocation2 + $0xd8] sm:$0xff]
      %v3032 = vld [vmem:[#allocation2 + $0xe0] sm:$0xff]
      %v3033 = vld [vmem:[#allocation2 + $0xe8] sm:$0xff]
      %v3034 = vld [vmem:[#allocation2 + $0xf0] sm:$0xff]
      %v3035 = vld [vmem:[#allocation2 + $0xf8] sm:$0xff]
      %v3036 = vadd.f32 %v3004, %v2878
      %v3037 = vadd.f32 %v3005, %v2881
      %v3038 = vadd.f32 %v3006, %v2886
      %v3039 = vadd.f32 %v3007, %v2889
      %v3040 = vadd.f32 %v3008, %v2894
      %v3041 = vadd.f32 %v3009, %v2897
      %v3042 = vadd.f32 %v3010, %v2902
      %v3043 = vadd.f32 %v3011, %v2905
      %v3044 = vadd.f32 %v3012, %v2910
      %v3045 = vadd.f32 %v3013, %v2913
      %v3046 = vadd.f32 %v3014, %v2918
      %v3047 = vadd.f32 %v3015, %v2921
      %v3048 = vadd.f32 %v3016, %v2926
      %v3049 = vadd.f32 %v3017, %v2929
      %v3050 = vadd.f32 %v3018, %v2934
      %v3051 = vadd.f32 %v3019, %v2937
      %v3052 = vadd.f32 %v3020, %v2942
      %v3053 = vadd.f32 %v3021, %v2945
      %v3054 = vadd.f32 %v3022, %v2950
      %v3055 = vadd.f32 %v3023, %v2953
      %v3056 = vadd.f32 %v3024, %v2958
      %v3057 = vadd.f32 %v3025, %v2961
      %v3058 = vadd.f32 %v3026, %v2966
      %v3059 = vadd.f32 %v3027, %v2969
      %v3060 = vadd.f32 %v3028, %v2974
      %v3061 = vadd.f32 %v3029, %v2977
      %v3062 = vadd.f32 %v3030, %v2982
      %v3063 = vadd.f32 %v3031, %v2985
      %v3064 = vadd.f32 %v3032, %v2990
      %v3065 = vadd.f32 %v3033, %v2993
      %v3066 = vadd.f32 %v3034, %v2998
      %v3067 = vadd.f32 %v3035, %v3001
      %3068 = vst [vmem:[#allocation2] sm:$0xff] %v3036
      %3069 = vst [vmem:[#allocation2 + $0x8] sm:$0xff] %v3037
      %3070 = vst [vmem:[#allocation2 + $0x10] sm:$0xff] %v3038
      %3071 = vst [vmem:[#allocation2 + $0x18] sm:$0xff] %v3039
      %3072 = vst [vmem:[#allocation2 + $0x20] sm:$0xff] %v3040
      %3073 = vst [vmem:[#allocation2 + $0x28] sm:$0xff] %v3041
      %3074 = vst [vmem:[#allocation2 + $0x30] sm:$0xff] %v3042
      %3075 = vst [vmem:[#allocation2 + $0x38] sm:$0xff] %v3043
      %3076 = vst [vmem:[#allocation2 + $0x40] sm:$0xff] %v3044
      %3077 = vst [vmem:[#allocation2 + $0x48] sm:$0xff] %v3045
      %3078 = vst [vmem:[#allocation2 + $0x50] sm:$0xff] %v3046
      %3079 = vst [vmem:[#allocation2 + $0x58] sm:$0xff] %v3047
      %3080 = vst [vmem:[#allocation2 + $0x60] sm:$0xff] %v3048
      %3081 = vst [vmem:[#allocation2 + $0x68] sm:$0xff] %v3049
      %3082 = vst [vmem:[#allocation2 + $0x70] sm:$0xff] %v3050
      %3083 = vst [vmem:[#allocation2 + $0x78] sm:$0xff] %v3051
      %3084 = vst [vmem:[#allocation2 + $0x80] sm:$0xff] %v3052
      %3085 = vst [vmem:[#allocation2 + $0x88] sm:$0xff] %v3053
      %3086 = vst [vmem:[#allocation2 + $0x90] sm:$0xff] %v3054
      %3087 = vst [vmem:[#allocation2 + $0x98] sm:$0xff] %v3055
      %3088 = vst [vmem:[#allocation2 + $0xa0] sm:$0xff] %v3056
      %3089 = vst [vmem:[#allocation2 + $0xa8] sm:$0xff] %v3057
      %3090 = vst [vmem:[#allocation2 + $0xb0] sm:$0xff] %v3058
      %3091 = vst [vmem:[#allocation2 + $0xb8] sm:$0xff] %v3059
      %3092 = vst [vmem:[#allocation2 + $0xc0] sm:$0xff] %v3060
      %3093 = vst [vmem:[#allocation2 + $0xc8] sm:$0xff] %v3061
      %3094 = vst [vmem:[#allocation2 + $0xd0] sm:$0xff] %v3062
      %3095 = vst [vmem:[#allocation2 + $0xd8] sm:$0xff] %v3063
      %3096 = vst [vmem:[#allocation2 + $0xe0] sm:$0xff] %v3064
      %3097 = vst [vmem:[#allocation2 + $0xe8] sm:$0xff] %v3065
      %3098 = vst [vmem:[#allocation2 + $0xf0] sm:$0xff] %v3066
      %3099 = vst [vmem:[#allocation2 + $0xf8] sm:$0xff] %v3067
      %v3100 = vld [vmem:[%s1887] sm:$0xe]
      %v3101 = vld [vmem:[%s1887 + $0x4] sm:$0xf]
      %v3102 = vld [vmem:[%s1887 + $0x8] sm:$0x1]
      %v3103 = vld [vmem:[%s1887 + $0xc] sm:$0xe]
      %v3104 = vld [vmem:[%s1887 + $0x10] sm:$0xf]
      %v3105 = vld [vmem:[%s1887 + $0x14] sm:$0x1]
      %v3106 = vld [vmem:[%s1887 + $0x18] sm:$0xe]
      %v3107 = vld [vmem:[%s1887 + $0x1c] sm:$0xf]
      %v3108 = vld [vmem:[%s1887 + $0x20] sm:$0x1]
      %v3109 = vld [vmem:[%s1887 + $0x24] sm:$0xe]
      %v3110 = vld [vmem:[%s1887 + $0x28] sm:$0xf]
      %v3111 = vld [vmem:[%s1887 + $0x2c] sm:$0x1]
      %v3112 = vld [vmem:[%s1887 + $0x30] sm:$0xe]
      %v3113 = vld [vmem:[%s1887 + $0x34] sm:$0xf]
      %v3114 = vld [vmem:[%s1887 + $0x38] sm:$0x1]
      %v3115 = vld [vmem:[%s1887 + $0x3c] sm:$0xe]
      %v3116 = vld [vmem:[%s1887 + $0x40] sm:$0xf]
      %v3117 = vld [vmem:[%s1887 + $0x44] sm:$0x1]
      %v3118 = vld [vmem:[%s1887 + $0x48] sm:$0xe]
      %v3119 = vld [vmem:[%s1887 + $0x4c] sm:$0xf]
      %v3120 = vld [vmem:[%s1887 + $0x50] sm:$0x1]
      %v3121 = vld [vmem:[%s1887 + $0x54] sm:$0xe]
      %v3122 = vld [vmem:[%s1887 + $0x58] sm:$0xf]
      %v3123 = vld [vmem:[%s1887 + $0x5c] sm:$0x1]
      %v3124 = vld [vmem:[%s1887 + $0x60] sm:$0xe]
      %v3125 = vld [vmem:[%s1887 + $0x64] sm:$0xf]
      %v3126 = vld [vmem:[%s1887 + $0x68] sm:$0x1]
      %v3127 = vld [vmem:[%s1887 + $0x6c] sm:$0xe]
      %v3128 = vld [vmem:[%s1887 + $0x70] sm:$0xf]
      %v3129 = vld [vmem:[%s1887 + $0x74] sm:$0x1]
      %v3130 = vld [vmem:[%s1887 + $0x78] sm:$0xe]
      %v3131 = vld [vmem:[%s1887 + $0x7c] sm:$0xf]
      %v3132 = vld [vmem:[%s1887 + $0x80] sm:$0x1]
      %v3133 = vld [vmem:[%s1887 + $0x84] sm:$0xe]
      %v3134 = vld [vmem:[%s1887 + $0x88] sm:$0xf]
      %v3135 = vld [vmem:[%s1887 + $0x8c] sm:$0x1]
      %v3136 = vld [vmem:[%s1887 + $0x90] sm:$0xe]
      %v3137 = vld [vmem:[%s1887 + $0x94] sm:$0xf]
      %v3138 = vld [vmem:[%s1887 + $0x98] sm:$0x1]
      %v3139 = vld [vmem:[%s1887 + $0x9c] sm:$0xe]
      %v3140 = vld [vmem:[%s1887 + $0xa0] sm:$0xf]
      %v3141 = vld [vmem:[%s1887 + $0xa4] sm:$0x1]
      %v3142 = vld [vmem:[%s1887 + $0xa8] sm:$0xe]
      %v3143 = vld [vmem:[%s1887 + $0xac] sm:$0xf]
      %v3144 = vld [vmem:[%s1887 + $0xb0] sm:$0x1]
      %v3145 = vld [vmem:[%s1887 + $0xb4] sm:$0xe]
      %v3146 = vld [vmem:[%s1887 + $0xb8] sm:$0xf]
      %v3147 = vld [vmem:[%s1887 + $0xbc] sm:$0x1]
      %v3196 = vrot.slane %v3100, 5
      %v3197 = vrot.slane %v3196, 4
      %v3198 = vrot.slane %v3101, 5
      %v3199 = vsel %vm1416, %v3197, %v3198
      %v3200 = vrot.slane %v3198, 4
      %v3201 = vrot.slane %v3102, 5
      %v3202 = vsel %vm1416, %v3200, %v3201
      %v3203 = vrot.slane %v3103, 5
      %v3204 = vrot.slane %v3203, 4
      %v3205 = vrot.slane %v3104, 5
      %v3206 = vsel %vm1416, %v3204, %v3205
      %v3207 = vrot.slane %v3205, 4
      %v3208 = vrot.slane %v3105, 5
      %v3209 = vsel %vm1416, %v3207, %v3208
      %v3210 = vrot.slane %v3106, 5
      %v3211 = vrot.slane %v3210, 4
      %v3212 = vrot.slane %v3107, 5
      %v3213 = vsel %vm1416, %v3211, %v3212
      %v3214 = vrot.slane %v3212, 4
      %v3215 = vrot.slane %v3108, 5
      %v3216 = vsel %vm1416, %v3214, %v3215
      %v3217 = vrot.slane %v3109, 5
      %v3218 = vrot.slane %v3217, 4
      %v3219 = vrot.slane %v3110, 5
      %v3220 = vsel %vm1416, %v3218, %v3219
      %v3221 = vrot.slane %v3219, 4
      %v3222 = vrot.slane %v3111, 5
      %v3223 = vsel %vm1416, %v3221, %v3222
      %v3224 = vrot.slane %v3112, 5
      %v3225 = vrot.slane %v3224, 4
      %v3226 = vrot.slane %v3113, 5
      %v3227 = vsel %vm1416, %v3225, %v3226
      %v3228 = vrot.slane %v3226, 4
      %v3229 = vrot.slane %v3114, 5
      %v3230 = vsel %vm1416, %v3228, %v3229
      %v3231 = vrot.slane %v3115, 5
      %v3232 = vrot.slane %v3231, 4
      %v3233 = vrot.slane %v3116, 5
      %v3234 = vsel %vm1416, %v3232, %v3233
      %v3235 = vrot.slane %v3233, 4
      %v3236 = vrot.slane %v3117, 5
      %v3237 = vsel %vm1416, %v3235, %v3236
      %v3238 = vrot.slane %v3118, 5
      %v3239 = vrot.slane %v3238, 4
      %v3240 = vrot.slane %v3119, 5
      %v3241 = vsel %vm1416, %v3239, %v3240
      %v3242 = vrot.slane %v3240, 4
      %v3243 = vrot.slane %v3120, 5
      %v3244 = vsel %vm1416, %v3242, %v3243
      %v3245 = vrot.slane %v3121, 5
      %v3246 = vrot.slane %v3245, 4
      %v3247 = vrot.slane %v3122, 5
      %v3248 = vsel %vm1416, %v3246, %v3247
      %v3249 = vrot.slane %v3247, 4
      %v3250 = vrot.slane %v3123, 5
      %v3251 = vsel %vm1416, %v3249, %v3250
      %v3252 = vrot.slane %v3124, 5
      %v3253 = vrot.slane %v3252, 4
      %v3254 = vrot.slane %v3125, 5
      %v3255 = vsel %vm1416, %v3253, %v3254
      %v3256 = vrot.slane %v3254, 4
      %v3257 = vrot.slane %v3126, 5
      %v3258 = vsel %vm1416, %v3256, %v3257
      %v3259 = vrot.slane %v3127, 5
      %v3260 = vrot.slane %v3259, 4
      %v3261 = vrot.slane %v3128, 5
      %v3262 = vsel %vm1416, %v3260, %v3261
      %v3263 = vrot.slane %v3261, 4
      %v3264 = vrot.slane %v3129, 5
      %v3265 = vsel %vm1416, %v3263, %v3264
      %v3266 = vrot.slane %v3130, 5
      %v3267 = vrot.slane %v3266, 4
      %v3268 = vrot.slane %v3131, 5
      %v3269 = vsel %vm1416, %v3267, %v3268
      %v3270 = vrot.slane %v3268, 4
      %v3271 = vrot.slane %v3132, 5
      %v3272 = vsel %vm1416, %v3270, %v3271
      %v3273 = vrot.slane %v3133, 5
      %v3274 = vrot.slane %v3273, 4
      %v3275 = vrot.slane %v3134, 5
      %v3276 = vsel %vm1416, %v3274, %v3275
      %v3277 = vrot.slane %v3275, 4
      %v3278 = vrot.slane %v3135, 5
      %v3279 = vsel %vm1416, %v3277, %v3278
      %v3280 = vrot.slane %v3136, 5
      %v3281 = vrot.slane %v3280, 4
      %v3282 = vrot.slane %v3137, 5
      %v3283 = vsel %vm1416, %v3281, %v3282
      %v3284 = vrot.slane %v3282, 4
      %v3285 = vrot.slane %v3138, 5
      %v3286 = vsel %vm1416, %v3284, %v3285
      %v3287 = vrot.slane %v3139, 5
      %v3288 = vrot.slane %v3287, 4
      %v3289 = vrot.slane %v3140, 5
      %v3290 = vsel %vm1416, %v3288, %v3289
      %v3291 = vrot.slane %v3289, 4
      %v3292 = vrot.slane %v3141, 5
      %v3293 = vsel %vm1416, %v3291, %v3292
      %v3294 = vrot.slane %v3142, 5
      %v3295 = vrot.slane %v3294, 4
      %v3296 = vrot.slane %v3143, 5
      %v3297 = vsel %vm1416, %v3295, %v3296
      %v3298 = vrot.slane %v3296, 4
      %v3299 = vrot.slane %v3144, 5
      %v3300 = vsel %vm1416, %v3298, %v3299
      %v3301 = vrot.slane %v3145, 5
      %v3302 = vrot.slane %v3301, 4
      %v3303 = vrot.slane %v3146, 5
      %v3304 = vsel %vm1416, %v3302, %v3303
      %v3305 = vrot.slane %v3303, 4
      %v3306 = vrot.slane %v3147, 5
      %v3307 = vsel %vm1416, %v3305, %v3306
      %s3308 = scalar_lea.vmem %s1, 10
      %v3309 = vld [vmem:[%s3308] sm:$0x3]
      %v3310 = vunpack.c.l.b16 %v3199
      %v3311 = vunpack.c.l.b16 %v3202
      %v3312 = vunpack.c.l.b16 %v3206
      %v3313 = vunpack.c.l.b16 %v3209
      %v3314 = vunpack.c.l.b16 %v3213
      %v3315 = vunpack.c.l.b16 %v3216
      %v3316 = vunpack.c.l.b16 %v3220
      %v3317 = vunpack.c.l.b16 %v3223
      %v3318 = vunpack.c.l.b16 %v3227
      %v3319 = vunpack.c.l.b16 %v3230
      %v3320 = vunpack.c.l.b16 %v3234
      %v3321 = vunpack.c.l.b16 %v3237
      %v3322 = vunpack.c.l.b16 %v3241
      %v3323 = vunpack.c.l.b16 %v3244
      %v3324 = vunpack.c.l.b16 %v3248
      %v3325 = vunpack.c.l.b16 %v3251
      %v3326 = vunpack.c.l.b16 %v3255
      %v3327 = vunpack.c.l.b16 %v3258
      %v3328 = vunpack.c.l.b16 %v3262
      %v3329 = vunpack.c.l.b16 %v3265
      %v3330 = vunpack.c.l.b16 %v3269
      %v3331 = vunpack.c.l.b16 %v3272
      %v3332 = vunpack.c.l.b16 %v3276
      %v3333 = vunpack.c.l.b16 %v3279
      %v3334 = vunpack.c.l.b16 %v3283
      %v3335 = vunpack.c.l.b16 %v3286
      %v3336 = vunpack.c.l.b16 %v3290
      %v3337 = vunpack.c.l.b16 %v3293
      %v3338 = vunpack.c.l.b16 %v3297
      %v3339 = vunpack.c.l.b16 %v3300
      %v3340 = vunpack.c.l.b16 %v3304
      %v3341 = vunpack.c.l.b16 %v3307
      %v3342 = vpack.c.b16 %v3311, %v3310
      %v3343 = vpack.c.b16 %v3313, %v3312
      %v3344 = vpack.c.b16 %v3315, %v3314
      %v3345 = vpack.c.b16 %v3317, %v3316
      %v3346 = vpack.c.b16 %v3319, %v3318
      %v3347 = vpack.c.b16 %v3321, %v3320
      %v3348 = vpack.c.b16 %v3323, %v3322
      %v3349 = vpack.c.b16 %v3325, %v3324
      %v3350 = vpack.c.b16 %v3327, %v3326
      %v3351 = vpack.c.b16 %v3329, %v3328
      %v3352 = vpack.c.b16 %v3331, %v3330
      %v3353 = vpack.c.b16 %v3333, %v3332
      %v3354 = vpack.c.b16 %v3335, %v3334
      %v3355 = vpack.c.b16 %v3337, %v3336
      %v3356 = vpack.c.b16 %v3339, %v3338
      %v3357 = vpack.c.b16 %v3341, %v3340
      %v3359 = vsel %vm279, %v3342, 0
      %v3362 = vsel %vm279, %v3343, 0
      %v3365 = vsel %vm279, %v3344, 0
      %v3368 = vsel %vm279, %v3345, 0
      %v3371 = vsel %vm279, %v3346, 0
      %v3374 = vsel %vm279, %v3347, 0
      %v3377 = vsel %vm279, %v3348, 0
      %v3380 = vsel %vm279, %v3349, 0
      %v3383 = vsel %vm279, %v3350, 0
      %v3386 = vsel %vm279, %v3351, 0
      %v3389 = vsel %vm279, %v3352, 0
      %v3392 = vsel %vm279, %v3353, 0
      %v3395 = vsel %vm279, %v3354, 0
      %v3398 = vsel %vm279, %v3355, 0
      %v3401 = vsel %vm279, %v3356, 0
      %v3404 = vsel %vm279, %v3357, 0
      %v3407 = vsel %vm328, %v3309, 0
      %3409 = vmatprep.subr.bf16.mxu0 0
      %3410 = vmatpush1.bf16.msra.mxu0 0
      %3411 = vmatprep.subr.bf16.mxu0 0
      %3412 = vmatpush1.bf16.msra.mxu0 0
      %3413 = vmatprep.subr.bf16.mxu0 0
      %3414 = vmatpush1.bf16.msra.mxu0 0
      %3415 = vmatprep.subr.bf16.mxu0 0
      %3416 = vmatpush1.bf16.msra.mxu0 0
      %3417 = vmatprep.subr.bf16.mxu0 0
      %3418 = vmatpush1.bf16.msra.mxu0 0
      %3419 = vmatprep.subr.bf16.mxu0 0
      %3420 = vmatpush1.bf16.msra.mxu0 0
      %3421 = vmatprep.subr.bf16.mxu0 0
      %3422 = vmatpush1.bf16.msra.mxu0 0
      %3423 = vmatprep.subr.bf16.mxu0 0
      %3424 = vmatpush1.bf16.msra.mxu0 %v3407
      %3425 = vmatprep.subr.bf16.mxu0 0
      %3426 = vmatpush2.bf16.msra.mxu0 0
      %3427 = vmatprep.subr.bf16.mxu0 0
      %3428 = vmatpush2.bf16.msra.mxu0 0
      %3429 = vmatprep.subr.bf16.mxu0 0
      %3430 = vmatpush2.bf16.msra.mxu0 0
      %3431 = vmatprep.subr.bf16.mxu0 0
      %3432 = vmatpush2.bf16.msra.mxu0 0
      %3433 = vmatprep.subr.bf16.mxu0 0
      %3434 = vmatpush2.bf16.msra.mxu0 0
      %3435 = vmatprep.subr.bf16.mxu0 0
      %3436 = vmatpush2.bf16.msra.mxu0 0
      %3437 = vmatprep.subr.bf16.mxu0 0
      %3438 = vmatpush2.bf16.msra.mxu0 0
      %3439 = vmatprep.subr.bf16.mxu0 0
      %3440 = vmatpush2.bf16.msra.mxu0 0
      %3441 = vmatprep.mubr.bf16.mxu0 0
      %3442 = vmatmul.mubr.bf16.gmra.mxu0 %v3359
      %v3443 = vpop.f32.mrf.mxu0
      %v3444 = vadd.f32 0.0, %v3443
      %v3445 = vpop.f32.mrf.mxu0
      %v3446 = vpop.f32.mrf.mxu0
      %v3447 = vadd.f32 0.0, %v3446
      %v3448 = vpop.f32.mrf.mxu0
      %3449 = vmatprep.mubr.bf16.mxu0 0
      %3450 = vmatmul.mubr.bf16.gmra.mxu0 %v3362
      %v3451 = vpop.f32.mrf.mxu0
      %v3452 = vadd.f32 0.0, %v3451
      %v3453 = vpop.f32.mrf.mxu0
      %v3454 = vpop.f32.mrf.mxu0
      %v3455 = vadd.f32 0.0, %v3454
      %v3456 = vpop.f32.mrf.mxu0
      %3457 = vmatprep.mubr.bf16.mxu0 0
      %3458 = vmatmul.mubr.bf16.gmra.mxu0 %v3365
      %v3459 = vpop.f32.mrf.mxu0
      %v3460 = vadd.f32 0.0, %v3459
      %v3461 = vpop.f32.mrf.mxu0
      %v3462 = vpop.f32.mrf.mxu0
      %v3463 = vadd.f32 0.0, %v3462
      %v3464 = vpop.f32.mrf.mxu0
      %3465 = vmatprep.mubr.bf16.mxu0 0
      %3466 = vmatmul.mubr.bf16.gmra.mxu0 %v3368
      %v3467 = vpop.f32.mrf.mxu0
      %v3468 = vadd.f32 0.0, %v3467
      %v3469 = vpop.f32.mrf.mxu0
      %v3470 = vpop.f32.mrf.mxu0
      %v3471 = vadd.f32 0.0, %v3470
      %v3472 = vpop.f32.mrf.mxu0
      %3473 = vmatprep.mubr.bf16.mxu0 0
      %3474 = vmatmul.mubr.bf16.gmra.mxu0 %v3371
      %v3475 = vpop.f32.mrf.mxu0
      %v3476 = vadd.f32 0.0, %v3475
      %v3477 = vpop.f32.mrf.mxu0
      %v3478 = vpop.f32.mrf.mxu0
      %v3479 = vadd.f32 0.0, %v3478
      %v3480 = vpop.f32.mrf.mxu0
      %3481 = vmatprep.mubr.bf16.mxu0 0
      %3482 = vmatmul.mubr.bf16.gmra.mxu0 %v3374
      %v3483 = vpop.f32.mrf.mxu0
      %v3484 = vadd.f32 0.0, %v3483
      %v3485 = vpop.f32.mrf.mxu0
      %v3486 = vpop.f32.mrf.mxu0
      %v3487 = vadd.f32 0.0, %v3486
      %v3488 = vpop.f32.mrf.mxu0
      %3489 = vmatprep.mubr.bf16.mxu0 0
      %3490 = vmatmul.mubr.bf16.gmra.mxu0 %v3377
      %v3491 = vpop.f32.mrf.mxu0
      %v3492 = vadd.f32 0.0, %v3491
      %v3493 = vpop.f32.mrf.mxu0
      %v3494 = vpop.f32.mrf.mxu0
      %v3495 = vadd.f32 0.0, %v3494
      %v3496 = vpop.f32.mrf.mxu0
      %3497 = vmatprep.mubr.bf16.mxu0 0
      %3498 = vmatmul.mubr.bf16.gmra.mxu0 %v3380
      %v3499 = vpop.f32.mrf.mxu0
      %v3500 = vadd.f32 0.0, %v3499
      %v3501 = vpop.f32.mrf.mxu0
      %v3502 = vpop.f32.mrf.mxu0
      %v3503 = vadd.f32 0.0, %v3502
      %v3504 = vpop.f32.mrf.mxu0
      %3505 = vmatprep.mubr.bf16.mxu0 0
      %3506 = vmatmul.mubr.bf16.gmra.mxu0 %v3383
      %v3507 = vpop.f32.mrf.mxu0
      %v3508 = vadd.f32 0.0, %v3507
      %v3509 = vpop.f32.mrf.mxu0
      %v3510 = vpop.f32.mrf.mxu0
      %v3511 = vadd.f32 0.0, %v3510
      %v3512 = vpop.f32.mrf.mxu0
      %3513 = vmatprep.mubr.bf16.mxu0 0
      %3514 = vmatmul.mubr.bf16.gmra.mxu0 %v3386
      %v3515 = vpop.f32.mrf.mxu0
      %v3516 = vadd.f32 0.0, %v3515
      %v3517 = vpop.f32.mrf.mxu0
      %v3518 = vpop.f32.mrf.mxu0
      %v3519 = vadd.f32 0.0, %v3518
      %v3520 = vpop.f32.mrf.mxu0
      %3521 = vmatprep.mubr.bf16.mxu0 0
      %3522 = vmatmul.mubr.bf16.gmra.mxu0 %v3389
      %v3523 = vpop.f32.mrf.mxu0
      %v3524 = vadd.f32 0.0, %v3523
      %v3525 = vpop.f32.mrf.mxu0
      %v3526 = vpop.f32.mrf.mxu0
      %v3527 = vadd.f32 0.0, %v3526
      %v3528 = vpop.f32.mrf.mxu0
      %3529 = vmatprep.mubr.bf16.mxu0 0
      %3530 = vmatmul.mubr.bf16.gmra.mxu0 %v3392
      %v3531 = vpop.f32.mrf.mxu0
      %v3532 = vadd.f32 0.0, %v3531
      %v3533 = vpop.f32.mrf.mxu0
      %v3534 = vpop.f32.mrf.mxu0
      %v3535 = vadd.f32 0.0, %v3534
      %v3536 = vpop.f32.mrf.mxu0
      %3537 = vmatprep.mubr.bf16.mxu0 0
      %3538 = vmatmul.mubr.bf16.gmra.mxu0 %v3395
      %v3539 = vpop.f32.mrf.mxu0
      %v3540 = vadd.f32 0.0, %v3539
      %v3541 = vpop.f32.mrf.mxu0
      %v3542 = vpop.f32.mrf.mxu0
      %v3543 = vadd.f32 0.0, %v3542
      %v3544 = vpop.f32.mrf.mxu0
      %3545 = vmatprep.mubr.bf16.mxu0 0
      %3546 = vmatmul.mubr.bf16.gmra.mxu0 %v3398
      %v3547 = vpop.f32.mrf.mxu0
      %v3548 = vadd.f32 0.0, %v3547
      %v3549 = vpop.f32.mrf.mxu0
      %v3550 = vpop.f32.mrf.mxu0
      %v3551 = vadd.f32 0.0, %v3550
      %v3552 = vpop.f32.mrf.mxu0
      %3553 = vmatprep.mubr.bf16.mxu0 0
      %3554 = vmatmul.mubr.bf16.gmra.mxu0 %v3401
      %v3555 = vpop.f32.mrf.mxu0
      %v3556 = vadd.f32 0.0, %v3555
      %v3557 = vpop.f32.mrf.mxu0
      %v3558 = vpop.f32.mrf.mxu0
      %v3559 = vadd.f32 0.0, %v3558
      %v3560 = vpop.f32.mrf.mxu0
      %3561 = vmatprep.mubr.bf16.mxu0 0
      %3562 = vmatmul.mubr.bf16.gmra.mxu0 %v3404
      %v3563 = vpop.f32.mrf.mxu0
      %v3564 = vadd.f32 0.0, %v3563
      %v3565 = vpop.f32.mrf.mxu0
      %v3566 = vpop.f32.mrf.mxu0
      %v3567 = vadd.f32 0.0, %v3566
      %v3568 = vpop.f32.mrf.mxu0
      %3569 = vdwg.mxu0
      %v3570 = vld [vmem:[#allocation2] sm:$0xff]
      %v3571 = vld [vmem:[#allocation2 + $0x8] sm:$0xff]
      %v3572 = vld [vmem:[#allocation2 + $0x10] sm:$0xff]
      %v3573 = vld [vmem:[#allocation2 + $0x18] sm:$0xff]
      %v3574 = vld [vmem:[#allocation2 + $0x20] sm:$0xff]
      %v3575 = vld [vmem:[#allocation2 + $0x28] sm:$0xff]
      %v3576 = vld [vmem:[#allocation2 + $0x30] sm:$0xff]
      %v3577 = vld [vmem:[#allocation2 + $0x38] sm:$0xff]
      %v3578 = vld [vmem:[#allocation2 + $0x40] sm:$0xff]
      %v3579 = vld [vmem:[#allocation2 + $0x48] sm:$0xff]
      %v3580 = vld [vmem:[#allocation2 + $0x50] sm:$0xff]
      %v3581 = vld [vmem:[#allocation2 + $0x58] sm:$0xff]
      %v3582 = vld [vmem:[#allocation2 + $0x60] sm:$0xff]
      %v3583 = vld [vmem:[#allocation2 + $0x68] sm:$0xff]
      %v3584 = vld [vmem:[#allocation2 + $0x70] sm:$0xff]
      %v3585 = vld [vmem:[#allocation2 + $0x78] sm:$0xff]
      %v3586 = vld [vmem:[#allocation2 + $0x80] sm:$0xff]
      %v3587 = vld [vmem:[#allocation2 + $0x88] sm:$0xff]
      %v3588 = vld [vmem:[#allocation2 + $0x90] sm:$0xff]
      %v3589 = vld [vmem:[#allocation2 + $0x98] sm:$0xff]
      %v3590 = vld [vmem:[#allocation2 + $0xa0] sm:$0xff]
      %v3591 = vld [vmem:[#allocation2 + $0xa8] sm:$0xff]
      %v3592 = vld [vmem:[#allocation2 + $0xb0] sm:$0xff]
      %v3593 = vld [vmem:[#allocation2 + $0xb8] sm:$0xff]
      %v3594 = vld [vmem:[#allocation2 + $0xc0] sm:$0xff]
      %v3595 = vld [vmem:[#allocation2 + $0xc8] sm:$0xff]
      %v3596 = vld [vmem:[#allocation2 + $0xd0] sm:$0xff]
      %v3597 = vld [vmem:[#allocation2 + $0xd8] sm:$0xff]
      %v3598 = vld [vmem:[#allocation2 + $0xe0] sm:$0xff]
      %v3599 = vld [vmem:[#allocation2 + $0xe8] sm:$0xff]
      %v3600 = vld [vmem:[#allocation2 + $0xf0] sm:$0xff]
      %v3601 = vld [vmem:[#allocation2 + $0xf8] sm:$0xff]
      %v3602 = vadd.f32 %v3570, %v3444
      %v3603 = vadd.f32 %v3571, %v3447
      %v3604 = vadd.f32 %v3572, %v3452
      %v3605 = vadd.f32 %v3573, %v3455
      %v3606 = vadd.f32 %v3574, %v3460
      %v3607 = vadd.f32 %v3575, %v3463
      %v3608 = vadd.f32 %v3576, %v3468
      %v3609 = vadd.f32 %v3577, %v3471
      %v3610 = vadd.f32 %v3578, %v3476
      %v3611 = vadd.f32 %v3579, %v3479
      %v3612 = vadd.f32 %v3580, %v3484
      %v3613 = vadd.f32 %v3581, %v3487
      %v3614 = vadd.f32 %v3582, %v3492
      %v3615 = vadd.f32 %v3583, %v3495
      %v3616 = vadd.f32 %v3584, %v3500
      %v3617 = vadd.f32 %v3585, %v3503
      %v3618 = vadd.f32 %v3586, %v3508
      %v3619 = vadd.f32 %v3587, %v3511
      %v3620 = vadd.f32 %v3588, %v3516
      %v3621 = vadd.f32 %v3589, %v3519
      %v3622 = vadd.f32 %v3590, %v3524
      %v3623 = vadd.f32 %v3591, %v3527
      %v3624 = vadd.f32 %v3592, %v3532
      %v3625 = vadd.f32 %v3593, %v3535
      %v3626 = vadd.f32 %v3594, %v3540
      %v3627 = vadd.f32 %v3595, %v3543
      %v3628 = vadd.f32 %v3596, %v3548
      %v3629 = vadd.f32 %v3597, %v3551
      %v3630 = vadd.f32 %v3598, %v3556
      %v3631 = vadd.f32 %v3599, %v3559
      %v3632 = vadd.f32 %v3600, %v3564
      %v3633 = vadd.f32 %v3601, %v3567
      %3634 = vst [vmem:[#allocation2] sm:$0xff] %v3602
      %3635 = vst [vmem:[#allocation2 + $0x8] sm:$0xff] %v3603
      %3636 = vst [vmem:[#allocation2 + $0x10] sm:$0xff] %v3604
      %3637 = vst [vmem:[#allocation2 + $0x18] sm:$0xff] %v3605
      %3638 = vst [vmem:[#allocation2 + $0x20] sm:$0xff] %v3606
      %3639 = vst [vmem:[#allocation2 + $0x28] sm:$0xff] %v3607
      %3640 = vst [vmem:[#allocation2 + $0x30] sm:$0xff] %v3608
      %3641 = vst [vmem:[#allocation2 + $0x38] sm:$0xff] %v3609
      %3642 = vst [vmem:[#allocation2 + $0x40] sm:$0xff] %v3610
      %3643 = vst [vmem:[#allocation2 + $0x48] sm:$0xff] %v3611
      %3644 = vst [vmem:[#allocation2 + $0x50] sm:$0xff] %v3612
      %3645 = vst [vmem:[#allocation2 + $0x58] sm:$0xff] %v3613
      %3646 = vst [vmem:[#allocation2 + $0x60] sm:$0xff] %v3614
      %3647 = vst [vmem:[#allocation2 + $0x68] sm:$0xff] %v3615
      %3648 = vst [vmem:[#allocation2 + $0x70] sm:$0xff] %v3616
      %3649 = vst [vmem:[#allocation2 + $0x78] sm:$0xff] %v3617
      %3650 = vst [vmem:[#allocation2 + $0x80] sm:$0xff] %v3618
      %3651 = vst [vmem:[#allocation2 + $0x88] sm:$0xff] %v3619
      %3652 = vst [vmem:[#allocation2 + $0x90] sm:$0xff] %v3620
      %3653 = vst [vmem:[#allocation2 + $0x98] sm:$0xff] %v3621
      %3654 = vst [vmem:[#allocation2 + $0xa0] sm:$0xff] %v3622
      %3655 = vst [vmem:[#allocation2 + $0xa8] sm:$0xff] %v3623
      %3656 = vst [vmem:[#allocation2 + $0xb0] sm:$0xff] %v3624
      %3657 = vst [vmem:[#allocation2 + $0xb8] sm:$0xff] %v3625
      %3658 = vst [vmem:[#allocation2 + $0xc0] sm:$0xff] %v3626
      %3659 = vst [vmem:[#allocation2 + $0xc8] sm:$0xff] %v3627
      %3660 = vst [vmem:[#allocation2 + $0xd0] sm:$0xff] %v3628
      %3661 = vst [vmem:[#allocation2 + $0xd8] sm:$0xff] %v3629
      %3662 = vst [vmem:[#allocation2 + $0xe0] sm:$0xff] %v3630
      %3663 = vst [vmem:[#allocation2 + $0xe8] sm:$0xff] %v3631
      %3664 = vst [vmem:[#allocation2 + $0xf0] sm:$0xff] %v3632
      %3665 = vst [vmem:[#allocation2 + $0xf8] sm:$0xff] %v3633
      %s3666 = scalar_lea.vmem %s157, 24
      %v3667 = vld [vmem:[%s3666] sm:$0xf]
      %v3668 = vld [vmem:[%s3666 + $0x4] sm:$0xf]
      %v3669 = vld [vmem:[%s3666 + $0xc] sm:$0xf]
      %v3670 = vld [vmem:[%s3666 + $0x10] sm:$0xf]
      %v3671 = vld [vmem:[%s3666 + $0x18] sm:$0xf]
      %v3672 = vld [vmem:[%s3666 + $0x1c] sm:$0xf]
      %v3673 = vld [vmem:[%s3666 + $0x24] sm:$0xf]
      %v3674 = vld [vmem:[%s3666 + $0x28] sm:$0xf]
      %v3675 = vld [vmem:[%s3666 + $0x30] sm:$0xf]
      %v3676 = vld [vmem:[%s3666 + $0x34] sm:$0xf]
      %v3677 = vld [vmem:[%s3666 + $0x3c] sm:$0xf]
      %v3678 = vld [vmem:[%s3666 + $0x40] sm:$0xf]
      %v3679 = vld [vmem:[%s3666 + $0x48] sm:$0xf]
      %v3680 = vld [vmem:[%s3666 + $0x4c] sm:$0xf]
      %v3681 = vld [vmem:[%s3666 + $0x54] sm:$0xf]
      %v3682 = vld [vmem:[%s3666 + $0x58] sm:$0xf]
      %v3683 = vld [vmem:[%s3666 + $0x60] sm:$0xf]
      %v3684 = vld [vmem:[%s3666 + $0x64] sm:$0xf]
      %v3685 = vld [vmem:[%s3666 + $0x6c] sm:$0xf]
      %v3686 = vld [vmem:[%s3666 + $0x70] sm:$0xf]
      %v3687 = vld [vmem:[%s3666 + $0x78] sm:$0xf]
      %v3688 = vld [vmem:[%s3666 + $0x7c] sm:$0xf]
      %v3689 = vld [vmem:[%s3666 + $0x84] sm:$0xf]
      %v3690 = vld [vmem:[%s3666 + $0x88] sm:$0xf]
      %v3691 = vld [vmem:[%s3666 + $0x90] sm:$0xf]
      %v3692 = vld [vmem:[%s3666 + $0x94] sm:$0xf]
      %v3693 = vld [vmem:[%s3666 + $0x9c] sm:$0xf]
      %v3694 = vld [vmem:[%s3666 + $0xa0] sm:$0xf]
      %v3695 = vld [vmem:[%s3666 + $0xa8] sm:$0xf]
      %v3696 = vld [vmem:[%s3666 + $0xac] sm:$0xf]
      %v3697 = vld [vmem:[%s3666 + $0xb4] sm:$0xf]
      %v3698 = vld [vmem:[%s3666 + $0xb8] sm:$0xf]
      %s3699 = scalar_lea.vmem %s1, 12
      %v3700 = vld [vmem:[%s3699] sm:$0x3]
      %v3733 = vunpack.c.l.b16 %v3667
      %v3734 = vunpack.c.l.b16 %v3668
      %v3735 = vunpack.c.l.b16 %v3669
      %v3736 = vunpack.c.l.b16 %v3670
      %v3737 = vunpack.c.l.b16 %v3671
      %v3738 = vunpack.c.l.b16 %v3672
      %v3739 = vunpack.c.l.b16 %v3673
      %v3740 = vunpack.c.l.b16 %v3674
      %v3741 = vunpack.c.l.b16 %v3675
      %v3742 = vunpack.c.l.b16 %v3676
      %v3743 = vunpack.c.l.b16 %v3677
      %v3744 = vunpack.c.l.b16 %v3678
      %v3745 = vunpack.c.l.b16 %v3679
      %v3746 = vunpack.c.l.b16 %v3680
      %v3747 = vunpack.c.l.b16 %v3681
      %v3748 = vunpack.c.l.b16 %v3682
      %v3749 = vunpack.c.l.b16 %v3683
      %v3750 = vunpack.c.l.b16 %v3684
      %v3751 = vunpack.c.l.b16 %v3685
      %v3752 = vunpack.c.l.b16 %v3686
      %v3753 = vunpack.c.l.b16 %v3687
      %v3754 = vunpack.c.l.b16 %v3688
      %v3755 = vunpack.c.l.b16 %v3689
      %v3756 = vunpack.c.l.b16 %v3690
      %v3757 = vunpack.c.l.b16 %v3691
      %v3758 = vunpack.c.l.b16 %v3692
      %v3759 = vunpack.c.l.b16 %v3693
      %v3760 = vunpack.c.l.b16 %v3694
      %v3761 = vunpack.c.l.b16 %v3695
      %v3762 = vunpack.c.l.b16 %v3696
      %v3763 = vunpack.c.l.b16 %v3697
      %v3764 = vunpack.c.l.b16 %v3698
      %v3765 = vpack.c.b16 %v3734, %v3733
      %v3766 = vpack.c.b16 %v3736, %v3735
      %v3767 = vpack.c.b16 %v3738, %v3737
      %v3768 = vpack.c.b16 %v3740, %v3739
      %v3769 = vpack.c.b16 %v3742, %v3741
      %v3770 = vpack.c.b16 %v3744, %v3743
      %v3771 = vpack.c.b16 %v3746, %v3745
      %v3772 = vpack.c.b16 %v3748, %v3747
      %v3773 = vpack.c.b16 %v3750, %v3749
      %v3774 = vpack.c.b16 %v3752, %v3751
      %v3775 = vpack.c.b16 %v3754, %v3753
      %v3776 = vpack.c.b16 %v3756, %v3755
      %v3777 = vpack.c.b16 %v3758, %v3757
      %v3778 = vpack.c.b16 %v3760, %v3759
      %v3779 = vpack.c.b16 %v3762, %v3761
      %v3780 = vpack.c.b16 %v3764, %v3763
      %v3782 = vsel %vm279, %v3765, 0
      %v3785 = vsel %vm279, %v3766, 0
      %v3788 = vsel %vm279, %v3767, 0
      %v3791 = vsel %vm279, %v3768, 0
      %v3794 = vsel %vm279, %v3769, 0
      %v3797 = vsel %vm279, %v3770, 0
      %v3800 = vsel %vm279, %v3771, 0
      %v3803 = vsel %vm279, %v3772, 0
      %v3806 = vsel %vm279, %v3773, 0
      %v3809 = vsel %vm279, %v3774, 0
      %v3812 = vsel %vm279, %v3775, 0
      %v3815 = vsel %vm279, %v3776, 0
      %v3818 = vsel %vm279, %v3777, 0
      %v3821 = vsel %vm279, %v3778, 0
      %v3824 = vsel %vm279, %v3779, 0
      %v3827 = vsel %vm279, %v3780, 0
      %v3830 = vsel %vm328, %v3700, 0
      %3832 = vmatprep.subr.bf16.mxu0 0
      %3833 = vmatpush1.bf16.msra.mxu0 0
      %3834 = vmatprep.subr.bf16.mxu0 0
      %3835 = vmatpush1.bf16.msra.mxu0 0
      %3836 = vmatprep.subr.bf16.mxu0 0
      %3837 = vmatpush1.bf16.msra.mxu0 0
      %3838 = vmatprep.subr.bf16.mxu0 0
      %3839 = vmatpush1.bf16.msra.mxu0 0
      %3840 = vmatprep.subr.bf16.mxu0 0
      %3841 = vmatpush1.bf16.msra.mxu0 0
      %3842 = vmatprep.subr.bf16.mxu0 0
      %3843 = vmatpush1.bf16.msra.mxu0 0
      %3844 = vmatprep.subr.bf16.mxu0 0
      %3845 = vmatpush1.bf16.msra.mxu0 0
      %3846 = vmatprep.subr.bf16.mxu0 0
      %3847 = vmatpush1.bf16.msra.mxu0 %v3830
      %3848 = vmatprep.subr.bf16.mxu0 0
      %3849 = vmatpush2.bf16.msra.mxu0 0
      %3850 = vmatprep.subr.bf16.mxu0 0
      %3851 = vmatpush2.bf16.msra.mxu0 0
      %3852 = vmatprep.subr.bf16.mxu0 0
      %3853 = vmatpush2.bf16.msra.mxu0 0
      %3854 = vmatprep.subr.bf16.mxu0 0
      %3855 = vmatpush2.bf16.msra.mxu0 0
      %3856 = vmatprep.subr.bf16.mxu0 0
      %3857 = vmatpush2.bf16.msra.mxu0 0
      %3858 = vmatprep.subr.bf16.mxu0 0
      %3859 = vmatpush2.bf16.msra.mxu0 0
      %3860 = vmatprep.subr.bf16.mxu0 0
      %3861 = vmatpush2.bf16.msra.mxu0 0
      %3862 = vmatprep.subr.bf16.mxu0 0
      %3863 = vmatpush2.bf16.msra.mxu0 0
      %3864 = vmatprep.mubr.bf16.mxu0 0
      %3865 = vmatmul.mubr.bf16.gmra.mxu0 %v3782
      %v3866 = vpop.f32.mrf.mxu0
      %v3867 = vadd.f32 0.0, %v3866
      %v3868 = vpop.f32.mrf.mxu0
      %v3869 = vpop.f32.mrf.mxu0
      %v3870 = vadd.f32 0.0, %v3869
      %v3871 = vpop.f32.mrf.mxu0
      %3872 = vmatprep.mubr.bf16.mxu0 0
      %3873 = vmatmul.mubr.bf16.gmra.mxu0 %v3785
      %v3874 = vpop.f32.mrf.mxu0
      %v3875 = vadd.f32 0.0, %v3874
      %v3876 = vpop.f32.mrf.mxu0
      %v3877 = vpop.f32.mrf.mxu0
      %v3878 = vadd.f32 0.0, %v3877
      %v3879 = vpop.f32.mrf.mxu0
      %3880 = vmatprep.mubr.bf16.mxu0 0
      %3881 = vmatmul.mubr.bf16.gmra.mxu0 %v3788
      %v3882 = vpop.f32.mrf.mxu0
      %v3883 = vadd.f32 0.0, %v3882
      %v3884 = vpop.f32.mrf.mxu0
      %v3885 = vpop.f32.mrf.mxu0
      %v3886 = vadd.f32 0.0, %v3885
      %v3887 = vpop.f32.mrf.mxu0
      %3888 = vmatprep.mubr.bf16.mxu0 0
      %3889 = vmatmul.mubr.bf16.gmra.mxu0 %v3791
      %v3890 = vpop.f32.mrf.mxu0
      %v3891 = vadd.f32 0.0, %v3890
      %v3892 = vpop.f32.mrf.mxu0
      %v3893 = vpop.f32.mrf.mxu0
      %v3894 = vadd.f32 0.0, %v3893
      %v3895 = vpop.f32.mrf.mxu0
      %3896 = vmatprep.mubr.bf16.mxu0 0
      %3897 = vmatmul.mubr.bf16.gmra.mxu0 %v3794
      %v3898 = vpop.f32.mrf.mxu0
      %v3899 = vadd.f32 0.0, %v3898
      %v3900 = vpop.f32.mrf.mxu0
      %v3901 = vpop.f32.mrf.mxu0
      %v3902 = vadd.f32 0.0, %v3901
      %v3903 = vpop.f32.mrf.mxu0
      %3904 = vmatprep.mubr.bf16.mxu0 0
      %3905 = vmatmul.mubr.bf16.gmra.mxu0 %v3797
      %v3906 = vpop.f32.mrf.mxu0
      %v3907 = vadd.f32 0.0, %v3906
      %v3908 = vpop.f32.mrf.mxu0
      %v3909 = vpop.f32.mrf.mxu0
      %v3910 = vadd.f32 0.0, %v3909
      %v3911 = vpop.f32.mrf.mxu0
      %3912 = vmatprep.mubr.bf16.mxu0 0
      %3913 = vmatmul.mubr.bf16.gmra.mxu0 %v3800
      %v3914 = vpop.f32.mrf.mxu0
      %v3915 = vadd.f32 0.0, %v3914
      %v3916 = vpop.f32.mrf.mxu0
      %v3917 = vpop.f32.mrf.mxu0
      %v3918 = vadd.f32 0.0, %v3917
      %v3919 = vpop.f32.mrf.mxu0
      %3920 = vmatprep.mubr.bf16.mxu0 0
      %3921 = vmatmul.mubr.bf16.gmra.mxu0 %v3803
      %v3922 = vpop.f32.mrf.mxu0
      %v3923 = vadd.f32 0.0, %v3922
      %v3924 = vpop.f32.mrf.mxu0
      %v3925 = vpop.f32.mrf.mxu0
      %v3926 = vadd.f32 0.0, %v3925
      %v3927 = vpop.f32.mrf.mxu0
      %3928 = vmatprep.mubr.bf16.mxu0 0
      %3929 = vmatmul.mubr.bf16.gmra.mxu0 %v3806
      %v3930 = vpop.f32.mrf.mxu0
      %v3931 = vadd.f32 0.0, %v3930
      %v3932 = vpop.f32.mrf.mxu0
      %v3933 = vpop.f32.mrf.mxu0
      %v3934 = vadd.f32 0.0, %v3933
      %v3935 = vpop.f32.mrf.mxu0
      %3936 = vmatprep.mubr.bf16.mxu0 0
      %3937 = vmatmul.mubr.bf16.gmra.mxu0 %v3809
      %v3938 = vpop.f32.mrf.mxu0
      %v3939 = vadd.f32 0.0, %v3938
      %v3940 = vpop.f32.mrf.mxu0
      %v3941 = vpop.f32.mrf.mxu0
      %v3942 = vadd.f32 0.0, %v3941
      %v3943 = vpop.f32.mrf.mxu0
      %3944 = vmatprep.mubr.bf16.mxu0 0
      %3945 = vmatmul.mubr.bf16.gmra.mxu0 %v3812
      %v3946 = vpop.f32.mrf.mxu0
      %v3947 = vadd.f32 0.0, %v3946
      %v3948 = vpop.f32.mrf.mxu0
      %v3949 = vpop.f32.mrf.mxu0
      %v3950 = vadd.f32 0.0, %v3949
      %v3951 = vpop.f32.mrf.mxu0
      %3952 = vmatprep.mubr.bf16.mxu0 0
      %3953 = vmatmul.mubr.bf16.gmra.mxu0 %v3815
      %v3954 = vpop.f32.mrf.mxu0
      %v3955 = vadd.f32 0.0, %v3954
      %v3956 = vpop.f32.mrf.mxu0
      %v3957 = vpop.f32.mrf.mxu0
      %v3958 = vadd.f32 0.0, %v3957
      %v3959 = vpop.f32.mrf.mxu0
      %3960 = vmatprep.mubr.bf16.mxu0 0
      %3961 = vmatmul.mubr.bf16.gmra.mxu0 %v3818
      %v3962 = vpop.f32.mrf.mxu0
      %v3963 = vadd.f32 0.0, %v3962
      %v3964 = vpop.f32.mrf.mxu0
      %v3965 = vpop.f32.mrf.mxu0
      %v3966 = vadd.f32 0.0, %v3965
      %v3967 = vpop.f32.mrf.mxu0
      %3968 = vmatprep.mubr.bf16.mxu0 0
      %3969 = vmatmul.mubr.bf16.gmra.mxu0 %v3821
      %v3970 = vpop.f32.mrf.mxu0
      %v3971 = vadd.f32 0.0, %v3970
      %v3972 = vpop.f32.mrf.mxu0
      %v3973 = vpop.f32.mrf.mxu0
      %v3974 = vadd.f32 0.0, %v3973
      %v3975 = vpop.f32.mrf.mxu0
      %3976 = vmatprep.mubr.bf16.mxu0 0
      %3977 = vmatmul.mubr.bf16.gmra.mxu0 %v3824
      %v3978 = vpop.f32.mrf.mxu0
      %v3979 = vadd.f32 0.0, %v3978
      %v3980 = vpop.f32.mrf.mxu0
      %v3981 = vpop.f32.mrf.mxu0
      %v3982 = vadd.f32 0.0, %v3981
      %v3983 = vpop.f32.mrf.mxu0
      %3984 = vmatprep.mubr.bf16.mxu0 0
      %3985 = vmatmul.mubr.bf16.gmra.mxu0 %v3827
      %v3986 = vpop.f32.mrf.mxu0
      %v3987 = vadd.f32 0.0, %v3986
      %v3988 = vpop.f32.mrf.mxu0
      %v3989 = vpop.f32.mrf.mxu0
      %v3990 = vadd.f32 0.0, %v3989
      %v3991 = vpop.f32.mrf.mxu0
      %3992 = vdwg.mxu0
      %v3993 = vld [vmem:[#allocation2] sm:$0xff]
      %v3994 = vld [vmem:[#allocation2 + $0x8] sm:$0xff]
      %v3995 = vld [vmem:[#allocation2 + $0x10] sm:$0xff]
      %v3996 = vld [vmem:[#allocation2 + $0x18] sm:$0xff]
      %v3997 = vld [vmem:[#allocation2 + $0x20] sm:$0xff]
      %v3998 = vld [vmem:[#allocation2 + $0x28] sm:$0xff]
      %v3999 = vld [vmem:[#allocation2 + $0x30] sm:$0xff]
      %v4000 = vld [vmem:[#allocation2 + $0x38] sm:$0xff]
      %v4001 = vld [vmem:[#allocation2 + $0x40] sm:$0xff]
      %v4002 = vld [vmem:[#allocation2 + $0x48] sm:$0xff]
      %v4003 = vld [vmem:[#allocation2 + $0x50] sm:$0xff]
      %v4004 = vld [vmem:[#allocation2 + $0x58] sm:$0xff]
      %v4005 = vld [vmem:[#allocation2 + $0x60] sm:$0xff]
      %v4006 = vld [vmem:[#allocation2 + $0x68] sm:$0xff]
      %v4007 = vld [vmem:[#allocation2 + $0x70] sm:$0xff]
      %v4008 = vld [vmem:[#allocation2 + $0x78] sm:$0xff]
      %v4009 = vld [vmem:[#allocation2 + $0x80] sm:$0xff]
      %v4010 = vld [vmem:[#allocation2 + $0x88] sm:$0xff]
      %v4011 = vld [vmem:[#allocation2 + $0x90] sm:$0xff]
      %v4012 = vld [vmem:[#allocation2 + $0x98] sm:$0xff]
      %v4013 = vld [vmem:[#allocation2 + $0xa0] sm:$0xff]
      %v4014 = vld [vmem:[#allocation2 + $0xa8] sm:$0xff]
      %v4015 = vld [vmem:[#allocation2 + $0xb0] sm:$0xff]
      %v4016 = vld [vmem:[#allocation2 + $0xb8] sm:$0xff]
      %v4017 = vld [vmem:[#allocation2 + $0xc0] sm:$0xff]
      %v4018 = vld [vmem:[#allocation2 + $0xc8] sm:$0xff]
      %v4019 = vld [vmem:[#allocation2 + $0xd0] sm:$0xff]
      %v4020 = vld [vmem:[#allocation2 + $0xd8] sm:$0xff]
      %v4021 = vld [vmem:[#allocation2 + $0xe0] sm:$0xff]
      %v4022 = vld [vmem:[#allocation2 + $0xe8] sm:$0xff]
      %v4023 = vld [vmem:[#allocation2 + $0xf0] sm:$0xff]
      %v4024 = vld [vmem:[#allocation2 + $0xf8] sm:$0xff]
      %v4025 = vadd.f32 %v3993, %v3867
      %v4026 = vadd.f32 %v3994, %v3870
      %v4027 = vadd.f32 %v3995, %v3875
      %v4028 = vadd.f32 %v3996, %v3878
      %v4029 = vadd.f32 %v3997, %v3883
      %v4030 = vadd.f32 %v3998, %v3886
      %v4031 = vadd.f32 %v3999, %v3891
      %v4032 = vadd.f32 %v4000, %v3894
      %v4033 = vadd.f32 %v4001, %v3899
      %v4034 = vadd.f32 %v4002, %v3902
      %v4035 = vadd.f32 %v4003, %v3907
      %v4036 = vadd.f32 %v4004, %v3910
      %v4037 = vadd.f32 %v4005, %v3915
      %v4038 = vadd.f32 %v4006, %v3918
      %v4039 = vadd.f32 %v4007, %v3923
      %v4040 = vadd.f32 %v4008, %v3926
      %v4041 = vadd.f32 %v4009, %v3931
      %v4042 = vadd.f32 %v4010, %v3934
      %v4043 = vadd.f32 %v4011, %v3939
      %v4044 = vadd.f32 %v4012, %v3942
      %v4045 = vadd.f32 %v4013, %v3947
      %v4046 = vadd.f32 %v4014, %v3950
      %v4047 = vadd.f32 %v4015, %v3955
      %v4048 = vadd.f32 %v4016, %v3958
      %v4049 = vadd.f32 %v4017, %v3963
      %v4050 = vadd.f32 %v4018, %v3966
      %v4051 = vadd.f32 %v4019, %v3971
      %v4052 = vadd.f32 %v4020, %v3974
      %v4053 = vadd.f32 %v4021, %v3979
      %v4054 = vadd.f32 %v4022, %v3982
      %v4055 = vadd.f32 %v4023, %v3987
      %v4056 = vadd.f32 %v4024, %v3990
      %4057 = vst [vmem:[#allocation2] sm:$0xff] %v4025
      %4058 = vst [vmem:[#allocation2 + $0x8] sm:$0xff] %v4026
      %4059 = vst [vmem:[#allocation2 + $0x10] sm:$0xff] %v4027
      %4060 = vst [vmem:[#allocation2 + $0x18] sm:$0xff] %v4028
      %4061 = vst [vmem:[#allocation2 + $0x20] sm:$0xff] %v4029
      %4062 = vst [vmem:[#allocation2 + $0x28] sm:$0xff] %v4030
      %4063 = vst [vmem:[#allocation2 + $0x30] sm:$0xff] %v4031
      %4064 = vst [vmem:[#allocation2 + $0x38] sm:$0xff] %v4032
      %4065 = vst [vmem:[#allocation2 + $0x40] sm:$0xff] %v4033
      %4066 = vst [vmem:[#allocation2 + $0x48] sm:$0xff] %v4034
      %4067 = vst [vmem:[#allocation2 + $0x50] sm:$0xff] %v4035
      %4068 = vst [vmem:[#allocation2 + $0x58] sm:$0xff] %v4036
      %4069 = vst [vmem:[#allocation2 + $0x60] sm:$0xff] %v4037
      %4070 = vst [vmem:[#allocation2 + $0x68] sm:$0xff] %v4038
      %4071 = vst [vmem:[#allocation2 + $0x70] sm:$0xff] %v4039
      %4072 = vst [vmem:[#allocation2 + $0x78] sm:$0xff] %v4040
      %4073 = vst [vmem:[#allocation2 + $0x80] sm:$0xff] %v4041
      %4074 = vst [vmem:[#allocation2 + $0x88] sm:$0xff] %v4042
      %4075 = vst [vmem:[#allocation2 + $0x90] sm:$0xff] %v4043
      %4076 = vst [vmem:[#allocation2 + $0x98] sm:$0xff] %v4044
      %4077 = vst [vmem:[#allocation2 + $0xa0] sm:$0xff] %v4045
      %4078 = vst [vmem:[#allocation2 + $0xa8] sm:$0xff] %v4046
      %4079 = vst [vmem:[#allocation2 + $0xb0] sm:$0xff] %v4047
      %4080 = vst [vmem:[#allocation2 + $0xb8] sm:$0xff] %v4048
      %4081 = vst [vmem:[#allocation2 + $0xc0] sm:$0xff] %v4049
      %4082 = vst [vmem:[#allocation2 + $0xc8] sm:$0xff] %v4050
      %4083 = vst [vmem:[#allocation2 + $0xd0] sm:$0xff] %v4051
      %4084 = vst [vmem:[#allocation2 + $0xd8] sm:$0xff] %v4052
      %4085 = vst [vmem:[#allocation2 + $0xe0] sm:$0xff] %v4053
      %4086 = vst [vmem:[#allocation2 + $0xe8] sm:$0xff] %v4054
      %4087 = vst [vmem:[#allocation2 + $0xf0] sm:$0xff] %v4055
      %4088 = vst [vmem:[#allocation2 + $0xf8] sm:$0xff] %v4056
      %v4089 = vld [vmem:[%s3666] sm:$0xf]
      %v4090 = vld [vmem:[%s3666 + $0x4] sm:$0xf]
      %v4091 = vld [vmem:[%s3666 + $0x8] sm:$0x1]
      %v4092 = vld [vmem:[%s3666 + $0xc] sm:$0xf]
      %v4093 = vld [vmem:[%s3666 + $0x10] sm:$0xf]
      %v4094 = vld [vmem:[%s3666 + $0x14] sm:$0x1]
      %v4095 = vld [vmem:[%s3666 + $0x18] sm:$0xf]
      %v4096 = vld [vmem:[%s3666 + $0x1c] sm:$0xf]
      %v4097 = vld [vmem:[%s3666 + $0x20] sm:$0x1]
      %v4098 = vld [vmem:[%s3666 + $0x24] sm:$0xf]
      %v4099 = vld [vmem:[%s3666 + $0x28] sm:$0xf]
      %v4100 = vld [vmem:[%s3666 + $0x2c] sm:$0x1]
      %v4101 = vld [vmem:[%s3666 + $0x30] sm:$0xf]
      %v4102 = vld [vmem:[%s3666 + $0x34] sm:$0xf]
      %v4103 = vld [vmem:[%s3666 + $0x38] sm:$0x1]
      %v4104 = vld [vmem:[%s3666 + $0x3c] sm:$0xf]
      %v4105 = vld [vmem:[%s3666 + $0x40] sm:$0xf]
      %v4106 = vld [vmem:[%s3666 + $0x44] sm:$0x1]
      %v4107 = vld [vmem:[%s3666 + $0x48] sm:$0xf]
      %v4108 = vld [vmem:[%s3666 + $0x4c] sm:$0xf]
      %v4109 = vld [vmem:[%s3666 + $0x50] sm:$0x1]
      %v4110 = vld [vmem:[%s3666 + $0x54] sm:$0xf]
      %v4111 = vld [vmem:[%s3666 + $0x58] sm:$0xf]
      %v4112 = vld [vmem:[%s3666 + $0x5c] sm:$0x1]
      %v4113 = vld [vmem:[%s3666 + $0x60] sm:$0xf]
      %v4114 = vld [vmem:[%s3666 + $0x64] sm:$0xf]
      %v4115 = vld [vmem:[%s3666 + $0x68] sm:$0x1]
      %v4116 = vld [vmem:[%s3666 + $0x6c] sm:$0xf]
      %v4117 = vld [vmem:[%s3666 + $0x70] sm:$0xf]
      %v4118 = vld [vmem:[%s3666 + $0x74] sm:$0x1]
      %v4119 = vld [vmem:[%s3666 + $0x78] sm:$0xf]
      %v4120 = vld [vmem:[%s3666 + $0x7c] sm:$0xf]
      %v4121 = vld [vmem:[%s3666 + $0x80] sm:$0x1]
      %v4122 = vld [vmem:[%s3666 + $0x84] sm:$0xf]
      %v4123 = vld [vmem:[%s3666 + $0x88] sm:$0xf]
      %v4124 = vld [vmem:[%s3666 + $0x8c] sm:$0x1]
      %v4125 = vld [vmem:[%s3666 + $0x90] sm:$0xf]
      %v4126 = vld [vmem:[%s3666 + $0x94] sm:$0xf]
      %v4127 = vld [vmem:[%s3666 + $0x98] sm:$0x1]
      %v4128 = vld [vmem:[%s3666 + $0x9c] sm:$0xf]
      %v4129 = vld [vmem:[%s3666 + $0xa0] sm:$0xf]
      %v4130 = vld [vmem:[%s3666 + $0xa4] sm:$0x1]
      %v4131 = vld [vmem:[%s3666 + $0xa8] sm:$0xf]
      %v4132 = vld [vmem:[%s3666 + $0xac] sm:$0xf]
      %v4133 = vld [vmem:[%s3666 + $0xb0] sm:$0x1]
      %v4134 = vld [vmem:[%s3666 + $0xb4] sm:$0xf]
      %v4135 = vld [vmem:[%s3666 + $0xb8] sm:$0xf]
      %v4136 = vld [vmem:[%s3666 + $0xbc] sm:$0x1]
      %v4138 = vshrl.u32 %v4089, 16
      %v4140 = vrot.slane %v4138, 4
      %v4141 = vshll.u32 %v4089, 16
      %v4143 = vrot.slane %v4141, 5
      %v4144 = vor.u32 %v4140, %v4143
      %v4145 = vrot.slane %v4144, 4
      %v4147 = vshll.u32 %v4090, 16
      %v4149 = vrot.slane %v4147, 5
      %v4150 = vsel %vm575, %v4145, %v4149
      %v4151 = vshrl.u32 %v4090, 16
      %v4153 = vrot.slane %v4151, 4
      %v4154 = vor.u32 %v4153, %v4149
      %v4155 = vrot.slane %v4154, 4
      %v4157 = vshll.u32 %v4091, 16
      %v4159 = vrot.slane %v4157, 5
      %v4160 = vsel %vm575, %v4155, %v4159
      %v4162 = vshrl.u32 %v4092, 16
      %v4164 = vrot.slane %v4162, 4
      %v4165 = vshll.u32 %v4092, 16
      %v4167 = vrot.slane %v4165, 5
      %v4168 = vor.u32 %v4164, %v4167
      %v4169 = vrot.slane %v4168, 4
      %v4171 = vshll.u32 %v4093, 16
      %v4173 = vrot.slane %v4171, 5
      %v4174 = vsel %vm575, %v4169, %v4173
      %v4175 = vshrl.u32 %v4093, 16
      %v4177 = vrot.slane %v4175, 4
      %v4178 = vor.u32 %v4177, %v4173
      %v4179 = vrot.slane %v4178, 4
      %v4181 = vshll.u32 %v4094, 16
      %v4183 = vrot.slane %v4181, 5
      %v4184 = vsel %vm575, %v4179, %v4183
      %v4186 = vshrl.u32 %v4095, 16
      %v4188 = vrot.slane %v4186, 4
      %v4189 = vshll.u32 %v4095, 16
      %v4191 = vrot.slane %v4189, 5
      %v4192 = vor.u32 %v4188, %v4191
      %v4193 = vrot.slane %v4192, 4
      %v4195 = vshll.u32 %v4096, 16
      %v4197 = vrot.slane %v4195, 5
      %v4198 = vsel %vm575, %v4193, %v4197
      %v4199 = vshrl.u32 %v4096, 16
      %v4201 = vrot.slane %v4199, 4
      %v4202 = vor.u32 %v4201, %v4197
      %v4203 = vrot.slane %v4202, 4
      %v4205 = vshll.u32 %v4097, 16
      %v4207 = vrot.slane %v4205, 5
      %v4208 = vsel %vm575, %v4203, %v4207
      %v4210 = vshrl.u32 %v4098, 16
      %v4212 = vrot.slane %v4210, 4
      %v4213 = vshll.u32 %v4098, 16
      %v4215 = vrot.slane %v4213, 5
      %v4216 = vor.u32 %v4212, %v4215
      %v4217 = vrot.slane %v4216, 4
      %v4219 = vshll.u32 %v4099, 16
      %v4221 = vrot.slane %v4219, 5
      %v4222 = vsel %vm575, %v4217, %v4221
      %v4223 = vshrl.u32 %v4099, 16
      %v4225 = vrot.slane %v4223, 4
      %v4226 = vor.u32 %v4225, %v4221
      %v4227 = vrot.slane %v4226, 4
      %v4229 = vshll.u32 %v4100, 16
      %v4231 = vrot.slane %v4229, 5
      %v4232 = vsel %vm575, %v4227, %v4231
      %v4234 = vshrl.u32 %v4101, 16
      %v4236 = vrot.slane %v4234, 4
      %v4237 = vshll.u32 %v4101, 16
      %v4239 = vrot.slane %v4237, 5
      %v4240 = vor.u32 %v4236, %v4239
      %v4241 = vrot.slane %v4240, 4
      %v4243 = vshll.u32 %v4102, 16
      %v4245 = vrot.slane %v4243, 5
      %v4246 = vsel %vm575, %v4241, %v4245
      %v4247 = vshrl.u32 %v4102, 16
      %v4249 = vrot.slane %v4247, 4
      %v4250 = vor.u32 %v4249, %v4245
      %v4251 = vrot.slane %v4250, 4
      %v4253 = vshll.u32 %v4103, 16
      %v4255 = vrot.slane %v4253, 5
      %v4256 = vsel %vm575, %v4251, %v4255
      %v4258 = vshrl.u32 %v4104, 16
      %v4260 = vrot.slane %v4258, 4
      %v4261 = vshll.u32 %v4104, 16
      %v4263 = vrot.slane %v4261, 5
      %v4264 = vor.u32 %v4260, %v4263
      %v4265 = vrot.slane %v4264, 4
      %v4267 = vshll.u32 %v4105, 16
      %v4269 = vrot.slane %v4267, 5
      %v4270 = vsel %vm575, %v4265, %v4269
      %v4271 = vshrl.u32 %v4105, 16
      %v4273 = vrot.slane %v4271, 4
      %v4274 = vor.u32 %v4273, %v4269
      %v4275 = vrot.slane %v4274, 4
      %v4277 = vshll.u32 %v4106, 16
      %v4279 = vrot.slane %v4277, 5
      %v4280 = vsel %vm575, %v4275, %v4279
      %v4282 = vshrl.u32 %v4107, 16
      %v4284 = vrot.slane %v4282, 4
      %v4285 = vshll.u32 %v4107, 16
      %v4287 = vrot.slane %v4285, 5
      %v4288 = vor.u32 %v4284, %v4287
      %v4289 = vrot.slane %v4288, 4
      %v4291 = vshll.u32 %v4108, 16
      %v4293 = vrot.slane %v4291, 5
      %v4294 = vsel %vm575, %v4289, %v4293
      %v4295 = vshrl.u32 %v4108, 16
      %v4297 = vrot.slane %v4295, 4
      %v4298 = vor.u32 %v4297, %v4293
      %v4299 = vrot.slane %v4298, 4
      %v4301 = vshll.u32 %v4109, 16
      %v4303 = vrot.slane %v4301, 5
      %v4304 = vsel %vm575, %v4299, %v4303
      %v4306 = vshrl.u32 %v4110, 16
      %v4308 = vrot.slane %v4306, 4
      %v4309 = vshll.u32 %v4110, 16
      %v4311 = vrot.slane %v4309, 5
      %v4312 = vor.u32 %v4308, %v4311
      %v4313 = vrot.slane %v4312, 4
      %v4315 = vshll.u32 %v4111, 16
      %v4317 = vrot.slane %v4315, 5
      %v4318 = vsel %vm575, %v4313, %v4317
      %v4319 = vshrl.u32 %v4111, 16
      %v4321 = vrot.slane %v4319, 4
      %v4322 = vor.u32 %v4321, %v4317
      %v4323 = vrot.slane %v4322, 4
      %v4325 = vshll.u32 %v4112, 16
      %v4327 = vrot.slane %v4325, 5
      %v4328 = vsel %vm575, %v4323, %v4327
      %v4330 = vshrl.u32 %v4113, 16
      %v4332 = vrot.slane %v4330, 4
      %v4333 = vshll.u32 %v4113, 16
      %v4335 = vrot.slane %v4333, 5
      %v4336 = vor.u32 %v4332, %v4335
      %v4337 = vrot.slane %v4336, 4
      %v4339 = vshll.u32 %v4114, 16
      %v4341 = vrot.slane %v4339, 5
      %v4342 = vsel %vm575, %v4337, %v4341
      %v4343 = vshrl.u32 %v4114, 16
      %v4345 = vrot.slane %v4343, 4
      %v4346 = vor.u32 %v4345, %v4341
      %v4347 = vrot.slane %v4346, 4
      %v4349 = vshll.u32 %v4115, 16
      %v4351 = vrot.slane %v4349, 5
      %v4352 = vsel %vm575, %v4347, %v4351
      %v4354 = vshrl.u32 %v4116, 16
      %v4356 = vrot.slane %v4354, 4
      %v4357 = vshll.u32 %v4116, 16
      %v4359 = vrot.slane %v4357, 5
      %v4360 = vor.u32 %v4356, %v4359
      %v4361 = vrot.slane %v4360, 4
      %v4363 = vshll.u32 %v4117, 16
      %v4365 = vrot.slane %v4363, 5
      %v4366 = vsel %vm575, %v4361, %v4365
      %v4367 = vshrl.u32 %v4117, 16
      %v4369 = vrot.slane %v4367, 4
      %v4370 = vor.u32 %v4369, %v4365
      %v4371 = vrot.slane %v4370, 4
      %v4373 = vshll.u32 %v4118, 16
      %v4375 = vrot.slane %v4373, 5
      %v4376 = vsel %vm575, %v4371, %v4375
      %v4378 = vshrl.u32 %v4119, 16
      %v4380 = vrot.slane %v4378, 4
      %v4381 = vshll.u32 %v4119, 16
      %v4383 = vrot.slane %v4381, 5
      %v4384 = vor.u32 %v4380, %v4383
      %v4385 = vrot.slane %v4384, 4
      %v4387 = vshll.u32 %v4120, 16
      %v4389 = vrot.slane %v4387, 5
      %v4390 = vsel %vm575, %v4385, %v4389
      %v4391 = vshrl.u32 %v4120, 16
      %v4393 = vrot.slane %v4391, 4
      %v4394 = vor.u32 %v4393, %v4389
      %v4395 = vrot.slane %v4394, 4
      %v4397 = vshll.u32 %v4121, 16
      %v4399 = vrot.slane %v4397, 5
      %v4400 = vsel %vm575, %v4395, %v4399
      %v4402 = vshrl.u32 %v4122, 16
      %v4404 = vrot.slane %v4402, 4
      %v4405 = vshll.u32 %v4122, 16
      %v4407 = vrot.slane %v4405, 5
      %v4408 = vor.u32 %v4404, %v4407
      %v4409 = vrot.slane %v4408, 4
      %v4411 = vshll.u32 %v4123, 16
      %v4413 = vrot.slane %v4411, 5
      %v4414 = vsel %vm575, %v4409, %v4413
      %v4415 = vshrl.u32 %v4123, 16
      %v4417 = vrot.slane %v4415, 4
      %v4418 = vor.u32 %v4417, %v4413
      %v4419 = vrot.slane %v4418, 4
      %v4421 = vshll.u32 %v4124, 16
      %v4423 = vrot.slane %v4421, 5
      %v4424 = vsel %vm575, %v4419, %v4423
      %v4426 = vshrl.u32 %v4125, 16
      %v4428 = vrot.slane %v4426, 4
      %v4429 = vshll.u32 %v4125, 16
      %v4431 = vrot.slane %v4429, 5
      %v4432 = vor.u32 %v4428, %v4431
      %v4433 = vrot.slane %v4432, 4
      %v4435 = vshll.u32 %v4126, 16
      %v4437 = vrot.slane %v4435, 5
      %v4438 = vsel %vm575, %v4433, %v4437
      %v4439 = vshrl.u32 %v4126, 16
      %v4441 = vrot.slane %v4439, 4
      %v4442 = vor.u32 %v4441, %v4437
      %v4443 = vrot.slane %v4442, 4
      %v4445 = vshll.u32 %v4127, 16
      %v4447 = vrot.slane %v4445, 5
      %v4448 = vsel %vm575, %v4443, %v4447
      %v4450 = vshrl.u32 %v4128, 16
      %v4452 = vrot.slane %v4450, 4
      %v4453 = vshll.u32 %v4128, 16
      %v4455 = vrot.slane %v4453, 5
      %v4456 = vor.u32 %v4452, %v4455
      %v4457 = vrot.slane %v4456, 4
      %v4459 = vshll.u32 %v4129, 16
      %v4461 = vrot.slane %v4459, 5
      %v4462 = vsel %vm575, %v4457, %v4461
      %v4463 = vshrl.u32 %v4129, 16
      %v4465 = vrot.slane %v4463, 4
      %v4466 = vor.u32 %v4465, %v4461
      %v4467 = vrot.slane %v4466, 4
      %v4469 = vshll.u32 %v4130, 16
      %v4471 = vrot.slane %v4469, 5
      %v4472 = vsel %vm575, %v4467, %v4471
      %v4474 = vshrl.u32 %v4131, 16
      %v4476 = vrot.slane %v4474, 4
      %v4477 = vshll.u32 %v4131, 16
      %v4479 = vrot.slane %v4477, 5
      %v4480 = vor.u32 %v4476, %v4479
      %v4481 = vrot.slane %v4480, 4
      %v4483 = vshll.u32 %v4132, 16
      %v4485 = vrot.slane %v4483, 5
      %v4486 = vsel %vm575, %v4481, %v4485
      %v4487 = vshrl.u32 %v4132, 16
      %v4489 = vrot.slane %v4487, 4
      %v4490 = vor.u32 %v4489, %v4485
      %v4491 = vrot.slane %v4490, 4
      %v4493 = vshll.u32 %v4133, 16
      %v4495 = vrot.slane %v4493, 5
      %v4496 = vsel %vm575, %v4491, %v4495
      %v4498 = vshrl.u32 %v4134, 16
      %v4500 = vrot.slane %v4498, 4
      %v4501 = vshll.u32 %v4134, 16
      %v4503 = vrot.slane %v4501, 5
      %v4504 = vor.u32 %v4500, %v4503
      %v4505 = vrot.slane %v4504, 4
      %v4507 = vshll.u32 %v4135, 16
      %v4509 = vrot.slane %v4507, 5
      %v4510 = vsel %vm575, %v4505, %v4509
      %v4511 = vshrl.u32 %v4135, 16
      %v4513 = vrot.slane %v4511, 4
      %v4514 = vor.u32 %v4513, %v4509
      %v4515 = vrot.slane %v4514, 4
      %v4517 = vshll.u32 %v4136, 16
      %v4519 = vrot.slane %v4517, 5
      %v4520 = vsel %vm575, %v4515, %v4519
      %s4521 = scalar_lea.vmem %s1, 14
      %v4522 = vld [vmem:[%s4521] sm:$0x3]
      %v4523 = vunpack.c.l.b16 %v4150
      %v4524 = vunpack.c.l.b16 %v4160
      %v4525 = vunpack.c.l.b16 %v4174
      %v4526 = vunpack.c.l.b16 %v4184
      %v4527 = vunpack.c.l.b16 %v4198
      %v4528 = vunpack.c.l.b16 %v4208
      %v4529 = vunpack.c.l.b16 %v4222
      %v4530 = vunpack.c.l.b16 %v4232
      %v4531 = vunpack.c.l.b16 %v4246
      %v4532 = vunpack.c.l.b16 %v4256
      %v4533 = vunpack.c.l.b16 %v4270
      %v4534 = vunpack.c.l.b16 %v4280
      %v4535 = vunpack.c.l.b16 %v4294
      %v4536 = vunpack.c.l.b16 %v4304
      %v4537 = vunpack.c.l.b16 %v4318
      %v4538 = vunpack.c.l.b16 %v4328
      %v4539 = vunpack.c.l.b16 %v4342
      %v4540 = vunpack.c.l.b16 %v4352
      %v4541 = vunpack.c.l.b16 %v4366
      %v4542 = vunpack.c.l.b16 %v4376
      %v4543 = vunpack.c.l.b16 %v4390
      %v4544 = vunpack.c.l.b16 %v4400
      %v4545 = vunpack.c.l.b16 %v4414
      %v4546 = vunpack.c.l.b16 %v4424
      %v4547 = vunpack.c.l.b16 %v4438
      %v4548 = vunpack.c.l.b16 %v4448
      %v4549 = vunpack.c.l.b16 %v4462
      %v4550 = vunpack.c.l.b16 %v4472
      %v4551 = vunpack.c.l.b16 %v4486
      %v4552 = vunpack.c.l.b16 %v4496
      %v4553 = vunpack.c.l.b16 %v4510
      %v4554 = vunpack.c.l.b16 %v4520
      %v4555 = vpack.c.b16 %v4524, %v4523
      %v4556 = vpack.c.b16 %v4526, %v4525
      %v4557 = vpack.c.b16 %v4528, %v4527
      %v4558 = vpack.c.b16 %v4530, %v4529
      %v4559 = vpack.c.b16 %v4532, %v4531
      %v4560 = vpack.c.b16 %v4534, %v4533
      %v4561 = vpack.c.b16 %v4536, %v4535
      %v4562 = vpack.c.b16 %v4538, %v4537
      %v4563 = vpack.c.b16 %v4540, %v4539
      %v4564 = vpack.c.b16 %v4542, %v4541
      %v4565 = vpack.c.b16 %v4544, %v4543
      %v4566 = vpack.c.b16 %v4546, %v4545
      %v4567 = vpack.c.b16 %v4548, %v4547
      %v4568 = vpack.c.b16 %v4550, %v4549
      %v4569 = vpack.c.b16 %v4552, %v4551
      %v4570 = vpack.c.b16 %v4554, %v4553
      %v4572 = vsel %vm279, %v4555, 0
      %v4575 = vsel %vm279, %v4556, 0
      %v4578 = vsel %vm279, %v4557, 0
      %v4581 = vsel %vm279, %v4558, 0
      %v4584 = vsel %vm279, %v4559, 0
      %v4587 = vsel %vm279, %v4560, 0
      %v4590 = vsel %vm279, %v4561, 0
      %v4593 = vsel %vm279, %v4562, 0
      %v4596 = vsel %vm279, %v4563, 0
      %v4599 = vsel %vm279, %v4564, 0
      %v4602 = vsel %vm279, %v4565, 0
      %v4605 = vsel %vm279, %v4566, 0
      %v4608 = vsel %vm279, %v4567, 0
      %v4611 = vsel %vm279, %v4568, 0
      %v4614 = vsel %vm279, %v4569, 0
      %v4617 = vsel %vm279, %v4570, 0
      %v4620 = vsel %vm328, %v4522, 0
      %4622 = vmatprep.subr.bf16.mxu0 0
      %4623 = vmatpush1.bf16.msra.mxu0 0
      %4624 = vmatprep.subr.bf16.mxu0 0
      %4625 = vmatpush1.bf16.msra.mxu0 0
      %4626 = vmatprep.subr.bf16.mxu0 0
      %4627 = vmatpush1.bf16.msra.mxu0 0
      %4628 = vmatprep.subr.bf16.mxu0 0
      %4629 = vmatpush1.bf16.msra.mxu0 0
      %4630 = vmatprep.subr.bf16.mxu0 0
      %4631 = vmatpush1.bf16.msra.mxu0 0
      %4632 = vmatprep.subr.bf16.mxu0 0
      %4633 = vmatpush1.bf16.msra.mxu0 0
      %4634 = vmatprep.subr.bf16.mxu0 0
      %4635 = vmatpush1.bf16.msra.mxu0 0
      %4636 = vmatprep.subr.bf16.mxu0 0
      %4637 = vmatpush1.bf16.msra.mxu0 %v4620
      %4638 = vmatprep.subr.bf16.mxu0 0
      %4639 = vmatpush2.bf16.msra.mxu0 0
      %4640 = vmatprep.subr.bf16.mxu0 0
      %4641 = vmatpush2.bf16.msra.mxu0 0
      %4642 = vmatprep.subr.bf16.mxu0 0
      %4643 = vmatpush2.bf16.msra.mxu0 0
      %4644 = vmatprep.subr.bf16.mxu0 0
      %4645 = vmatpush2.bf16.msra.mxu0 0
      %4646 = vmatprep.subr.bf16.mxu0 0
      %4647 = vmatpush2.bf16.msra.mxu0 0
      %4648 = vmatprep.subr.bf16.mxu0 0
      %4649 = vmatpush2.bf16.msra.mxu0 0
      %4650 = vmatprep.subr.bf16.mxu0 0
      %4651 = vmatpush2.bf16.msra.mxu0 0
      %4652 = vmatprep.subr.bf16.mxu0 0
      %4653 = vmatpush2.bf16.msra.mxu0 0
      %4654 = vmatprep.mubr.bf16.mxu0 0
      %4655 = vmatmul.mubr.bf16.gmra.mxu0 %v4572
      %v4656 = vpop.f32.mrf.mxu0
      %v4657 = vadd.f32 0.0, %v4656
      %v4658 = vpop.f32.mrf.mxu0
      %v4659 = vpop.f32.mrf.mxu0
      %v4660 = vadd.f32 0.0, %v4659
      %v4661 = vpop.f32.mrf.mxu0
      %4662 = vmatprep.mubr.bf16.mxu0 0
      %4663 = vmatmul.mubr.bf16.gmra.mxu0 %v4575
      %v4664 = vpop.f32.mrf.mxu0
      %v4665 = vadd.f32 0.0, %v4664
      %v4666 = vpop.f32.mrf.mxu0
      %v4667 = vpop.f32.mrf.mxu0
      %v4668 = vadd.f32 0.0, %v4667
      %v4669 = vpop.f32.mrf.mxu0
      %4670 = vmatprep.mubr.bf16.mxu0 0
      %4671 = vmatmul.mubr.bf16.gmra.mxu0 %v4578
      %v4672 = vpop.f32.mrf.mxu0
      %v4673 = vadd.f32 0.0, %v4672
      %v4674 = vpop.f32.mrf.mxu0
      %v4675 = vpop.f32.mrf.mxu0
      %v4676 = vadd.f32 0.0, %v4675
      %v4677 = vpop.f32.mrf.mxu0
      %4678 = vmatprep.mubr.bf16.mxu0 0
      %4679 = vmatmul.mubr.bf16.gmra.mxu0 %v4581
      %v4680 = vpop.f32.mrf.mxu0
      %v4681 = vadd.f32 0.0, %v4680
      %v4682 = vpop.f32.mrf.mxu0
      %v4683 = vpop.f32.mrf.mxu0
      %v4684 = vadd.f32 0.0, %v4683
      %v4685 = vpop.f32.mrf.mxu0
      %4686 = vmatprep.mubr.bf16.mxu0 0
      %4687 = vmatmul.mubr.bf16.gmra.mxu0 %v4584
      %v4688 = vpop.f32.mrf.mxu0
      %v4689 = vadd.f32 0.0, %v4688
      %v4690 = vpop.f32.mrf.mxu0
      %v4691 = vpop.f32.mrf.mxu0
      %v4692 = vadd.f32 0.0, %v4691
      %v4693 = vpop.f32.mrf.mxu0
      %4694 = vmatprep.mubr.bf16.mxu0 0
      %4695 = vmatmul.mubr.bf16.gmra.mxu0 %v4587
      %v4696 = vpop.f32.mrf.mxu0
      %v4697 = vadd.f32 0.0, %v4696
      %v4698 = vpop.f32.mrf.mxu0
      %v4699 = vpop.f32.mrf.mxu0
      %v4700 = vadd.f32 0.0, %v4699
      %v4701 = vpop.f32.mrf.mxu0
      %4702 = vmatprep.mubr.bf16.mxu0 0
      %4703 = vmatmul.mubr.bf16.gmra.mxu0 %v4590
      %v4704 = vpop.f32.mrf.mxu0
      %v4705 = vadd.f32 0.0, %v4704
      %v4706 = vpop.f32.mrf.mxu0
      %v4707 = vpop.f32.mrf.mxu0
      %v4708 = vadd.f32 0.0, %v4707
      %v4709 = vpop.f32.mrf.mxu0
      %4710 = vmatprep.mubr.bf16.mxu0 0
      %4711 = vmatmul.mubr.bf16.gmra.mxu0 %v4593
      %v4712 = vpop.f32.mrf.mxu0
      %v4713 = vadd.f32 0.0, %v4712
      %v4714 = vpop.f32.mrf.mxu0
      %v4715 = vpop.f32.mrf.mxu0
      %v4716 = vadd.f32 0.0, %v4715
      %v4717 = vpop.f32.mrf.mxu0
      %4718 = vmatprep.mubr.bf16.mxu0 0
      %4719 = vmatmul.mubr.bf16.gmra.mxu0 %v4596
      %v4720 = vpop.f32.mrf.mxu0
      %v4721 = vadd.f32 0.0, %v4720
      %v4722 = vpop.f32.mrf.mxu0
      %v4723 = vpop.f32.mrf.mxu0
      %v4724 = vadd.f32 0.0, %v4723
      %v4725 = vpop.f32.mrf.mxu0
      %4726 = vmatprep.mubr.bf16.mxu0 0
      %4727 = vmatmul.mubr.bf16.gmra.mxu0 %v4599
      %v4728 = vpop.f32.mrf.mxu0
      %v4729 = vadd.f32 0.0, %v4728
      %v4730 = vpop.f32.mrf.mxu0
      %v4731 = vpop.f32.mrf.mxu0
      %v4732 = vadd.f32 0.0, %v4731
      %v4733 = vpop.f32.mrf.mxu0
      %4734 = vmatprep.mubr.bf16.mxu0 0
      %4735 = vmatmul.mubr.bf16.gmra.mxu0 %v4602
      %v4736 = vpop.f32.mrf.mxu0
      %v4737 = vadd.f32 0.0, %v4736
      %v4738 = vpop.f32.mrf.mxu0
      %v4739 = vpop.f32.mrf.mxu0
      %v4740 = vadd.f32 0.0, %v4739
      %v4741 = vpop.f32.mrf.mxu0
      %4742 = vmatprep.mubr.bf16.mxu0 0
      %4743 = vmatmul.mubr.bf16.gmra.mxu0 %v4605
      %v4744 = vpop.f32.mrf.mxu0
      %v4745 = vadd.f32 0.0, %v4744
      %v4746 = vpop.f32.mrf.mxu0
      %v4747 = vpop.f32.mrf.mxu0
      %v4748 = vadd.f32 0.0, %v4747
      %v4749 = vpop.f32.mrf.mxu0
      %4750 = vmatprep.mubr.bf16.mxu0 0
      %4751 = vmatmul.mubr.bf16.gmra.mxu0 %v4608
      %v4752 = vpop.f32.mrf.mxu0
      %v4753 = vadd.f32 0.0, %v4752
      %v4754 = vpop.f32.mrf.mxu0
      %v4755 = vpop.f32.mrf.mxu0
      %v4756 = vadd.f32 0.0, %v4755
      %v4757 = vpop.f32.mrf.mxu0
      %4758 = vmatprep.mubr.bf16.mxu0 0
      %4759 = vmatmul.mubr.bf16.gmra.mxu0 %v4611
      %v4760 = vpop.f32.mrf.mxu0
      %v4761 = vadd.f32 0.0, %v4760
      %v4762 = vpop.f32.mrf.mxu0
      %v4763 = vpop.f32.mrf.mxu0
      %v4764 = vadd.f32 0.0, %v4763
      %v4765 = vpop.f32.mrf.mxu0
      %4766 = vmatprep.mubr.bf16.mxu0 0
      %4767 = vmatmul.mubr.bf16.gmra.mxu0 %v4614
      %v4768 = vpop.f32.mrf.mxu0
      %v4769 = vadd.f32 0.0, %v4768
      %v4770 = vpop.f32.mrf.mxu0
      %v4771 = vpop.f32.mrf.mxu0
      %v4772 = vadd.f32 0.0, %v4771
      %v4773 = vpop.f32.mrf.mxu0
      %4774 = vmatprep.mubr.bf16.mxu0 0
      %4775 = vmatmul.mubr.bf16.gmra.mxu0 %v4617
      %v4776 = vpop.f32.mrf.mxu0
      %v4777 = vadd.f32 0.0, %v4776
      %v4778 = vpop.f32.mrf.mxu0
      %v4779 = vpop.f32.mrf.mxu0
      %v4780 = vadd.f32 0.0, %v4779
      %v4781 = vpop.f32.mrf.mxu0
      %4782 = vdwg.mxu0
      %v4783 = vld [vmem:[#allocation2] sm:$0xff]
      %v4784 = vld [vmem:[#allocation2 + $0x8] sm:$0xff]
      %v4785 = vld [vmem:[#allocation2 + $0x10] sm:$0xff]
      %v4786 = vld [vmem:[#allocation2 + $0x18] sm:$0xff]
      %v4787 = vld [vmem:[#allocation2 + $0x20] sm:$0xff]
      %v4788 = vld [vmem:[#allocation2 + $0x28] sm:$0xff]
      %v4789 = vld [vmem:[#allocation2 + $0x30] sm:$0xff]
      %v4790 = vld [vmem:[#allocation2 + $0x38] sm:$0xff]
      %v4791 = vld [vmem:[#allocation2 + $0x40] sm:$0xff]
      %v4792 = vld [vmem:[#allocation2 + $0x48] sm:$0xff]
      %v4793 = vld [vmem:[#allocation2 + $0x50] sm:$0xff]
      %v4794 = vld [vmem:[#allocation2 + $0x58] sm:$0xff]
      %v4795 = vld [vmem:[#allocation2 + $0x60] sm:$0xff]
      %v4796 = vld [vmem:[#allocation2 + $0x68] sm:$0xff]
      %v4797 = vld [vmem:[#allocation2 + $0x70] sm:$0xff]
      %v4798 = vld [vmem:[#allocation2 + $0x78] sm:$0xff]
      %v4799 = vld [vmem:[#allocation2 + $0x80] sm:$0xff]
      %v4800 = vld [vmem:[#allocation2 + $0x88] sm:$0xff]
      %v4801 = vld [vmem:[#allocation2 + $0x90] sm:$0xff]
      %v4802 = vld [vmem:[#allocation2 + $0x98] sm:$0xff]
      %v4803 = vld [vmem:[#allocation2 + $0xa0] sm:$0xff]
      %v4804 = vld [vmem:[#allocation2 + $0xa8] sm:$0xff]
      %v4805 = vld [vmem:[#allocation2 + $0xb0] sm:$0xff]
      %v4806 = vld [vmem:[#allocation2 + $0xb8] sm:$0xff]
      %v4807 = vld [vmem:[#allocation2 + $0xc0] sm:$0xff]
      %v4808 = vld [vmem:[#allocation2 + $0xc8] sm:$0xff]
      %v4809 = vld [vmem:[#allocation2 + $0xd0] sm:$0xff]
      %v4810 = vld [vmem:[#allocation2 + $0xd8] sm:$0xff]
      %v4811 = vld [vmem:[#allocation2 + $0xe0] sm:$0xff]
      %v4812 = vld [vmem:[#allocation2 + $0xe8] sm:$0xff]
      %v4813 = vld [vmem:[#allocation2 + $0xf0] sm:$0xff]
      %v4814 = vld [vmem:[#allocation2 + $0xf8] sm:$0xff]
      %v4815 = vadd.f32 %v4783, %v4657
      %v4816 = vadd.f32 %v4784, %v4660
      %v4817 = vadd.f32 %v4785, %v4665
      %v4818 = vadd.f32 %v4786, %v4668
      %v4819 = vadd.f32 %v4787, %v4673
      %v4820 = vadd.f32 %v4788, %v4676
      %v4821 = vadd.f32 %v4789, %v4681
      %v4822 = vadd.f32 %v4790, %v4684
      %v4823 = vadd.f32 %v4791, %v4689
      %v4824 = vadd.f32 %v4792, %v4692
      %v4825 = vadd.f32 %v4793, %v4697
      %v4826 = vadd.f32 %v4794, %v4700
      %v4827 = vadd.f32 %v4795, %v4705
      %v4828 = vadd.f32 %v4796, %v4708
      %v4829 = vadd.f32 %v4797, %v4713
      %v4830 = vadd.f32 %v4798, %v4716
      %v4831 = vadd.f32 %v4799, %v4721
      %v4832 = vadd.f32 %v4800, %v4724
      %v4833 = vadd.f32 %v4801, %v4729
      %v4834 = vadd.f32 %v4802, %v4732
      %v4835 = vadd.f32 %v4803, %v4737
      %v4836 = vadd.f32 %v4804, %v4740
      %v4837 = vadd.f32 %v4805, %v4745
      %v4838 = vadd.f32 %v4806, %v4748
      %v4839 = vadd.f32 %v4807, %v4753
      %v4840 = vadd.f32 %v4808, %v4756
      %v4841 = vadd.f32 %v4809, %v4761
      %v4842 = vadd.f32 %v4810, %v4764
      %v4843 = vadd.f32 %v4811, %v4769
      %v4844 = vadd.f32 %v4812, %v4772
      %v4845 = vadd.f32 %v4813, %v4777
      %v4846 = vadd.f32 %v4814, %v4780
      %4847 = vst [vmem:[#allocation2] sm:$0xff] %v4815
      %4848 = vst [vmem:[#allocation2 + $0x8] sm:$0xff] %v4816
      %4849 = vst [vmem:[#allocation2 + $0x10] sm:$0xff] %v4817
      %4850 = vst [vmem:[#allocation2 + $0x18] sm:$0xff] %v4818
      %4851 = vst [vmem:[#allocation2 + $0x20] sm:$0xff] %v4819
      %4852 = vst [vmem:[#allocation2 + $0x28] sm:$0xff] %v4820
      %4853 = vst [vmem:[#allocation2 + $0x30] sm:$0xff] %v4821
      %4854 = vst [vmem:[#allocation2 + $0x38] sm:$0xff] %v4822
      %4855 = vst [vmem:[#allocation2 + $0x40] sm:$0xff] %v4823
      %4856 = vst [vmem:[#allocation2 + $0x48] sm:$0xff] %v4824
      %4857 = vst [vmem:[#allocation2 + $0x50] sm:$0xff] %v4825
      %4858 = vst [vmem:[#allocation2 + $0x58] sm:$0xff] %v4826
      %4859 = vst [vmem:[#allocation2 + $0x60] sm:$0xff] %v4827
      %4860 = vst [vmem:[#allocation2 + $0x68] sm:$0xff] %v4828
      %4861 = vst [vmem:[#allocation2 + $0x70] sm:$0xff] %v4829
      %4862 = vst [vmem:[#allocation2 + $0x78] sm:$0xff] %v4830
      %4863 = vst [vmem:[#allocation2 + $0x80] sm:$0xff] %v4831
      %4864 = vst [vmem:[#allocation2 + $0x88] sm:$0xff] %v4832
      %4865 = vst [vmem:[#allocation2 + $0x90] sm:$0xff] %v4833
      %4866 = vst [vmem:[#allocation2 + $0x98] sm:$0xff] %v4834
      %4867 = vst [vmem:[#allocation2 + $0xa0] sm:$0xff] %v4835
      %4868 = vst [vmem:[#allocation2 + $0xa8] sm:$0xff] %v4836
      %4869 = vst [vmem:[#allocation2 + $0xb0] sm:$0xff] %v4837
      %4870 = vst [vmem:[#allocation2 + $0xb8] sm:$0xff] %v4838
      %4871 = vst [vmem:[#allocation2 + $0xc0] sm:$0xff] %v4839
      %4872 = vst [vmem:[#allocation2 + $0xc8] sm:$0xff] %v4840
      %4873 = vst [vmem:[#allocation2 + $0xd0] sm:$0xff] %v4841
      %4874 = vst [vmem:[#allocation2 + $0xd8] sm:$0xff] %v4842
      %4875 = vst [vmem:[#allocation2 + $0xe0] sm:$0xff] %v4843
      %4876 = vst [vmem:[#allocation2 + $0xe8] sm:$0xff] %v4844
      %4877 = vst [vmem:[#allocation2 + $0xf0] sm:$0xff] %v4845
      %4878 = vst [vmem:[#allocation2 + $0xf8] sm:$0xff] %v4846
      %v4879 = vld [vmem:[%s3666] sm:$0xe]
      %v4880 = vld [vmem:[%s3666 + $0x4] sm:$0xf]
      %v4881 = vld [vmem:[%s3666 + $0x8] sm:$0x1]
      %v4882 = vld [vmem:[%s3666 + $0xc] sm:$0xe]
      %v4883 = vld [vmem:[%s3666 + $0x10] sm:$0xf]
      %v4884 = vld [vmem:[%s3666 + $0x14] sm:$0x1]
      %v4885 = vld [vmem:[%s3666 + $0x18] sm:$0xe]
      %v4886 = vld [vmem:[%s3666 + $0x1c] sm:$0xf]
      %v4887 = vld [vmem:[%s3666 + $0x20] sm:$0x1]
      %v4888 = vld [vmem:[%s3666 + $0x24] sm:$0xe]
      %v4889 = vld [vmem:[%s3666 + $0x28] sm:$0xf]
      %v4890 = vld [vmem:[%s3666 + $0x2c] sm:$0x1]
      %v4891 = vld [vmem:[%s3666 + $0x30] sm:$0xe]
      %v4892 = vld [vmem:[%s3666 + $0x34] sm:$0xf]
      %v4893 = vld [vmem:[%s3666 + $0x38] sm:$0x1]
      %v4894 = vld [vmem:[%s3666 + $0x3c] sm:$0xe]
      %v4895 = vld [vmem:[%s3666 + $0x40] sm:$0xf]
      %v4896 = vld [vmem:[%s3666 + $0x44] sm:$0x1]
      %v4897 = vld [vmem:[%s3666 + $0x48] sm:$0xe]
      %v4898 = vld [vmem:[%s3666 + $0x4c] sm:$0xf]
      %v4899 = vld [vmem:[%s3666 + $0x50] sm:$0x1]
      %v4900 = vld [vmem:[%s3666 + $0x54] sm:$0xe]
      %v4901 = vld [vmem:[%s3666 + $0x58] sm:$0xf]
      %v4902 = vld [vmem:[%s3666 + $0x5c] sm:$0x1]
      %v4903 = vld [vmem:[%s3666 + $0x60] sm:$0xe]
      %v4904 = vld [vmem:[%s3666 + $0x64] sm:$0xf]
      %v4905 = vld [vmem:[%s3666 + $0x68] sm:$0x1]
      %v4906 = vld [vmem:[%s3666 + $0x6c] sm:$0xe]
      %v4907 = vld [vmem:[%s3666 + $0x70] sm:$0xf]
      %v4908 = vld [vmem:[%s3666 + $0x74] sm:$0x1]
      %v4909 = vld [vmem:[%s3666 + $0x78] sm:$0xe]
      %v4910 = vld [vmem:[%s3666 + $0x7c] sm:$0xf]
      %v4911 = vld [vmem:[%s3666 + $0x80] sm:$0x1]
      %v4912 = vld [vmem:[%s3666 + $0x84] sm:$0xe]
      %v4913 = vld [vmem:[%s3666 + $0x88] sm:$0xf]
      %v4914 = vld [vmem:[%s3666 + $0x8c] sm:$0x1]
      %v4915 = vld [vmem:[%s3666 + $0x90] sm:$0xe]
      %v4916 = vld [vmem:[%s3666 + $0x94] sm:$0xf]
      %v4917 = vld [vmem:[%s3666 + $0x98] sm:$0x1]
      %v4918 = vld [vmem:[%s3666 + $0x9c] sm:$0xe]
      %v4919 = vld [vmem:[%s3666 + $0xa0] sm:$0xf]
      %v4920 = vld [vmem:[%s3666 + $0xa4] sm:$0x1]
      %v4921 = vld [vmem:[%s3666 + $0xa8] sm:$0xe]
      %v4922 = vld [vmem:[%s3666 + $0xac] sm:$0xf]
      %v4923 = vld [vmem:[%s3666 + $0xb0] sm:$0x1]
      %v4924 = vld [vmem:[%s3666 + $0xb4] sm:$0xe]
      %v4925 = vld [vmem:[%s3666 + $0xb8] sm:$0xf]
      %v4926 = vld [vmem:[%s3666 + $0xbc] sm:$0x1]
      %v4975 = vrot.slane %v4879, 5
      %v4976 = vrot.slane %v4975, 4
      %v4977 = vrot.slane %v4880, 5
      %v4978 = vsel %vm1416, %v4976, %v4977
      %v4979 = vrot.slane %v4977, 4
      %v4980 = vrot.slane %v4881, 5
      %v4981 = vsel %vm1416, %v4979, %v4980
      %v4982 = vrot.slane %v4882, 5
      %v4983 = vrot.slane %v4982, 4
      %v4984 = vrot.slane %v4883, 5
      %v4985 = vsel %vm1416, %v4983, %v4984
      %v4986 = vrot.slane %v4984, 4
      %v4987 = vrot.slane %v4884, 5
      %v4988 = vsel %vm1416, %v4986, %v4987
      %v4989 = vrot.slane %v4885, 5
      %v4990 = vrot.slane %v4989, 4
      %v4991 = vrot.slane %v4886, 5
      %v4992 = vsel %vm1416, %v4990, %v4991
      %v4993 = vrot.slane %v4991, 4
      %v4994 = vrot.slane %v4887, 5
      %v4995 = vsel %vm1416, %v4993, %v4994
      %v4996 = vrot.slane %v4888, 5
      %v4997 = vrot.slane %v4996, 4
      %v4998 = vrot.slane %v4889, 5
      %v4999 = vsel %vm1416, %v4997, %v4998
      %v5000 = vrot.slane %v4998, 4
      %v5001 = vrot.slane %v4890, 5
      %v5002 = vsel %vm1416, %v5000, %v5001
      %v5003 = vrot.slane %v4891, 5
      %v5004 = vrot.slane %v5003, 4
      %v5005 = vrot.slane %v4892, 5
      %v5006 = vsel %vm1416, %v5004, %v5005
      %v5007 = vrot.slane %v5005, 4
      %v5008 = vrot.slane %v4893, 5
      %v5009 = vsel %vm1416, %v5007, %v5008
      %v5010 = vrot.slane %v4894, 5
      %v5011 = vrot.slane %v5010, 4
      %v5012 = vrot.slane %v4895, 5
      %v5013 = vsel %vm1416, %v5011, %v5012
      %v5014 = vrot.slane %v5012, 4
      %v5015 = vrot.slane %v4896, 5
      %v5016 = vsel %vm1416, %v5014, %v5015
      %v5017 = vrot.slane %v4897, 5
      %v5018 = vrot.slane %v5017, 4
      %v5019 = vrot.slane %v4898, 5
      %v5020 = vsel %vm1416, %v5018, %v5019
      %v5021 = vrot.slane %v5019, 4
      %v5022 = vrot.slane %v4899, 5
      %v5023 = vsel %vm1416, %v5021, %v5022
      %v5024 = vrot.slane %v4900, 5
      %v5025 = vrot.slane %v5024, 4
      %v5026 = vrot.slane %v4901, 5
      %v5027 = vsel %vm1416, %v5025, %v5026
      %v5028 = vrot.slane %v5026, 4
      %v5029 = vrot.slane %v4902, 5
      %v5030 = vsel %vm1416, %v5028, %v5029
      %v5031 = vrot.slane %v4903, 5
      %v5032 = vrot.slane %v5031, 4
      %v5033 = vrot.slane %v4904, 5
      %v5034 = vsel %vm1416, %v5032, %v5033
      %v5035 = vrot.slane %v5033, 4
      %v5036 = vrot.slane %v4905, 5
      %v5037 = vsel %vm1416, %v5035, %v5036
      %v5038 = vrot.slane %v4906, 5
      %v5039 = vrot.slane %v5038, 4
      %v5040 = vrot.slane %v4907, 5
      %v5041 = vsel %vm1416, %v5039, %v5040
      %v5042 = vrot.slane %v5040, 4
      %v5043 = vrot.slane %v4908, 5
      %v5044 = vsel %vm1416, %v5042, %v5043
      %v5045 = vrot.slane %v4909, 5
      %v5046 = vrot.slane %v5045, 4
      %v5047 = vrot.slane %v4910, 5
      %v5048 = vsel %vm1416, %v5046, %v5047
      %v5049 = vrot.slane %v5047, 4
      %v5050 = vrot.slane %v4911, 5
      %v5051 = vsel %vm1416, %v5049, %v5050
      %v5052 = vrot.slane %v4912, 5
      %v5053 = vrot.slane %v5052, 4
      %v5054 = vrot.slane %v4913, 5
      %v5055 = vsel %vm1416, %v5053, %v5054
      %v5056 = vrot.slane %v5054, 4
      %v5057 = vrot.slane %v4914, 5
      %v5058 = vsel %vm1416, %v5056, %v5057
      %v5059 = vrot.slane %v4915, 5
      %v5060 = vrot.slane %v5059, 4
      %v5061 = vrot.slane %v4916, 5
      %v5062 = vsel %vm1416, %v5060, %v5061
      %v5063 = vrot.slane %v5061, 4
      %v5064 = vrot.slane %v4917, 5
      %v5065 = vsel %vm1416, %v5063, %v5064
      %v5066 = vrot.slane %v4918, 5
      %v5067 = vrot.slane %v5066, 4
      %v5068 = vrot.slane %v4919, 5
      %v5069 = vsel %vm1416, %v5067, %v5068
      %v5070 = vrot.slane %v5068, 4
      %v5071 = vrot.slane %v4920, 5
      %v5072 = vsel %vm1416, %v5070, %v5071
      %v5073 = vrot.slane %v4921, 5
      %v5074 = vrot.slane %v5073, 4
      %v5075 = vrot.slane %v4922, 5
      %v5076 = vsel %vm1416, %v5074, %v5075
      %v5077 = vrot.slane %v5075, 4
      %v5078 = vrot.slane %v4923, 5
      %v5079 = vsel %vm1416, %v5077, %v5078
      %v5080 = vrot.slane %v4924, 5
      %v5081 = vrot.slane %v5080, 4
      %v5082 = vrot.slane %v4925, 5
      %v5083 = vsel %vm1416, %v5081, %v5082
      %v5084 = vrot.slane %v5082, 4
      %v5085 = vrot.slane %v4926, 5
      %v5086 = vsel %vm1416, %v5084, %v5085
      %s5087 = scalar_lea.vmem %s1, 16
      %v5088 = vld [vmem:[%s5087] sm:$0x3]
      %v5089 = vunpack.c.l.b16 %v4978
      %v5090 = vunpack.c.l.b16 %v4981
      %v5091 = vunpack.c.l.b16 %v4985
      %v5092 = vunpack.c.l.b16 %v4988
      %v5093 = vunpack.c.l.b16 %v4992
      %v5094 = vunpack.c.l.b16 %v4995
      %v5095 = vunpack.c.l.b16 %v4999
      %v5096 = vunpack.c.l.b16 %v5002
      %v5097 = vunpack.c.l.b16 %v5006
      %v5098 = vunpack.c.l.b16 %v5009
      %v5099 = vunpack.c.l.b16 %v5013
      %v5100 = vunpack.c.l.b16 %v5016
      %v5101 = vunpack.c.l.b16 %v5020
      %v5102 = vunpack.c.l.b16 %v5023
      %v5103 = vunpack.c.l.b16 %v5027
      %v5104 = vunpack.c.l.b16 %v5030
      %v5105 = vunpack.c.l.b16 %v5034
      %v5106 = vunpack.c.l.b16 %v5037
      %v5107 = vunpack.c.l.b16 %v5041
      %v5108 = vunpack.c.l.b16 %v5044
      %v5109 = vunpack.c.l.b16 %v5048
      %v5110 = vunpack.c.l.b16 %v5051
      %v5111 = vunpack.c.l.b16 %v5055
      %v5112 = vunpack.c.l.b16 %v5058
      %v5113 = vunpack.c.l.b16 %v5062
      %v5114 = vunpack.c.l.b16 %v5065
      %v5115 = vunpack.c.l.b16 %v5069
      %v5116 = vunpack.c.l.b16 %v5072
      %v5117 = vunpack.c.l.b16 %v5076
      %v5118 = vunpack.c.l.b16 %v5079
      %v5119 = vunpack.c.l.b16 %v5083
      %v5120 = vunpack.c.l.b16 %v5086
      %v5121 = vpack.c.b16 %v5090, %v5089
      %v5122 = vpack.c.b16 %v5092, %v5091
      %v5123 = vpack.c.b16 %v5094, %v5093
      %v5124 = vpack.c.b16 %v5096, %v5095
      %v5125 = vpack.c.b16 %v5098, %v5097
      %v5126 = vpack.c.b16 %v5100, %v5099
      %v5127 = vpack.c.b16 %v5102, %v5101
      %v5128 = vpack.c.b16 %v5104, %v5103
      %v5129 = vpack.c.b16 %v5106, %v5105
      %v5130 = vpack.c.b16 %v5108, %v5107
      %v5131 = vpack.c.b16 %v5110, %v5109
      %v5132 = vpack.c.b16 %v5112, %v5111
      %v5133 = vpack.c.b16 %v5114, %v5113
      %v5134 = vpack.c.b16 %v5116, %v5115
      %v5135 = vpack.c.b16 %v5118, %v5117
      %v5136 = vpack.c.b16 %v5120, %v5119
      %v5138 = vsel %vm279, %v5121, 0
      %v5141 = vsel %vm279, %v5122, 0
      %v5144 = vsel %vm279, %v5123, 0
      %v5147 = vsel %vm279, %v5124, 0
      %v5150 = vsel %vm279, %v5125, 0
      %v5153 = vsel %vm279, %v5126, 0
      %v5156 = vsel %vm279, %v5127, 0
      %v5159 = vsel %vm279, %v5128, 0
      %v5162 = vsel %vm279, %v5129, 0
      %v5165 = vsel %vm279, %v5130, 0
      %v5168 = vsel %vm279, %v5131, 0
      %v5171 = vsel %vm279, %v5132, 0
      %v5174 = vsel %vm279, %v5133, 0
      %v5177 = vsel %vm279, %v5134, 0
      %v5180 = vsel %vm279, %v5135, 0
      %v5183 = vsel %vm279, %v5136, 0
      %v5186 = vsel %vm328, %v5088, 0
      %5188 = vmatprep.subr.bf16.mxu0 0
      %5189 = vmatpush1.bf16.msra.mxu0 0
      %5190 = vmatprep.subr.bf16.mxu0 0
      %5191 = vmatpush1.bf16.msra.mxu0 0
      %5192 = vmatprep.subr.bf16.mxu0 0
      %5193 = vmatpush1.bf16.msra.mxu0 0
      %5194 = vmatprep.subr.bf16.mxu0 0
      %5195 = vmatpush1.bf16.msra.mxu0 0
      %5196 = vmatprep.subr.bf16.mxu0 0
      %5197 = vmatpush1.bf16.msra.mxu0 0
      %5198 = vmatprep.subr.bf16.mxu0 0
      %5199 = vmatpush1.bf16.msra.mxu0 0
      %5200 = vmatprep.subr.bf16.mxu0 0
      %5201 = vmatpush1.bf16.msra.mxu0 0
      %5202 = vmatprep.subr.bf16.mxu0 0
      %5203 = vmatpush1.bf16.msra.mxu0 %v5186
      %5204 = vmatprep.subr.bf16.mxu0 0
      %5205 = vmatpush2.bf16.msra.mxu0 0
      %5206 = vmatprep.subr.bf16.mxu0 0
      %5207 = vmatpush2.bf16.msra.mxu0 0
      %5208 = vmatprep.subr.bf16.mxu0 0
      %5209 = vmatpush2.bf16.msra.mxu0 0
      %5210 = vmatprep.subr.bf16.mxu0 0
      %5211 = vmatpush2.bf16.msra.mxu0 0
      %5212 = vmatprep.subr.bf16.mxu0 0
      %5213 = vmatpush2.bf16.msra.mxu0 0
      %5214 = vmatprep.subr.bf16.mxu0 0
      %5215 = vmatpush2.bf16.msra.mxu0 0
      %5216 = vmatprep.subr.bf16.mxu0 0
      %5217 = vmatpush2.bf16.msra.mxu0 0
      %5218 = vmatprep.subr.bf16.mxu0 0
      %5219 = vmatpush2.bf16.msra.mxu0 0
      %5220 = vmatprep.mubr.bf16.mxu0 0
      %5221 = vmatmul.mubr.bf16.gmra.mxu0 %v5138
      %v5222 = vpop.f32.mrf.mxu0
      %v5223 = vadd.f32 0.0, %v5222
      %v5224 = vpop.f32.mrf.mxu0
      %v5225 = vpop.f32.mrf.mxu0
      %v5226 = vadd.f32 0.0, %v5225
      %v5227 = vpop.f32.mrf.mxu0
      %5228 = vmatprep.mubr.bf16.mxu0 0
      %5229 = vmatmul.mubr.bf16.gmra.mxu0 %v5141
      %v5230 = vpop.f32.mrf.mxu0
      %v5231 = vadd.f32 0.0, %v5230
      %v5232 = vpop.f32.mrf.mxu0
      %v5233 = vpop.f32.mrf.mxu0
      %v5234 = vadd.f32 0.0, %v5233
      %v5235 = vpop.f32.mrf.mxu0
      %5236 = vmatprep.mubr.bf16.mxu0 0
      %5237 = vmatmul.mubr.bf16.gmra.mxu0 %v5144
      %v5238 = vpop.f32.mrf.mxu0
      %v5239 = vadd.f32 0.0, %v5238
      %v5240 = vpop.f32.mrf.mxu0
      %v5241 = vpop.f32.mrf.mxu0
      %v5242 = vadd.f32 0.0, %v5241
      %v5243 = vpop.f32.mrf.mxu0
      %5244 = vmatprep.mubr.bf16.mxu0 0
      %5245 = vmatmul.mubr.bf16.gmra.mxu0 %v5147
      %v5246 = vpop.f32.mrf.mxu0
      %v5247 = vadd.f32 0.0, %v5246
      %v5248 = vpop.f32.mrf.mxu0
      %v5249 = vpop.f32.mrf.mxu0
      %v5250 = vadd.f32 0.0, %v5249
      %v5251 = vpop.f32.mrf.mxu0
      %5252 = vmatprep.mubr.bf16.mxu0 0
      %5253 = vmatmul.mubr.bf16.gmra.mxu0 %v5150
      %v5254 = vpop.f32.mrf.mxu0
      %v5255 = vadd.f32 0.0, %v5254
      %v5256 = vpop.f32.mrf.mxu0
      %v5257 = vpop.f32.mrf.mxu0
      %v5258 = vadd.f32 0.0, %v5257
      %v5259 = vpop.f32.mrf.mxu0
      %5260 = vmatprep.mubr.bf16.mxu0 0
      %5261 = vmatmul.mubr.bf16.gmra.mxu0 %v5153
      %v5262 = vpop.f32.mrf.mxu0
      %v5263 = vadd.f32 0.0, %v5262
      %v5264 = vpop.f32.mrf.mxu0
      %v5265 = vpop.f32.mrf.mxu0
      %v5266 = vadd.f32 0.0, %v5265
      %v5267 = vpop.f32.mrf.mxu0
      %5268 = vmatprep.mubr.bf16.mxu0 0
      %5269 = vmatmul.mubr.bf16.gmra.mxu0 %v5156
      %v5270 = vpop.f32.mrf.mxu0
      %v5271 = vadd.f32 0.0, %v5270
      %v5272 = vpop.f32.mrf.mxu0
      %v5273 = vpop.f32.mrf.mxu0
      %v5274 = vadd.f32 0.0, %v5273
      %v5275 = vpop.f32.mrf.mxu0
      %5276 = vmatprep.mubr.bf16.mxu0 0
      %5277 = vmatmul.mubr.bf16.gmra.mxu0 %v5159
      %v5278 = vpop.f32.mrf.mxu0
      %v5279 = vadd.f32 0.0, %v5278
      %v5280 = vpop.f32.mrf.mxu0
      %v5281 = vpop.f32.mrf.mxu0
      %v5282 = vadd.f32 0.0, %v5281
      %v5283 = vpop.f32.mrf.mxu0
      %5284 = vmatprep.mubr.bf16.mxu0 0
      %5285 = vmatmul.mubr.bf16.gmra.mxu0 %v5162
      %v5286 = vpop.f32.mrf.mxu0
      %v5287 = vadd.f32 0.0, %v5286
      %v5288 = vpop.f32.mrf.mxu0
      %v5289 = vpop.f32.mrf.mxu0
      %v5290 = vadd.f32 0.0, %v5289
      %v5291 = vpop.f32.mrf.mxu0
      %5292 = vmatprep.mubr.bf16.mxu0 0
      %5293 = vmatmul.mubr.bf16.gmra.mxu0 %v5165
      %v5294 = vpop.f32.mrf.mxu0
      %v5295 = vadd.f32 0.0, %v5294
      %v5296 = vpop.f32.mrf.mxu0
      %v5297 = vpop.f32.mrf.mxu0
      %v5298 = vadd.f32 0.0, %v5297
      %v5299 = vpop.f32.mrf.mxu0
      %5300 = vmatprep.mubr.bf16.mxu0 0
      %5301 = vmatmul.mubr.bf16.gmra.mxu0 %v5168
      %v5302 = vpop.f32.mrf.mxu0
      %v5303 = vadd.f32 0.0, %v5302
      %v5304 = vpop.f32.mrf.mxu0
      %v5305 = vpop.f32.mrf.mxu0
      %v5306 = vadd.f32 0.0, %v5305
      %v5307 = vpop.f32.mrf.mxu0
      %5308 = vmatprep.mubr.bf16.mxu0 0
      %5309 = vmatmul.mubr.bf16.gmra.mxu0 %v5171
      %v5310 = vpop.f32.mrf.mxu0
      %v5311 = vadd.f32 0.0, %v5310
      %v5312 = vpop.f32.mrf.mxu0
      %v5313 = vpop.f32.mrf.mxu0
      %v5314 = vadd.f32 0.0, %v5313
      %v5315 = vpop.f32.mrf.mxu0
      %5316 = vmatprep.mubr.bf16.mxu0 0
      %5317 = vmatmul.mubr.bf16.gmra.mxu0 %v5174
      %v5318 = vpop.f32.mrf.mxu0
      %v5319 = vadd.f32 0.0, %v5318
      %v5320 = vpop.f32.mrf.mxu0
      %v5321 = vpop.f32.mrf.mxu0
      %v5322 = vadd.f32 0.0, %v5321
      %v5323 = vpop.f32.mrf.mxu0
      %5324 = vmatprep.mubr.bf16.mxu0 0
      %5325 = vmatmul.mubr.bf16.gmra.mxu0 %v5177
      %v5326 = vpop.f32.mrf.mxu0
      %v5327 = vadd.f32 0.0, %v5326
      %v5328 = vpop.f32.mrf.mxu0
      %v5329 = vpop.f32.mrf.mxu0
      %v5330 = vadd.f32 0.0, %v5329
      %v5331 = vpop.f32.mrf.mxu0
      %5332 = vmatprep.mubr.bf16.mxu0 0
      %5333 = vmatmul.mubr.bf16.gmra.mxu0 %v5180
      %v5334 = vpop.f32.mrf.mxu0
      %v5335 = vadd.f32 0.0, %v5334
      %v5336 = vpop.f32.mrf.mxu0
      %v5337 = vpop.f32.mrf.mxu0
      %v5338 = vadd.f32 0.0, %v5337
      %v5339 = vpop.f32.mrf.mxu0
      %5340 = vmatprep.mubr.bf16.mxu0 0
      %5341 = vmatmul.mubr.bf16.gmra.mxu0 %v5183
      %v5342 = vpop.f32.mrf.mxu0
      %v5343 = vadd.f32 0.0, %v5342
      %v5344 = vpop.f32.mrf.mxu0
      %v5345 = vpop.f32.mrf.mxu0
      %v5346 = vadd.f32 0.0, %v5345
      %v5347 = vpop.f32.mrf.mxu0
      %5348 = vdwg.mxu0
      %v5349 = vld [vmem:[#allocation2] sm:$0xff]
      %v5350 = vld [vmem:[#allocation2 + $0x8] sm:$0xff]
      %v5351 = vld [vmem:[#allocation2 + $0x10] sm:$0xff]
      %v5352 = vld [vmem:[#allocation2 + $0x18] sm:$0xff]
      %v5353 = vld [vmem:[#allocation2 + $0x20] sm:$0xff]
      %v5354 = vld [vmem:[#allocation2 + $0x28] sm:$0xff]
      %v5355 = vld [vmem:[#allocation2 + $0x30] sm:$0xff]
      %v5356 = vld [vmem:[#allocation2 + $0x38] sm:$0xff]
      %v5357 = vld [vmem:[#allocation2 + $0x40] sm:$0xff]
      %v5358 = vld [vmem:[#allocation2 + $0x48] sm:$0xff]
      %v5359 = vld [vmem:[#allocation2 + $0x50] sm:$0xff]
      %v5360 = vld [vmem:[#allocation2 + $0x58] sm:$0xff]
      %v5361 = vld [vmem:[#allocation2 + $0x60] sm:$0xff]
      %v5362 = vld [vmem:[#allocation2 + $0x68] sm:$0xff]
      %v5363 = vld [vmem:[#allocation2 + $0x70] sm:$0xff]
      %v5364 = vld [vmem:[#allocation2 + $0x78] sm:$0xff]
      %v5365 = vld [vmem:[#allocation2 + $0x80] sm:$0xff]
      %v5366 = vld [vmem:[#allocation2 + $0x88] sm:$0xff]
      %v5367 = vld [vmem:[#allocation2 + $0x90] sm:$0xff]
      %v5368 = vld [vmem:[#allocation2 + $0x98] sm:$0xff]
      %v5369 = vld [vmem:[#allocation2 + $0xa0] sm:$0xff]
      %v5370 = vld [vmem:[#allocation2 + $0xa8] sm:$0xff]
      %v5371 = vld [vmem:[#allocation2 + $0xb0] sm:$0xff]
      %v5372 = vld [vmem:[#allocation2 + $0xb8] sm:$0xff]
      %v5373 = vld [vmem:[#allocation2 + $0xc0] sm:$0xff]
      %v5374 = vld [vmem:[#allocation2 + $0xc8] sm:$0xff]
      %v5375 = vld [vmem:[#allocation2 + $0xd0] sm:$0xff]
      %v5376 = vld [vmem:[#allocation2 + $0xd8] sm:$0xff]
      %v5377 = vld [vmem:[#allocation2 + $0xe0] sm:$0xff]
      %v5378 = vld [vmem:[#allocation2 + $0xe8] sm:$0xff]
      %v5379 = vld [vmem:[#allocation2 + $0xf0] sm:$0xff]
      %v5380 = vld [vmem:[#allocation2 + $0xf8] sm:$0xff]
      %v5381 = vadd.f32 %v5349, %v5223
      %v5382 = vadd.f32 %v5350, %v5226
      %v5383 = vadd.f32 %v5351, %v5231
      %v5384 = vadd.f32 %v5352, %v5234
      %v5385 = vadd.f32 %v5353, %v5239
      %v5386 = vadd.f32 %v5354, %v5242
      %v5387 = vadd.f32 %v5355, %v5247
      %v5388 = vadd.f32 %v5356, %v5250
      %v5389 = vadd.f32 %v5357, %v5255
      %v5390 = vadd.f32 %v5358, %v5258
      %v5391 = vadd.f32 %v5359, %v5263
      %v5392 = vadd.f32 %v5360, %v5266
      %v5393 = vadd.f32 %v5361, %v5271
      %v5394 = vadd.f32 %v5362, %v5274
      %v5395 = vadd.f32 %v5363, %v5279
      %v5396 = vadd.f32 %v5364, %v5282
      %v5397 = vadd.f32 %v5365, %v5287
      %v5398 = vadd.f32 %v5366, %v5290
      %v5399 = vadd.f32 %v5367, %v5295
      %v5400 = vadd.f32 %v5368, %v5298
      %v5401 = vadd.f32 %v5369, %v5303
      %v5402 = vadd.f32 %v5370, %v5306
      %v5403 = vadd.f32 %v5371, %v5311
      %v5404 = vadd.f32 %v5372, %v5314
      %v5405 = vadd.f32 %v5373, %v5319
      %v5406 = vadd.f32 %v5374, %v5322
      %v5407 = vadd.f32 %v5375, %v5327
      %v5408 = vadd.f32 %v5376, %v5330
      %v5409 = vadd.f32 %v5377, %v5335
      %v5410 = vadd.f32 %v5378, %v5338
      %v5411 = vadd.f32 %v5379, %v5343
      %v5412 = vadd.f32 %v5380, %v5346
      %5413 = vst [vmem:[#allocation2] sm:$0xff] %v5381
      %5414 = vst [vmem:[#allocation2 + $0x8] sm:$0xff] %v5382
      %5415 = vst [vmem:[#allocation2 + $0x10] sm:$0xff] %v5383
      %5416 = vst [vmem:[#allocation2 + $0x18] sm:$0xff] %v5384
      %5417 = vst [vmem:[#allocation2 + $0x20] sm:$0xff] %v5385
      %5418 = vst [vmem:[#allocation2 + $0x28] sm:$0xff] %v5386
      %5419 = vst [vmem:[#allocation2 + $0x30] sm:$0xff] %v5387
      %5420 = vst [vmem:[#allocation2 + $0x38] sm:$0xff] %v5388
      %5421 = vst [vmem:[#allocation2 + $0x40] sm:$0xff] %v5389
      %5422 = vst [vmem:[#allocation2 + $0x48] sm:$0xff] %v5390
      %5423 = vst [vmem:[#allocation2 + $0x50] sm:$0xff] %v5391
      %5424 = vst [vmem:[#allocation2 + $0x58] sm:$0xff] %v5392
      %5425 = vst [vmem:[#allocation2 + $0x60] sm:$0xff] %v5393
      %5426 = vst [vmem:[#allocation2 + $0x68] sm:$0xff] %v5394
      %5427 = vst [vmem:[#allocation2 + $0x70] sm:$0xff] %v5395
      %5428 = vst [vmem:[#allocation2 + $0x78] sm:$0xff] %v5396
      %5429 = vst [vmem:[#allocation2 + $0x80] sm:$0xff] %v5397
      %5430 = vst [vmem:[#allocation2 + $0x88] sm:$0xff] %v5398
      %5431 = vst [vmem:[#allocation2 + $0x90] sm:$0xff] %v5399
      %5432 = vst [vmem:[#allocation2 + $0x98] sm:$0xff] %v5400
      %5433 = vst [vmem:[#allocation2 + $0xa0] sm:$0xff] %v5401
      %5434 = vst [vmem:[#allocation2 + $0xa8] sm:$0xff] %v5402
      %5435 = vst [vmem:[#allocation2 + $0xb0] sm:$0xff] %v5403
      %5436 = vst [vmem:[#allocation2 + $0xb8] sm:$0xff] %v5404
      %5437 = vst [vmem:[#allocation2 + $0xc0] sm:$0xff] %v5405
      %5438 = vst [vmem:[#allocation2 + $0xc8] sm:$0xff] %v5406
      %5439 = vst [vmem:[#allocation2 + $0xd0] sm:$0xff] %v5407
      %5440 = vst [vmem:[#allocation2 + $0xd8] sm:$0xff] %v5408
      %5441 = vst [vmem:[#allocation2 + $0xe0] sm:$0xff] %v5409
      %5442 = vst [vmem:[#allocation2 + $0xe8] sm:$0xff] %v5410
      %5443 = vst [vmem:[#allocation2 + $0xf0] sm:$0xff] %v5411
      %5444 = vst [vmem:[#allocation2 + $0xf8] sm:$0xff] %v5412
      %v5445 = vld [vmem:[#allocation2] sm:$0xff]
      %v5446 = vld [vmem:[#allocation2 + $0x8] sm:$0xff]
      %v5447 = vld [vmem:[#allocation2 + $0x10] sm:$0xff]
      %v5448 = vld [vmem:[#allocation2 + $0x18] sm:$0xff]
      %v5449 = vld [vmem:[#allocation2 + $0x20] sm:$0xff]
      %v5450 = vld [vmem:[#allocation2 + $0x28] sm:$0xff]
      %v5451 = vld [vmem:[#allocation2 + $0x30] sm:$0xff]
      %v5452 = vld [vmem:[#allocation2 + $0x38] sm:$0xff]
      %v5453 = vld [vmem:[#allocation2 + $0x40] sm:$0xff]
      %v5454 = vld [vmem:[#allocation2 + $0x48] sm:$0xff]
      %v5455 = vld [vmem:[#allocation2 + $0x50] sm:$0xff]
      %v5456 = vld [vmem:[#allocation2 + $0x58] sm:$0xff]
      %v5457 = vld [vmem:[#allocation2 + $0x60] sm:$0xff]
      %v5458 = vld [vmem:[#allocation2 + $0x68] sm:$0xff]
      %v5459 = vld [vmem:[#allocation2 + $0x70] sm:$0xff]
      %v5460 = vld [vmem:[#allocation2 + $0x78] sm:$0xff]
      %v5461 = vld [vmem:[#allocation2 + $0x80] sm:$0xff]
      %v5462 = vld [vmem:[#allocation2 + $0x88] sm:$0xff]
      %v5463 = vld [vmem:[#allocation2 + $0x90] sm:$0xff]
      %v5464 = vld [vmem:[#allocation2 + $0x98] sm:$0xff]
      %v5465 = vld [vmem:[#allocation2 + $0xa0] sm:$0xff]
      %v5466 = vld [vmem:[#allocation2 + $0xa8] sm:$0xff]
      %v5467 = vld [vmem:[#allocation2 + $0xb0] sm:$0xff]
      %v5468 = vld [vmem:[#allocation2 + $0xb8] sm:$0xff]
      %v5469 = vld [vmem:[#allocation2 + $0xc0] sm:$0xff]
      %v5470 = vld [vmem:[#allocation2 + $0xc8] sm:$0xff]
      %v5471 = vld [vmem:[#allocation2 + $0xd0] sm:$0xff]
      %v5472 = vld [vmem:[#allocation2 + $0xd8] sm:$0xff]
      %v5473 = vld [vmem:[#allocation2 + $0xe0] sm:$0xff]
      %v5474 = vld [vmem:[#allocation2 + $0xe8] sm:$0xff]
      %v5475 = vld [vmem:[#allocation2 + $0xf0] sm:$0xff]
      %v5476 = vld [vmem:[#allocation2 + $0xf8] sm:$0xff]
      %v5477 = vld [vmem:[%s2] sm:$0x1]
      %v5478 = vadd.f32 %v5445, %v5446
      %v5479 = vadd.f32 %v5478, %v5447
      %v5480 = vadd.f32 %v5479, %v5448
      %v5481 = vadd.f32 %v5480, %v5449
      %v5482 = vadd.f32 %v5481, %v5450
      %v5483 = vadd.f32 %v5482, %v5451
      %v5484 = vadd.f32 %v5483, %v5452
      %v5485 = vadd.f32 %v5484, %v5453
      %v5486 = vadd.f32 %v5485, %v5454
      %v5487 = vadd.f32 %v5486, %v5455
      %v5488 = vadd.f32 %v5487, %v5456
      %v5489 = vadd.f32 %v5488, %v5457
      %v5490 = vadd.f32 %v5489, %v5458
      %v5491 = vadd.f32 %v5490, %v5459
      %v5492 = vadd.f32 %v5491, %v5460
      %v5493 = vadd.f32 %v5492, %v5461
      %v5494 = vadd.f32 %v5493, %v5462
      %v5495 = vadd.f32 %v5494, %v5463
      %v5496 = vadd.f32 %v5495, %v5464
      %v5497 = vadd.f32 %v5496, %v5465
      %v5498 = vadd.f32 %v5497, %v5466
      %v5499 = vadd.f32 %v5498, %v5467
      %v5500 = vadd.f32 %v5499, %v5468
      %v5501 = vadd.f32 %v5500, %v5469
      %v5502 = vadd.f32 %v5501, %v5470
      %v5503 = vadd.f32 %v5502, %v5471
      %v5504 = vadd.f32 %v5503, %v5472
      %v5505 = vadd.f32 %v5504, %v5473
      %v5506 = vadd.f32 %v5505, %v5474
      %v5507 = vadd.f32 %v5506, %v5475
      %v5508 = vadd.f32 %v5507, %v5476
      %v5509 = vrot.slane %v5508, 4
      %v5510 = vadd.f32 %v5508, %v5509
      %v5511 = vrot.slane %v5510, 2
      %v5512 = vadd.f32 %v5510, %v5511
      %v5513 = vrot.slane %v5512, 1
      %v5514 = vadd.f32 %v5512, %v5513
      %v5515 = vadd.f32 %v5477, %v5514
      %5516 = vst [vmem:[%s2] sm:$0x1] %v5515
      %v5517 = vld [vmem:[%s3] sm:$0x1]
      %v5518 = vmul.f32 %v5445, %v5445
      %v5519 = vmul.f32 %v5446, %v5446
      %v5520 = vmul.f32 %v5447, %v5447
      %v5521 = vmul.f32 %v5448, %v5448
      %v5522 = vmul.f32 %v5449, %v5449
      %v5523 = vmul.f32 %v5450, %v5450
      %v5524 = vmul.f32 %v5451, %v5451
      %v5525 = vmul.f32 %v5452, %v5452
      %v5526 = vmul.f32 %v5453, %v5453
      %v5527 = vmul.f32 %v5454, %v5454
      %v5528 = vmul.f32 %v5455, %v5455
      %v5529 = vmul.f32 %v5456, %v5456
      %v5530 = vmul.f32 %v5457, %v5457
      %v5531 = vmul.f32 %v5458, %v5458
      %v5532 = vmul.f32 %v5459, %v5459
      %v5533 = vmul.f32 %v5460, %v5460
      %v5534 = vmul.f32 %v5461, %v5461
      %v5535 = vmul.f32 %v5462, %v5462
      %v5536 = vmul.f32 %v5463, %v5463
      %v5537 = vmul.f32 %v5464, %v5464
      %v5538 = vmul.f32 %v5465, %v5465
      %v5539 = vmul.f32 %v5466, %v5466
      %v5540 = vmul.f32 %v5467, %v5467
      %v5541 = vmul.f32 %v5468, %v5468
      %v5542 = vmul.f32 %v5469, %v5469
      %v5543 = vmul.f32 %v5470, %v5470
      %v5544 = vmul.f32 %v5471, %v5471
      %v5545 = vmul.f32 %v5472, %v5472
      %v5546 = vmul.f32 %v5473, %v5473
      %v5547 = vmul.f32 %v5474, %v5474
      %v5548 = vmul.f32 %v5475, %v5475
      %v5549 = vmul.f32 %v5476, %v5476
      %v5550 = vadd.f32 %v5518, %v5519
      %v5551 = vadd.f32 %v5550, %v5520
      %v5552 = vadd.f32 %v5551, %v5521
      %v5553 = vadd.f32 %v5552, %v5522
      %v5554 = vadd.f32 %v5553, %v5523
      %v5555 = vadd.f32 %v5554, %v5524
      %v5556 = vadd.f32 %v5555, %v5525
      %v5557 = vadd.f32 %v5556, %v5526
      %v5558 = vadd.f32 %v5557, %v5527
      %v5559 = vadd.f32 %v5558, %v5528
      %v5560 = vadd.f32 %v5559, %v5529
      %v5561 = vadd.f32 %v5560, %v5530
      %v5562 = vadd.f32 %v5561, %v5531
      %v5563 = vadd.f32 %v5562, %v5532
      %v5564 = vadd.f32 %v5563, %v5533
      %v5565 = vadd.f32 %v5564, %v5534
      %v5566 = vadd.f32 %v5565, %v5535
      %v5567 = vadd.f32 %v5566, %v5536
      %v5568 = vadd.f32 %v5567, %v5537
      %v5569 = vadd.f32 %v5568, %v5538
      %v5570 = vadd.f32 %v5569, %v5539
      %v5571 = vadd.f32 %v5570, %v5540
      %v5572 = vadd.f32 %v5571, %v5541
      %v5573 = vadd.f32 %v5572, %v5542
      %v5574 = vadd.f32 %v5573, %v5543
      %v5575 = vadd.f32 %v5574, %v5544
      %v5576 = vadd.f32 %v5575, %v5545
      %v5577 = vadd.f32 %v5576, %v5546
      %v5578 = vadd.f32 %v5577, %v5547
      %v5579 = vadd.f32 %v5578, %v5548
      %v5580 = vadd.f32 %v5579, %v5549
      %v5581 = vrot.slane %v5580, 4
      %v5582 = vadd.f32 %v5580, %v5581
      %v5583 = vrot.slane %v5582, 2
      %v5584 = vadd.f32 %v5582, %v5583
      %v5585 = vrot.slane %v5584, 1
      %v5586 = vadd.f32 %v5584, %v5585
      %v5587 = vadd.f32 %v5517, %v5586
      %5588 = vst [vmem:[%s3] sm:$0x1] %v5587
      // Predicated region
      $region33: #{conv_block_forward.2} parent=27 // pred_check
        %p5589 = pneg %p75
      $region34: #{conv_block_forward.2} parent=27 // pred_check_branch
        %5591 = sbr.rel (%p5589) target = $region36
      $region35: #{conv_block_forward.2} parent=27 // pred_region
        _
      $region36: #{conv_block_forward.2} parent=27 // pred_fallthru
        _
      // Predicated region
      $region37: #{conv_block_forward.2} parent=27 // pred_check
        %p5592 = pneg %p96
      $region38: #{conv_block_forward.2} parent=27 // pred_check_branch
        %5594 = sbr.rel (%p5592) target = $region40
      $region39: #{conv_block_forward.2} parent=27 // pred_region
        _
      $region40: #{conv_block_forward.2} parent=27 // pred_fallthru
        _
      // Predicated region
      $region41: #{conv_block_forward.2} parent=27 // pred_check
        %p5595 = pneg %p75
      $region42: #{conv_block_forward.2} parent=27 // pred_check_branch
        %5597 = sbr.rel (%p5595) target = $region44
      $region43: #{conv_block_forward.2} parent=27 // pred_region
        _
      $region44: #{conv_block_forward.2} parent=27 // pred_fallthru
        _
      // Predicated region
      $region45: #{conv_block_forward.2} parent=27 // pred_check
        %p5598 = pneg %p96
      $region46: #{conv_block_forward.2} parent=27 // pred_check_branch
        %5600 = sbr.rel (%p5598) target = $region48
      $region47: #{conv_block_forward.2} parent=27 // pred_region
        _
      $region48: #{conv_block_forward.2} parent=27 // pred_fallthru
        _
    $region28: #{conv_block_forward.2} parent=5 // pred_fallthru
      _
    %p5601 = scmp.le.s32.totalorder 2, %s10
    // Predicated region
    $region49: #{conv_block_forward.2} parent=5 // pred_check
      %p5602 = pneg %p5601
    $region50: #{conv_block_forward.2} parent=5 // pred_check_branch
      %5604 = sbr.rel (%p5602) target = $region52
    $region51: #{conv_block_forward.2} parent=5 // pred_region
      %s5605 = ssub.s32 %s10, 2
    $region52: #{conv_block_forward.2} parent=5 // pred_fallthru
      _
  $region6: #{conv_block_forward.2} parent=0 // loop_footer
    %s14 = sadd.s32 1, %s10
  $region7: #{conv_block_forward.2} parent=0 // loop_footer_branch
    %9 = sbr.rel target = $region3
  $region8: #{conv_block_forward.2} parent=0 // loop_exit
    _

// kernel: conv_block_forward.3
$region0: #{conv_block_forward.3}
  #allocation0 [shape = 'u32[]', space=smem, size = 0x4, offset = 0x4, fixed_abs, tag = 'smem constant byte address 0x4 - core index']
  #allocation1 [shape = 'u32[144,128]{1,0:T(1,128)}', space=vmem, size = 0x12000, scoped, tag = 'internal scratch']
  %s0 = inlined_call_operand.vmem [shape: bf16[36,18,4], index: 0, kind: input, shape index: {}]
  %s1 = inlined_call_operand.vmem [shape: bf16[9,4,128], index: 1, kind: input, shape index: {}]
  %s2 = inlined_call_operand.vmem [shape: f32[1,128], index: 2, kind: input, shape index: {}]
  %s3 = inlined_call_operand.vmem [shape: f32[1,128], index: 3, kind: input, shape index: {}]
  %s4 = inlined_call_operand.vmem [shape: f32[512,128], index: 4, kind: output, shape index: {}]
  %s5 = sld [smem:[#allocation0]]
  $region49: #{conv_block_forward.3} parent=0
    _
  %s7 = ssub.s32 1, %s5
  %s8 = scalar_select 0, %s7, %s5
  loop: start=0, step=1, limit=4
  $region2: #{conv_block_forward.3} parent=0 // loop_pre_header
    _
  $region3: #{conv_block_forward.3} parent=0 // loop_header
    %s10 = sphi 0, %s14
    %p11 = scmp.ge.s32.totalorder %s10, 4
    %s20 = sphi 0, %s22
    %s23 = sphi 0, %s20
    %s24 = sphi 0, %s23
    %s40 = sphi 0, %s24
    %s44 = sphi 0, %s44
    %s46 = sphi 0, %s44
    %s47 = sphi 0, %s46
    %s61 = sphi 0, %s47
    %s65 = sphi 0, %s65
    %s67 = sphi 0, %s65
    %s68 = sphi 0, %s67
    %s82 = sphi 0, %s68
    %s86 = sphi 0, %s86
    %s88 = sphi 0, %s86
    %s89 = sphi 0, %s88
    %s103 = sphi 0, %s89
    %s109 = sphi 0, %s111
    %s112 = sphi 0, %s109
    %s113 = sphi 0, %s112
    %s129 = sphi 0, %s113
  $region4: #{conv_block_forward.3} parent=0 // loop_header_branch
    %13 = sbr.rel (%p11) target = $region8
  $region5: #{conv_block_forward.3} parent=0 // loop_body
    %s15 = ssub.s32 %s10, 1
    %s16 = ssub.s32 %s10, 2
    %s17 = sadd.s32 %s10, 1
    %s18 = ssub.s32 %s10, %s17
    %p19 = scmp.eq.s32.totalorder %s18, 0
    %s21 = sadd.s32 %s20, 1
    %s22 = scalar_select %p19, %s20, %s21
    %p25 = pneg %p19
    %p26 = scmp.eq.s32.totalorder %s10, 1
    %p27 = por %p25, %p26
    %p28 = scmp.ne.s32.totalorder %s20, %s23
    %p29 = scmp.eq.s32.totalorder %s10, 0
    %p30 = por %p28, %p29
    %p31 = scmp.ne.s32.totalorder %s20, %s23
    %p32 = scmp.eq.s32.totalorder %s15, 1
    %p33 = por %p31, %p32
    %p34 = scmp.ne.s32.totalorder %s23, %s24
    %p35 = scmp.eq.s32.totalorder %s15, 0
    %p36 = por %p34, %p35
    %p37 = scmp.ne.s32.totalorder %s23, %s24
    %p38 = scmp.eq.s32.totalorder %s16, 1
    %p39 = por %p37, %p38
    %p41 = scmp.ne.s32.totalorder %s24, %s40
    %p42 = scmp.eq.s32.totalorder %s16, 0
    %p43 = por %p41, %p42
    %s45 = sadd.s32 %s44, 1
    %p48 = scmp.eq.s32.totalorder %s10, 1
    %p49 = scmp.ne.s32.totalorder %s44, %s46
    %p50 = scmp.eq.s32.totalorder %s10, 0
    %p51 = por %p49, %p50
    %p52 = scmp.ne.s32.totalorder %s44, %s46
    %p53 = scmp.eq.s32.totalorder %s15, 1
    %p54 = por %p52, %p53
    %p55 = scmp.ne.s32.totalorder %s46, %s47
    %p56 = scmp.eq.s32.totalorder %s15, 0
    %p57 = por %p55, %p56
    %p58 = scmp.ne.s32.totalorder %s46, %s47
    %p59 = scmp.eq.s32.totalorder %s16, 1
    %p60 = por %p58, %p59
    %p62 = scmp.ne.s32.totalorder %s47, %s61
    %p63 = scmp.eq.s32.totalorder %s16, 0
    %p64 = por %p62, %p63
    %s66 = sadd.s32 %s65, 1
    %p69 = scmp.eq.s32.totalorder %s10, 1
    %p70 = scmp.ne.s32.totalorder %s65, %s67
    %p71 = scmp.eq.s32.totalorder %s10, 0
    %p72 = por %p70, %p71
    %p73 = scmp.ne.s32.totalorder %s65, %s67
    %p74 = scmp.eq.s32.totalorder %s15, 1
    %p75 = por %p73, %p74
    %p76 = scmp.ne.s32.totalorder %s67, %s68
    %p77 = scmp.eq.s32.totalorder %s15, 0
    %p78 = por %p76, %p77
    %p79 = scmp.ne.s32.totalorder %s67, %s68
    %p80 = scmp.eq.s32.totalorder %s16, 1
    %p81 = por %p79, %p80
    %p83 = scmp.ne.s32.totalorder %s68, %s82
    %p84 = scmp.eq.s32.totalorder %s16, 0
    %p85 = por %p83, %p84
    %s87 = sadd.s32 %s86, 1
    %p90 = scmp.eq.s32.totalorder %s10, 1
    %p91 = scmp.ne.s32.totalorder %s86, %s88
    %p92 = scmp.eq.s32.totalorder %s10, 0
    %p93 = por %p91, %p92
    %p94 = scmp.ne.s32.totalorder %s86, %s88
    %p95 = scmp.eq.s32.totalorder %s15, 1
    %p96 = por %p94, %p95
    %p97 = scmp.ne.s32.totalorder %s88, %s89
    %p98 = scmp.eq.s32.totalorder %s15, 0
    %p99 = por %p97, %p98
    %p100 = scmp.ne.s32.totalorder %s88, %s89
    %p101 = scmp.eq.s32.totalorder %s16, 1
    %p102 = por %p100, %p101
    %p104 = scmp.ne.s32.totalorder %s89, %s103
    %p105 = scmp.eq.s32.totalorder %s16, 0
    %p106 = por %p104, %p105
    %s107 = ssub.s32 %s10, %s17
    %p108 = scmp.eq.s32.totalorder %s107, 0
    %s110 = sadd.s32 %s109, 1
    %s111 = scalar_select %p108, %s109, %s110
    %p114 = pneg %p108
    %p115 = scmp.eq.s32.totalorder %s10, 1
    %p116 = por %p114, %p115
    %p117 = scmp.ne.s32.totalorder %s109, %s112
    %p118 = scmp.eq.s32.totalorder %s10, 0
    %p119 = por %p117, %p118
    %p120 = scmp.ne.s32.totalorder %s109, %s112
    %p121 = scmp.eq.s32.totalorder %s15, 1
    %p122 = por %p120, %p121
    %p123 = scmp.ne.s32.totalorder %s112, %s113
    %p124 = scmp.eq.s32.totalorder %s15, 0
    %p125 = por %p123, %p124
    %p126 = scmp.ne.s32.totalorder %s112, %s113
    %p127 = scmp.eq.s32.totalorder %s16, 1
    %p128 = por %p126, %p127
    %p130 = scmp.ne.s32.totalorder %s113, %s129
    %p131 = scmp.eq.s32.totalorder %s16, 0
    %p132 = por %p130, %p131
    %p133 = scmp.le.s32.totalorder 1, %s10
    %p134 = scmp.lt.s32.totalorder %s10, 3
    %p135 = pnand %p133, %p134
    %p136 = pneg %p135
    // Predicated region
    $region9: #{conv_block_forward.3} parent=5 // pred_check
      _
    $region10: #{conv_block_forward.3} parent=5 // pred_check_branch
      %138 = sbr.rel (%p135) target = $region12
    $region11: #{conv_block_forward.3} parent=5 // pred_region
      %s139 = ssub.s32 %s10, 1
      // Predicated region
      $region13: #{conv_block_forward.3} parent=11 // pred_check
        %p140 = pneg %p57
      $region14: #{conv_block_forward.3} parent=11 // pred_check_branch
        %142 = sbr.rel (%p140) target = $region16
      $region15: #{conv_block_forward.3} parent=11 // pred_region
        _
      $region16: #{conv_block_forward.3} parent=11 // pred_fallthru
        _
      // Predicated region
      $region17: #{conv_block_forward.3} parent=11 // pred_check
        %p143 = pneg %p78
      $region18: #{conv_block_forward.3} parent=11 // pred_check_branch
        %145 = sbr.rel (%p143) target = $region20
      $region19: #{conv_block_forward.3} parent=11 // pred_region
        _
      $region20: #{conv_block_forward.3} parent=11 // pred_fallthru
        _
      // Predicated region
      $region21: #{conv_block_forward.3} parent=11 // pred_check
        %p146 = pneg %p99
      $region22: #{conv_block_forward.3} parent=11 // pred_check_branch
        %148 = sbr.rel (%p146) target = $region24
      $region23: #{conv_block_forward.3} parent=11 // pred_region
        _
      $region24: #{conv_block_forward.3} parent=11 // pred_fallthru
        _
    $region12: #{conv_block_forward.3} parent=5 // pred_fallthru
      _
    %p149 = scmp.lt.s32.totalorder %s10, 2
    // Predicated region
    $region25: #{conv_block_forward.3} parent=5 // pred_check
      %p150 = pneg %p149
    $region26: #{conv_block_forward.3} parent=5 // pred_check_branch
      %152 = sbr.rel (%p150) target = $region28
    $region27: #{conv_block_forward.3} parent=5 // pred_region
      // Predicated region
      $region29: #{conv_block_forward.3} parent=27 // pred_check
        %p153 = pneg %p30
      $region30: #{conv_block_forward.3} parent=27 // pred_check_branch
        %155 = sbr.rel (%p153) target = $region32
      $region31: #{conv_block_forward.3} parent=27 // pred_region
        %s156 = smul.u32 18, %s10
        %p157 = scmp.lt.s32.totalorder %s156, 35
        %s158 = scalar_select %p157, %s156, 35
        %s159 = smul.addr %s158, 3
        %s160 = smul.addr %s159, 4
        %s161 = scalar_lea.vmem %s0, %s160
        %s162 = smul.u32 18, %s10
      $region32: #{conv_block_forward.3} parent=27 // pred_fallthru
        _
    $region28: #{conv_block_forward.3} parent=5 // pred_fallthru
      _
    %p163 = scmp.le.s32.totalorder 1, %s10
    %p164 = scmp.lt.s32.totalorder %s10, 3
    %p165 = pnand %p163, %p164
    %p166 = pneg %p165
    // Predicated region
    $region33: #{conv_block_forward.3} parent=5 // pred_check
      _
    $region34: #{conv_block_forward.3} parent=5 // pred_check_branch
      %168 = sbr.rel (%p165) target = $region36
    $region35: #{conv_block_forward.3} parent=5 // pred_region
      %s169 = ssub.s32 %s10, 1
      %s170 = smul.u32 18, %s15
      %p171 = scmp.lt.s32.totalorder %s170, 35
      %s172 = scalar_select %p171, %s170, 35
      %s173 = smul.addr %s172, 3
      %s174 = smul.addr %s173, 4
      %s175 = scalar_lea.vmem %s0, %s174
      %p176 = pneg %p36
      %p177 = pneg %p33
      %p178 = pneg %p57
      %p179 = pneg %p54
      %p180 = pneg %p78
      %p181 = pneg %p75
      %p182 = pneg %p99
      %p183 = pneg %p96
      %p184 = pneg %p125
      %p185 = pneg %p122
      %s186 = smul.u32 32, %s15
      %p187 = scmp.lt.s32.totalorder %s186, 63
      %s188 = scalar_select %p187, %s186, 63
      %s189 = smul.addr %s188, 8
      %s190 = scalar_lea.vmem %s4, %s189
      %s191 = smul.u32 18, %s15
      %p192 = scmp.lt.s32.totalorder %s191, 35
      %s193 = scalar_select %p192, %s191, 35
      %s194 = smul.addr %s193, 3
      %s195 = smul.addr %s194, 4
      %s196 = scalar_lea.vmem %s0, %s195
      %s197 = smul.u32 18, %s15
      %s198 = smul.u32 32, %s15
      %p199 = scmp.lt.s32.totalorder %s198, 63
      %s200 = scalar_select %p199, %s198, 63
      %s201 = smul.addr %s200, 8
      %s202 = scalar_lea.vmem %s4, %s201
      %s203 = smul.u32 32, %s15
      %v205 = vld [vmem:[%s196] sm:$0xf]
      %v206 = vld [vmem:[%s196 + $0x4] sm:$0xf]
      %v207 = vld [vmem:[%s196 + $0xc] sm:$0xf]
      %v208 = vld [vmem:[%s196 + $0x10] sm:$0xf]
      %v209 = vld [vmem:[%s196 + $0x18] sm:$0xf]
      %v210 = vld [vmem:[%s196 + $0x1c] sm:$0xf]
      %v211 = vld [vmem:[%s196 + $0x24] sm:$0xf]
      %v212 = vld [vmem:[%s196 + $0x28] sm:$0xf]
      %v213 = vld [vmem:[%s196 + $0x30] sm:$0xf]
      %v214 = vld [vmem:[%s196 + $0x34] sm:$0xf]
      %v215 = vld [vmem:[%s196 + $0x3c] sm:$0xf]
      %v216 = vld [vmem:[%s196 + $0x40] sm:$0xf]
      %v217 = vld [vmem:[%s196 + $0x48] sm:$0xf]
      %v218 = vld [vmem:[%s196 + $0x4c] sm:$0xf]
      %v219 = vld [vmem:[%s196 + $0x54] sm:$0xf]
      %v220 = vld [vmem:[%s196 + $0x58] sm:$0xf]
      %v221 = vld [vmem:[%s196 + $0x60] sm:$0xf]
      %v222 = vld [vmem:[%s196 + $0x64] sm:$0xf]
      %v223 = vld [vmem:[%s196 + $0x6c] sm:$0xf]
      %v224 = vld [vmem:[%s196 + $0x70] sm:$0xf]
      %v225 = vld [vmem:[%s196 + $0x78] sm:$0xf]
      %v226 = vld [vmem:[%s196 + $0x7c] sm:$0xf]
      %v227 = vld [vmem:[%s196 + $0x84] sm:$0xf]
      %v228 = vld [vmem:[%s196 + $0x88] sm:$0xf]
      %v229 = vld [vmem:[%s196 + $0x90] sm:$0xf]
      %v230 = vld [vmem:[%s196 + $0x94] sm:$0xf]
      %v231 = vld [vmem:[%s196 + $0x9c] sm:$0xf]
      %v232 = vld [vmem:[%s196 + $0xa0] sm:$0xf]
      %v233 = vld [vmem:[%s196 + $0xa8] sm:$0xf]
      %v234 = vld [vmem:[%s196 + $0xac] sm:$0xf]
      %v235 = vld [vmem:[%s196 + $0xb4] sm:$0xf]
      %v236 = vld [vmem:[%s196 + $0xb8] sm:$0xf]
      %v237 = vld [vmem:[%s1] sm:$0x3]
      %v270 = vunpack.c.l.b16 %v205
      %v271 = vunpack.c.l.b16 %v206
      %v272 = vunpack.c.l.b16 %v207
      %v273 = vunpack.c.l.b16 %v208
      %v274 = vunpack.c.l.b16 %v209
      %v275 = vunpack.c.l.b16 %v210
      %v276 = vunpack.c.l.b16 %v211
      %v277 = vunpack.c.l.b16 %v212
      %v278 = vunpack.c.l.b16 %v213
      %v279 = vunpack.c.l.b16 %v214
      %v280 = vunpack.c.l.b16 %v215
      %v281 = vunpack.c.l.b16 %v216
      %v282 = vunpack.c.l.b16 %v217
      %v283 = vunpack.c.l.b16 %v218
      %v284 = vunpack.c.l.b16 %v219
      %v285 = vunpack.c.l.b16 %v220
      %v286 = vunpack.c.l.b16 %v221
      %v287 = vunpack.c.l.b16 %v222
      %v288 = vunpack.c.l.b16 %v223
      %v289 = vunpack.c.l.b16 %v224
      %v290 = vunpack.c.l.b16 %v225
      %v291 = vunpack.c.l.b16 %v226
      %v292 = vunpack.c.l.b16 %v227
      %v293 = vunpack.c.l.b16 %v228
      %v294 = vunpack.c.l.b16 %v229
      %v295 = vunpack.c.l.b16 %v230
      %v296 = vunpack.c.l.b16 %v231
      %v297 = vunpack.c.l.b16 %v232
      %v298 = vunpack.c.l.b16 %v233
      %v299 = vunpack.c.l.b16 %v234
      %v300 = vunpack.c.l.b16 %v235
      %v301 = vunpack.c.l.b16 %v236
      %v302 = vpack.c.b16 %v271, %v270
      %v303 = vpack.c.b16 %v273, %v272
      %v304 = vpack.c.b16 %v275, %v274
      %v305 = vpack.c.b16 %v277, %v276
      %v306 = vpack.c.b16 %v279, %v278
      %v307 = vpack.c.b16 %v281, %v280
      %v308 = vpack.c.b16 %v283, %v282
      %v309 = vpack.c.b16 %v285, %v284
      %v310 = vpack.c.b16 %v287, %v286
      %v311 = vpack.c.b16 %v289, %v288
      %v312 = vpack.c.b16 %v291, %v290
      %v313 = vpack.c.b16 %v293, %v292
      %v314 = vpack.c.b16 %v295, %v294
      %v315 = vpack.c.b16 %v297, %v296
      %v316 = vpack.c.b16 %v299, %v298
      %v317 = vpack.c.b16 %v301, %v300
      %vm318 = vcmask 31744
      %v320 = vsel %vm318, %v302, 0
      %v323 = vsel %vm318, %v303, 0
      %v326 = vsel %vm318, %v304, 0
      %v329 = vsel %vm318, %v305, 0
      %v332 = vsel %vm318, %v306, 0
      %v335 = vsel %vm318, %v307, 0
      %v338 = vsel %vm318, %v308, 0
      %v341 = vsel %vm318, %v309, 0
      %v344 = vsel %vm318, %v310, 0
      %v347 = vsel %vm318, %v311, 0
      %v350 = vsel %vm318, %v312, 0
      %v353 = vsel %vm318, %v313, 0
      %v356 = vsel %vm318, %v314, 0
      %v359 = vsel %vm318, %v315, 0
      %v362 = vsel %vm318, %v316, 0
      %v365 = vsel %vm318, %v317, 0
      %vm367 = vcmask 1041408
      %v369 = vsel %vm367, %v237, 0
      %371 = vmatprep.subr.bf16.mxu0 0
      %372 = vmatpush1.bf16.msra.mxu0 0
      %373 = vmatprep.subr.bf16.mxu0 0
      %374 = vmatpush1.bf16.msra.mxu0 0
      %375 = vmatprep.subr.bf16.mxu0 0
      %376 = vmatpush1.bf16.msra.mxu0 0
      %377 = vmatprep.subr.bf16.mxu0 0
      %378 = vmatpush1.bf16.msra.mxu0 0
      %379 = vmatprep.subr.bf16.mxu0 0
      %380 = vmatpush1.bf16.msra.mxu0 0
      %381 = vmatprep.subr.bf16.mxu0 0
      %382 = vmatpush1.bf16.msra.mxu0 0
      %383 = vmatprep.subr.bf16.mxu0 0
      %384 = vmatpush1.bf16.msra.mxu0 0
      %385 = vmatprep.subr.bf16.mxu0 0
      %386 = vmatpush1.bf16.msra.mxu0 %v369
      %387 = vmatprep.subr.bf16.mxu0 0
      %388 = vmatpush2.bf16.msra.mxu0 0
      %389 = vmatprep.subr.bf16.mxu0 0
      %390 = vmatpush2.bf16.msra.mxu0 0
      %391 = vmatprep.subr.bf16.mxu0 0
      %392 = vmatpush2.bf16.msra.mxu0 0
      %393 = vmatprep.subr.bf16.mxu0 0
      %394 = vmatpush2.bf16.msra.mxu0 0
      %395 = vmatprep.subr.bf16.mxu0 0
      %396 = vmatpush2.bf16.msra.mxu0 0
      %397 = vmatprep.subr.bf16.mxu0 0
      %398 = vmatpush2.bf16.msra.mxu0 0
      %399 = vmatprep.subr.bf16.mxu0 0
      %400 = vmatpush2.bf16.msra.mxu0 0
      %401 = vmatprep.subr.bf16.mxu0 0
      %402 = vmatpush2.bf16.msra.mxu0 0
      %403 = vmatprep.mubr.bf16.mxu0 0
      %404 = vmatmul.mubr.bf16.gmra.mxu0 %v320
      %v405 = vpop.f32.mrf.mxu0
      %v406 = vadd.f32 0.0, %v405
      %v407 = vpop.f32.mrf.mxu0
      %v408 = vpop.f32.mrf.mxu0
      %v409 = vadd.f32 0.0, %v408
      %v410 = vpop.f32.mrf.mxu0
      %411 = vmatprep.mubr.bf16.mxu0 0
      %412 = vmatmul.mubr.bf16.gmra.mxu0 %v323
      %v413 = vpop.f32.mrf.mxu0
      %v414 = vadd.f32 0.0, %v413
      %v415 = vpop.f32.mrf.mxu0
      %v416 = vpop.f32.mrf.mxu0
      %v417 = vadd.f32 0.0, %v416
      %v418 = vpop.f32.mrf.mxu0
      %419 = vmatprep.mubr.bf16.mxu0 0
      %420 = vmatmul.mubr.bf16.gmra.mxu0 %v326
      %v421 = vpop.f32.mrf.mxu0
      %v422 = vadd.f32 0.0, %v421
      %v423 = vpop.f32.mrf.mxu0
      %v424 = vpop.f32.mrf.mxu0
      %v425 = vadd.f32 0.0, %v424
      %v426 = vpop.f32.mrf.mxu0
      %427 = vmatprep.mubr.bf16.mxu0 0
      %428 = vmatmul.mubr.bf16.gmra.mxu0 %v329
      %v429 = vpop.f32.mrf.mxu0
      %v430 = vadd.f32 0.0, %v429
      %v431 = vpop.f32.mrf.mxu0
      %v432 = vpop.f32.mrf.mxu0
      %v433 = vadd.f32 0.0, %v432
      %v434 = vpop.f32.mrf.mxu0
      %435 = vmatprep.mubr.bf16.mxu0 0
      %436 = vmatmul.mubr.bf16.gmra.mxu0 %v332
      %v437 = vpop.f32.mrf.mxu0
      %v438 = vadd.f32 0.0, %v437
      %v439 = vpop.f32.mrf.mxu0
      %v440 = vpop.f32.mrf.mxu0
      %v441 = vadd.f32 0.0, %v440
      %v442 = vpop.f32.mrf.mxu0
      %443 = vmatprep.mubr.bf16.mxu0 0
      %444 = vmatmul.mubr.bf16.gmra.mxu0 %v335
      %v445 = vpop.f32.mrf.mxu0
      %v446 = vadd.f32 0.0, %v445
      %v447 = vpop.f32.mrf.mxu0
      %v448 = vpop.f32.mrf.mxu0
      %v449 = vadd.f32 0.0, %v448
      %v450 = vpop.f32.mrf.mxu0
      %451 = vmatprep.mubr.bf16.mxu0 0
      %452 = vmatmul.mubr.bf16.gmra.mxu0 %v338
      %v453 = vpop.f32.mrf.mxu0
      %v454 = vadd.f32 0.0, %v453
      %v455 = vpop.f32.mrf.mxu0
      %v456 = vpop.f32.mrf.mxu0
      %v457 = vadd.f32 0.0, %v456
      %v458 = vpop.f32.mrf.mxu0
      %459 = vmatprep.mubr.bf16.mxu0 0
      %460 = vmatmul.mubr.bf16.gmra.mxu0 %v341
      %v461 = vpop.f32.mrf.mxu0
      %v462 = vadd.f32 0.0, %v461
      %v463 = vpop.f32.mrf.mxu0
      %v464 = vpop.f32.mrf.mxu0
      %v465 = vadd.f32 0.0, %v464
      %v466 = vpop.f32.mrf.mxu0
      %467 = vmatprep.mubr.bf16.mxu0 0
      %468 = vmatmul.mubr.bf16.gmra.mxu0 %v344
      %v469 = vpop.f32.mrf.mxu0
      %v470 = vadd.f32 0.0, %v469
      %v471 = vpop.f32.mrf.mxu0
      %v472 = vpop.f32.mrf.mxu0
      %v473 = vadd.f32 0.0, %v472
      %v474 = vpop.f32.mrf.mxu0
      %475 = vmatprep.mubr.bf16.mxu0 0
      %476 = vmatmul.mubr.bf16.gmra.mxu0 %v347
      %v477 = vpop.f32.mrf.mxu0
      %v478 = vadd.f32 0.0, %v477
      %v479 = vpop.f32.mrf.mxu0
      %v480 = vpop.f32.mrf.mxu0
      %v481 = vadd.f32 0.0, %v480
      %v482 = vpop.f32.mrf.mxu0
      %483 = vmatprep.mubr.bf16.mxu0 0
      %484 = vmatmul.mubr.bf16.gmra.mxu0 %v350
      %v485 = vpop.f32.mrf.mxu0
      %v486 = vadd.f32 0.0, %v485
      %v487 = vpop.f32.mrf.mxu0
      %v488 = vpop.f32.mrf.mxu0
      %v489 = vadd.f32 0.0, %v488
      %v490 = vpop.f32.mrf.mxu0
      %491 = vmatprep.mubr.bf16.mxu0 0
      %492 = vmatmul.mubr.bf16.gmra.mxu0 %v353
      %v493 = vpop.f32.mrf.mxu0
      %v494 = vadd.f32 0.0, %v493
      %v495 = vpop.f32.mrf.mxu0
      %v496 = vpop.f32.mrf.mxu0
      %v497 = vadd.f32 0.0, %v496
      %v498 = vpop.f32.mrf.mxu0
      %499 = vmatprep.mubr.bf16.mxu0 0
      %500 = vmatmul.mubr.bf16.gmra.mxu0 %v356
      %v501 = vpop.f32.mrf.mxu0
      %v502 = vadd.f32 0.0, %v501
      %v503 = vpop.f32.mrf.mxu0
      %v504 = vpop.f32.mrf.mxu0
      %v505 = vadd.f32 0.0, %v504
      %v506 = vpop.f32.mrf.mxu0
      %507 = vmatprep.mubr.bf16.mxu0 0
      %508 = vmatmul.mubr.bf16.gmra.mxu0 %v359
      %v509 = vpop.f32.mrf.mxu0
      %v510 = vadd.f32 0.0, %v509
      %v511 = vpop.f32.mrf.mxu0
      %v512 = vpop.f32.mrf.mxu0
      %v513 = vadd.f32 0.0, %v512
      %v514 = vpop.f32.mrf.mxu0
      %515 = vmatprep.mubr.bf16.mxu0 0
      %516 = vmatmul.mubr.bf16.gmra.mxu0 %v362
      %v517 = vpop.f32.mrf.mxu0
      %v518 = vadd.f32 0.0, %v517
      %v519 = vpop.f32.mrf.mxu0
      %v520 = vpop.f32.mrf.mxu0
      %v521 = vadd.f32 0.0, %v520
      %v522 = vpop.f32.mrf.mxu0
      %523 = vmatprep.mubr.bf16.mxu0 0
      %524 = vmatmul.mubr.bf16.gmra.mxu0 %v365
      %v525 = vpop.f32.mrf.mxu0
      %v526 = vadd.f32 0.0, %v525
      %v527 = vpop.f32.mrf.mxu0
      %v528 = vpop.f32.mrf.mxu0
      %v529 = vadd.f32 0.0, %v528
      %v530 = vpop.f32.mrf.mxu0
      %531 = vdwg.mxu0
      %532 = vst [vmem:[%s202] sm:$0xff] %v406
      %533 = vst [vmem:[%s202 + $0x8] sm:$0xff] %v409
      %534 = vst [vmem:[%s202 + $0x10] sm:$0xff] %v414
      %535 = vst [vmem:[%s202 + $0x18] sm:$0xff] %v417
      %536 = vst [vmem:[%s202 + $0x20] sm:$0xff] %v422
      %537 = vst [vmem:[%s202 + $0x28] sm:$0xff] %v425
      %538 = vst [vmem:[%s202 + $0x30] sm:$0xff] %v430
      %539 = vst [vmem:[%s202 + $0x38] sm:$0xff] %v433
      %540 = vst [vmem:[%s202 + $0x40] sm:$0xff] %v438
      %541 = vst [vmem:[%s202 + $0x48] sm:$0xff] %v441
      %542 = vst [vmem:[%s202 + $0x50] sm:$0xff] %v446
      %543 = vst [vmem:[%s202 + $0x58] sm:$0xff] %v449
      %544 = vst [vmem:[%s202 + $0x60] sm:$0xff] %v454
      %545 = vst [vmem:[%s202 + $0x68] sm:$0xff] %v457
      %546 = vst [vmem:[%s202 + $0x70] sm:$0xff] %v462
      %547 = vst [vmem:[%s202 + $0x78] sm:$0xff] %v465
      %548 = vst [vmem:[%s202 + $0x80] sm:$0xff] %v470
      %549 = vst [vmem:[%s202 + $0x88] sm:$0xff] %v473
      %550 = vst [vmem:[%s202 + $0x90] sm:$0xff] %v478
      %551 = vst [vmem:[%s202 + $0x98] sm:$0xff] %v481
      %552 = vst [vmem:[%s202 + $0xa0] sm:$0xff] %v486
      %553 = vst [vmem:[%s202 + $0xa8] sm:$0xff] %v489
      %554 = vst [vmem:[%s202 + $0xb0] sm:$0xff] %v494
      %555 = vst [vmem:[%s202 + $0xb8] sm:$0xff] %v497
      %556 = vst [vmem:[%s202 + $0xc0] sm:$0xff] %v502
      %557 = vst [vmem:[%s202 + $0xc8] sm:$0xff] %v505
      %558 = vst [vmem:[%s202 + $0xd0] sm:$0xff] %v510
      %559 = vst [vmem:[%s202 + $0xd8] sm:$0xff] %v513
      %560 = vst [vmem:[%s202 + $0xe0] sm:$0xff] %v518
      %561 = vst [vmem:[%s202 + $0xe8] sm:$0xff] %v521
      %562 = vst [vmem:[%s202 + $0xf0] sm:$0xff] %v526
      %563 = vst [vmem:[%s202 + $0xf8] sm:$0xff] %v529
      %v564 = vld [vmem:[%s196] sm:$0xf]
      %v565 = vld [vmem:[%s196 + $0x4] sm:$0xf]
      %v566 = vld [vmem:[%s196 + $0x8] sm:$0x1]
      %v567 = vld [vmem:[%s196 + $0xc] sm:$0xf]
      %v568 = vld [vmem:[%s196 + $0x10] sm:$0xf]
      %v569 = vld [vmem:[%s196 + $0x14] sm:$0x1]
      %v570 = vld [vmem:[%s196 + $0x18] sm:$0xf]
      %v571 = vld [vmem:[%s196 + $0x1c] sm:$0xf]
      %v572 = vld [vmem:[%s196 + $0x20] sm:$0x1]
      %v573 = vld [vmem:[%s196 + $0x24] sm:$0xf]
      %v574 = vld [vmem:[%s196 + $0x28] sm:$0xf]
      %v575 = vld [vmem:[%s196 + $0x2c] sm:$0x1]
      %v576 = vld [vmem:[%s196 + $0x30] sm:$0xf]
      %v577 = vld [vmem:[%s196 + $0x34] sm:$0xf]
      %v578 = vld [vmem:[%s196 + $0x38] sm:$0x1]
      %v579 = vld [vmem:[%s196 + $0x3c] sm:$0xf]
      %v580 = vld [vmem:[%s196 + $0x40] sm:$0xf]
      %v581 = vld [vmem:[%s196 + $0x44] sm:$0x1]
      %v582 = vld [vmem:[%s196 + $0x48] sm:$0xf]
      %v583 = vld [vmem:[%s196 + $0x4c] sm:$0xf]
      %v584 = vld [vmem:[%s196 + $0x50] sm:$0x1]
      %v585 = vld [vmem:[%s196 + $0x54] sm:$0xf]
      %v586 = vld [vmem:[%s196 + $0x58] sm:$0xf]
      %v587 = vld [vmem:[%s196 + $0x5c] sm:$0x1]
      %v588 = vld [vmem:[%s196 + $0x60] sm:$0xf]
      %v589 = vld [vmem:[%s196 + $0x64] sm:$0xf]
      %v590 = vld [vmem:[%s196 + $0x68] sm:$0x1]
      %v591 = vld [vmem:[%s196 + $0x6c] sm:$0xf]
      %v592 = vld [vmem:[%s196 + $0x70] sm:$0xf]
      %v593 = vld [vmem:[%s196 + $0x74] sm:$0x1]
      %v594 = vld [vmem:[%s196 + $0x78] sm:$0xf]
      %v595 = vld [vmem:[%s196 + $0x7c] sm:$0xf]
      %v596 = vld [vmem:[%s196 + $0x80] sm:$0x1]
      %v597 = vld [vmem:[%s196 + $0x84] sm:$0xf]
      %v598 = vld [vmem:[%s196 + $0x88] sm:$0xf]
      %v599 = vld [vmem:[%s196 + $0x8c] sm:$0x1]
      %v600 = vld [vmem:[%s196 + $0x90] sm:$0xf]
      %v601 = vld [vmem:[%s196 + $0x94] sm:$0xf]
      %v602 = vld [vmem:[%s196 + $0x98] sm:$0x1]
      %v603 = vld [vmem:[%s196 + $0x9c] sm:$0xf]
      %v604 = vld [vmem:[%s196 + $0xa0] sm:$0xf]
      %v605 = vld [vmem:[%s196 + $0xa4] sm:$0x1]
      %v606 = vld [vmem:[%s196 + $0xa8] sm:$0xf]
      %v607 = vld [vmem:[%s196 + $0xac] sm:$0xf]
      %v608 = vld [vmem:[%s196 + $0xb0] sm:$0x1]
      %v609 = vld [vmem:[%s196 + $0xb4] sm:$0xf]
      %v610 = vld [vmem:[%s196 + $0xb8] sm:$0xf]
      %v611 = vld [vmem:[%s196 + $0xbc] sm:$0x1]
      %vm612 = vsmask.f32 3328
      %vm613 = vsmask.f32 7440
      %vm614 = vmor %vm612, %vm613
      %v616 = vshrl.u32 %v564, 16
      %v618 = vrot.slane %v616, 4
      %v619 = vshll.u32 %v564, 16
      %v621 = vrot.slane %v619, 5
      %v622 = vor.u32 %v618, %v621
      %v623 = vrot.slane %v622, 4
      %v625 = vshll.u32 %v565, 16
      %v627 = vrot.slane %v625, 5
      %v628 = vsel %vm614, %v623, %v627
      %v629 = vshrl.u32 %v565, 16
      %v631 = vrot.slane %v629, 4
      %v632 = vor.u32 %v631, %v627
      %v633 = vrot.slane %v632, 4
      %v635 = vshll.u32 %v566, 16
      %v637 = vrot.slane %v635, 5
      %v638 = vsel %vm614, %v633, %v637
      %v640 = vshrl.u32 %v567, 16
      %v642 = vrot.slane %v640, 4
      %v643 = vshll.u32 %v567, 16
      %v645 = vrot.slane %v643, 5
      %v646 = vor.u32 %v642, %v645
      %v647 = vrot.slane %v646, 4
      %v649 = vshll.u32 %v568, 16
      %v651 = vrot.slane %v649, 5
      %v652 = vsel %vm614, %v647, %v651
      %v653 = vshrl.u32 %v568, 16
      %v655 = vrot.slane %v653, 4
      %v656 = vor.u32 %v655, %v651
      %v657 = vrot.slane %v656, 4
      %v659 = vshll.u32 %v569, 16
      %v661 = vrot.slane %v659, 5
      %v662 = vsel %vm614, %v657, %v661
      %v664 = vshrl.u32 %v570, 16
      %v666 = vrot.slane %v664, 4
      %v667 = vshll.u32 %v570, 16
      %v669 = vrot.slane %v667, 5
      %v670 = vor.u32 %v666, %v669
      %v671 = vrot.slane %v670, 4
      %v673 = vshll.u32 %v571, 16
      %v675 = vrot.slane %v673, 5
      %v676 = vsel %vm614, %v671, %v675
      %v677 = vshrl.u32 %v571, 16
      %v679 = vrot.slane %v677, 4
      %v680 = vor.u32 %v679, %v675
      %v681 = vrot.slane %v680, 4
      %v683 = vshll.u32 %v572, 16
      %v685 = vrot.slane %v683, 5
      %v686 = vsel %vm614, %v681, %v685
      %v688 = vshrl.u32 %v573, 16
      %v690 = vrot.slane %v688, 4
      %v691 = vshll.u32 %v573, 16
      %v693 = vrot.slane %v691, 5
      %v694 = vor.u32 %v690, %v693
      %v695 = vrot.slane %v694, 4
      %v697 = vshll.u32 %v574, 16
      %v699 = vrot.slane %v697, 5
      %v700 = vsel %vm614, %v695, %v699
      %v701 = vshrl.u32 %v574, 16
      %v703 = vrot.slane %v701, 4
      %v704 = vor.u32 %v703, %v699
      %v705 = vrot.slane %v704, 4
      %v707 = vshll.u32 %v575, 16
      %v709 = vrot.slane %v707, 5
      %v710 = vsel %vm614, %v705, %v709
      %v712 = vshrl.u32 %v576, 16
      %v714 = vrot.slane %v712, 4
      %v715 = vshll.u32 %v576, 16
      %v717 = vrot.slane %v715, 5
      %v718 = vor.u32 %v714, %v717
      %v719 = vrot.slane %v718, 4
      %v721 = vshll.u32 %v577, 16
      %v723 = vrot.slane %v721, 5
      %v724 = vsel %vm614, %v719, %v723
      %v725 = vshrl.u32 %v577, 16
      %v727 = vrot.slane %v725, 4
      %v728 = vor.u32 %v727, %v723
      %v729 = vrot.slane %v728, 4
      %v731 = vshll.u32 %v578, 16
      %v733 = vrot.slane %v731, 5
      %v734 = vsel %vm614, %v729, %v733
      %v736 = vshrl.u32 %v579, 16
      %v738 = vrot.slane %v736, 4
      %v739 = vshll.u32 %v579, 16
      %v741 = vrot.slane %v739, 5
      %v742 = vor.u32 %v738, %v741
      %v743 = vrot.slane %v742, 4
      %v745 = vshll.u32 %v580, 16
      %v747 = vrot.slane %v745, 5
      %v748 = vsel %vm614, %v743, %v747
      %v749 = vshrl.u32 %v580, 16
      %v751 = vrot.slane %v749, 4
      %v752 = vor.u32 %v751, %v747
      %v753 = vrot.slane %v752, 4
      %v755 = vshll.u32 %v581, 16
      %v757 = vrot.slane %v755, 5
      %v758 = vsel %vm614, %v753, %v757
      %v760 = vshrl.u32 %v582, 16
      %v762 = vrot.slane %v760, 4
      %v763 = vshll.u32 %v582, 16
      %v765 = vrot.slane %v763, 5
      %v766 = vor.u32 %v762, %v765
      %v767 = vrot.slane %v766, 4
      %v769 = vshll.u32 %v583, 16
      %v771 = vrot.slane %v769, 5
      %v772 = vsel %vm614, %v767, %v771
      %v773 = vshrl.u32 %v583, 16
      %v775 = vrot.slane %v773, 4
      %v776 = vor.u32 %v775, %v771
      %v777 = vrot.slane %v776, 4
      %v779 = vshll.u32 %v584, 16
      %v781 = vrot.slane %v779, 5
      %v782 = vsel %vm614, %v777, %v781
      %v784 = vshrl.u32 %v585, 16
      %v786 = vrot.slane %v784, 4
      %v787 = vshll.u32 %v585, 16
      %v789 = vrot.slane %v787, 5
      %v790 = vor.u32 %v786, %v789
      %v791 = vrot.slane %v790, 4
      %v793 = vshll.u32 %v586, 16
      %v795 = vrot.slane %v793, 5
      %v796 = vsel %vm614, %v791, %v795
      %v797 = vshrl.u32 %v586, 16
      %v799 = vrot.slane %v797, 4
      %v800 = vor.u32 %v799, %v795
      %v801 = vrot.slane %v800, 4
      %v803 = vshll.u32 %v587, 16
      %v805 = vrot.slane %v803, 5
      %v806 = vsel %vm614, %v801, %v805
      %v808 = vshrl.u32 %v588, 16
      %v810 = vrot.slane %v808, 4
      %v811 = vshll.u32 %v588, 16
      %v813 = vrot.slane %v811, 5
      %v814 = vor.u32 %v810, %v813
      %v815 = vrot.slane %v814, 4
      %v817 = vshll.u32 %v589, 16
      %v819 = vrot.slane %v817, 5
      %v820 = vsel %vm614, %v815, %v819
      %v821 = vshrl.u32 %v589, 16
      %v823 = vrot.slane %v821, 4
      %v824 = vor.u32 %v823, %v819
      %v825 = vrot.slane %v824, 4
      %v827 = vshll.u32 %v590, 16
      %v829 = vrot.slane %v827, 5
      %v830 = vsel %vm614, %v825, %v829
      %v832 = vshrl.u32 %v591, 16
      %v834 = vrot.slane %v832, 4
      %v835 = vshll.u32 %v591, 16
      %v837 = vrot.slane %v835, 5
      %v838 = vor.u32 %v834, %v837
      %v839 = vrot.slane %v838, 4
      %v841 = vshll.u32 %v592, 16
      %v843 = vrot.slane %v841, 5
      %v844 = vsel %vm614, %v839, %v843
      %v845 = vshrl.u32 %v592, 16
      %v847 = vrot.slane %v845, 4
      %v848 = vor.u32 %v847, %v843
      %v849 = vrot.slane %v848, 4
      %v851 = vshll.u32 %v593, 16
      %v853 = vrot.slane %v851, 5
      %v854 = vsel %vm614, %v849, %v853
      %v856 = vshrl.u32 %v594, 16
      %v858 = vrot.slane %v856, 4
      %v859 = vshll.u32 %v594, 16
      %v861 = vrot.slane %v859, 5
      %v862 = vor.u32 %v858, %v861
      %v863 = vrot.slane %v862, 4
      %v865 = vshll.u32 %v595, 16
      %v867 = vrot.slane %v865, 5
      %v868 = vsel %vm614, %v863, %v867
      %v869 = vshrl.u32 %v595, 16
      %v871 = vrot.slane %v869, 4
      %v872 = vor.u32 %v871, %v867
      %v873 = vrot.slane %v872, 4
      %v875 = vshll.u32 %v596, 16
      %v877 = vrot.slane %v875, 5
      %v878 = vsel %vm614, %v873, %v877
      %v880 = vshrl.u32 %v597, 16
      %v882 = vrot.slane %v880, 4
      %v883 = vshll.u32 %v597, 16
      %v885 = vrot.slane %v883, 5
      %v886 = vor.u32 %v882, %v885
      %v887 = vrot.slane %v886, 4
      %v889 = vshll.u32 %v598, 16
      %v891 = vrot.slane %v889, 5
      %v892 = vsel %vm614, %v887, %v891
      %v893 = vshrl.u32 %v598, 16
      %v895 = vrot.slane %v893, 4
      %v896 = vor.u32 %v895, %v891
      %v897 = vrot.slane %v896, 4
      %v899 = vshll.u32 %v599, 16
      %v901 = vrot.slane %v899, 5
      %v902 = vsel %vm614, %v897, %v901
      %v904 = vshrl.u32 %v600, 16
      %v906 = vrot.slane %v904, 4
      %v907 = vshll.u32 %v600, 16
      %v909 = vrot.slane %v907, 5
      %v910 = vor.u32 %v906, %v909
      %v911 = vrot.slane %v910, 4
      %v913 = vshll.u32 %v601, 16
      %v915 = vrot.slane %v913, 5
      %v916 = vsel %vm614, %v911, %v915
      %v917 = vshrl.u32 %v601, 16
      %v919 = vrot.slane %v917, 4
      %v920 = vor.u32 %v919, %v915
      %v921 = vrot.slane %v920, 4
      %v923 = vshll.u32 %v602, 16
      %v925 = vrot.slane %v923, 5
      %v926 = vsel %vm614, %v921, %v925
      %v928 = vshrl.u32 %v603, 16
      %v930 = vrot.slane %v928, 4
      %v931 = vshll.u32 %v603, 16
      %v933 = vrot.slane %v931, 5
      %v934 = vor.u32 %v930, %v933
      %v935 = vrot.slane %v934, 4
      %v937 = vshll.u32 %v604, 16
      %v939 = vrot.slane %v937, 5
      %v940 = vsel %vm614, %v935, %v939
      %v941 = vshrl.u32 %v604, 16
      %v943 = vrot.slane %v941, 4
      %v944 = vor.u32 %v943, %v939
      %v945 = vrot.slane %v944, 4
      %v947 = vshll.u32 %v605, 16
      %v949 = vrot.slane %v947, 5
      %v950 = vsel %vm614, %v945, %v949
      %v952 = vshrl.u32 %v606, 16
      %v954 = vrot.slane %v952, 4
      %v955 = vshll.u32 %v606, 16
      %v957 = vrot.slane %v955, 5
      %v958 = vor.u32 %v954, %v957
      %v959 = vrot.slane %v958, 4
      %v961 = vshll.u32 %v607, 16
      %v963 = vrot.slane %v961, 5
      %v964 = vsel %vm614, %v959, %v963
      %v965 = vshrl.u32 %v607, 16
      %v967 = vrot.slane %v965, 4
      %v968 = vor.u32 %v967, %v963
      %v969 = vrot.slane %v968, 4
      %v971 = vshll.u32 %v608, 16
      %v973 = vrot.slane %v971, 5
      %v974 = vsel %vm614, %v969, %v973
      %v976 = vshrl.u32 %v609, 16
      %v978 = vrot.slane %v976, 4
      %v979 = vshll.u32 %v609, 16
      %v981 = vrot.slane %v979, 5
      %v982 = vor.u32 %v978, %v981
      %v983 = vrot.slane %v982, 4
      %v985 = vshll.u32 %v610, 16
      %v987 = vrot.slane %v985, 5
      %v988 = vsel %vm614, %v983, %v987
      %v989 = vshrl.u32 %v610, 16
      %v991 = vrot.slane %v989, 4
      %v992 = vor.u32 %v991, %v987
      %v993 = vrot.slane %v992, 4
      %v995 = vshll.u32 %v611, 16
      %v997 = vrot.slane %v995, 5
      %v998 = vsel %vm614, %v993, %v997
      %s999 = scalar_lea.vmem %s1, 2
      %v1000 = vld [vmem:[%s999] sm:$0x3]
      %v1001 = vunpack.c.l.b16 %v628
      %v1002 = vunpack.c.l.b16 %v638
      %v1003 = vunpack.c.l.b16 %v652
      %v1004 = vunpack.c.l.b16 %v662
      %v1005 = vunpack.c.l.b16 %v676
      %v1006 = vunpack.c.l.b16 %v686
      %v1007 = vunpack.c.l.b16 %v700
      %v1008 = vunpack.c.l.b16 %v710
      %v1009 = vunpack.c.l.b16 %v724
      %v1010 = vunpack.c.l.b16 %v734
      %v1011 = vunpack.c.l.b16 %v748
      %v1012 = vunpack.c.l.b16 %v758
      %v1013 = vunpack.c.l.b16 %v772
      %v1014 = vunpack.c.l.b16 %v782
      %v1015 = vunpack.c.l.b16 %v796
      %v1016 = vunpack.c.l.b16 %v806
      %v1017 = vunpack.c.l.b16 %v820
      %v1018 = vunpack.c.l.b16 %v830
      %v1019 = vunpack.c.l.b16 %v844
      %v1020 = vunpack.c.l.b16 %v854
      %v1021 = vunpack.c.l.b16 %v868
      %v1022 = vunpack.c.l.b16 %v878
      %v1023 = vunpack.c.l.b16 %v892
      %v1024 = vunpack.c.l.b16 %v902
      %v1025 = vunpack.c.l.b16 %v916
      %v1026 = vunpack.c.l.b16 %v926
      %v1027 = vunpack.c.l.b16 %v940
      %v1028 = vunpack.c.l.b16 %v950
      %v1029 = vunpack.c.l.b16 %v964
      %v1030 = vunpack.c.l.b16 %v974
      %v1031 = vunpack.c.l.b16 %v988
      %v1032 = vunpack.c.l.b16 %v998
      %v1033 = vpack.c.b16 %v1002, %v1001
      %v1034 = vpack.c.b16 %v1004, %v1003
      %v1035 = vpack.c.b16 %v1006, %v1005
      %v1036 = vpack.c.b16 %v1008, %v1007
      %v1037 = vpack.c.b16 %v1010, %v1009
      %v1038 = vpack.c.b16 %v1012, %v1011
      %v1039 = vpack.c.b16 %v1014, %v1013
      %v1040 = vpack.c.b16 %v1016, %v1015
      %v1041 = vpack.c.b16 %v1018, %v1017
      %v1042 = vpack.c.b16 %v1020, %v1019
      %v1043 = vpack.c.b16 %v1022, %v1021
      %v1044 = vpack.c.b16 %v1024, %v1023
      %v1045 = vpack.c.b16 %v1026, %v1025
      %v1046 = vpack.c.b16 %v1028, %v1027
      %v1047 = vpack.c.b16 %v1030, %v1029
      %v1048 = vpack.c.b16 %v1032, %v1031
      %v1050 = vsel %vm318, %v1033, 0
      %v1053 = vsel %vm318, %v1034, 0
      %v1056 = vsel %vm318, %v1035, 0
      %v1059 = vsel %vm318, %v1036, 0
      %v1062 = vsel %vm318, %v1037, 0
      %v1065 = vsel %vm318, %v1038, 0
      %v1068 = vsel %vm318, %v1039, 0
      %v1071 = vsel %vm318, %v1040, 0
      %v1074 = vsel %vm318, %v1041, 0
      %v1077 = vsel %vm318, %v1042, 0
      %v1080 = vsel %vm318, %v1043, 0
      %v1083 = vsel %vm318, %v1044, 0
      %v1086 = vsel %vm318, %v1045, 0
      %v1089 = vsel %vm318, %v1046, 0
      %v1092 = vsel %vm318, %v1047, 0
      %v1095 = vsel %vm318, %v1048, 0
      %v1098 = vsel %vm367, %v1000, 0
      %1100 = vmatprep.subr.bf16.mxu0 0
      %1101 = vmatpush1.bf16.msra.mxu0 0
      %1102 = vmatprep.subr.bf16.mxu0 0
      %1103 = vmatpush1.bf16.msra.mxu0 0
      %1104 = vmatprep.subr.bf16.mxu0 0
      %1105 = vmatpush1.bf16.msra.mxu0 0
      %1106 = vmatprep.subr.bf16.mxu0 0
      %1107 = vmatpush1.bf16.msra.mxu0 0
      %1108 = vmatprep.subr.bf16.mxu0 0
      %1109 = vmatpush1.bf16.msra.mxu0 0
      %1110 = vmatprep.subr.bf16.mxu0 0
      %1111 = vmatpush1.bf16.msra.mxu0 0
      %1112 = vmatprep.subr.bf16.mxu0 0
      %1113 = vmatpush1.bf16.msra.mxu0 0
      %1114 = vmatprep.subr.bf16.mxu0 0
      %1115 = vmatpush1.bf16.msra.mxu0 %v1098
      %1116 = vmatprep.subr.bf16.mxu0 0
      %1117 = vmatpush2.bf16.msra.mxu0 0
      %1118 = vmatprep.subr.bf16.mxu0 0
      %1119 = vmatpush2.bf16.msra.mxu0 0
      %1120 = vmatprep.subr.bf16.mxu0 0
      %1121 = vmatpush2.bf16.msra.mxu0 0
      %1122 = vmatprep.subr.bf16.mxu0 0
      %1123 = vmatpush2.bf16.msra.mxu0 0
      %1124 = vmatprep.subr.bf16.mxu0 0
      %1125 = vmatpush2.bf16.msra.mxu0 0
      %1126 = vmatprep.subr.bf16.mxu0 0
      %1127 = vmatpush2.bf16.msra.mxu0 0
      %1128 = vmatprep.subr.bf16.mxu0 0
      %1129 = vmatpush2.bf16.msra.mxu0 0
      %1130 = vmatprep.subr.bf16.mxu0 0
      %1131 = vmatpush2.bf16.msra.mxu0 0
      %1132 = vmatprep.mubr.bf16.mxu0 0
      %1133 = vmatmul.mubr.bf16.gmra.mxu0 %v1050
      %v1134 = vpop.f32.mrf.mxu0
      %v1135 = vadd.f32 0.0, %v1134
      %v1136 = vpop.f32.mrf.mxu0
      %v1137 = vpop.f32.mrf.mxu0
      %v1138 = vadd.f32 0.0, %v1137
      %v1139 = vpop.f32.mrf.mxu0
      %1140 = vmatprep.mubr.bf16.mxu0 0
      %1141 = vmatmul.mubr.bf16.gmra.mxu0 %v1053
      %v1142 = vpop.f32.mrf.mxu0
      %v1143 = vadd.f32 0.0, %v1142
      %v1144 = vpop.f32.mrf.mxu0
      %v1145 = vpop.f32.mrf.mxu0
      %v1146 = vadd.f32 0.0, %v1145
      %v1147 = vpop.f32.mrf.mxu0
      %1148 = vmatprep.mubr.bf16.mxu0 0
      %1149 = vmatmul.mubr.bf16.gmra.mxu0 %v1056
      %v1150 = vpop.f32.mrf.mxu0
      %v1151 = vadd.f32 0.0, %v1150
      %v1152 = vpop.f32.mrf.mxu0
      %v1153 = vpop.f32.mrf.mxu0
      %v1154 = vadd.f32 0.0, %v1153
      %v1155 = vpop.f32.mrf.mxu0
      %1156 = vmatprep.mubr.bf16.mxu0 0
      %1157 = vmatmul.mubr.bf16.gmra.mxu0 %v1059
      %v1158 = vpop.f32.mrf.mxu0
      %v1159 = vadd.f32 0.0, %v1158
      %v1160 = vpop.f32.mrf.mxu0
      %v1161 = vpop.f32.mrf.mxu0
      %v1162 = vadd.f32 0.0, %v1161
      %v1163 = vpop.f32.mrf.mxu0
      %1164 = vmatprep.mubr.bf16.mxu0 0
      %1165 = vmatmul.mubr.bf16.gmra.mxu0 %v1062
      %v1166 = vpop.f32.mrf.mxu0
      %v1167 = vadd.f32 0.0, %v1166
      %v1168 = vpop.f32.mrf.mxu0
      %v1169 = vpop.f32.mrf.mxu0
      %v1170 = vadd.f32 0.0, %v1169
      %v1171 = vpop.f32.mrf.mxu0
      %1172 = vmatprep.mubr.bf16.mxu0 0
      %1173 = vmatmul.mubr.bf16.gmra.mxu0 %v1065
      %v1174 = vpop.f32.mrf.mxu0
      %v1175 = vadd.f32 0.0, %v1174
      %v1176 = vpop.f32.mrf.mxu0
      %v1177 = vpop.f32.mrf.mxu0
      %v1178 = vadd.f32 0.0, %v1177
      %v1179 = vpop.f32.mrf.mxu0
      %1180 = vmatprep.mubr.bf16.mxu0 0
      %1181 = vmatmul.mubr.bf16.gmra.mxu0 %v1068
      %v1182 = vpop.f32.mrf.mxu0
      %v1183 = vadd.f32 0.0, %v1182
      %v1184 = vpop.f32.mrf.mxu0
      %v1185 = vpop.f32.mrf.mxu0
      %v1186 = vadd.f32 0.0, %v1185
      %v1187 = vpop.f32.mrf.mxu0
      %1188 = vmatprep.mubr.bf16.mxu0 0
      %1189 = vmatmul.mubr.bf16.gmra.mxu0 %v1071
      %v1190 = vpop.f32.mrf.mxu0
      %v1191 = vadd.f32 0.0, %v1190
      %v1192 = vpop.f32.mrf.mxu0
      %v1193 = vpop.f32.mrf.mxu0
      %v1194 = vadd.f32 0.0, %v1193
      %v1195 = vpop.f32.mrf.mxu0
      %1196 = vmatprep.mubr.bf16.mxu0 0
      %1197 = vmatmul.mubr.bf16.gmra.mxu0 %v1074
      %v1198 = vpop.f32.mrf.mxu0
      %v1199 = vadd.f32 0.0, %v1198
      %v1200 = vpop.f32.mrf.mxu0
      %v1201 = vpop.f32.mrf.mxu0
      %v1202 = vadd.f32 0.0, %v1201
      %v1203 = vpop.f32.mrf.mxu0
      %1204 = vmatprep.mubr.bf16.mxu0 0
      %1205 = vmatmul.mubr.bf16.gmra.mxu0 %v1077
      %v1206 = vpop.f32.mrf.mxu0
      %v1207 = vadd.f32 0.0, %v1206
      %v1208 = vpop.f32.mrf.mxu0
      %v1209 = vpop.f32.mrf.mxu0
      %v1210 = vadd.f32 0.0, %v1209
      %v1211 = vpop.f32.mrf.mxu0
      %1212 = vmatprep.mubr.bf16.mxu0 0
      %1213 = vmatmul.mubr.bf16.gmra.mxu0 %v1080
      %v1214 = vpop.f32.mrf.mxu0
      %v1215 = vadd.f32 0.0, %v1214
      %v1216 = vpop.f32.mrf.mxu0
      %v1217 = vpop.f32.mrf.mxu0
      %v1218 = vadd.f32 0.0, %v1217
      %v1219 = vpop.f32.mrf.mxu0
      %1220 = vmatprep.mubr.bf16.mxu0 0
      %1221 = vmatmul.mubr.bf16.gmra.mxu0 %v1083
      %v1222 = vpop.f32.mrf.mxu0
      %v1223 = vadd.f32 0.0, %v1222
      %v1224 = vpop.f32.mrf.mxu0
      %v1225 = vpop.f32.mrf.mxu0
      %v1226 = vadd.f32 0.0, %v1225
      %v1227 = vpop.f32.mrf.mxu0
      %1228 = vmatprep.mubr.bf16.mxu0 0
      %1229 = vmatmul.mubr.bf16.gmra.mxu0 %v1086
      %v1230 = vpop.f32.mrf.mxu0
      %v1231 = vadd.f32 0.0, %v1230
      %v1232 = vpop.f32.mrf.mxu0
      %v1233 = vpop.f32.mrf.mxu0
      %v1234 = vadd.f32 0.0, %v1233
      %v1235 = vpop.f32.mrf.mxu0
      %1236 = vmatprep.mubr.bf16.mxu0 0
      %1237 = vmatmul.mubr.bf16.gmra.mxu0 %v1089
      %v1238 = vpop.f32.mrf.mxu0
      %v1239 = vadd.f32 0.0, %v1238
      %v1240 = vpop.f32.mrf.mxu0
      %v1241 = vpop.f32.mrf.mxu0
      %v1242 = vadd.f32 0.0, %v1241
      %v1243 = vpop.f32.mrf.mxu0
      %1244 = vmatprep.mubr.bf16.mxu0 0
      %1245 = vmatmul.mubr.bf16.gmra.mxu0 %v1092
      %v1246 = vpop.f32.mrf.mxu0
      %v1247 = vadd.f32 0.0, %v1246
      %v1248 = vpop.f32.mrf.mxu0
      %v1249 = vpop.f32.mrf.mxu0
      %v1250 = vadd.f32 0.0, %v1249
      %v1251 = vpop.f32.mrf.mxu0
      %1252 = vmatprep.mubr.bf16.mxu0 0
      %1253 = vmatmul.mubr.bf16.gmra.mxu0 %v1095
      %v1254 = vpop.f32.mrf.mxu0
      %v1255 = vadd.f32 0.0, %v1254
      %v1256 = vpop.f32.mrf.mxu0
      %v1257 = vpop.f32.mrf.mxu0
      %v1258 = vadd.f32 0.0, %v1257
      %v1259 = vpop.f32.mrf.mxu0
      %1260 = vdwg.mxu0
      %v1261 = vld [vmem:[%s202] sm:$0xff]
      %v1262 = vld [vmem:[%s202 + $0x8] sm:$0xff]
      %v1263 = vld [vmem:[%s202 + $0x10] sm:$0xff]
      %v1264 = vld [vmem:[%s202 + $0x18] sm:$0xff]
      %v1265 = vld [vmem:[%s202 + $0x20] sm:$0xff]
      %v1266 = vld [vmem:[%s202 + $0x28] sm:$0xff]
      %v1267 = vld [vmem:[%s202 + $0x30] sm:$0xff]
      %v1268 = vld [vmem:[%s202 + $0x38] sm:$0xff]
      %v1269 = vld [vmem:[%s202 + $0x40] sm:$0xff]
      %v1270 = vld [vmem:[%s202 + $0x48] sm:$0xff]
      %v1271 = vld [vmem:[%s202 + $0x50] sm:$0xff]
      %v1272 = vld [vmem:[%s202 + $0x58] sm:$0xff]
      %v1273 = vld [vmem:[%s202 + $0x60] sm:$0xff]
      %v1274 = vld [vmem:[%s202 + $0x68] sm:$0xff]
      %v1275 = vld [vmem:[%s202 + $0x70] sm:$0xff]
      %v1276 = vld [vmem:[%s202 + $0x78] sm:$0xff]
      %v1277 = vld [vmem:[%s202 + $0x80] sm:$0xff]
      %v1278 = vld [vmem:[%s202 + $0x88] sm:$0xff]
      %v1279 = vld [vmem:[%s202 + $0x90] sm:$0xff]
      %v1280 = vld [vmem:[%s202 + $0x98] sm:$0xff]
      %v1281 = vld [vmem:[%s202 + $0xa0] sm:$0xff]
      %v1282 = vld [vmem:[%s202 + $0xa8] sm:$0xff]
      %v1283 = vld [vmem:[%s202 + $0xb0] sm:$0xff]
      %v1284 = vld [vmem:[%s202 + $0xb8] sm:$0xff]
      %v1285 = vld [vmem:[%s202 + $0xc0] sm:$0xff]
      %v1286 = vld [vmem:[%s202 + $0xc8] sm:$0xff]
      %v1287 = vld [vmem:[%s202 + $0xd0] sm:$0xff]
      %v1288 = vld [vmem:[%s202 + $0xd8] sm:$0xff]
      %v1289 = vld [vmem:[%s202 + $0xe0] sm:$0xff]
      %v1290 = vld [vmem:[%s202 + $0xe8] sm:$0xff]
      %v1291 = vld [vmem:[%s202 + $0xf0] sm:$0xff]
      %v1292 = vld [vmem:[%s202 + $0xf8] sm:$0xff]
      %v1293 = vadd.f32 %v1261, %v1135
      %v1294 = vadd.f32 %v1262, %v1138
      %v1295 = vadd.f32 %v1263, %v1143
      %v1296 = vadd.f32 %v1264, %v1146
      %v1297 = vadd.f32 %v1265, %v1151
      %v1298 = vadd.f32 %v1266, %v1154
      %v1299 = vadd.f32 %v1267, %v1159
      %v1300 = vadd.f32 %v1268, %v1162
      %v1301 = vadd.f32 %v1269, %v1167
      %v1302 = vadd.f32 %v1270, %v1170
      %v1303 = vadd.f32 %v1271, %v1175
      %v1304 = vadd.f32 %v1272, %v1178
      %v1305 = vadd.f32 %v1273, %v1183
      %v1306 = vadd.f32 %v1274, %v1186
      %v1307 = vadd.f32 %v1275, %v1191
      %v1308 = vadd.f32 %v1276, %v1194
      %v1309 = vadd.f32 %v1277, %v1199
      %v1310 = vadd.f32 %v1278, %v1202
      %v1311 = vadd.f32 %v1279, %v1207
      %v1312 = vadd.f32 %v1280, %v1210
      %v1313 = vadd.f32 %v1281, %v1215
      %v1314 = vadd.f32 %v1282, %v1218
      %v1315 = vadd.f32 %v1283, %v1223
      %v1316 = vadd.f32 %v1284, %v1226
      %v1317 = vadd.f32 %v1285, %v1231
      %v1318 = vadd.f32 %v1286, %v1234
      %v1319 = vadd.f32 %v1287, %v1239
      %v1320 = vadd.f32 %v1288, %v1242
      %v1321 = vadd.f32 %v1289, %v1247
      %v1322 = vadd.f32 %v1290, %v1250
      %v1323 = vadd.f32 %v1291, %v1255
      %v1324 = vadd.f32 %v1292, %v1258
      %1325 = vst [vmem:[%s202] sm:$0xff] %v1293
      %1326 = vst [vmem:[%s202 + $0x8] sm:$0xff] %v1294
      %1327 = vst [vmem:[%s202 + $0x10] sm:$0xff] %v1295
      %1328 = vst [vmem:[%s202 + $0x18] sm:$0xff] %v1296
      %1329 = vst [vmem:[%s202 + $0x20] sm:$0xff] %v1297
      %1330 = vst [vmem:[%s202 + $0x28] sm:$0xff] %v1298
      %1331 = vst [vmem:[%s202 + $0x30] sm:$0xff] %v1299
      %1332 = vst [vmem:[%s202 + $0x38] sm:$0xff] %v1300
      %1333 = vst [vmem:[%s202 + $0x40] sm:$0xff] %v1301
      %1334 = vst [vmem:[%s202 + $0x48] sm:$0xff] %v1302
      %1335 = vst [vmem:[%s202 + $0x50] sm:$0xff] %v1303
      %1336 = vst [vmem:[%s202 + $0x58] sm:$0xff] %v1304
      %1337 = vst [vmem:[%s202 + $0x60] sm:$0xff] %v1305
      %1338 = vst [vmem:[%s202 + $0x68] sm:$0xff] %v1306
      %1339 = vst [vmem:[%s202 + $0x70] sm:$0xff] %v1307
      %1340 = vst [vmem:[%s202 + $0x78] sm:$0xff] %v1308
      %1341 = vst [vmem:[%s202 + $0x80] sm:$0xff] %v1309
      %1342 = vst [vmem:[%s202 + $0x88] sm:$0xff] %v1310
      %1343 = vst [vmem:[%s202 + $0x90] sm:$0xff] %v1311
      %1344 = vst [vmem:[%s202 + $0x98] sm:$0xff] %v1312
      %1345 = vst [vmem:[%s202 + $0xa0] sm:$0xff] %v1313
      %1346 = vst [vmem:[%s202 + $0xa8] sm:$0xff] %v1314
      %1347 = vst [vmem:[%s202 + $0xb0] sm:$0xff] %v1315
      %1348 = vst [vmem:[%s202 + $0xb8] sm:$0xff] %v1316
      %1349 = vst [vmem:[%s202 + $0xc0] sm:$0xff] %v1317
      %1350 = vst [vmem:[%s202 + $0xc8] sm:$0xff] %v1318
      %1351 = vst [vmem:[%s202 + $0xd0] sm:$0xff] %v1319
      %1352 = vst [vmem:[%s202 + $0xd8] sm:$0xff] %v1320
      %1353 = vst [vmem:[%s202 + $0xe0] sm:$0xff] %v1321
      %1354 = vst [vmem:[%s202 + $0xe8] sm:$0xff] %v1322
      %1355 = vst [vmem:[%s202 + $0xf0] sm:$0xff] %v1323
      %1356 = vst [vmem:[%s202 + $0xf8] sm:$0xff] %v1324
      %v1357 = vld [vmem:[%s196] sm:$0xe]
      %v1358 = vld [vmem:[%s196 + $0x4] sm:$0xf]
      %v1359 = vld [vmem:[%s196 + $0x8] sm:$0x1]
      %v1360 = vld [vmem:[%s196 + $0xc] sm:$0xe]
      %v1361 = vld [vmem:[%s196 + $0x10] sm:$0xf]
      %v1362 = vld [vmem:[%s196 + $0x14] sm:$0x1]
      %v1363 = vld [vmem:[%s196 + $0x18] sm:$0xe]
      %v1364 = vld [vmem:[%s196 + $0x1c] sm:$0xf]
      %v1365 = vld [vmem:[%s196 + $0x20] sm:$0x1]
      %v1366 = vld [vmem:[%s196 + $0x24] sm:$0xe]
      %v1367 = vld [vmem:[%s196 + $0x28] sm:$0xf]
      %v1368 = vld [vmem:[%s196 + $0x2c] sm:$0x1]
      %v1369 = vld [vmem:[%s196 + $0x30] sm:$0xe]
      %v1370 = vld [vmem:[%s196 + $0x34] sm:$0xf]
      %v1371 = vld [vmem:[%s196 + $0x38] sm:$0x1]
      %v1372 = vld [vmem:[%s196 + $0x3c] sm:$0xe]
      %v1373 = vld [vmem:[%s196 + $0x40] sm:$0xf]
      %v1374 = vld [vmem:[%s196 + $0x44] sm:$0x1]
      %v1375 = vld [vmem:[%s196 + $0x48] sm:$0xe]
      %v1376 = vld [vmem:[%s196 + $0x4c] sm:$0xf]
      %v1377 = vld [vmem:[%s196 + $0x50] sm:$0x1]
      %v1378 = vld [vmem:[%s196 + $0x54] sm:$0xe]
      %v1379 = vld [vmem:[%s196 + $0x58] sm:$0xf]
      %v1380 = vld [vmem:[%s196 + $0x5c] sm:$0x1]
      %v1381 = vld [vmem:[%s196 + $0x60] sm:$0xe]
      %v1382 = vld [vmem:[%s196 + $0x64] sm:$0xf]
      %v1383 = vld [vmem:[%s196 + $0x68] sm:$0x1]
      %v1384 = vld [vmem:[%s196 + $0x6c] sm:$0xe]
      %v1385 = vld [vmem:[%s196 + $0x70] sm:$0xf]
      %v1386 = vld [vmem:[%s196 + $0x74] sm:$0x1]
      %v1387 = vld [vmem:[%s196 + $0x78] sm:$0xe]
      %v1388 = vld [vmem:[%s196 + $0x7c] sm:$0xf]
      %v1389 = vld [vmem:[%s196 + $0x80] sm:$0x1]
      %v1390 = vld [vmem:[%s196 + $0x84] sm:$0xe]
      %v1391 = vld [vmem:[%s196 + $0x88] sm:$0xf]
      %v1392 = vld [vmem:[%s196 + $0x8c] sm:$0x1]
      %v1393 = vld [vmem:[%s196 + $0x90] sm:$0xe]
      %v1394 = vld [vmem:[%s196 + $0x94] sm:$0xf]
      %v1395 = vld [vmem:[%s196 + $0x98] sm:$0x1]
      %v1396 = vld [vmem:[%s196 + $0x9c] sm:$0xe]
      %v1397 = vld [vmem:[%s196 + $0xa0] sm:$0xf]
      %v1398 = vld [vmem:[%s196 + $0xa4] sm:$0x1]
      %v1399 = vld [vmem:[%s196 + $0xa8] sm:$0xe]
      %v1400 = vld [vmem:[%s196 + $0xac] sm:$0xf]
      %v1401 = vld [vmem:[%s196 + $0xb0] sm:$0x1]
      %v1402 = vld [vmem:[%s196 + $0xb4] sm:$0xe]
      %v1403 = vld [vmem:[%s196 + $0xb8] sm:$0xf]
      %v1404 = vld [vmem:[%s196 + $0xbc] sm:$0x1]
      %vm1453 = vcmask 1042432
      %vm1454 = vcmask 1046532
      %vm1455 = vmor %vm1453, %vm1454
      %v1456 = vrot.slane %v1357, 5
      %v1457 = vrot.slane %v1456, 4
      %v1458 = vrot.slane %v1358, 5
      %v1459 = vsel %vm1455, %v1457, %v1458
      %v1460 = vrot.slane %v1458, 4
      %v1461 = vrot.slane %v1359, 5
      %v1462 = vsel %vm1455, %v1460, %v1461
      %v1463 = vrot.slane %v1360, 5
      %v1464 = vrot.slane %v1463, 4
      %v1465 = vrot.slane %v1361, 5
      %v1466 = vsel %vm1455, %v1464, %v1465
      %v1467 = vrot.slane %v1465, 4
      %v1468 = vrot.slane %v1362, 5
      %v1469 = vsel %vm1455, %v1467, %v1468
      %v1470 = vrot.slane %v1363, 5
      %v1471 = vrot.slane %v1470, 4
      %v1472 = vrot.slane %v1364, 5
      %v1473 = vsel %vm1455, %v1471, %v1472
      %v1474 = vrot.slane %v1472, 4
      %v1475 = vrot.slane %v1365, 5
      %v1476 = vsel %vm1455, %v1474, %v1475
      %v1477 = vrot.slane %v1366, 5
      %v1478 = vrot.slane %v1477, 4
      %v1479 = vrot.slane %v1367, 5
      %v1480 = vsel %vm1455, %v1478, %v1479
      %v1481 = vrot.slane %v1479, 4
      %v1482 = vrot.slane %v1368, 5
      %v1483 = vsel %vm1455, %v1481, %v1482
      %v1484 = vrot.slane %v1369, 5
      %v1485 = vrot.slane %v1484, 4
      %v1486 = vrot.slane %v1370, 5
      %v1487 = vsel %vm1455, %v1485, %v1486
      %v1488 = vrot.slane %v1486, 4
      %v1489 = vrot.slane %v1371, 5
      %v1490 = vsel %vm1455, %v1488, %v1489
      %v1491 = vrot.slane %v1372, 5
      %v1492 = vrot.slane %v1491, 4
      %v1493 = vrot.slane %v1373, 5
      %v1494 = vsel %vm1455, %v1492, %v1493
      %v1495 = vrot.slane %v1493, 4
      %v1496 = vrot.slane %v1374, 5
      %v1497 = vsel %vm1455, %v1495, %v1496
      %v1498 = vrot.slane %v1375, 5
      %v1499 = vrot.slane %v1498, 4
      %v1500 = vrot.slane %v1376, 5
      %v1501 = vsel %vm1455, %v1499, %v1500
      %v1502 = vrot.slane %v1500, 4
      %v1503 = vrot.slane %v1377, 5
      %v1504 = vsel %vm1455, %v1502, %v1503
      %v1505 = vrot.slane %v1378, 5
      %v1506 = vrot.slane %v1505, 4
      %v1507 = vrot.slane %v1379, 5
      %v1508 = vsel %vm1455, %v1506, %v1507
      %v1509 = vrot.slane %v1507, 4
      %v1510 = vrot.slane %v1380, 5
      %v1511 = vsel %vm1455, %v1509, %v1510
      %v1512 = vrot.slane %v1381, 5
      %v1513 = vrot.slane %v1512, 4
      %v1514 = vrot.slane %v1382, 5
      %v1515 = vsel %vm1455, %v1513, %v1514
      %v1516 = vrot.slane %v1514, 4
      %v1517 = vrot.slane %v1383, 5
      %v1518 = vsel %vm1455, %v1516, %v1517
      %v1519 = vrot.slane %v1384, 5
      %v1520 = vrot.slane %v1519, 4
      %v1521 = vrot.slane %v1385, 5
      %v1522 = vsel %vm1455, %v1520, %v1521
      %v1523 = vrot.slane %v1521, 4
      %v1524 = vrot.slane %v1386, 5
      %v1525 = vsel %vm1455, %v1523, %v1524
      %v1526 = vrot.slane %v1387, 5
      %v1527 = vrot.slane %v1526, 4
      %v1528 = vrot.slane %v1388, 5
      %v1529 = vsel %vm1455, %v1527, %v1528
      %v1530 = vrot.slane %v1528, 4
      %v1531 = vrot.slane %v1389, 5
      %v1532 = vsel %vm1455, %v1530, %v1531
      %v1533 = vrot.slane %v1390, 5
      %v1534 = vrot.slane %v1533, 4
      %v1535 = vrot.slane %v1391, 5
      %v1536 = vsel %vm1455, %v1534, %v1535
      %v1537 = vrot.slane %v1535, 4
      %v1538 = vrot.slane %v1392, 5
      %v1539 = vsel %vm1455, %v1537, %v1538
      %v1540 = vrot.slane %v1393, 5
      %v1541 = vrot.slane %v1540, 4
      %v1542 = vrot.slane %v1394, 5
      %v1543 = vsel %vm1455, %v1541, %v1542
      %v1544 = vrot.slane %v1542, 4
      %v1545 = vrot.slane %v1395, 5
      %v1546 = vsel %vm1455, %v1544, %v1545
      %v1547 = vrot.slane %v1396, 5
      %v1548 = vrot.slane %v1547, 4
      %v1549 = vrot.slane %v1397, 5
      %v1550 = vsel %vm1455, %v1548, %v1549
      %v1551 = vrot.slane %v1549, 4
      %v1552 = vrot.slane %v1398, 5
      %v1553 = vsel %vm1455, %v1551, %v1552
      %v1554 = vrot.slane %v1399, 5
      %v1555 = vrot.slane %v1554, 4
      %v1556 = vrot.slane %v1400, 5
      %v1557 = vsel %vm1455, %v1555, %v1556
      %v1558 = vrot.slane %v1556, 4
      %v1559 = vrot.slane %v1401, 5
      %v1560 = vsel %vm1455, %v1558, %v1559
      %v1561 = vrot.slane %v1402, 5
      %v1562 = vrot.slane %v1561, 4
      %v1563 = vrot.slane %v1403, 5
      %v1564 = vsel %vm1455, %v1562, %v1563
      %v1565 = vrot.slane %v1563, 4
      %v1566 = vrot.slane %v1404, 5
      %v1567 = vsel %vm1455, %v1565, %v1566
      %s1568 = scalar_lea.vmem %s1, 4
      %v1569 = vld [vmem:[%s1568] sm:$0x3]
      %v1570 = vunpack.c.l.b16 %v1459
      %v1571 = vunpack.c.l.b16 %v1462
      %v1572 = vunpack.c.l.b16 %v1466
      %v1573 = vunpack.c.l.b16 %v1469
      %v1574 = vunpack.c.l.b16 %v1473
      %v1575 = vunpack.c.l.b16 %v1476
      %v1576 = vunpack.c.l.b16 %v1480
      %v1577 = vunpack.c.l.b16 %v1483
      %v1578 = vunpack.c.l.b16 %v1487
      %v1579 = vunpack.c.l.b16 %v1490
      %v1580 = vunpack.c.l.b16 %v1494
      %v1581 = vunpack.c.l.b16 %v1497
      %v1582 = vunpack.c.l.b16 %v1501
      %v1583 = vunpack.c.l.b16 %v1504
      %v1584 = vunpack.c.l.b16 %v1508
      %v1585 = vunpack.c.l.b16 %v1511
      %v1586 = vunpack.c.l.b16 %v1515
      %v1587 = vunpack.c.l.b16 %v1518
      %v1588 = vunpack.c.l.b16 %v1522
      %v1589 = vunpack.c.l.b16 %v1525
      %v1590 = vunpack.c.l.b16 %v1529
      %v1591 = vunpack.c.l.b16 %v1532
      %v1592 = vunpack.c.l.b16 %v1536
      %v1593 = vunpack.c.l.b16 %v1539
      %v1594 = vunpack.c.l.b16 %v1543
      %v1595 = vunpack.c.l.b16 %v1546
      %v1596 = vunpack.c.l.b16 %v1550
      %v1597 = vunpack.c.l.b16 %v1553
      %v1598 = vunpack.c.l.b16 %v1557
      %v1599 = vunpack.c.l.b16 %v1560
      %v1600 = vunpack.c.l.b16 %v1564
      %v1601 = vunpack.c.l.b16 %v1567
      %v1602 = vpack.c.b16 %v1571, %v1570
      %v1603 = vpack.c.b16 %v1573, %v1572
      %v1604 = vpack.c.b16 %v1575, %v1574
      %v1605 = vpack.c.b16 %v1577, %v1576
      %v1606 = vpack.c.b16 %v1579, %v1578
      %v1607 = vpack.c.b16 %v1581, %v1580
      %v1608 = vpack.c.b16 %v1583, %v1582
      %v1609 = vpack.c.b16 %v1585, %v1584
      %v1610 = vpack.c.b16 %v1587, %v1586
      %v1611 = vpack.c.b16 %v1589, %v1588
      %v1612 = vpack.c.b16 %v1591, %v1590
      %v1613 = vpack.c.b16 %v1593, %v1592
      %v1614 = vpack.c.b16 %v1595, %v1594
      %v1615 = vpack.c.b16 %v1597, %v1596
      %v1616 = vpack.c.b16 %v1599, %v1598
      %v1617 = vpack.c.b16 %v1601, %v1600
      %v1619 = vsel %vm318, %v1602, 0
      %v1622 = vsel %vm318, %v1603, 0
      %v1625 = vsel %vm318, %v1604, 0
      %v1628 = vsel %vm318, %v1605, 0
      %v1631 = vsel %vm318, %v1606, 0
      %v1634 = vsel %vm318, %v1607, 0
      %v1637 = vsel %vm318, %v1608, 0
      %v1640 = vsel %vm318, %v1609, 0
      %v1643 = vsel %vm318, %v1610, 0
      %v1646 = vsel %vm318, %v1611, 0
      %v1649 = vsel %vm318, %v1612, 0
      %v1652 = vsel %vm318, %v1613, 0
      %v1655 = vsel %vm318, %v1614, 0
      %v1658 = vsel %vm318, %v1615, 0
      %v1661 = vsel %vm318, %v1616, 0
      %v1664 = vsel %vm318, %v1617, 0
      %v1667 = vsel %vm367, %v1569, 0
      %1669 = vmatprep.subr.bf16.mxu0 0
      %1670 = vmatpush1.bf16.msra.mxu0 0
      %1671 = vmatprep.subr.bf16.mxu0 0
      %1672 = vmatpush1.bf16.msra.mxu0 0
      %1673 = vmatprep.subr.bf16.mxu0 0
      %1674 = vmatpush1.bf16.msra.mxu0 0
      %1675 = vmatprep.subr.bf16.mxu0 0
      %1676 = vmatpush1.bf16.msra.mxu0 0
      %1677 = vmatprep.subr.bf16.mxu0 0
      %1678 = vmatpush1.bf16.msra.mxu0 0
      %1679 = vmatprep.subr.bf16.mxu0 0
      %1680 = vmatpush1.bf16.msra.mxu0 0
      %1681 = vmatprep.subr.bf16.mxu0 0
      %1682 = vmatpush1.bf16.msra.mxu0 0
      %1683 = vmatprep.subr.bf16.mxu0 0
      %1684 = vmatpush1.bf16.msra.mxu0 %v1667
      %1685 = vmatprep.subr.bf16.mxu0 0
      %1686 = vmatpush2.bf16.msra.mxu0 0
      %1687 = vmatprep.subr.bf16.mxu0 0
      %1688 = vmatpush2.bf16.msra.mxu0 0
      %1689 = vmatprep.subr.bf16.mxu0 0
      %1690 = vmatpush2.bf16.msra.mxu0 0
      %1691 = vmatprep.subr.bf16.mxu0 0
      %1692 = vmatpush2.bf16.msra.mxu0 0
      %1693 = vmatprep.subr.bf16.mxu0 0
      %1694 = vmatpush2.bf16.msra.mxu0 0
      %1695 = vmatprep.subr.bf16.mxu0 0
      %1696 = vmatpush2.bf16.msra.mxu0 0
      %1697 = vmatprep.subr.bf16.mxu0 0
      %1698 = vmatpush2.bf16.msra.mxu0 0
      %1699 = vmatprep.subr.bf16.mxu0 0
      %1700 = vmatpush2.bf16.msra.mxu0 0
      %1701 = vmatprep.mubr.bf16.mxu0 0
      %1702 = vmatmul.mubr.bf16.gmra.mxu0 %v1619
      %v1703 = vpop.f32.mrf.mxu0
      %v1704 = vadd.f32 0.0, %v1703
      %v1705 = vpop.f32.mrf.mxu0
      %v1706 = vpop.f32.mrf.mxu0
      %v1707 = vadd.f32 0.0, %v1706
      %v1708 = vpop.f32.mrf.mxu0
      %1709 = vmatprep.mubr.bf16.mxu0 0
      %1710 = vmatmul.mubr.bf16.gmra.mxu0 %v1622
      %v1711 = vpop.f32.mrf.mxu0
      %v1712 = vadd.f32 0.0, %v1711
      %v1713 = vpop.f32.mrf.mxu0
      %v1714 = vpop.f32.mrf.mxu0
      %v1715 = vadd.f32 0.0, %v1714
      %v1716 = vpop.f32.mrf.mxu0
      %1717 = vmatprep.mubr.bf16.mxu0 0
      %1718 = vmatmul.mubr.bf16.gmra.mxu0 %v1625
      %v1719 = vpop.f32.mrf.mxu0
      %v1720 = vadd.f32 0.0, %v1719
      %v1721 = vpop.f32.mrf.mxu0
      %v1722 = vpop.f32.mrf.mxu0
      %v1723 = vadd.f32 0.0, %v1722
      %v1724 = vpop.f32.mrf.mxu0
      %1725 = vmatprep.mubr.bf16.mxu0 0
      %1726 = vmatmul.mubr.bf16.gmra.mxu0 %v1628
      %v1727 = vpop.f32.mrf.mxu0
      %v1728 = vadd.f32 0.0, %v1727
      %v1729 = vpop.f32.mrf.mxu0
      %v1730 = vpop.f32.mrf.mxu0
      %v1731 = vadd.f32 0.0, %v1730
      %v1732 = vpop.f32.mrf.mxu0
      %1733 = vmatprep.mubr.bf16.mxu0 0
      %1734 = vmatmul.mubr.bf16.gmra.mxu0 %v1631
      %v1735 = vpop.f32.mrf.mxu0
      %v1736 = vadd.f32 0.0, %v1735
      %v1737 = vpop.f32.mrf.mxu0
      %v1738 = vpop.f32.mrf.mxu0
      %v1739 = vadd.f32 0.0, %v1738
      %v1740 = vpop.f32.mrf.mxu0
      %1741 = vmatprep.mubr.bf16.mxu0 0
      %1742 = vmatmul.mubr.bf16.gmra.mxu0 %v1634
      %v1743 = vpop.f32.mrf.mxu0
      %v1744 = vadd.f32 0.0, %v1743
      %v1745 = vpop.f32.mrf.mxu0
      %v1746 = vpop.f32.mrf.mxu0
      %v1747 = vadd.f32 0.0, %v1746
      %v1748 = vpop.f32.mrf.mxu0
      %1749 = vmatprep.mubr.bf16.mxu0 0
      %1750 = vmatmul.mubr.bf16.gmra.mxu0 %v1637
      %v1751 = vpop.f32.mrf.mxu0
      %v1752 = vadd.f32 0.0, %v1751
      %v1753 = vpop.f32.mrf.mxu0
      %v1754 = vpop.f32.mrf.mxu0
      %v1755 = vadd.f32 0.0, %v1754
      %v1756 = vpop.f32.mrf.mxu0
      %1757 = vmatprep.mubr.bf16.mxu0 0
      %1758 = vmatmul.mubr.bf16.gmra.mxu0 %v1640
      %v1759 = vpop.f32.mrf.mxu0
      %v1760 = vadd.f32 0.0, %v1759
      %v1761 = vpop.f32.mrf.mxu0
      %v1762 = vpop.f32.mrf.mxu0
      %v1763 = vadd.f32 0.0, %v1762
      %v1764 = vpop.f32.mrf.mxu0
      %1765 = vmatprep.mubr.bf16.mxu0 0
      %1766 = vmatmul.mubr.bf16.gmra.mxu0 %v1643
      %v1767 = vpop.f32.mrf.mxu0
      %v1768 = vadd.f32 0.0, %v1767
      %v1769 = vpop.f32.mrf.mxu0
      %v1770 = vpop.f32.mrf.mxu0
      %v1771 = vadd.f32 0.0, %v1770
      %v1772 = vpop.f32.mrf.mxu0
      %1773 = vmatprep.mubr.bf16.mxu0 0
      %1774 = vmatmul.mubr.bf16.gmra.mxu0 %v1646
      %v1775 = vpop.f32.mrf.mxu0
      %v1776 = vadd.f32 0.0, %v1775
      %v1777 = vpop.f32.mrf.mxu0
      %v1778 = vpop.f32.mrf.mxu0
      %v1779 = vadd.f32 0.0, %v1778
      %v1780 = vpop.f32.mrf.mxu0
      %1781 = vmatprep.mubr.bf16.mxu0 0
      %1782 = vmatmul.mubr.bf16.gmra.mxu0 %v1649
      %v1783 = vpop.f32.mrf.mxu0
      %v1784 = vadd.f32 0.0, %v1783
      %v1785 = vpop.f32.mrf.mxu0
      %v1786 = vpop.f32.mrf.mxu0
      %v1787 = vadd.f32 0.0, %v1786
      %v1788 = vpop.f32.mrf.mxu0
      %1789 = vmatprep.mubr.bf16.mxu0 0
      %1790 = vmatmul.mubr.bf16.gmra.mxu0 %v1652
      %v1791 = vpop.f32.mrf.mxu0
      %v1792 = vadd.f32 0.0, %v1791
      %v1793 = vpop.f32.mrf.mxu0
      %v1794 = vpop.f32.mrf.mxu0
      %v1795 = vadd.f32 0.0, %v1794
      %v1796 = vpop.f32.mrf.mxu0
      %1797 = vmatprep.mubr.bf16.mxu0 0
      %1798 = vmatmul.mubr.bf16.gmra.mxu0 %v1655
      %v1799 = vpop.f32.mrf.mxu0
      %v1800 = vadd.f32 0.0, %v1799
      %v1801 = vpop.f32.mrf.mxu0
      %v1802 = vpop.f32.mrf.mxu0
      %v1803 = vadd.f32 0.0, %v1802
      %v1804 = vpop.f32.mrf.mxu0
      %1805 = vmatprep.mubr.bf16.mxu0 0
      %1806 = vmatmul.mubr.bf16.gmra.mxu0 %v1658
      %v1807 = vpop.f32.mrf.mxu0
      %v1808 = vadd.f32 0.0, %v1807
      %v1809 = vpop.f32.mrf.mxu0
      %v1810 = vpop.f32.mrf.mxu0
      %v1811 = vadd.f32 0.0, %v1810
      %v1812 = vpop.f32.mrf.mxu0
      %1813 = vmatprep.mubr.bf16.mxu0 0
      %1814 = vmatmul.mubr.bf16.gmra.mxu0 %v1661
      %v1815 = vpop.f32.mrf.mxu0
      %v1816 = vadd.f32 0.0, %v1815
      %v1817 = vpop.f32.mrf.mxu0
      %v1818 = vpop.f32.mrf.mxu0
      %v1819 = vadd.f32 0.0, %v1818
      %v1820 = vpop.f32.mrf.mxu0
      %1821 = vmatprep.mubr.bf16.mxu0 0
      %1822 = vmatmul.mubr.bf16.gmra.mxu0 %v1664
      %v1823 = vpop.f32.mrf.mxu0
      %v1824 = vadd.f32 0.0, %v1823
      %v1825 = vpop.f32.mrf.mxu0
      %v1826 = vpop.f32.mrf.mxu0
      %v1827 = vadd.f32 0.0, %v1826
      %v1828 = vpop.f32.mrf.mxu0
      %1829 = vdwg.mxu0
      %v1830 = vld [vmem:[%s202] sm:$0xff]
      %v1831 = vld [vmem:[%s202 + $0x8] sm:$0xff]
      %v1832 = vld [vmem:[%s202 + $0x10] sm:$0xff]
      %v1833 = vld [vmem:[%s202 + $0x18] sm:$0xff]
      %v1834 = vld [vmem:[%s202 + $0x20] sm:$0xff]
      %v1835 = vld [vmem:[%s202 + $0x28] sm:$0xff]
      %v1836 = vld [vmem:[%s202 + $0x30] sm:$0xff]
      %v1837 = vld [vmem:[%s202 + $0x38] sm:$0xff]
      %v1838 = vld [vmem:[%s202 + $0x40] sm:$0xff]
      %v1839 = vld [vmem:[%s202 + $0x48] sm:$0xff]
      %v1840 = vld [vmem:[%s202 + $0x50] sm:$0xff]
      %v1841 = vld [vmem:[%s202 + $0x58] sm:$0xff]
      %v1842 = vld [vmem:[%s202 + $0x60] sm:$0xff]
      %v1843 = vld [vmem:[%s202 + $0x68] sm:$0xff]
      %v1844 = vld [vmem:[%s202 + $0x70] sm:$0xff]
      %v1845 = vld [vmem:[%s202 + $0x78] sm:$0xff]
      %v1846 = vld [vmem:[%s202 + $0x80] sm:$0xff]
      %v1847 = vld [vmem:[%s202 + $0x88] sm:$0xff]
      %v1848 = vld [vmem:[%s202 + $0x90] sm:$0xff]
      %v1849 = vld [vmem:[%s202 + $0x98] sm:$0xff]
      %v1850 = vld [vmem:[%s202 + $0xa0] sm:$0xff]
      %v1851 = vld [vmem:[%s202 + $0xa8] sm:$0xff]
      %v1852 = vld [vmem:[%s202 + $0xb0] sm:$0xff]
      %v1853 = vld [vmem:[%s202 + $0xb8] sm:$0xff]
      %v1854 = vld [vmem:[%s202 + $0xc0] sm:$0xff]
      %v1855 = vld [vmem:[%s202 + $0xc8] sm:$0xff]
      %v1856 = vld [vmem:[%s202 + $0xd0] sm:$0xff]
      %v1857 = vld [vmem:[%s202 + $0xd8] sm:$0xff]
      %v1858 = vld [vmem:[%s202 + $0xe0] sm:$0xff]
      %v1859 = vld [vmem:[%s202 + $0xe8] sm:$0xff]
      %v1860 = vld [vmem:[%s202 + $0xf0] sm:$0xff]
      %v1861 = vld [vmem:[%s202 + $0xf8] sm:$0xff]
      %v1862 = vadd.f32 %v1830, %v1704
      %v1863 = vadd.f32 %v1831, %v1707
      %v1864 = vadd.f32 %v1832, %v1712
      %v1865 = vadd.f32 %v1833, %v1715
      %v1866 = vadd.f32 %v1834, %v1720
      %v1867 = vadd.f32 %v1835, %v1723
      %v1868 = vadd.f32 %v1836, %v1728
      %v1869 = vadd.f32 %v1837, %v1731
      %v1870 = vadd.f32 %v1838, %v1736
      %v1871 = vadd.f32 %v1839, %v1739
      %v1872 = vadd.f32 %v1840, %v1744
      %v1873 = vadd.f32 %v1841, %v1747
      %v1874 = vadd.f32 %v1842, %v1752
      %v1875 = vadd.f32 %v1843, %v1755
      %v1876 = vadd.f32 %v1844, %v1760
      %v1877 = vadd.f32 %v1845, %v1763
      %v1878 = vadd.f32 %v1846, %v1768
      %v1879 = vadd.f32 %v1847, %v1771
      %v1880 = vadd.f32 %v1848, %v1776
      %v1881 = vadd.f32 %v1849, %v1779
      %v1882 = vadd.f32 %v1850, %v1784
      %v1883 = vadd.f32 %v1851, %v1787
      %v1884 = vadd.f32 %v1852, %v1792
      %v1885 = vadd.f32 %v1853, %v1795
      %v1886 = vadd.f32 %v1854, %v1800
      %v1887 = vadd.f32 %v1855, %v1803
      %v1888 = vadd.f32 %v1856, %v1808
      %v1889 = vadd.f32 %v1857, %v1811
      %v1890 = vadd.f32 %v1858, %v1816
      %v1891 = vadd.f32 %v1859, %v1819
      %v1892 = vadd.f32 %v1860, %v1824
      %v1893 = vadd.f32 %v1861, %v1827
      %1894 = vst [vmem:[%s202] sm:$0xff] %v1862
      %1895 = vst [vmem:[%s202 + $0x8] sm:$0xff] %v1863
      %1896 = vst [vmem:[%s202 + $0x10] sm:$0xff] %v1864
      %1897 = vst [vmem:[%s202 + $0x18] sm:$0xff] %v1865
      %1898 = vst [vmem:[%s202 + $0x20] sm:$0xff] %v1866
      %1899 = vst [vmem:[%s202 + $0x28] sm:$0xff] %v1867
      %1900 = vst [vmem:[%s202 + $0x30] sm:$0xff] %v1868
      %1901 = vst [vmem:[%s202 + $0x38] sm:$0xff] %v1869
      %1902 = vst [vmem:[%s202 + $0x40] sm:$0xff] %v1870
      %1903 = vst [vmem:[%s202 + $0x48] sm:$0xff] %v1871
      %1904 = vst [vmem:[%s202 + $0x50] sm:$0xff] %v1872
      %1905 = vst [vmem:[%s202 + $0x58] sm:$0xff] %v1873
      %1906 = vst [vmem:[%s202 + $0x60] sm:$0xff] %v1874
      %1907 = vst [vmem:[%s202 + $0x68] sm:$0xff] %v1875
      %1908 = vst [vmem:[%s202 + $0x70] sm:$0xff] %v1876
      %1909 = vst [vmem:[%s202 + $0x78] sm:$0xff] %v1877
      %1910 = vst [vmem:[%s202 + $0x80] sm:$0xff] %v1878
      %1911 = vst [vmem:[%s202 + $0x88] sm:$0xff] %v1879
      %1912 = vst [vmem:[%s202 + $0x90] sm:$0xff] %v1880
      %1913 = vst [vmem:[%s202 + $0x98] sm:$0xff] %v1881
      %1914 = vst [vmem:[%s202 + $0xa0] sm:$0xff] %v1882
      %1915 = vst [vmem:[%s202 + $0xa8] sm:$0xff] %v1883
      %1916 = vst [vmem:[%s202 + $0xb0] sm:$0xff] %v1884
      %1917 = vst [vmem:[%s202 + $0xb8] sm:$0xff] %v1885
      %1918 = vst [vmem:[%s202 + $0xc0] sm:$0xff] %v1886
      %1919 = vst [vmem:[%s202 + $0xc8] sm:$0xff] %v1887
      %1920 = vst [vmem:[%s202 + $0xd0] sm:$0xff] %v1888
      %1921 = vst [vmem:[%s202 + $0xd8] sm:$0xff] %v1889
      %1922 = vst [vmem:[%s202 + $0xe0] sm:$0xff] %v1890
      %1923 = vst [vmem:[%s202 + $0xe8] sm:$0xff] %v1891
      %1924 = vst [vmem:[%s202 + $0xf0] sm:$0xff] %v1892
      %1925 = vst [vmem:[%s202 + $0xf8] sm:$0xff] %v1893
      %s1926 = scalar_lea.vmem %s196, 12
      %v1927 = vld [vmem:[%s1926] sm:$0xf]
      %v1928 = vld [vmem:[%s1926 + $0x4] sm:$0xf]
      %v1929 = vld [vmem:[%s1926 + $0xc] sm:$0xf]
      %v1930 = vld [vmem:[%s1926 + $0x10] sm:$0xf]
      %v1931 = vld [vmem:[%s1926 + $0x18] sm:$0xf]
      %v1932 = vld [vmem:[%s1926 + $0x1c] sm:$0xf]
      %v1933 = vld [vmem:[%s1926 + $0x24] sm:$0xf]
      %v1934 = vld [vmem:[%s1926 + $0x28] sm:$0xf]
      %v1935 = vld [vmem:[%s1926 + $0x30] sm:$0xf]
      %v1936 = vld [vmem:[%s1926 + $0x34] sm:$0xf]
      %v1937 = vld [vmem:[%s1926 + $0x3c] sm:$0xf]
      %v1938 = vld [vmem:[%s1926 + $0x40] sm:$0xf]
      %v1939 = vld [vmem:[%s1926 + $0x48] sm:$0xf]
      %v1940 = vld [vmem:[%s1926 + $0x4c] sm:$0xf]
      %v1941 = vld [vmem:[%s1926 + $0x54] sm:$0xf]
      %v1942 = vld [vmem:[%s1926 + $0x58] sm:$0xf]
      %v1943 = vld [vmem:[%s1926 + $0x60] sm:$0xf]
      %v1944 = vld [vmem:[%s1926 + $0x64] sm:$0xf]
      %v1945 = vld [vmem:[%s1926 + $0x6c] sm:$0xf]
      %v1946 = vld [vmem:[%s1926 + $0x70] sm:$0xf]
      %v1947 = vld [vmem:[%s1926 + $0x78] sm:$0xf]
      %v1948 = vld [vmem:[%s1926 + $0x7c] sm:$0xf]
      %v1949 = vld [vmem:[%s1926 + $0x84] sm:$0xf]
      %v1950 = vld [vmem:[%s1926 + $0x88] sm:$0xf]
      %v1951 = vld [vmem:[%s1926 + $0x90] sm:$0xf]
      %v1952 = vld [vmem:[%s1926 + $0x94] sm:$0xf]
      %v1953 = vld [vmem:[%s1926 + $0x9c] sm:$0xf]
      %v1954 = vld [vmem:[%s1926 + $0xa0] sm:$0xf]
      %v1955 = vld [vmem:[%s1926 + $0xa8] sm:$0xf]
      %v1956 = vld [vmem:[%s1926 + $0xac] sm:$0xf]
      %v1957 = vld [vmem:[%s1926 + $0xb4] sm:$0xf]
      %v1958 = vld [vmem:[%s1926 + $0xb8] sm:$0xf]
      %s1959 = scalar_lea.vmem %s1, 6
      %v1960 = vld [vmem:[%s1959] sm:$0x3]
      %v1993 = vunpack.c.l.b16 %v1927
      %v1994 = vunpack.c.l.b16 %v1928
      %v1995 = vunpack.c.l.b16 %v1929
      %v1996 = vunpack.c.l.b16 %v1930
      %v1997 = vunpack.c.l.b16 %v1931
      %v1998 = vunpack.c.l.b16 %v1932
      %v1999 = vunpack.c.l.b16 %v1933
      %v2000 = vunpack.c.l.b16 %v1934
      %v2001 = vunpack.c.l.b16 %v1935
      %v2002 = vunpack.c.l.b16 %v1936
      %v2003 = vunpack.c.l.b16 %v1937
      %v2004 = vunpack.c.l.b16 %v1938
      %v2005 = vunpack.c.l.b16 %v1939
      %v2006 = vunpack.c.l.b16 %v1940
      %v2007 = vunpack.c.l.b16 %v1941
      %v2008 = vunpack.c.l.b16 %v1942
      %v2009 = vunpack.c.l.b16 %v1943
      %v2010 = vunpack.c.l.b16 %v1944
      %v2011 = vunpack.c.l.b16 %v1945
      %v2012 = vunpack.c.l.b16 %v1946
      %v2013 = vunpack.c.l.b16 %v1947
      %v2014 = vunpack.c.l.b16 %v1948
      %v2015 = vunpack.c.l.b16 %v1949
      %v2016 = vunpack.c.l.b16 %v1950
      %v2017 = vunpack.c.l.b16 %v1951
      %v2018 = vunpack.c.l.b16 %v1952
      %v2019 = vunpack.c.l.b16 %v1953
      %v2020 = vunpack.c.l.b16 %v1954
      %v2021 = vunpack.c.l.b16 %v1955
      %v2022 = vunpack.c.l.b16 %v1956
      %v2023 = vunpack.c.l.b16 %v1957
      %v2024 = vunpack.c.l.b16 %v1958
      %v2025 = vpack.c.b16 %v1994, %v1993
      %v2026 = vpack.c.b16 %v1996, %v1995
      %v2027 = vpack.c.b16 %v1998, %v1997
      %v2028 = vpack.c.b16 %v2000, %v1999
      %v2029 = vpack.c.b16 %v2002, %v2001
      %v2030 = vpack.c.b16 %v2004, %v2003
      %v2031 = vpack.c.b16 %v2006, %v2005
      %v2032 = vpack.c.b16 %v2008, %v2007
      %v2033 = vpack.c.b16 %v2010, %v2009
      %v2034 = vpack.c.b16 %v2012, %v2011
      %v2035 = vpack.c.b16 %v2014, %v2013
      %v2036 = vpack.c.b16 %v2016, %v2015
      %v2037 = vpack.c.b16 %v2018, %v2017
      %v2038 = vpack.c.b16 %v2020, %v2019
      %v2039 = vpack.c.b16 %v2022, %v2021
      %v2040 = vpack.c.b16 %v2024, %v2023
      %v2042 = vsel %vm318, %v2025, 0
      %v2045 = vsel %vm318, %v2026, 0
      %v2048 = vsel %vm318, %v2027, 0
      %v2051 = vsel %vm318, %v2028, 0
      %v2054 = vsel %vm318, %v2029, 0
      %v2057 = vsel %vm318, %v2030, 0
      %v2060 = vsel %vm318, %v2031, 0
      %v2063 = vsel %vm318, %v2032, 0
      %v2066 = vsel %vm318, %v2033, 0
      %v2069 = vsel %vm318, %v2034, 0
      %v2072 = vsel %vm318, %v2035, 0
      %v2075 = vsel %vm318, %v2036, 0
      %v2078 = vsel %vm318, %v2037, 0
      %v2081 = vsel %vm318, %v2038, 0
      %v2084 = vsel %vm318, %v2039, 0
      %v2087 = vsel %vm318, %v2040, 0
      %v2090 = vsel %vm367, %v1960, 0
      %2092 = vmatprep.subr.bf16.mxu0 0
      %2093 = vmatpush1.bf16.msra.mxu0 0
      %2094 = vmatprep.subr.bf16.mxu0 0
      %2095 = vmatpush1.bf16.msra.mxu0 0
      %2096 = vmatprep.subr.bf16.mxu0 0
      %2097 = vmatpush1.bf16.msra.mxu0 0
      %2098 = vmatprep.subr.bf16.mxu0 0
      %2099 = vmatpush1.bf16.msra.mxu0 0
      %2100 = vmatprep.subr.bf16.mxu0 0
      %2101 = vmatpush1.bf16.msra.mxu0 0
      %2102 = vmatprep.subr.bf16.mxu0 0
      %2103 = vmatpush1.bf16.msra.mxu0 0
      %2104 = vmatprep.subr.bf16.mxu0 0
      %2105 = vmatpush1.bf16.msra.mxu0 0
      %2106 = vmatprep.subr.bf16.mxu0 0
      %2107 = vmatpush1.bf16.msra.mxu0 %v2090
      %2108 = vmatprep.subr.bf16.mxu0 0
      %2109 = vmatpush2.bf16.msra.mxu0 0
      %2110 = vmatprep.subr.bf16.mxu0 0
      %2111 = vmatpush2.bf16.msra.mxu0 0
      %2112 = vmatprep.subr.bf16.mxu0 0
      %2113 = vmatpush2.bf16.msra.mxu0 0
      %2114 = vmatprep.subr.bf16.mxu0 0
      %2115 = vmatpush2.bf16.msra.mxu0 0
      %2116 = vmatprep.subr.bf16.mxu0 0
      %2117 = vmatpush2.bf16.msra.mxu0 0
      %2118 = vmatprep.subr.bf16.mxu0 0
      %2119 = vmatpush2.bf16.msra.mxu0 0
      %2120 = vmatprep.subr.bf16.mxu0 0
      %2121 = vmatpush2.bf16.msra.mxu0 0
      %2122 = vmatprep.subr.bf16.mxu0 0
      %2123 = vmatpush2.bf16.msra.mxu0 0
      %2124 = vmatprep.mubr.bf16.mxu0 0
      %2125 = vmatmul.mubr.bf16.gmra.mxu0 %v2042
      %v2126 = vpop.f32.mrf.mxu0
      %v2127 = vadd.f32 0.0, %v2126
      %v2128 = vpop.f32.mrf.mxu0
      %v2129 = vpop.f32.mrf.mxu0
      %v2130 = vadd.f32 0.0, %v2129
      %v2131 = vpop.f32.mrf.mxu0
      %2132 = vmatprep.mubr.bf16.mxu0 0
      %2133 = vmatmul.mubr.bf16.gmra.mxu0 %v2045
      %v2134 = vpop.f32.mrf.mxu0
      %v2135 = vadd.f32 0.0, %v2134
      %v2136 = vpop.f32.mrf.mxu0
      %v2137 = vpop.f32.mrf.mxu0
      %v2138 = vadd.f32 0.0, %v2137
      %v2139 = vpop.f32.mrf.mxu0
      %2140 = vmatprep.mubr.bf16.mxu0 0
      %2141 = vmatmul.mubr.bf16.gmra.mxu0 %v2048
      %v2142 = vpop.f32.mrf.mxu0
      %v2143 = vadd.f32 0.0, %v2142
      %v2144 = vpop.f32.mrf.mxu0
      %v2145 = vpop.f32.mrf.mxu0
      %v2146 = vadd.f32 0.0, %v2145
      %v2147 = vpop.f32.mrf.mxu0
      %2148 = vmatprep.mubr.bf16.mxu0 0
      %2149 = vmatmul.mubr.bf16.gmra.mxu0 %v2051
      %v2150 = vpop.f32.mrf.mxu0
      %v2151 = vadd.f32 0.0, %v2150
      %v2152 = vpop.f32.mrf.mxu0
      %v2153 = vpop.f32.mrf.mxu0
      %v2154 = vadd.f32 0.0, %v2153
      %v2155 = vpop.f32.mrf.mxu0
      %2156 = vmatprep.mubr.bf16.mxu0 0
      %2157 = vmatmul.mubr.bf16.gmra.mxu0 %v2054
      %v2158 = vpop.f32.mrf.mxu0
      %v2159 = vadd.f32 0.0, %v2158
      %v2160 = vpop.f32.mrf.mxu0
      %v2161 = vpop.f32.mrf.mxu0
      %v2162 = vadd.f32 0.0, %v2161
      %v2163 = vpop.f32.mrf.mxu0
      %2164 = vmatprep.mubr.bf16.mxu0 0
      %2165 = vmatmul.mubr.bf16.gmra.mxu0 %v2057
      %v2166 = vpop.f32.mrf.mxu0
      %v2167 = vadd.f32 0.0, %v2166
      %v2168 = vpop.f32.mrf.mxu0
      %v2169 = vpop.f32.mrf.mxu0
      %v2170 = vadd.f32 0.0, %v2169
      %v2171 = vpop.f32.mrf.mxu0
      %2172 = vmatprep.mubr.bf16.mxu0 0
      %2173 = vmatmul.mubr.bf16.gmra.mxu0 %v2060
      %v2174 = vpop.f32.mrf.mxu0
      %v2175 = vadd.f32 0.0, %v2174
      %v2176 = vpop.f32.mrf.mxu0
      %v2177 = vpop.f32.mrf.mxu0
      %v2178 = vadd.f32 0.0, %v2177
      %v2179 = vpop.f32.mrf.mxu0
      %2180 = vmatprep.mubr.bf16.mxu0 0
      %2181 = vmatmul.mubr.bf16.gmra.mxu0 %v2063
      %v2182 = vpop.f32.mrf.mxu0
      %v2183 = vadd.f32 0.0, %v2182
      %v2184 = vpop.f32.mrf.mxu0
      %v2185 = vpop.f32.mrf.mxu0
      %v2186 = vadd.f32 0.0, %v2185
      %v2187 = vpop.f32.mrf.mxu0
      %2188 = vmatprep.mubr.bf16.mxu0 0
      %2189 = vmatmul.mubr.bf16.gmra.mxu0 %v2066
      %v2190 = vpop.f32.mrf.mxu0
      %v2191 = vadd.f32 0.0, %v2190
      %v2192 = vpop.f32.mrf.mxu0
      %v2193 = vpop.f32.mrf.mxu0
      %v2194 = vadd.f32 0.0, %v2193
      %v2195 = vpop.f32.mrf.mxu0
      %2196 = vmatprep.mubr.bf16.mxu0 0
      %2197 = vmatmul.mubr.bf16.gmra.mxu0 %v2069
      %v2198 = vpop.f32.mrf.mxu0
      %v2199 = vadd.f32 0.0, %v2198
      %v2200 = vpop.f32.mrf.mxu0
      %v2201 = vpop.f32.mrf.mxu0
      %v2202 = vadd.f32 0.0, %v2201
      %v2203 = vpop.f32.mrf.mxu0
      %2204 = vmatprep.mubr.bf16.mxu0 0
      %2205 = vmatmul.mubr.bf16.gmra.mxu0 %v2072
      %v2206 = vpop.f32.mrf.mxu0
      %v2207 = vadd.f32 0.0, %v2206
      %v2208 = vpop.f32.mrf.mxu0
      %v2209 = vpop.f32.mrf.mxu0
      %v2210 = vadd.f32 0.0, %v2209
      %v2211 = vpop.f32.mrf.mxu0
      %2212 = vmatprep.mubr.bf16.mxu0 0
      %2213 = vmatmul.mubr.bf16.gmra.mxu0 %v2075
      %v2214 = vpop.f32.mrf.mxu0
      %v2215 = vadd.f32 0.0, %v2214
      %v2216 = vpop.f32.mrf.mxu0
      %v2217 = vpop.f32.mrf.mxu0
      %v2218 = vadd.f32 0.0, %v2217
      %v2219 = vpop.f32.mrf.mxu0
      %2220 = vmatprep.mubr.bf16.mxu0 0
      %2221 = vmatmul.mubr.bf16.gmra.mxu0 %v2078
      %v2222 = vpop.f32.mrf.mxu0
      %v2223 = vadd.f32 0.0, %v2222
      %v2224 = vpop.f32.mrf.mxu0
      %v2225 = vpop.f32.mrf.mxu0
      %v2226 = vadd.f32 0.0, %v2225
      %v2227 = vpop.f32.mrf.mxu0
      %2228 = vmatprep.mubr.bf16.mxu0 0
      %2229 = vmatmul.mubr.bf16.gmra.mxu0 %v2081
      %v2230 = vpop.f32.mrf.mxu0
      %v2231 = vadd.f32 0.0, %v2230
      %v2232 = vpop.f32.mrf.mxu0
      %v2233 = vpop.f32.mrf.mxu0
      %v2234 = vadd.f32 0.0, %v2233
      %v2235 = vpop.f32.mrf.mxu0
      %2236 = vmatprep.mubr.bf16.mxu0 0
      %2237 = vmatmul.mubr.bf16.gmra.mxu0 %v2084
      %v2238 = vpop.f32.mrf.mxu0
      %v2239 = vadd.f32 0.0, %v2238
      %v2240 = vpop.f32.mrf.mxu0
      %v2241 = vpop.f32.mrf.mxu0
      %v2242 = vadd.f32 0.0, %v2241
      %v2243 = vpop.f32.mrf.mxu0
      %2244 = vmatprep.mubr.bf16.mxu0 0
      %2245 = vmatmul.mubr.bf16.gmra.mxu0 %v2087
      %v2246 = vpop.f32.mrf.mxu0
      %v2247 = vadd.f32 0.0, %v2246
      %v2248 = vpop.f32.mrf.mxu0
      %v2249 = vpop.f32.mrf.mxu0
      %v2250 = vadd.f32 0.0, %v2249
      %v2251 = vpop.f32.mrf.mxu0
      %2252 = vdwg.mxu0
      %v2253 = vld [vmem:[%s202] sm:$0xff]
      %v2254 = vld [vmem:[%s202 + $0x8] sm:$0xff]
      %v2255 = vld [vmem:[%s202 + $0x10] sm:$0xff]
      %v2256 = vld [vmem:[%s202 + $0x18] sm:$0xff]
      %v2257 = vld [vmem:[%s202 + $0x20] sm:$0xff]
      %v2258 = vld [vmem:[%s202 + $0x28] sm:$0xff]
      %v2259 = vld [vmem:[%s202 + $0x30] sm:$0xff]
      %v2260 = vld [vmem:[%s202 + $0x38] sm:$0xff]
      %v2261 = vld [vmem:[%s202 + $0x40] sm:$0xff]
      %v2262 = vld [vmem:[%s202 + $0x48] sm:$0xff]
      %v2263 = vld [vmem:[%s202 + $0x50] sm:$0xff]
      %v2264 = vld [vmem:[%s202 + $0x58] sm:$0xff]
      %v2265 = vld [vmem:[%s202 + $0x60] sm:$0xff]
      %v2266 = vld [vmem:[%s202 + $0x68] sm:$0xff]
      %v2267 = vld [vmem:[%s202 + $0x70] sm:$0xff]
      %v2268 = vld [vmem:[%s202 + $0x78] sm:$0xff]
      %v2269 = vld [vmem:[%s202 + $0x80] sm:$0xff]
      %v2270 = vld [vmem:[%s202 + $0x88] sm:$0xff]
      %v2271 = vld [vmem:[%s202 + $0x90] sm:$0xff]
      %v2272 = vld [vmem:[%s202 + $0x98] sm:$0xff]
      %v2273 = vld [vmem:[%s202 + $0xa0] sm:$0xff]
      %v2274 = vld [vmem:[%s202 + $0xa8] sm:$0xff]
      %v2275 = vld [vmem:[%s202 + $0xb0] sm:$0xff]
      %v2276 = vld [vmem:[%s202 + $0xb8] sm:$0xff]
      %v2277 = vld [vmem:[%s202 + $0xc0] sm:$0xff]
      %v2278 = vld [vmem:[%s202 + $0xc8] sm:$0xff]
      %v2279 = vld [vmem:[%s202 + $0xd0] sm:$0xff]
      %v2280 = vld [vmem:[%s202 + $0xd8] sm:$0xff]
      %v2281 = vld [vmem:[%s202 + $0xe0] sm:$0xff]
      %v2282 = vld [vmem:[%s202 + $0xe8] sm:$0xff]
      %v2283 = vld [vmem:[%s202 + $0xf0] sm:$0xff]
      %v2284 = vld [vmem:[%s202 + $0xf8] sm:$0xff]
      %v2285 = vadd.f32 %v2253, %v2127
      %v2286 = vadd.f32 %v2254, %v2130
      %v2287 = vadd.f32 %v2255, %v2135
      %v2288 = vadd.f32 %v2256, %v2138
      %v2289 = vadd.f32 %v2257, %v2143
      %v2290 = vadd.f32 %v2258, %v2146
      %v2291 = vadd.f32 %v2259, %v2151
      %v2292 = vadd.f32 %v2260, %v2154
      %v2293 = vadd.f32 %v2261, %v2159
      %v2294 = vadd.f32 %v2262, %v2162
      %v2295 = vadd.f32 %v2263, %v2167
      %v2296 = vadd.f32 %v2264, %v2170
      %v2297 = vadd.f32 %v2265, %v2175
      %v2298 = vadd.f32 %v2266, %v2178
      %v2299 = vadd.f32 %v2267, %v2183
      %v2300 = vadd.f32 %v2268, %v2186
      %v2301 = vadd.f32 %v2269, %v2191
      %v2302 = vadd.f32 %v2270, %v2194
      %v2303 = vadd.f32 %v2271, %v2199
      %v2304 = vadd.f32 %v2272, %v2202
      %v2305 = vadd.f32 %v2273, %v2207
      %v2306 = vadd.f32 %v2274, %v2210
      %v2307 = vadd.f32 %v2275, %v2215
      %v2308 = vadd.f32 %v2276, %v2218
      %v2309 = vadd.f32 %v2277, %v2223
      %v2310 = vadd.f32 %v2278, %v2226
      %v2311 = vadd.f32 %v2279, %v2231
      %v2312 = vadd.f32 %v2280, %v2234
      %v2313 = vadd.f32 %v2281, %v2239
      %v2314 = vadd.f32 %v2282, %v2242
      %v2315 = vadd.f32 %v2283, %v2247
      %v2316 = vadd.f32 %v2284, %v2250
      %2317 = vst [vmem:[%s202] sm:$0xff] %v2285
      %2318 = vst [vmem:[%s202 + $0x8] sm:$0xff] %v2286
      %2319 = vst [vmem:[%s202 + $0x10] sm:$0xff] %v2287
      %2320 = vst [vmem:[%s202 + $0x18] sm:$0xff] %v2288
      %2321 = vst [vmem:[%s202 + $0x20] sm:$0xff] %v2289
      %2322 = vst [vmem:[%s202 + $0x28] sm:$0xff] %v2290
      %2323 = vst [vmem:[%s202 + $0x30] sm:$0xff] %v2291
      %2324 = vst [vmem:[%s202 + $0x38] sm:$0xff] %v2292
      %2325 = vst [vmem:[%s202 + $0x40] sm:$0xff] %v2293
      %2326 = vst [vmem:[%s202 + $0x48] sm:$0xff] %v2294
      %2327 = vst [vmem:[%s202 + $0x50] sm:$0xff] %v2295
      %2328 = vst [vmem:[%s202 + $0x58] sm:$0xff] %v2296
      %2329 = vst [vmem:[%s202 + $0x60] sm:$0xff] %v2297
      %2330 = vst [vmem:[%s202 + $0x68] sm:$0xff] %v2298
      %2331 = vst [vmem:[%s202 + $0x70] sm:$0xff] %v2299
      %2332 = vst [vmem:[%s202 + $0x78] sm:$0xff] %v2300
      %2333 = vst [vmem:[%s202 + $0x80] sm:$0xff] %v2301
      %2334 = vst [vmem:[%s202 + $0x88] sm:$0xff] %v2302
      %2335 = vst [vmem:[%s202 + $0x90] sm:$0xff] %v2303
      %2336 = vst [vmem:[%s202 + $0x98] sm:$0xff] %v2304
      %2337 = vst [vmem:[%s202 + $0xa0] sm:$0xff] %v2305
      %2338 = vst [vmem:[%s202 + $0xa8] sm:$0xff] %v2306
      %2339 = vst [vmem:[%s202 + $0xb0] sm:$0xff] %v2307
      %2340 = vst [vmem:[%s202 + $0xb8] sm:$0xff] %v2308
      %2341 = vst [vmem:[%s202 + $0xc0] sm:$0xff] %v2309
      %2342 = vst [vmem:[%s202 + $0xc8] sm:$0xff] %v2310
      %2343 = vst [vmem:[%s202 + $0xd0] sm:$0xff] %v2311
      %2344 = vst [vmem:[%s202 + $0xd8] sm:$0xff] %v2312
      %2345 = vst [vmem:[%s202 + $0xe0] sm:$0xff] %v2313
      %2346 = vst [vmem:[%s202 + $0xe8] sm:$0xff] %v2314
      %2347 = vst [vmem:[%s202 + $0xf0] sm:$0xff] %v2315
      %2348 = vst [vmem:[%s202 + $0xf8] sm:$0xff] %v2316
      %v2349 = vld [vmem:[%s1926] sm:$0xf]
      %v2350 = vld [vmem:[%s1926 + $0x4] sm:$0xf]
      %v2351 = vld [vmem:[%s1926 + $0x8] sm:$0x1]
      %v2352 = vld [vmem:[%s1926 + $0xc] sm:$0xf]
      %v2353 = vld [vmem:[%s1926 + $0x10] sm:$0xf]
      %v2354 = vld [vmem:[%s1926 + $0x14] sm:$0x1]
      %v2355 = vld [vmem:[%s1926 + $0x18] sm:$0xf]
      %v2356 = vld [vmem:[%s1926 + $0x1c] sm:$0xf]
      %v2357 = vld [vmem:[%s1926 + $0x20] sm:$0x1]
      %v2358 = vld [vmem:[%s1926 + $0x24] sm:$0xf]
      %v2359 = vld [vmem:[%s1926 + $0x28] sm:$0xf]
      %v2360 = vld [vmem:[%s1926 + $0x2c] sm:$0x1]
      %v2361 = vld [vmem:[%s1926 + $0x30] sm:$0xf]
      %v2362 = vld [vmem:[%s1926 + $0x34] sm:$0xf]
      %v2363 = vld [vmem:[%s1926 + $0x38] sm:$0x1]
      %v2364 = vld [vmem:[%s1926 + $0x3c] sm:$0xf]
      %v2365 = vld [vmem:[%s1926 + $0x40] sm:$0xf]
      %v2366 = vld [vmem:[%s1926 + $0x44] sm:$0x1]
      %v2367 = vld [vmem:[%s1926 + $0x48] sm:$0xf]
      %v2368 = vld [vmem:[%s1926 + $0x4c] sm:$0xf]
      %v2369 = vld [vmem:[%s1926 + $0x50] sm:$0x1]
      %v2370 = vld [vmem:[%s1926 + $0x54] sm:$0xf]
      %v2371 = vld [vmem:[%s1926 + $0x58] sm:$0xf]
      %v2372 = vld [vmem:[%s1926 + $0x5c] sm:$0x1]
      %v2373 = vld [vmem:[%s1926 + $0x60] sm:$0xf]
      %v2374 = vld [vmem:[%s1926 + $0x64] sm:$0xf]
      %v2375 = vld [vmem:[%s1926 + $0x68] sm:$0x1]
      %v2376 = vld [vmem:[%s1926 + $0x6c] sm:$0xf]
      %v2377 = vld [vmem:[%s1926 + $0x70] sm:$0xf]
      %v2378 = vld [vmem:[%s1926 + $0x74] sm:$0x1]
      %v2379 = vld [vmem:[%s1926 + $0x78] sm:$0xf]
      %v2380 = vld [vmem:[%s1926 + $0x7c] sm:$0xf]
      %v2381 = vld [vmem:[%s1926 + $0x80] sm:$0x1]
      %v2382 = vld [vmem:[%s1926 + $0x84] sm:$0xf]
      %v2383 = vld [vmem:[%s1926 + $0x88] sm:$0xf]
      %v2384 = vld [vmem:[%s1926 + $0x8c] sm:$0x1]
      %v2385 = vld [vmem:[%s1926 + $0x90] sm:$0xf]
      %v2386 = vld [vmem:[%s1926 + $0x94] sm:$0xf]
      %v2387 = vld [vmem:[%s1926 + $0x98] sm:$0x1]
      %v2388 = vld [vmem:[%s1926 + $0x9c] sm:$0xf]
      %v2389 = vld [vmem:[%s1926 + $0xa0] sm:$0xf]
      %v2390 = vld [vmem:[%s1926 + $0xa4] sm:$0x1]
      %v2391 = vld [vmem:[%s1926 + $0xa8] sm:$0xf]
      %v2392 = vld [vmem:[%s1926 + $0xac] sm:$0xf]
      %v2393 = vld [vmem:[%s1926 + $0xb0] sm:$0x1]
      %v2394 = vld [vmem:[%s1926 + $0xb4] sm:$0xf]
      %v2395 = vld [vmem:[%s1926 + $0xb8] sm:$0xf]
      %v2396 = vld [vmem:[%s1926 + $0xbc] sm:$0x1]
      %v2398 = vshrl.u32 %v2349, 16
      %v2400 = vrot.slane %v2398, 4
      %v2401 = vshll.u32 %v2349, 16
      %v2403 = vrot.slane %v2401, 5
      %v2404 = vor.u32 %v2400, %v2403
      %v2405 = vrot.slane %v2404, 4
      %v2407 = vshll.u32 %v2350, 16
      %v2409 = vrot.slane %v2407, 5
      %v2410 = vsel %vm614, %v2405, %v2409
      %v2411 = vshrl.u32 %v2350, 16
      %v2413 = vrot.slane %v2411, 4
      %v2414 = vor.u32 %v2413, %v2409
      %v2415 = vrot.slane %v2414, 4
      %v2417 = vshll.u32 %v2351, 16
      %v2419 = vrot.slane %v2417, 5
      %v2420 = vsel %vm614, %v2415, %v2419
      %v2422 = vshrl.u32 %v2352, 16
      %v2424 = vrot.slane %v2422, 4
      %v2425 = vshll.u32 %v2352, 16
      %v2427 = vrot.slane %v2425, 5
      %v2428 = vor.u32 %v2424, %v2427
      %v2429 = vrot.slane %v2428, 4
      %v2431 = vshll.u32 %v2353, 16
      %v2433 = vrot.slane %v2431, 5
      %v2434 = vsel %vm614, %v2429, %v2433
      %v2435 = vshrl.u32 %v2353, 16
      %v2437 = vrot.slane %v2435, 4
      %v2438 = vor.u32 %v2437, %v2433
      %v2439 = vrot.slane %v2438, 4
      %v2441 = vshll.u32 %v2354, 16
      %v2443 = vrot.slane %v2441, 5
      %v2444 = vsel %vm614, %v2439, %v2443
      %v2446 = vshrl.u32 %v2355, 16
      %v2448 = vrot.slane %v2446, 4
      %v2449 = vshll.u32 %v2355, 16
      %v2451 = vrot.slane %v2449, 5
      %v2452 = vor.u32 %v2448, %v2451
      %v2453 = vrot.slane %v2452, 4
      %v2455 = vshll.u32 %v2356, 16
      %v2457 = vrot.slane %v2455, 5
      %v2458 = vsel %vm614, %v2453, %v2457
      %v2459 = vshrl.u32 %v2356, 16
      %v2461 = vrot.slane %v2459, 4
      %v2462 = vor.u32 %v2461, %v2457
      %v2463 = vrot.slane %v2462, 4
      %v2465 = vshll.u32 %v2357, 16
      %v2467 = vrot.slane %v2465, 5
      %v2468 = vsel %vm614, %v2463, %v2467
      %v2470 = vshrl.u32 %v2358, 16
      %v2472 = vrot.slane %v2470, 4
      %v2473 = vshll.u32 %v2358, 16
      %v2475 = vrot.slane %v2473, 5
      %v2476 = vor.u32 %v2472, %v2475
      %v2477 = vrot.slane %v2476, 4
      %v2479 = vshll.u32 %v2359, 16
      %v2481 = vrot.slane %v2479, 5
      %v2482 = vsel %vm614, %v2477, %v2481
      %v2483 = vshrl.u32 %v2359, 16
      %v2485 = vrot.slane %v2483, 4
      %v2486 = vor.u32 %v2485, %v2481
      %v2487 = vrot.slane %v2486, 4
      %v2489 = vshll.u32 %v2360, 16
      %v2491 = vrot.slane %v2489, 5
      %v2492 = vsel %vm614, %v2487, %v2491
      %v2494 = vshrl.u32 %v2361, 16
      %v2496 = vrot.slane %v2494, 4
      %v2497 = vshll.u32 %v2361, 16
      %v2499 = vrot.slane %v2497, 5
      %v2500 = vor.u32 %v2496, %v2499
      %v2501 = vrot.slane %v2500, 4
      %v2503 = vshll.u32 %v2362, 16
      %v2505 = vrot.slane %v2503, 5
      %v2506 = vsel %vm614, %v2501, %v2505
      %v2507 = vshrl.u32 %v2362, 16
      %v2509 = vrot.slane %v2507, 4
      %v2510 = vor.u32 %v2509, %v2505
      %v2511 = vrot.slane %v2510, 4
      %v2513 = vshll.u32 %v2363, 16
      %v2515 = vrot.slane %v2513, 5
      %v2516 = vsel %vm614, %v2511, %v2515
      %v2518 = vshrl.u32 %v2364, 16
      %v2520 = vrot.slane %v2518, 4
      %v2521 = vshll.u32 %v2364, 16
      %v2523 = vrot.slane %v2521, 5
      %v2524 = vor.u32 %v2520, %v2523
      %v2525 = vrot.slane %v2524, 4
      %v2527 = vshll.u32 %v2365, 16
      %v2529 = vrot.slane %v2527, 5
      %v2530 = vsel %vm614, %v2525, %v2529
      %v2531 = vshrl.u32 %v2365, 16
      %v2533 = vrot.slane %v2531, 4
      %v2534 = vor.u32 %v2533, %v2529
      %v2535 = vrot.slane %v2534, 4
      %v2537 = vshll.u32 %v2366, 16
      %v2539 = vrot.slane %v2537, 5
      %v2540 = vsel %vm614, %v2535, %v2539
      %v2542 = vshrl.u32 %v2367, 16
      %v2544 = vrot.slane %v2542, 4
      %v2545 = vshll.u32 %v2367, 16
      %v2547 = vrot.slane %v2545, 5
      %v2548 = vor.u32 %v2544, %v2547
      %v2549 = vrot.slane %v2548, 4
      %v2551 = vshll.u32 %v2368, 16
      %v2553 = vrot.slane %v2551, 5
      %v2554 = vsel %vm614, %v2549, %v2553
      %v2555 = vshrl.u32 %v2368, 16
      %v2557 = vrot.slane %v2555, 4
      %v2558 = vor.u32 %v2557, %v2553
      %v2559 = vrot.slane %v2558, 4
      %v2561 = vshll.u32 %v2369, 16
      %v2563 = vrot.slane %v2561, 5
      %v2564 = vsel %vm614, %v2559, %v2563
      %v2566 = vshrl.u32 %v2370, 16
      %v2568 = vrot.slane %v2566, 4
      %v2569 = vshll.u32 %v2370, 16
      %v2571 = vrot.slane %v2569, 5
      %v2572 = vor.u32 %v2568, %v2571
      %v2573 = vrot.slane %v2572, 4
      %v2575 = vshll.u32 %v2371, 16
      %v2577 = vrot.slane %v2575, 5
      %v2578 = vsel %vm614, %v2573, %v2577
      %v2579 = vshrl.u32 %v2371, 16
      %v2581 = vrot.slane %v2579, 4
      %v2582 = vor.u32 %v2581, %v2577
      %v2583 = vrot.slane %v2582, 4
      %v2585 = vshll.u32 %v2372, 16
      %v2587 = vrot.slane %v2585, 5
      %v2588 = vsel %vm614, %v2583, %v2587
      %v2590 = vshrl.u32 %v2373, 16
      %v2592 = vrot.slane %v2590, 4
      %v2593 = vshll.u32 %v2373, 16
      %v2595 = vrot.slane %v2593, 5
      %v2596 = vor.u32 %v2592, %v2595
      %v2597 = vrot.slane %v2596, 4
      %v2599 = vshll.u32 %v2374, 16
      %v2601 = vrot.slane %v2599, 5
      %v2602 = vsel %vm614, %v2597, %v2601
      %v2603 = vshrl.u32 %v2374, 16
      %v2605 = vrot.slane %v2603, 4
      %v2606 = vor.u32 %v2605, %v2601
      %v2607 = vrot.slane %v2606, 4
      %v2609 = vshll.u32 %v2375, 16
      %v2611 = vrot.slane %v2609, 5
      %v2612 = vsel %vm614, %v2607, %v2611
      %v2614 = vshrl.u32 %v2376, 16
      %v2616 = vrot.slane %v2614, 4
      %v2617 = vshll.u32 %v2376, 16
      %v2619 = vrot.slane %v2617, 5
      %v2620 = vor.u32 %v2616, %v2619
      %v2621 = vrot.slane %v2620, 4
      %v2623 = vshll.u32 %v2377, 16
      %v2625 = vrot.slane %v2623, 5
      %v2626 = vsel %vm614, %v2621, %v2625
      %v2627 = vshrl.u32 %v2377, 16
      %v2629 = vrot.slane %v2627, 4
      %v2630 = vor.u32 %v2629, %v2625
      %v2631 = vrot.slane %v2630, 4
      %v2633 = vshll.u32 %v2378, 16
      %v2635 = vrot.slane %v2633, 5
      %v2636 = vsel %vm614, %v2631, %v2635
      %v2638 = vshrl.u32 %v2379, 16
      %v2640 = vrot.slane %v2638, 4
      %v2641 = vshll.u32 %v2379, 16
      %v2643 = vrot.slane %v2641, 5
      %v2644 = vor.u32 %v2640, %v2643
      %v2645 = vrot.slane %v2644, 4
      %v2647 = vshll.u32 %v2380, 16
      %v2649 = vrot.slane %v2647, 5
      %v2650 = vsel %vm614, %v2645, %v2649
      %v2651 = vshrl.u32 %v2380, 16
      %v2653 = vrot.slane %v2651, 4
      %v2654 = vor.u32 %v2653, %v2649
      %v2655 = vrot.slane %v2654, 4
      %v2657 = vshll.u32 %v2381, 16
      %v2659 = vrot.slane %v2657, 5
      %v2660 = vsel %vm614, %v2655, %v2659
      %v2662 = vshrl.u32 %v2382, 16
      %v2664 = vrot.slane %v2662, 4
      %v2665 = vshll.u32 %v2382, 16
      %v2667 = vrot.slane %v2665, 5
      %v2668 = vor.u32 %v2664, %v2667
      %v2669 = vrot.slane %v2668, 4
      %v2671 = vshll.u32 %v2383, 16
      %v2673 = vrot.slane %v2671, 5
      %v2674 = vsel %vm614, %v2669, %v2673
      %v2675 = vshrl.u32 %v2383, 16
      %v2677 = vrot.slane %v2675, 4
      %v2678 = vor.u32 %v2677, %v2673
      %v2679 = vrot.slane %v2678, 4
      %v2681 = vshll.u32 %v2384, 16
      %v2683 = vrot.slane %v2681, 5
      %v2684 = vsel %vm614, %v2679, %v2683
      %v2686 = vshrl.u32 %v2385, 16
      %v2688 = vrot.slane %v2686, 4
      %v2689 = vshll.u32 %v2385, 16
      %v2691 = vrot.slane %v2689, 5
      %v2692 = vor.u32 %v2688, %v2691
      %v2693 = vrot.slane %v2692, 4
      %v2695 = vshll.u32 %v2386, 16
      %v2697 = vrot.slane %v2695, 5
      %v2698 = vsel %vm614, %v2693, %v2697
      %v2699 = vshrl.u32 %v2386, 16
      %v2701 = vrot.slane %v2699, 4
      %v2702 = vor.u32 %v2701, %v2697
      %v2703 = vrot.slane %v2702, 4
      %v2705 = vshll.u32 %v2387, 16
      %v2707 = vrot.slane %v2705, 5
      %v2708 = vsel %vm614, %v2703, %v2707
      %v2710 = vshrl.u32 %v2388, 16
      %v2712 = vrot.slane %v2710, 4
      %v2713 = vshll.u32 %v2388, 16
      %v2715 = vrot.slane %v2713, 5
      %v2716 = vor.u32 %v2712, %v2715
      %v2717 = vrot.slane %v2716, 4
      %v2719 = vshll.u32 %v2389, 16
      %v2721 = vrot.slane %v2719, 5
      %v2722 = vsel %vm614, %v2717, %v2721
      %v2723 = vshrl.u32 %v2389, 16
      %v2725 = vrot.slane %v2723, 4
      %v2726 = vor.u32 %v2725, %v2721
      %v2727 = vrot.slane %v2726, 4
      %v2729 = vshll.u32 %v2390, 16
      %v2731 = vrot.slane %v2729, 5
      %v2732 = vsel %vm614, %v2727, %v2731
      %v2734 = vshrl.u32 %v2391, 16
      %v2736 = vrot.slane %v2734, 4
      %v2737 = vshll.u32 %v2391, 16
      %v2739 = vrot.slane %v2737, 5
      %v2740 = vor.u32 %v2736, %v2739
      %v2741 = vrot.slane %v2740, 4
      %v2743 = vshll.u32 %v2392, 16
      %v2745 = vrot.slane %v2743, 5
      %v2746 = vsel %vm614, %v2741, %v2745
      %v2747 = vshrl.u32 %v2392, 16
      %v2749 = vrot.slane %v2747, 4
      %v2750 = vor.u32 %v2749, %v2745
      %v2751 = vrot.slane %v2750, 4
      %v2753 = vshll.u32 %v2393, 16
      %v2755 = vrot.slane %v2753, 5
      %v2756 = vsel %vm614, %v2751, %v2755
      %v2758 = vshrl.u32 %v2394, 16
      %v2760 = vrot.slane %v2758, 4
      %v2761 = vshll.u32 %v2394, 16
      %v2763 = vrot.slane %v2761, 5
      %v2764 = vor.u32 %v2760, %v2763
      %v2765 = vrot.slane %v2764, 4
      %v2767 = vshll.u32 %v2395, 16
      %v2769 = vrot.slane %v2767, 5
      %v2770 = vsel %vm614, %v2765, %v2769
      %v2771 = vshrl.u32 %v2395, 16
      %v2773 = vrot.slane %v2771, 4
      %v2774 = vor.u32 %v2773, %v2769
      %v2775 = vrot.slane %v2774, 4
      %v2777 = vshll.u32 %v2396, 16
      %v2779 = vrot.slane %v2777, 5
      %v2780 = vsel %vm614, %v2775, %v2779
      %s2781 = scalar_lea.vmem %s1, 8
      %v2782 = vld [vmem:[%s2781] sm:$0x3]
      %v2783 = vunpack.c.l.b16 %v2410
      %v2784 = vunpack.c.l.b16 %v2420
      %v2785 = vunpack.c.l.b16 %v2434
      %v2786 = vunpack.c.l.b16 %v2444
      %v2787 = vunpack.c.l.b16 %v2458
      %v2788 = vunpack.c.l.b16 %v2468
      %v2789 = vunpack.c.l.b16 %v2482
      %v2790 = vunpack.c.l.b16 %v2492
      %v2791 = vunpack.c.l.b16 %v2506
      %v2792 = vunpack.c.l.b16 %v2516
      %v2793 = vunpack.c.l.b16 %v2530
      %v2794 = vunpack.c.l.b16 %v2540
      %v2795 = vunpack.c.l.b16 %v2554
      %v2796 = vunpack.c.l.b16 %v2564
      %v2797 = vunpack.c.l.b16 %v2578
      %v2798 = vunpack.c.l.b16 %v2588
      %v2799 = vunpack.c.l.b16 %v2602
      %v2800 = vunpack.c.l.b16 %v2612
      %v2801 = vunpack.c.l.b16 %v2626
      %v2802 = vunpack.c.l.b16 %v2636
      %v2803 = vunpack.c.l.b16 %v2650
      %v2804 = vunpack.c.l.b16 %v2660
      %v2805 = vunpack.c.l.b16 %v2674
      %v2806 = vunpack.c.l.b16 %v2684
      %v2807 = vunpack.c.l.b16 %v2698
      %v2808 = vunpack.c.l.b16 %v2708
      %v2809 = vunpack.c.l.b16 %v2722
      %v2810 = vunpack.c.l.b16 %v2732
      %v2811 = vunpack.c.l.b16 %v2746
      %v2812 = vunpack.c.l.b16 %v2756
      %v2813 = vunpack.c.l.b16 %v2770
      %v2814 = vunpack.c.l.b16 %v2780
      %v2815 = vpack.c.b16 %v2784, %v2783
      %v2816 = vpack.c.b16 %v2786, %v2785
      %v2817 = vpack.c.b16 %v2788, %v2787
      %v2818 = vpack.c.b16 %v2790, %v2789
      %v2819 = vpack.c.b16 %v2792, %v2791
      %v2820 = vpack.c.b16 %v2794, %v2793
      %v2821 = vpack.c.b16 %v2796, %v2795
      %v2822 = vpack.c.b16 %v2798, %v2797
      %v2823 = vpack.c.b16 %v2800, %v2799
      %v2824 = vpack.c.b16 %v2802, %v2801
      %v2825 = vpack.c.b16 %v2804, %v2803
      %v2826 = vpack.c.b16 %v2806, %v2805
      %v2827 = vpack.c.b16 %v2808, %v2807
      %v2828 = vpack.c.b16 %v2810, %v2809
      %v2829 = vpack.c.b16 %v2812, %v2811
      %v2830 = vpack.c.b16 %v2814, %v2813
      %v2832 = vsel %vm318, %v2815, 0
      %v2835 = vsel %vm318, %v2816, 0
      %v2838 = vsel %vm318, %v2817, 0
      %v2841 = vsel %vm318, %v2818, 0
      %v2844 = vsel %vm318, %v2819, 0
      %v2847 = vsel %vm318, %v2820, 0
      %v2850 = vsel %vm318, %v2821, 0
      %v2853 = vsel %vm318, %v2822, 0
      %v2856 = vsel %vm318, %v2823, 0
      %v2859 = vsel %vm318, %v2824, 0
      %v2862 = vsel %vm318, %v2825, 0
      %v2865 = vsel %vm318, %v2826, 0
      %v2868 = vsel %vm318, %v2827, 0
      %v2871 = vsel %vm318, %v2828, 0
      %v2874 = vsel %vm318, %v2829, 0
      %v2877 = vsel %vm318, %v2830, 0
      %v2880 = vsel %vm367, %v2782, 0
      %2882 = vmatprep.subr.bf16.mxu0 0
      %2883 = vmatpush1.bf16.msra.mxu0 0
      %2884 = vmatprep.subr.bf16.mxu0 0
      %2885 = vmatpush1.bf16.msra.mxu0 0
      %2886 = vmatprep.subr.bf16.mxu0 0
      %2887 = vmatpush1.bf16.msra.mxu0 0
      %2888 = vmatprep.subr.bf16.mxu0 0
      %2889 = vmatpush1.bf16.msra.mxu0 0
      %2890 = vmatprep.subr.bf16.mxu0 0
      %2891 = vmatpush1.bf16.msra.mxu0 0
      %2892 = vmatprep.subr.bf16.mxu0 0
      %2893 = vmatpush1.bf16.msra.mxu0 0
      %2894 = vmatprep.subr.bf16.mxu0 0
      %2895 = vmatpush1.bf16.msra.mxu0 0
      %2896 = vmatprep.subr.bf16.mxu0 0
      %2897 = vmatpush1.bf16.msra.mxu0 %v2880
      %2898 = vmatprep.subr.bf16.mxu0 0
      %2899 = vmatpush2.bf16.msra.mxu0 0
      %2900 = vmatprep.subr.bf16.mxu0 0
      %2901 = vmatpush2.bf16.msra.mxu0 0
      %2902 = vmatprep.subr.bf16.mxu0 0
      %2903 = vmatpush2.bf16.msra.mxu0 0
      %2904 = vmatprep.subr.bf16.mxu0 0
      %2905 = vmatpush2.bf16.msra.mxu0 0
      %2906 = vmatprep.subr.bf16.mxu0 0
      %2907 = vmatpush2.bf16.msra.mxu0 0
      %2908 = vmatprep.subr.bf16.mxu0 0
      %2909 = vmatpush2.bf16.msra.mxu0 0
      %2910 = vmatprep.subr.bf16.mxu0 0
      %2911 = vmatpush2.bf16.msra.mxu0 0
      %2912 = vmatprep.subr.bf16.mxu0 0
      %2913 = vmatpush2.bf16.msra.mxu0 0
      %2914 = vmatprep.mubr.bf16.mxu0 0
      %2915 = vmatmul.mubr.bf16.gmra.mxu0 %v2832
      %v2916 = vpop.f32.mrf.mxu0
      %v2917 = vadd.f32 0.0, %v2916
      %v2918 = vpop.f32.mrf.mxu0
      %v2919 = vpop.f32.mrf.mxu0
      %v2920 = vadd.f32 0.0, %v2919
      %v2921 = vpop.f32.mrf.mxu0
      %2922 = vmatprep.mubr.bf16.mxu0 0
      %2923 = vmatmul.mubr.bf16.gmra.mxu0 %v2835
      %v2924 = vpop.f32.mrf.mxu0
      %v2925 = vadd.f32 0.0, %v2924
      %v2926 = vpop.f32.mrf.mxu0
      %v2927 = vpop.f32.mrf.mxu0
      %v2928 = vadd.f32 0.0, %v2927
      %v2929 = vpop.f32.mrf.mxu0
      %2930 = vmatprep.mubr.bf16.mxu0 0
      %2931 = vmatmul.mubr.bf16.gmra.mxu0 %v2838
      %v2932 = vpop.f32.mrf.mxu0
      %v2933 = vadd.f32 0.0, %v2932
      %v2934 = vpop.f32.mrf.mxu0
      %v2935 = vpop.f32.mrf.mxu0
      %v2936 = vadd.f32 0.0, %v2935
      %v2937 = vpop.f32.mrf.mxu0
      %2938 = vmatprep.mubr.bf16.mxu0 0
      %2939 = vmatmul.mubr.bf16.gmra.mxu0 %v2841
      %v2940 = vpop.f32.mrf.mxu0
      %v2941 = vadd.f32 0.0, %v2940
      %v2942 = vpop.f32.mrf.mxu0
      %v2943 = vpop.f32.mrf.mxu0
      %v2944 = vadd.f32 0.0, %v2943
      %v2945 = vpop.f32.mrf.mxu0
      %2946 = vmatprep.mubr.bf16.mxu0 0
      %2947 = vmatmul.mubr.bf16.gmra.mxu0 %v2844
      %v2948 = vpop.f32.mrf.mxu0
      %v2949 = vadd.f32 0.0, %v2948
      %v2950 = vpop.f32.mrf.mxu0
      %v2951 = vpop.f32.mrf.mxu0
      %v2952 = vadd.f32 0.0, %v2951
      %v2953 = vpop.f32.mrf.mxu0
      %2954 = vmatprep.mubr.bf16.mxu0 0
      %2955 = vmatmul.mubr.bf16.gmra.mxu0 %v2847
      %v2956 = vpop.f32.mrf.mxu0
      %v2957 = vadd.f32 0.0, %v2956
      %v2958 = vpop.f32.mrf.mxu0
      %v2959 = vpop.f32.mrf.mxu0
      %v2960 = vadd.f32 0.0, %v2959
      %v2961 = vpop.f32.mrf.mxu0
      %2962 = vmatprep.mubr.bf16.mxu0 0
      %2963 = vmatmul.mubr.bf16.gmra.mxu0 %v2850
      %v2964 = vpop.f32.mrf.mxu0
      %v2965 = vadd.f32 0.0, %v2964
      %v2966 = vpop.f32.mrf.mxu0
      %v2967 = vpop.f32.mrf.mxu0
      %v2968 = vadd.f32 0.0, %v2967
      %v2969 = vpop.f32.mrf.mxu0
      %2970 = vmatprep.mubr.bf16.mxu0 0
      %2971 = vmatmul.mubr.bf16.gmra.mxu0 %v2853
      %v2972 = vpop.f32.mrf.mxu0
      %v2973 = vadd.f32 0.0, %v2972
      %v2974 = vpop.f32.mrf.mxu0
      %v2975 = vpop.f32.mrf.mxu0
      %v2976 = vadd.f32 0.0, %v2975
      %v2977 = vpop.f32.mrf.mxu0
      %2978 = vmatprep.mubr.bf16.mxu0 0
      %2979 = vmatmul.mubr.bf16.gmra.mxu0 %v2856
      %v2980 = vpop.f32.mrf.mxu0
      %v2981 = vadd.f32 0.0, %v2980
      %v2982 = vpop.f32.mrf.mxu0
      %v2983 = vpop.f32.mrf.mxu0
      %v2984 = vadd.f32 0.0, %v2983
      %v2985 = vpop.f32.mrf.mxu0
      %2986 = vmatprep.mubr.bf16.mxu0 0
      %2987 = vmatmul.mubr.bf16.gmra.mxu0 %v2859
      %v2988 = vpop.f32.mrf.mxu0
      %v2989 = vadd.f32 0.0, %v2988
      %v2990 = vpop.f32.mrf.mxu0
      %v2991 = vpop.f32.mrf.mxu0
      %v2992 = vadd.f32 0.0, %v2991
      %v2993 = vpop.f32.mrf.mxu0
      %2994 = vmatprep.mubr.bf16.mxu0 0
      %2995 = vmatmul.mubr.bf16.gmra.mxu0 %v2862
      %v2996 = vpop.f32.mrf.mxu0
      %v2997 = vadd.f32 0.0, %v2996
      %v2998 = vpop.f32.mrf.mxu0
      %v2999 = vpop.f32.mrf.mxu0
      %v3000 = vadd.f32 0.0, %v2999
      %v3001 = vpop.f32.mrf.mxu0
      %3002 = vmatprep.mubr.bf16.mxu0 0
      %3003 = vmatmul.mubr.bf16.gmra.mxu0 %v2865
      %v3004 = vpop.f32.mrf.mxu0
      %v3005 = vadd.f32 0.0, %v3004
      %v3006 = vpop.f32.mrf.mxu0
      %v3007 = vpop.f32.mrf.mxu0
      %v3008 = vadd.f32 0.0, %v3007
      %v3009 = vpop.f32.mrf.mxu0
      %3010 = vmatprep.mubr.bf16.mxu0 0
      %3011 = vmatmul.mubr.bf16.gmra.mxu0 %v2868
      %v3012 = vpop.f32.mrf.mxu0
      %v3013 = vadd.f32 0.0, %v3012
      %v3014 = vpop.f32.mrf.mxu0
      %v3015 = vpop.f32.mrf.mxu0
      %v3016 = vadd.f32 0.0, %v3015
      %v3017 = vpop.f32.mrf.mxu0
      %3018 = vmatprep.mubr.bf16.mxu0 0
      %3019 = vmatmul.mubr.bf16.gmra.mxu0 %v2871
      %v3020 = vpop.f32.mrf.mxu0
      %v3021 = vadd.f32 0.0, %v3020
      %v3022 = vpop.f32.mrf.mxu0
      %v3023 = vpop.f32.mrf.mxu0
      %v3024 = vadd.f32 0.0, %v3023
      %v3025 = vpop.f32.mrf.mxu0
      %3026 = vmatprep.mubr.bf16.mxu0 0
      %3027 = vmatmul.mubr.bf16.gmra.mxu0 %v2874
      %v3028 = vpop.f32.mrf.mxu0
      %v3029 = vadd.f32 0.0, %v3028
      %v3030 = vpop.f32.mrf.mxu0
      %v3031 = vpop.f32.mrf.mxu0
      %v3032 = vadd.f32 0.0, %v3031
      %v3033 = vpop.f32.mrf.mxu0
      %3034 = vmatprep.mubr.bf16.mxu0 0
      %3035 = vmatmul.mubr.bf16.gmra.mxu0 %v2877
      %v3036 = vpop.f32.mrf.mxu0
      %v3037 = vadd.f32 0.0, %v3036
      %v3038 = vpop.f32.mrf.mxu0
      %v3039 = vpop.f32.mrf.mxu0
      %v3040 = vadd.f32 0.0, %v3039
      %v3041 = vpop.f32.mrf.mxu0
      %3042 = vdwg.mxu0
      %v3043 = vld [vmem:[%s202] sm:$0xff]
      %v3044 = vld [vmem:[%s202 + $0x8] sm:$0xff]
      %v3045 = vld [vmem:[%s202 + $0x10] sm:$0xff]
      %v3046 = vld [vmem:[%s202 + $0x18] sm:$0xff]
      %v3047 = vld [vmem:[%s202 + $0x20] sm:$0xff]
      %v3048 = vld [vmem:[%s202 + $0x28] sm:$0xff]
      %v3049 = vld [vmem:[%s202 + $0x30] sm:$0xff]
      %v3050 = vld [vmem:[%s202 + $0x38] sm:$0xff]
      %v3051 = vld [vmem:[%s202 + $0x40] sm:$0xff]
      %v3052 = vld [vmem:[%s202 + $0x48] sm:$0xff]
      %v3053 = vld [vmem:[%s202 + $0x50] sm:$0xff]
      %v3054 = vld [vmem:[%s202 + $0x58] sm:$0xff]
      %v3055 = vld [vmem:[%s202 + $0x60] sm:$0xff]
      %v3056 = vld [vmem:[%s202 + $0x68] sm:$0xff]
      %v3057 = vld [vmem:[%s202 + $0x70] sm:$0xff]
      %v3058 = vld [vmem:[%s202 + $0x78] sm:$0xff]
      %v3059 = vld [vmem:[%s202 + $0x80] sm:$0xff]
      %v3060 = vld [vmem:[%s202 + $0x88] sm:$0xff]
      %v3061 = vld [vmem:[%s202 + $0x90] sm:$0xff]
      %v3062 = vld [vmem:[%s202 + $0x98] sm:$0xff]
      %v3063 = vld [vmem:[%s202 + $0xa0] sm:$0xff]
      %v3064 = vld [vmem:[%s202 + $0xa8] sm:$0xff]
      %v3065 = vld [vmem:[%s202 + $0xb0] sm:$0xff]
      %v3066 = vld [vmem:[%s202 + $0xb8] sm:$0xff]
      %v3067 = vld [vmem:[%s202 + $0xc0] sm:$0xff]
      %v3068 = vld [vmem:[%s202 + $0xc8] sm:$0xff]
      %v3069 = vld [vmem:[%s202 + $0xd0] sm:$0xff]
      %v3070 = vld [vmem:[%s202 + $0xd8] sm:$0xff]
      %v3071 = vld [vmem:[%s202 + $0xe0] sm:$0xff]
      %v3072 = vld [vmem:[%s202 + $0xe8] sm:$0xff]
      %v3073 = vld [vmem:[%s202 + $0xf0] sm:$0xff]
      %v3074 = vld [vmem:[%s202 + $0xf8] sm:$0xff]
      %v3075 = vadd.f32 %v3043, %v2917
      %v3076 = vadd.f32 %v3044, %v2920
      %v3077 = vadd.f32 %v3045, %v2925
      %v3078 = vadd.f32 %v3046, %v2928
      %v3079 = vadd.f32 %v3047, %v2933
      %v3080 = vadd.f32 %v3048, %v2936
      %v3081 = vadd.f32 %v3049, %v2941
      %v3082 = vadd.f32 %v3050, %v2944
      %v3083 = vadd.f32 %v3051, %v2949
      %v3084 = vadd.f32 %v3052, %v2952
      %v3085 = vadd.f32 %v3053, %v2957
      %v3086 = vadd.f32 %v3054, %v2960
      %v3087 = vadd.f32 %v3055, %v2965
      %v3088 = vadd.f32 %v3056, %v2968
      %v3089 = vadd.f32 %v3057, %v2973
      %v3090 = vadd.f32 %v3058, %v2976
      %v3091 = vadd.f32 %v3059, %v2981
      %v3092 = vadd.f32 %v3060, %v2984
      %v3093 = vadd.f32 %v3061, %v2989
      %v3094 = vadd.f32 %v3062, %v2992
      %v3095 = vadd.f32 %v3063, %v2997
      %v3096 = vadd.f32 %v3064, %v3000
      %v3097 = vadd.f32 %v3065, %v3005
      %v3098 = vadd.f32 %v3066, %v3008
      %v3099 = vadd.f32 %v3067, %v3013
      %v3100 = vadd.f32 %v3068, %v3016
      %v3101 = vadd.f32 %v3069, %v3021
      %v3102 = vadd.f32 %v3070, %v3024
      %v3103 = vadd.f32 %v3071, %v3029
      %v3104 = vadd.f32 %v3072, %v3032
      %v3105 = vadd.f32 %v3073, %v3037
      %v3106 = vadd.f32 %v3074, %v3040
      %3107 = vst [vmem:[%s202] sm:$0xff] %v3075
      %3108 = vst [vmem:[%s202 + $0x8] sm:$0xff] %v3076
      %3109 = vst [vmem:[%s202 + $0x10] sm:$0xff] %v3077
      %3110 = vst [vmem:[%s202 + $0x18] sm:$0xff] %v3078
      %3111 = vst [vmem:[%s202 + $0x20] sm:$0xff] %v3079
      %3112 = vst [vmem:[%s202 + $0x28] sm:$0xff] %v3080
      %3113 = vst [vmem:[%s202 + $0x30] sm:$0xff] %v3081
      %3114 = vst [vmem:[%s202 + $0x38] sm:$0xff] %v3082
      %3115 = vst [vmem:[%s202 + $0x40] sm:$0xff] %v3083
      %3116 = vst [vmem:[%s202 + $0x48] sm:$0xff] %v3084
      %3117 = vst [vmem:[%s202 + $0x50] sm:$0xff] %v3085
      %3118 = vst [vmem:[%s202 + $0x58] sm:$0xff] %v3086
      %3119 = vst [vmem:[%s202 + $0x60] sm:$0xff] %v3087
      %3120 = vst [vmem:[%s202 + $0x68] sm:$0xff] %v3088
      %3121 = vst [vmem:[%s202 + $0x70] sm:$0xff] %v3089
      %3122 = vst [vmem:[%s202 + $0x78] sm:$0xff] %v3090
      %3123 = vst [vmem:[%s202 + $0x80] sm:$0xff] %v3091
      %3124 = vst [vmem:[%s202 + $0x88] sm:$0xff] %v3092
      %3125 = vst [vmem:[%s202 + $0x90] sm:$0xff] %v3093
      %3126 = vst [vmem:[%s202 + $0x98] sm:$0xff] %v3094
      %3127 = vst [vmem:[%s202 + $0xa0] sm:$0xff] %v3095
      %3128 = vst [vmem:[%s202 + $0xa8] sm:$0xff] %v3096
      %3129 = vst [vmem:[%s202 + $0xb0] sm:$0xff] %v3097
      %3130 = vst [vmem:[%s202 + $0xb8] sm:$0xff] %v3098
      %3131 = vst [vmem:[%s202 + $0xc0] sm:$0xff] %v3099
      %3132 = vst [vmem:[%s202 + $0xc8] sm:$0xff] %v3100
      %3133 = vst [vmem:[%s202 + $0xd0] sm:$0xff] %v3101
      %3134 = vst [vmem:[%s202 + $0xd8] sm:$0xff] %v3102
      %3135 = vst [vmem:[%s202 + $0xe0] sm:$0xff] %v3103
      %3136 = vst [vmem:[%s202 + $0xe8] sm:$0xff] %v3104
      %3137 = vst [vmem:[%s202 + $0xf0] sm:$0xff] %v3105
      %3138 = vst [vmem:[%s202 + $0xf8] sm:$0xff] %v3106
      %v3139 = vld [vmem:[%s1926] sm:$0xe]
      %v3140 = vld [vmem:[%s1926 + $0x4] sm:$0xf]
      %v3141 = vld [vmem:[%s1926 + $0x8] sm:$0x1]
      %v3142 = vld [vmem:[%s1926 + $0xc] sm:$0xe]
      %v3143 = vld [vmem:[%s1926 + $0x10] sm:$0xf]
      %v3144 = vld [vmem:[%s1926 + $0x14] sm:$0x1]
      %v3145 = vld [vmem:[%s1926 + $0x18] sm:$0xe]
      %v3146 = vld [vmem:[%s1926 + $0x1c] sm:$0xf]
      %v3147 = vld [vmem:[%s1926 + $0x20] sm:$0x1]
      %v3148 = vld [vmem:[%s1926 + $0x24] sm:$0xe]
      %v3149 = vld [vmem:[%s1926 + $0x28] sm:$0xf]
      %v3150 = vld [vmem:[%s1926 + $0x2c] sm:$0x1]
      %v3151 = vld [vmem:[%s1926 + $0x30] sm:$0xe]
      %v3152 = vld [vmem:[%s1926 + $0x34] sm:$0xf]
      %v3153 = vld [vmem:[%s1926 + $0x38] sm:$0x1]
      %v3154 = vld [vmem:[%s1926 + $0x3c] sm:$0xe]
      %v3155 = vld [vmem:[%s1926 + $0x40] sm:$0xf]
      %v3156 = vld [vmem:[%s1926 + $0x44] sm:$0x1]
      %v3157 = vld [vmem:[%s1926 + $0x48] sm:$0xe]
      %v3158 = vld [vmem:[%s1926 + $0x4c] sm:$0xf]
      %v3159 = vld [vmem:[%s1926 + $0x50] sm:$0x1]
      %v3160 = vld [vmem:[%s1926 + $0x54] sm:$0xe]
      %v3161 = vld [vmem:[%s1926 + $0x58] sm:$0xf]
      %v3162 = vld [vmem:[%s1926 + $0x5c] sm:$0x1]
      %v3163 = vld [vmem:[%s1926 + $0x60] sm:$0xe]
      %v3164 = vld [vmem:[%s1926 + $0x64] sm:$0xf]
      %v3165 = vld [vmem:[%s1926 + $0x68] sm:$0x1]
      %v3166 = vld [vmem:[%s1926 + $0x6c] sm:$0xe]
      %v3167 = vld [vmem:[%s1926 + $0x70] sm:$0xf]
      %v3168 = vld [vmem:[%s1926 + $0x74] sm:$0x1]
      %v3169 = vld [vmem:[%s1926 + $0x78] sm:$0xe]
      %v3170 = vld [vmem:[%s1926 + $0x7c] sm:$0xf]
      %v3171 = vld [vmem:[%s1926 + $0x80] sm:$0x1]
      %v3172 = vld [vmem:[%s1926 + $0x84] sm:$0xe]
      %v3173 = vld [vmem:[%s1926 + $0x88] sm:$0xf]
      %v3174 = vld [vmem:[%s1926 + $0x8c] sm:$0x1]
      %v3175 = vld [vmem:[%s1926 + $0x90] sm:$0xe]
      %v3176 = vld [vmem:[%s1926 + $0x94] sm:$0xf]
      %v3177 = vld [vmem:[%s1926 + $0x98] sm:$0x1]
      %v3178 = vld [vmem:[%s1926 + $0x9c] sm:$0xe]
      %v3179 = vld [vmem:[%s1926 + $0xa0] sm:$0xf]
      %v3180 = vld [vmem:[%s1926 + $0xa4] sm:$0x1]
      %v3181 = vld [vmem:[%s1926 + $0xa8] sm:$0xe]
      %v3182 = vld [vmem:[%s1926 + $0xac] sm:$0xf]
      %v3183 = vld [vmem:[%s1926 + $0xb0] sm:$0x1]
      %v3184 = vld [vmem:[%s1926 + $0xb4] sm:$0xe]
      %v3185 = vld [vmem:[%s1926 + $0xb8] sm:$0xf]
      %v3186 = vld [vmem:[%s1926 + $0xbc] sm:$0x1]
      %v3235 = vrot.slane %v3139, 5
      %v3236 = vrot.slane %v3235, 4
      %v3237 = vrot.slane %v3140, 5
      %v3238 = vsel %vm1455, %v3236, %v3237
      %v3239 = vrot.slane %v3237, 4
      %v3240 = vrot.slane %v3141, 5
      %v3241 = vsel %vm1455, %v3239, %v3240
      %v3242 = vrot.slane %v3142, 5
      %v3243 = vrot.slane %v3242, 4
      %v3244 = vrot.slane %v3143, 5
      %v3245 = vsel %vm1455, %v3243, %v3244
      %v3246 = vrot.slane %v3244, 4
      %v3247 = vrot.slane %v3144, 5
      %v3248 = vsel %vm1455, %v3246, %v3247
      %v3249 = vrot.slane %v3145, 5
      %v3250 = vrot.slane %v3249, 4
      %v3251 = vrot.slane %v3146, 5
      %v3252 = vsel %vm1455, %v3250, %v3251
      %v3253 = vrot.slane %v3251, 4
      %v3254 = vrot.slane %v3147, 5
      %v3255 = vsel %vm1455, %v3253, %v3254
      %v3256 = vrot.slane %v3148, 5
      %v3257 = vrot.slane %v3256, 4
      %v3258 = vrot.slane %v3149, 5
      %v3259 = vsel %vm1455, %v3257, %v3258
      %v3260 = vrot.slane %v3258, 4
      %v3261 = vrot.slane %v3150, 5
      %v3262 = vsel %vm1455, %v3260, %v3261
      %v3263 = vrot.slane %v3151, 5
      %v3264 = vrot.slane %v3263, 4
      %v3265 = vrot.slane %v3152, 5
      %v3266 = vsel %vm1455, %v3264, %v3265
      %v3267 = vrot.slane %v3265, 4
      %v3268 = vrot.slane %v3153, 5
      %v3269 = vsel %vm1455, %v3267, %v3268
      %v3270 = vrot.slane %v3154, 5
      %v3271 = vrot.slane %v3270, 4
      %v3272 = vrot.slane %v3155, 5
      %v3273 = vsel %vm1455, %v3271, %v3272
      %v3274 = vrot.slane %v3272, 4
      %v3275 = vrot.slane %v3156, 5
      %v3276 = vsel %vm1455, %v3274, %v3275
      %v3277 = vrot.slane %v3157, 5
      %v3278 = vrot.slane %v3277, 4
      %v3279 = vrot.slane %v3158, 5
      %v3280 = vsel %vm1455, %v3278, %v3279
      %v3281 = vrot.slane %v3279, 4
      %v3282 = vrot.slane %v3159, 5
      %v3283 = vsel %vm1455, %v3281, %v3282
      %v3284 = vrot.slane %v3160, 5
      %v3285 = vrot.slane %v3284, 4
      %v3286 = vrot.slane %v3161, 5
      %v3287 = vsel %vm1455, %v3285, %v3286
      %v3288 = vrot.slane %v3286, 4
      %v3289 = vrot.slane %v3162, 5
      %v3290 = vsel %vm1455, %v3288, %v3289
      %v3291 = vrot.slane %v3163, 5
      %v3292 = vrot.slane %v3291, 4
      %v3293 = vrot.slane %v3164, 5
      %v3294 = vsel %vm1455, %v3292, %v3293
      %v3295 = vrot.slane %v3293, 4
      %v3296 = vrot.slane %v3165, 5
      %v3297 = vsel %vm1455, %v3295, %v3296
      %v3298 = vrot.slane %v3166, 5
      %v3299 = vrot.slane %v3298, 4
      %v3300 = vrot.slane %v3167, 5
      %v3301 = vsel %vm1455, %v3299, %v3300
      %v3302 = vrot.slane %v3300, 4
      %v3303 = vrot.slane %v3168, 5
      %v3304 = vsel %vm1455, %v3302, %v3303
      %v3305 = vrot.slane %v3169, 5
      %v3306 = vrot.slane %v3305, 4
      %v3307 = vrot.slane %v3170, 5
      %v3308 = vsel %vm1455, %v3306, %v3307
      %v3309 = vrot.slane %v3307, 4
      %v3310 = vrot.slane %v3171, 5
      %v3311 = vsel %vm1455, %v3309, %v3310
      %v3312 = vrot.slane %v3172, 5
      %v3313 = vrot.slane %v3312, 4
      %v3314 = vrot.slane %v3173, 5
      %v3315 = vsel %vm1455, %v3313, %v3314
      %v3316 = vrot.slane %v3314, 4
      %v3317 = vrot.slane %v3174, 5
      %v3318 = vsel %vm1455, %v3316, %v3317
      %v3319 = vrot.slane %v3175, 5
      %v3320 = vrot.slane %v3319, 4
      %v3321 = vrot.slane %v3176, 5
      %v3322 = vsel %vm1455, %v3320, %v3321
      %v3323 = vrot.slane %v3321, 4
      %v3324 = vrot.slane %v3177, 5
      %v3325 = vsel %vm1455, %v3323, %v3324
      %v3326 = vrot.slane %v3178, 5
      %v3327 = vrot.slane %v3326, 4
      %v3328 = vrot.slane %v3179, 5
      %v3329 = vsel %vm1455, %v3327, %v3328
      %v3330 = vrot.slane %v3328, 4
      %v3331 = vrot.slane %v3180, 5
      %v3332 = vsel %vm1455, %v3330, %v3331
      %v3333 = vrot.slane %v3181, 5
      %v3334 = vrot.slane %v3333, 4
      %v3335 = vrot.slane %v3182, 5
      %v3336 = vsel %vm1455, %v3334, %v3335
      %v3337 = vrot.slane %v3335, 4
      %v3338 = vrot.slane %v3183, 5
      %v3339 = vsel %vm1455, %v3337, %v3338
      %v3340 = vrot.slane %v3184, 5
      %v3341 = vrot.slane %v3340, 4
      %v3342 = vrot.slane %v3185, 5
      %v3343 = vsel %vm1455, %v3341, %v3342
      %v3344 = vrot.slane %v3342, 4
      %v3345 = vrot.slane %v3186, 5
      %v3346 = vsel %vm1455, %v3344, %v3345
      %s3347 = scalar_lea.vmem %s1, 10
      %v3348 = vld [vmem:[%s3347] sm:$0x3]
      %v3349 = vunpack.c.l.b16 %v3238
      %v3350 = vunpack.c.l.b16 %v3241
      %v3351 = vunpack.c.l.b16 %v3245
      %v3352 = vunpack.c.l.b16 %v3248
      %v3353 = vunpack.c.l.b16 %v3252
      %v3354 = vunpack.c.l.b16 %v3255
      %v3355 = vunpack.c.l.b16 %v3259
      %v3356 = vunpack.c.l.b16 %v3262
      %v3357 = vunpack.c.l.b16 %v3266
      %v3358 = vunpack.c.l.b16 %v3269
      %v3359 = vunpack.c.l.b16 %v3273
      %v3360 = vunpack.c.l.b16 %v3276
      %v3361 = vunpack.c.l.b16 %v3280
      %v3362 = vunpack.c.l.b16 %v3283
      %v3363 = vunpack.c.l.b16 %v3287
      %v3364 = vunpack.c.l.b16 %v3290
      %v3365 = vunpack.c.l.b16 %v3294
      %v3366 = vunpack.c.l.b16 %v3297
      %v3367 = vunpack.c.l.b16 %v3301
      %v3368 = vunpack.c.l.b16 %v3304
      %v3369 = vunpack.c.l.b16 %v3308
      %v3370 = vunpack.c.l.b16 %v3311
      %v3371 = vunpack.c.l.b16 %v3315
      %v3372 = vunpack.c.l.b16 %v3318
      %v3373 = vunpack.c.l.b16 %v3322
      %v3374 = vunpack.c.l.b16 %v3325
      %v3375 = vunpack.c.l.b16 %v3329
      %v3376 = vunpack.c.l.b16 %v3332
      %v3377 = vunpack.c.l.b16 %v3336
      %v3378 = vunpack.c.l.b16 %v3339
      %v3379 = vunpack.c.l.b16 %v3343
      %v3380 = vunpack.c.l.b16 %v3346
      %v3381 = vpack.c.b16 %v3350, %v3349
      %v3382 = vpack.c.b16 %v3352, %v3351
      %v3383 = vpack.c.b16 %v3354, %v3353
      %v3384 = vpack.c.b16 %v3356, %v3355
      %v3385 = vpack.c.b16 %v3358, %v3357
      %v3386 = vpack.c.b16 %v3360, %v3359
      %v3387 = vpack.c.b16 %v3362, %v3361
      %v3388 = vpack.c.b16 %v3364, %v3363
      %v3389 = vpack.c.b16 %v3366, %v3365
      %v3390 = vpack.c.b16 %v3368, %v3367
      %v3391 = vpack.c.b16 %v3370, %v3369
      %v3392 = vpack.c.b16 %v3372, %v3371
      %v3393 = vpack.c.b16 %v3374, %v3373
      %v3394 = vpack.c.b16 %v3376, %v3375
      %v3395 = vpack.c.b16 %v3378, %v3377
      %v3396 = vpack.c.b16 %v3380, %v3379
      %v3398 = vsel %vm318, %v3381, 0
      %v3401 = vsel %vm318, %v3382, 0
      %v3404 = vsel %vm318, %v3383, 0
      %v3407 = vsel %vm318, %v3384, 0
      %v3410 = vsel %vm318, %v3385, 0
      %v3413 = vsel %vm318, %v3386, 0
      %v3416 = vsel %vm318, %v3387, 0
      %v3419 = vsel %vm318, %v3388, 0
      %v3422 = vsel %vm318, %v3389, 0
      %v3425 = vsel %vm318, %v3390, 0
      %v3428 = vsel %vm318, %v3391, 0
      %v3431 = vsel %vm318, %v3392, 0
      %v3434 = vsel %vm318, %v3393, 0
      %v3437 = vsel %vm318, %v3394, 0
      %v3440 = vsel %vm318, %v3395, 0
      %v3443 = vsel %vm318, %v3396, 0
      %v3446 = vsel %vm367, %v3348, 0
      %3448 = vmatprep.subr.bf16.mxu0 0
      %3449 = vmatpush1.bf16.msra.mxu0 0
      %3450 = vmatprep.subr.bf16.mxu0 0
      %3451 = vmatpush1.bf16.msra.mxu0 0
      %3452 = vmatprep.subr.bf16.mxu0 0
      %3453 = vmatpush1.bf16.msra.mxu0 0
      %3454 = vmatprep.subr.bf16.mxu0 0
      %3455 = vmatpush1.bf16.msra.mxu0 0
      %3456 = vmatprep.subr.bf16.mxu0 0
      %3457 = vmatpush1.bf16.msra.mxu0 0
      %3458 = vmatprep.subr.bf16.mxu0 0
      %3459 = vmatpush1.bf16.msra.mxu0 0
      %3460 = vmatprep.subr.bf16.mxu0 0
      %3461 = vmatpush1.bf16.msra.mxu0 0
      %3462 = vmatprep.subr.bf16.mxu0 0
      %3463 = vmatpush1.bf16.msra.mxu0 %v3446
      %3464 = vmatprep.subr.bf16.mxu0 0
      %3465 = vmatpush2.bf16.msra.mxu0 0
      %3466 = vmatprep.subr.bf16.mxu0 0
      %3467 = vmatpush2.bf16.msra.mxu0 0
      %3468 = vmatprep.subr.bf16.mxu0 0
      %3469 = vmatpush2.bf16.msra.mxu0 0
      %3470 = vmatprep.subr.bf16.mxu0 0
      %3471 = vmatpush2.bf16.msra.mxu0 0
      %3472 = vmatprep.subr.bf16.mxu0 0
      %3473 = vmatpush2.bf16.msra.mxu0 0
      %3474 = vmatprep.subr.bf16.mxu0 0
      %3475 = vmatpush2.bf16.msra.mxu0 0
      %3476 = vmatprep.subr.bf16.mxu0 0
      %3477 = vmatpush2.bf16.msra.mxu0 0
      %3478 = vmatprep.subr.bf16.mxu0 0
      %3479 = vmatpush2.bf16.msra.mxu0 0
      %3480 = vmatprep.mubr.bf16.mxu0 0
      %3481 = vmatmul.mubr.bf16.gmra.mxu0 %v3398
      %v3482 = vpop.f32.mrf.mxu0
      %v3483 = vadd.f32 0.0, %v3482
      %v3484 = vpop.f32.mrf.mxu0
      %v3485 = vpop.f32.mrf.mxu0
      %v3486 = vadd.f32 0.0, %v3485
      %v3487 = vpop.f32.mrf.mxu0
      %3488 = vmatprep.mubr.bf16.mxu0 0
      %3489 = vmatmul.mubr.bf16.gmra.mxu0 %v3401
      %v3490 = vpop.f32.mrf.mxu0
      %v3491 = vadd.f32 0.0, %v3490
      %v3492 = vpop.f32.mrf.mxu0
      %v3493 = vpop.f32.mrf.mxu0
      %v3494 = vadd.f32 0.0, %v3493
      %v3495 = vpop.f32.mrf.mxu0
      %3496 = vmatprep.mubr.bf16.mxu0 0
      %3497 = vmatmul.mubr.bf16.gmra.mxu0 %v3404
      %v3498 = vpop.f32.mrf.mxu0
      %v3499 = vadd.f32 0.0, %v3498
      %v3500 = vpop.f32.mrf.mxu0
      %v3501 = vpop.f32.mrf.mxu0
      %v3502 = vadd.f32 0.0, %v3501
      %v3503 = vpop.f32.mrf.mxu0
      %3504 = vmatprep.mubr.bf16.mxu0 0
      %3505 = vmatmul.mubr.bf16.gmra.mxu0 %v3407
      %v3506 = vpop.f32.mrf.mxu0
      %v3507 = vadd.f32 0.0, %v3506
      %v3508 = vpop.f32.mrf.mxu0
      %v3509 = vpop.f32.mrf.mxu0
      %v3510 = vadd.f32 0.0, %v3509
      %v3511 = vpop.f32.mrf.mxu0
      %3512 = vmatprep.mubr.bf16.mxu0 0
      %3513 = vmatmul.mubr.bf16.gmra.mxu0 %v3410
      %v3514 = vpop.f32.mrf.mxu0
      %v3515 = vadd.f32 0.0, %v3514
      %v3516 = vpop.f32.mrf.mxu0
      %v3517 = vpop.f32.mrf.mxu0
      %v3518 = vadd.f32 0.0, %v3517
      %v3519 = vpop.f32.mrf.mxu0
      %3520 = vmatprep.mubr.bf16.mxu0 0
      %3521 = vmatmul.mubr.bf16.gmra.mxu0 %v3413
      %v3522 = vpop.f32.mrf.mxu0
      %v3523 = vadd.f32 0.0, %v3522
      %v3524 = vpop.f32.mrf.mxu0
      %v3525 = vpop.f32.mrf.mxu0
      %v3526 = vadd.f32 0.0, %v3525
      %v3527 = vpop.f32.mrf.mxu0
      %3528 = vmatprep.mubr.bf16.mxu0 0
      %3529 = vmatmul.mubr.bf16.gmra.mxu0 %v3416
      %v3530 = vpop.f32.mrf.mxu0
      %v3531 = vadd.f32 0.0, %v3530
      %v3532 = vpop.f32.mrf.mxu0
      %v3533 = vpop.f32.mrf.mxu0
      %v3534 = vadd.f32 0.0, %v3533
      %v3535 = vpop.f32.mrf.mxu0
      %3536 = vmatprep.mubr.bf16.mxu0 0
      %3537 = vmatmul.mubr.bf16.gmra.mxu0 %v3419
      %v3538 = vpop.f32.mrf.mxu0
      %v3539 = vadd.f32 0.0, %v3538
      %v3540 = vpop.f32.mrf.mxu0
      %v3541 = vpop.f32.mrf.mxu0
      %v3542 = vadd.f32 0.0, %v3541
      %v3543 = vpop.f32.mrf.mxu0
      %3544 = vmatprep.mubr.bf16.mxu0 0
      %3545 = vmatmul.mubr.bf16.gmra.mxu0 %v3422
      %v3546 = vpop.f32.mrf.mxu0
      %v3547 = vadd.f32 0.0, %v3546
      %v3548 = vpop.f32.mrf.mxu0
      %v3549 = vpop.f32.mrf.mxu0
      %v3550 = vadd.f32 0.0, %v3549
      %v3551 = vpop.f32.mrf.mxu0
      %3552 = vmatprep.mubr.bf16.mxu0 0
      %3553 = vmatmul.mubr.bf16.gmra.mxu0 %v3425
      %v3554 = vpop.f32.mrf.mxu0
      %v3555 = vadd.f32 0.0, %v3554
      %v3556 = vpop.f32.mrf.mxu0
      %v3557 = vpop.f32.mrf.mxu0
      %v3558 = vadd.f32 0.0, %v3557
      %v3559 = vpop.f32.mrf.mxu0
      %3560 = vmatprep.mubr.bf16.mxu0 0
      %3561 = vmatmul.mubr.bf16.gmra.mxu0 %v3428
      %v3562 = vpop.f32.mrf.mxu0
      %v3563 = vadd.f32 0.0, %v3562
      %v3564 = vpop.f32.mrf.mxu0
      %v3565 = vpop.f32.mrf.mxu0
      %v3566 = vadd.f32 0.0, %v3565
      %v3567 = vpop.f32.mrf.mxu0
      %3568 = vmatprep.mubr.bf16.mxu0 0
      %3569 = vmatmul.mubr.bf16.gmra.mxu0 %v3431
      %v3570 = vpop.f32.mrf.mxu0
      %v3571 = vadd.f32 0.0, %v3570
      %v3572 = vpop.f32.mrf.mxu0
      %v3573 = vpop.f32.mrf.mxu0
      %v3574 = vadd.f32 0.0, %v3573
      %v3575 = vpop.f32.mrf.mxu0
      %3576 = vmatprep.mubr.bf16.mxu0 0
      %3577 = vmatmul.mubr.bf16.gmra.mxu0 %v3434
      %v3578 = vpop.f32.mrf.mxu0
      %v3579 = vadd.f32 0.0, %v3578
      %v3580 = vpop.f32.mrf.mxu0
      %v3581 = vpop.f32.mrf.mxu0
      %v3582 = vadd.f32 0.0, %v3581
      %v3583 = vpop.f32.mrf.mxu0
      %3584 = vmatprep.mubr.bf16.mxu0 0
      %3585 = vmatmul.mubr.bf16.gmra.mxu0 %v3437
      %v3586 = vpop.f32.mrf.mxu0
      %v3587 = vadd.f32 0.0, %v3586
      %v3588 = vpop.f32.mrf.mxu0
      %v3589 = vpop.f32.mrf.mxu0
      %v3590 = vadd.f32 0.0, %v3589
      %v3591 = vpop.f32.mrf.mxu0
      %3592 = vmatprep.mubr.bf16.mxu0 0
      %3593 = vmatmul.mubr.bf16.gmra.mxu0 %v3440
      %v3594 = vpop.f32.mrf.mxu0
      %v3595 = vadd.f32 0.0, %v3594
      %v3596 = vpop.f32.mrf.mxu0
      %v3597 = vpop.f32.mrf.mxu0
      %v3598 = vadd.f32 0.0, %v3597
      %v3599 = vpop.f32.mrf.mxu0
      %3600 = vmatprep.mubr.bf16.mxu0 0
      %3601 = vmatmul.mubr.bf16.gmra.mxu0 %v3443
      %v3602 = vpop.f32.mrf.mxu0
      %v3603 = vadd.f32 0.0, %v3602
      %v3604 = vpop.f32.mrf.mxu0
      %v3605 = vpop.f32.mrf.mxu0
      %v3606 = vadd.f32 0.0, %v3605
      %v3607 = vpop.f32.mrf.mxu0
      %3608 = vdwg.mxu0
      %v3609 = vld [vmem:[%s202] sm:$0xff]
      %v3610 = vld [vmem:[%s202 + $0x8] sm:$0xff]
      %v3611 = vld [vmem:[%s202 + $0x10] sm:$0xff]
      %v3612 = vld [vmem:[%s202 + $0x18] sm:$0xff]
      %v3613 = vld [vmem:[%s202 + $0x20] sm:$0xff]
      %v3614 = vld [vmem:[%s202 + $0x28] sm:$0xff]
      %v3615 = vld [vmem:[%s202 + $0x30] sm:$0xff]
      %v3616 = vld [vmem:[%s202 + $0x38] sm:$0xff]
      %v3617 = vld [vmem:[%s202 + $0x40] sm:$0xff]
      %v3618 = vld [vmem:[%s202 + $0x48] sm:$0xff]
      %v3619 = vld [vmem:[%s202 + $0x50] sm:$0xff]
      %v3620 = vld [vmem:[%s202 + $0x58] sm:$0xff]
      %v3621 = vld [vmem:[%s202 + $0x60] sm:$0xff]
      %v3622 = vld [vmem:[%s202 + $0x68] sm:$0xff]
      %v3623 = vld [vmem:[%s202 + $0x70] sm:$0xff]
      %v3624 = vld [vmem:[%s202 + $0x78] sm:$0xff]
      %v3625 = vld [vmem:[%s202 + $0x80] sm:$0xff]
      %v3626 = vld [vmem:[%s202 + $0x88] sm:$0xff]
      %v3627 = vld [vmem:[%s202 + $0x90] sm:$0xff]
      %v3628 = vld [vmem:[%s202 + $0x98] sm:$0xff]
      %v3629 = vld [vmem:[%s202 + $0xa0] sm:$0xff]
      %v3630 = vld [vmem:[%s202 + $0xa8] sm:$0xff]
      %v3631 = vld [vmem:[%s202 + $0xb0] sm:$0xff]
      %v3632 = vld [vmem:[%s202 + $0xb8] sm:$0xff]
      %v3633 = vld [vmem:[%s202 + $0xc0] sm:$0xff]
      %v3634 = vld [vmem:[%s202 + $0xc8] sm:$0xff]
      %v3635 = vld [vmem:[%s202 + $0xd0] sm:$0xff]
      %v3636 = vld [vmem:[%s202 + $0xd8] sm:$0xff]
      %v3637 = vld [vmem:[%s202 + $0xe0] sm:$0xff]
      %v3638 = vld [vmem:[%s202 + $0xe8] sm:$0xff]
      %v3639 = vld [vmem:[%s202 + $0xf0] sm:$0xff]
      %v3640 = vld [vmem:[%s202 + $0xf8] sm:$0xff]
      %v3641 = vadd.f32 %v3609, %v3483
      %v3642 = vadd.f32 %v3610, %v3486
      %v3643 = vadd.f32 %v3611, %v3491
      %v3644 = vadd.f32 %v3612, %v3494
      %v3645 = vadd.f32 %v3613, %v3499
      %v3646 = vadd.f32 %v3614, %v3502
      %v3647 = vadd.f32 %v3615, %v3507
      %v3648 = vadd.f32 %v3616, %v3510
      %v3649 = vadd.f32 %v3617, %v3515
      %v3650 = vadd.f32 %v3618, %v3518
      %v3651 = vadd.f32 %v3619, %v3523
      %v3652 = vadd.f32 %v3620, %v3526
      %v3653 = vadd.f32 %v3621, %v3531
      %v3654 = vadd.f32 %v3622, %v3534
      %v3655 = vadd.f32 %v3623, %v3539
      %v3656 = vadd.f32 %v3624, %v3542
      %v3657 = vadd.f32 %v3625, %v3547
      %v3658 = vadd.f32 %v3626, %v3550
      %v3659 = vadd.f32 %v3627, %v3555
      %v3660 = vadd.f32 %v3628, %v3558
      %v3661 = vadd.f32 %v3629, %v3563
      %v3662 = vadd.f32 %v3630, %v3566
      %v3663 = vadd.f32 %v3631, %v3571
      %v3664 = vadd.f32 %v3632, %v3574
      %v3665 = vadd.f32 %v3633, %v3579
      %v3666 = vadd.f32 %v3634, %v3582
      %v3667 = vadd.f32 %v3635, %v3587
      %v3668 = vadd.f32 %v3636, %v3590
      %v3669 = vadd.f32 %v3637, %v3595
      %v3670 = vadd.f32 %v3638, %v3598
      %v3671 = vadd.f32 %v3639, %v3603
      %v3672 = vadd.f32 %v3640, %v3606
      %3673 = vst [vmem:[%s202] sm:$0xff] %v3641
      %3674 = vst [vmem:[%s202 + $0x8] sm:$0xff] %v3642
      %3675 = vst [vmem:[%s202 + $0x10] sm:$0xff] %v3643
      %3676 = vst [vmem:[%s202 + $0x18] sm:$0xff] %v3644
      %3677 = vst [vmem:[%s202 + $0x20] sm:$0xff] %v3645
      %3678 = vst [vmem:[%s202 + $0x28] sm:$0xff] %v3646
      %3679 = vst [vmem:[%s202 + $0x30] sm:$0xff] %v3647
      %3680 = vst [vmem:[%s202 + $0x38] sm:$0xff] %v3648
      %3681 = vst [vmem:[%s202 + $0x40] sm:$0xff] %v3649
      %3682 = vst [vmem:[%s202 + $0x48] sm:$0xff] %v3650
      %3683 = vst [vmem:[%s202 + $0x50] sm:$0xff] %v3651
      %3684 = vst [vmem:[%s202 + $0x58] sm:$0xff] %v3652
      %3685 = vst [vmem:[%s202 + $0x60] sm:$0xff] %v3653
      %3686 = vst [vmem:[%s202 + $0x68] sm:$0xff] %v3654
      %3687 = vst [vmem:[%s202 + $0x70] sm:$0xff] %v3655
      %3688 = vst [vmem:[%s202 + $0x78] sm:$0xff] %v3656
      %3689 = vst [vmem:[%s202 + $0x80] sm:$0xff] %v3657
      %3690 = vst [vmem:[%s202 + $0x88] sm:$0xff] %v3658
      %3691 = vst [vmem:[%s202 + $0x90] sm:$0xff] %v3659
      %3692 = vst [vmem:[%s202 + $0x98] sm:$0xff] %v3660
      %3693 = vst [vmem:[%s202 + $0xa0] sm:$0xff] %v3661
      %3694 = vst [vmem:[%s202 + $0xa8] sm:$0xff] %v3662
      %3695 = vst [vmem:[%s202 + $0xb0] sm:$0xff] %v3663
      %3696 = vst [vmem:[%s202 + $0xb8] sm:$0xff] %v3664
      %3697 = vst [vmem:[%s202 + $0xc0] sm:$0xff] %v3665
      %3698 = vst [vmem:[%s202 + $0xc8] sm:$0xff] %v3666
      %3699 = vst [vmem:[%s202 + $0xd0] sm:$0xff] %v3667
      %3700 = vst [vmem:[%s202 + $0xd8] sm:$0xff] %v3668
      %3701 = vst [vmem:[%s202 + $0xe0] sm:$0xff] %v3669
      %3702 = vst [vmem:[%s202 + $0xe8] sm:$0xff] %v3670
      %3703 = vst [vmem:[%s202 + $0xf0] sm:$0xff] %v3671
      %3704 = vst [vmem:[%s202 + $0xf8] sm:$0xff] %v3672
      %s3705 = scalar_lea.vmem %s196, 24
      %v3706 = vld [vmem:[%s3705] sm:$0xf]
      %v3707 = vld [vmem:[%s3705 + $0x4] sm:$0xf]
      %v3708 = vld [vmem:[%s3705 + $0xc] sm:$0xf]
      %v3709 = vld [vmem:[%s3705 + $0x10] sm:$0xf]
      %v3710 = vld [vmem:[%s3705 + $0x18] sm:$0xf]
      %v3711 = vld [vmem:[%s3705 + $0x1c] sm:$0xf]
      %v3712 = vld [vmem:[%s3705 + $0x24] sm:$0xf]
      %v3713 = vld [vmem:[%s3705 + $0x28] sm:$0xf]
      %v3714 = vld [vmem:[%s3705 + $0x30] sm:$0xf]
      %v3715 = vld [vmem:[%s3705 + $0x34] sm:$0xf]
      %v3716 = vld [vmem:[%s3705 + $0x3c] sm:$0xf]
      %v3717 = vld [vmem:[%s3705 + $0x40] sm:$0xf]
      %v3718 = vld [vmem:[%s3705 + $0x48] sm:$0xf]
      %v3719 = vld [vmem:[%s3705 + $0x4c] sm:$0xf]
      %v3720 = vld [vmem:[%s3705 + $0x54] sm:$0xf]
      %v3721 = vld [vmem:[%s3705 + $0x58] sm:$0xf]
      %v3722 = vld [vmem:[%s3705 + $0x60] sm:$0xf]
      %v3723 = vld [vmem:[%s3705 + $0x64] sm:$0xf]
      %v3724 = vld [vmem:[%s3705 + $0x6c] sm:$0xf]
      %v3725 = vld [vmem:[%s3705 + $0x70] sm:$0xf]
      %v3726 = vld [vmem:[%s3705 + $0x78] sm:$0xf]
      %v3727 = vld [vmem:[%s3705 + $0x7c] sm:$0xf]
      %v3728 = vld [vmem:[%s3705 + $0x84] sm:$0xf]
      %v3729 = vld [vmem:[%s3705 + $0x88] sm:$0xf]
      %v3730 = vld [vmem:[%s3705 + $0x90] sm:$0xf]
      %v3731 = vld [vmem:[%s3705 + $0x94] sm:$0xf]
      %v3732 = vld [vmem:[%s3705 + $0x9c] sm:$0xf]
      %v3733 = vld [vmem:[%s3705 + $0xa0] sm:$0xf]
      %v3734 = vld [vmem:[%s3705 + $0xa8] sm:$0xf]
      %v3735 = vld [vmem:[%s3705 + $0xac] sm:$0xf]
      %v3736 = vld [vmem:[%s3705 + $0xb4] sm:$0xf]
      %v3737 = vld [vmem:[%s3705 + $0xb8] sm:$0xf]
      %s3738 = scalar_lea.vmem %s1, 12
      %v3739 = vld [vmem:[%s3738] sm:$0x3]
      %v3772 = vunpack.c.l.b16 %v3706
      %v3773 = vunpack.c.l.b16 %v3707
      %v3774 = vunpack.c.l.b16 %v3708
      %v3775 = vunpack.c.l.b16 %v3709
      %v3776 = vunpack.c.l.b16 %v3710
      %v3777 = vunpack.c.l.b16 %v3711
      %v3778 = vunpack.c.l.b16 %v3712
      %v3779 = vunpack.c.l.b16 %v3713
      %v3780 = vunpack.c.l.b16 %v3714
      %v3781 = vunpack.c.l.b16 %v3715
      %v3782 = vunpack.c.l.b16 %v3716
      %v3783 = vunpack.c.l.b16 %v3717
      %v3784 = vunpack.c.l.b16 %v3718
      %v3785 = vunpack.c.l.b16 %v3719
      %v3786 = vunpack.c.l.b16 %v3720
      %v3787 = vunpack.c.l.b16 %v3721
      %v3788 = vunpack.c.l.b16 %v3722
      %v3789 = vunpack.c.l.b16 %v3723
      %v3790 = vunpack.c.l.b16 %v3724
      %v3791 = vunpack.c.l.b16 %v3725
      %v3792 = vunpack.c.l.b16 %v3726
      %v3793 = vunpack.c.l.b16 %v3727
      %v3794 = vunpack.c.l.b16 %v3728
      %v3795 = vunpack.c.l.b16 %v3729
      %v3796 = vunpack.c.l.b16 %v3730
      %v3797 = vunpack.c.l.b16 %v3731
      %v3798 = vunpack.c.l.b16 %v3732
      %v3799 = vunpack.c.l.b16 %v3733
      %v3800 = vunpack.c.l.b16 %v3734
      %v3801 = vunpack.c.l.b16 %v3735
      %v3802 = vunpack.c.l.b16 %v3736
      %v3803 = vunpack.c.l.b16 %v3737
      %v3804 = vpack.c.b16 %v3773, %v3772
      %v3805 = vpack.c.b16 %v3775, %v3774
      %v3806 = vpack.c.b16 %v3777, %v3776
      %v3807 = vpack.c.b16 %v3779, %v3778
      %v3808 = vpack.c.b16 %v3781, %v3780
      %v3809 = vpack.c.b16 %v3783, %v3782
      %v3810 = vpack.c.b16 %v3785, %v3784
      %v3811 = vpack.c.b16 %v3787, %v3786
      %v3812 = vpack.c.b16 %v3789, %v3788
      %v3813 = vpack.c.b16 %v3791, %v3790
      %v3814 = vpack.c.b16 %v3793, %v3792
      %v3815 = vpack.c.b16 %v3795, %v3794
      %v3816 = vpack.c.b16 %v3797, %v3796
      %v3817 = vpack.c.b16 %v3799, %v3798
      %v3818 = vpack.c.b16 %v3801, %v3800
      %v3819 = vpack.c.b16 %v3803, %v3802
      %v3821 = vsel %vm318, %v3804, 0
      %v3824 = vsel %vm318, %v3805, 0
      %v3827 = vsel %vm318, %v3806, 0
      %v3830 = vsel %vm318, %v3807, 0
      %v3833 = vsel %vm318, %v3808, 0
      %v3836 = vsel %vm318, %v3809, 0
      %v3839 = vsel %vm318, %v3810, 0
      %v3842 = vsel %vm318, %v3811, 0
      %v3845 = vsel %vm318, %v3812, 0
      %v3848 = vsel %vm318, %v3813, 0
      %v3851 = vsel %vm318, %v3814, 0
      %v3854 = vsel %vm318, %v3815, 0
      %v3857 = vsel %vm318, %v3816, 0
      %v3860 = vsel %vm318, %v3817, 0
      %v3863 = vsel %vm318, %v3818, 0
      %v3866 = vsel %vm318, %v3819, 0
      %v3869 = vsel %vm367, %v3739, 0
      %3871 = vmatprep.subr.bf16.mxu0 0
      %3872 = vmatpush1.bf16.msra.mxu0 0
      %3873 = vmatprep.subr.bf16.mxu0 0
      %3874 = vmatpush1.bf16.msra.mxu0 0
      %3875 = vmatprep.subr.bf16.mxu0 0
      %3876 = vmatpush1.bf16.msra.mxu0 0
      %3877 = vmatprep.subr.bf16.mxu0 0
      %3878 = vmatpush1.bf16.msra.mxu0 0
      %3879 = vmatprep.subr.bf16.mxu0 0
      %3880 = vmatpush1.bf16.msra.mxu0 0
      %3881 = vmatprep.subr.bf16.mxu0 0
      %3882 = vmatpush1.bf16.msra.mxu0 0
      %3883 = vmatprep.subr.bf16.mxu0 0
      %3884 = vmatpush1.bf16.msra.mxu0 0
      %3885 = vmatprep.subr.bf16.mxu0 0
      %3886 = vmatpush1.bf16.msra.mxu0 %v3869
      %3887 = vmatprep.subr.bf16.mxu0 0
      %3888 = vmatpush2.bf16.msra.mxu0 0
      %3889 = vmatprep.subr.bf16.mxu0 0
      %3890 = vmatpush2.bf16.msra.mxu0 0
      %3891 = vmatprep.subr.bf16.mxu0 0
      %3892 = vmatpush2.bf16.msra.mxu0 0
      %3893 = vmatprep.subr.bf16.mxu0 0
      %3894 = vmatpush2.bf16.msra.mxu0 0
      %3895 = vmatprep.subr.bf16.mxu0 0
      %3896 = vmatpush2.bf16.msra.mxu0 0
      %3897 = vmatprep.subr.bf16.mxu0 0
      %3898 = vmatpush2.bf16.msra.mxu0 0
      %3899 = vmatprep.subr.bf16.mxu0 0
      %3900 = vmatpush2.bf16.msra.mxu0 0
      %3901 = vmatprep.subr.bf16.mxu0 0
      %3902 = vmatpush2.bf16.msra.mxu0 0
      %3903 = vmatprep.mubr.bf16.mxu0 0
      %3904 = vmatmul.mubr.bf16.gmra.mxu0 %v3821
      %v3905 = vpop.f32.mrf.mxu0
      %v3906 = vadd.f32 0.0, %v3905
      %v3907 = vpop.f32.mrf.mxu0
      %v3908 = vpop.f32.mrf.mxu0
      %v3909 = vadd.f32 0.0, %v3908
      %v3910 = vpop.f32.mrf.mxu0
      %3911 = vmatprep.mubr.bf16.mxu0 0
      %3912 = vmatmul.mubr.bf16.gmra.mxu0 %v3824
      %v3913 = vpop.f32.mrf.mxu0
      %v3914 = vadd.f32 0.0, %v3913
      %v3915 = vpop.f32.mrf.mxu0
      %v3916 = vpop.f32.mrf.mxu0
      %v3917 = vadd.f32 0.0, %v3916
      %v3918 = vpop.f32.mrf.mxu0
      %3919 = vmatprep.mubr.bf16.mxu0 0
      %3920 = vmatmul.mubr.bf16.gmra.mxu0 %v3827
      %v3921 = vpop.f32.mrf.mxu0
      %v3922 = vadd.f32 0.0, %v3921
      %v3923 = vpop.f32.mrf.mxu0
      %v3924 = vpop.f32.mrf.mxu0
      %v3925 = vadd.f32 0.0, %v3924
      %v3926 = vpop.f32.mrf.mxu0
      %3927 = vmatprep.mubr.bf16.mxu0 0
      %3928 = vmatmul.mubr.bf16.gmra.mxu0 %v3830
      %v3929 = vpop.f32.mrf.mxu0
      %v3930 = vadd.f32 0.0, %v3929
      %v3931 = vpop.f32.mrf.mxu0
      %v3932 = vpop.f32.mrf.mxu0
      %v3933 = vadd.f32 0.0, %v3932
      %v3934 = vpop.f32.mrf.mxu0
      %3935 = vmatprep.mubr.bf16.mxu0 0
      %3936 = vmatmul.mubr.bf16.gmra.mxu0 %v3833
      %v3937 = vpop.f32.mrf.mxu0
      %v3938 = vadd.f32 0.0, %v3937
      %v3939 = vpop.f32.mrf.mxu0
      %v3940 = vpop.f32.mrf.mxu0
      %v3941 = vadd.f32 0.0, %v3940
      %v3942 = vpop.f32.mrf.mxu0
      %3943 = vmatprep.mubr.bf16.mxu0 0
      %3944 = vmatmul.mubr.bf16.gmra.mxu0 %v3836
      %v3945 = vpop.f32.mrf.mxu0
      %v3946 = vadd.f32 0.0, %v3945
      %v3947 = vpop.f32.mrf.mxu0
      %v3948 = vpop.f32.mrf.mxu0
      %v3949 = vadd.f32 0.0, %v3948
      %v3950 = vpop.f32.mrf.mxu0
      %3951 = vmatprep.mubr.bf16.mxu0 0
      %3952 = vmatmul.mubr.bf16.gmra.mxu0 %v3839
      %v3953 = vpop.f32.mrf.mxu0
      %v3954 = vadd.f32 0.0, %v3953
      %v3955 = vpop.f32.mrf.mxu0
      %v3956 = vpop.f32.mrf.mxu0
      %v3957 = vadd.f32 0.0, %v3956
      %v3958 = vpop.f32.mrf.mxu0
      %3959 = vmatprep.mubr.bf16.mxu0 0
      %3960 = vmatmul.mubr.bf16.gmra.mxu0 %v3842
      %v3961 = vpop.f32.mrf.mxu0
      %v3962 = vadd.f32 0.0, %v3961
      %v3963 = vpop.f32.mrf.mxu0
      %v3964 = vpop.f32.mrf.mxu0
      %v3965 = vadd.f32 0.0, %v3964
      %v3966 = vpop.f32.mrf.mxu0
      %3967 = vmatprep.mubr.bf16.mxu0 0
      %3968 = vmatmul.mubr.bf16.gmra.mxu0 %v3845
      %v3969 = vpop.f32.mrf.mxu0
      %v3970 = vadd.f32 0.0, %v3969
      %v3971 = vpop.f32.mrf.mxu0
      %v3972 = vpop.f32.mrf.mxu0
      %v3973 = vadd.f32 0.0, %v3972
      %v3974 = vpop.f32.mrf.mxu0
      %3975 = vmatprep.mubr.bf16.mxu0 0
      %3976 = vmatmul.mubr.bf16.gmra.mxu0 %v3848
      %v3977 = vpop.f32.mrf.mxu0
      %v3978 = vadd.f32 0.0, %v3977
      %v3979 = vpop.f32.mrf.mxu0
      %v3980 = vpop.f32.mrf.mxu0
      %v3981 = vadd.f32 0.0, %v3980
      %v3982 = vpop.f32.mrf.mxu0
      %3983 = vmatprep.mubr.bf16.mxu0 0
      %3984 = vmatmul.mubr.bf16.gmra.mxu0 %v3851
      %v3985 = vpop.f32.mrf.mxu0
      %v3986 = vadd.f32 0.0, %v3985
      %v3987 = vpop.f32.mrf.mxu0
      %v3988 = vpop.f32.mrf.mxu0
      %v3989 = vadd.f32 0.0, %v3988
      %v3990 = vpop.f32.mrf.mxu0
      %3991 = vmatprep.mubr.bf16.mxu0 0
      %3992 = vmatmul.mubr.bf16.gmra.mxu0 %v3854
      %v3993 = vpop.f32.mrf.mxu0
      %v3994 = vadd.f32 0.0, %v3993
      %v3995 = vpop.f32.mrf.mxu0
      %v3996 = vpop.f32.mrf.mxu0
      %v3997 = vadd.f32 0.0, %v3996
      %v3998 = vpop.f32.mrf.mxu0
      %3999 = vmatprep.mubr.bf16.mxu0 0
      %4000 = vmatmul.mubr.bf16.gmra.mxu0 %v3857
      %v4001 = vpop.f32.mrf.mxu0
      %v4002 = vadd.f32 0.0, %v4001
      %v4003 = vpop.f32.mrf.mxu0
      %v4004 = vpop.f32.mrf.mxu0
      %v4005 = vadd.f32 0.0, %v4004
      %v4006 = vpop.f32.mrf.mxu0
      %4007 = vmatprep.mubr.bf16.mxu0 0
      %4008 = vmatmul.mubr.bf16.gmra.mxu0 %v3860
      %v4009 = vpop.f32.mrf.mxu0
      %v4010 = vadd.f32 0.0, %v4009
      %v4011 = vpop.f32.mrf.mxu0
      %v4012 = vpop.f32.mrf.mxu0
      %v4013 = vadd.f32 0.0, %v4012
      %v4014 = vpop.f32.mrf.mxu0
      %4015 = vmatprep.mubr.bf16.mxu0 0
      %4016 = vmatmul.mubr.bf16.gmra.mxu0 %v3863
      %v4017 = vpop.f32.mrf.mxu0
      %v4018 = vadd.f32 0.0, %v4017
      %v4019 = vpop.f32.mrf.mxu0
      %v4020 = vpop.f32.mrf.mxu0
      %v4021 = vadd.f32 0.0, %v4020
      %v4022 = vpop.f32.mrf.mxu0
      %4023 = vmatprep.mubr.bf16.mxu0 0
      %4024 = vmatmul.mubr.bf16.gmra.mxu0 %v3866
      %v4025 = vpop.f32.mrf.mxu0
      %v4026 = vadd.f32 0.0, %v4025
      %v4027 = vpop.f32.mrf.mxu0
      %v4028 = vpop.f32.mrf.mxu0
      %v4029 = vadd.f32 0.0, %v4028
      %v4030 = vpop.f32.mrf.mxu0
      %4031 = vdwg.mxu0
      %v4032 = vld [vmem:[%s202] sm:$0xff]
      %v4033 = vld [vmem:[%s202 + $0x8] sm:$0xff]
      %v4034 = vld [vmem:[%s202 + $0x10] sm:$0xff]
      %v4035 = vld [vmem:[%s202 + $0x18] sm:$0xff]
      %v4036 = vld [vmem:[%s202 + $0x20] sm:$0xff]
      %v4037 = vld [vmem:[%s202 + $0x28] sm:$0xff]
      %v4038 = vld [vmem:[%s202 + $0x30] sm:$0xff]
      %v4039 = vld [vmem:[%s202 + $0x38] sm:$0xff]
      %v4040 = vld [vmem:[%s202 + $0x40] sm:$0xff]
      %v4041 = vld [vmem:[%s202 + $0x48] sm:$0xff]
      %v4042 = vld [vmem:[%s202 + $0x50] sm:$0xff]
      %v4043 = vld [vmem:[%s202 + $0x58] sm:$0xff]
      %v4044 = vld [vmem:[%s202 + $0x60] sm:$0xff]
      %v4045 = vld [vmem:[%s202 + $0x68] sm:$0xff]
      %v4046 = vld [vmem:[%s202 + $0x70] sm:$0xff]
      %v4047 = vld [vmem:[%s202 + $0x78] sm:$0xff]
      %v4048 = vld [vmem:[%s202 + $0x80] sm:$0xff]
      %v4049 = vld [vmem:[%s202 + $0x88] sm:$0xff]
      %v4050 = vld [vmem:[%s202 + $0x90] sm:$0xff]
      %v4051 = vld [vmem:[%s202 + $0x98] sm:$0xff]
      %v4052 = vld [vmem:[%s202 + $0xa0] sm:$0xff]
      %v4053 = vld [vmem:[%s202 + $0xa8] sm:$0xff]
      %v4054 = vld [vmem:[%s202 + $0xb0] sm:$0xff]
      %v4055 = vld [vmem:[%s202 + $0xb8] sm:$0xff]
      %v4056 = vld [vmem:[%s202 + $0xc0] sm:$0xff]
      %v4057 = vld [vmem:[%s202 + $0xc8] sm:$0xff]
      %v4058 = vld [vmem:[%s202 + $0xd0] sm:$0xff]
      %v4059 = vld [vmem:[%s202 + $0xd8] sm:$0xff]
      %v4060 = vld [vmem:[%s202 + $0xe0] sm:$0xff]
      %v4061 = vld [vmem:[%s202 + $0xe8] sm:$0xff]
      %v4062 = vld [vmem:[%s202 + $0xf0] sm:$0xff]
      %v4063 = vld [vmem:[%s202 + $0xf8] sm:$0xff]
      %v4064 = vadd.f32 %v4032, %v3906
      %v4065 = vadd.f32 %v4033, %v3909
      %v4066 = vadd.f32 %v4034, %v3914
      %v4067 = vadd.f32 %v4035, %v3917
      %v4068 = vadd.f32 %v4036, %v3922
      %v4069 = vadd.f32 %v4037, %v3925
      %v4070 = vadd.f32 %v4038, %v3930
      %v4071 = vadd.f32 %v4039, %v3933
      %v4072 = vadd.f32 %v4040, %v3938
      %v4073 = vadd.f32 %v4041, %v3941
      %v4074 = vadd.f32 %v4042, %v3946
      %v4075 = vadd.f32 %v4043, %v3949
      %v4076 = vadd.f32 %v4044, %v3954
      %v4077 = vadd.f32 %v4045, %v3957
      %v4078 = vadd.f32 %v4046, %v3962
      %v4079 = vadd.f32 %v4047, %v3965
      %v4080 = vadd.f32 %v4048, %v3970
      %v4081 = vadd.f32 %v4049, %v3973
      %v4082 = vadd.f32 %v4050, %v3978
      %v4083 = vadd.f32 %v4051, %v3981
      %v4084 = vadd.f32 %v4052, %v3986
      %v4085 = vadd.f32 %v4053, %v3989
      %v4086 = vadd.f32 %v4054, %v3994
      %v4087 = vadd.f32 %v4055, %v3997
      %v4088 = vadd.f32 %v4056, %v4002
      %v4089 = vadd.f32 %v4057, %v4005
      %v4090 = vadd.f32 %v4058, %v4010
      %v4091 = vadd.f32 %v4059, %v4013
      %v4092 = vadd.f32 %v4060, %v4018
      %v4093 = vadd.f32 %v4061, %v4021
      %v4094 = vadd.f32 %v4062, %v4026
      %v4095 = vadd.f32 %v4063, %v4029
      %4096 = vst [vmem:[%s202] sm:$0xff] %v4064
      %4097 = vst [vmem:[%s202 + $0x8] sm:$0xff] %v4065
      %4098 = vst [vmem:[%s202 + $0x10] sm:$0xff] %v4066
      %4099 = vst [vmem:[%s202 + $0x18] sm:$0xff] %v4067
      %4100 = vst [vmem:[%s202 + $0x20] sm:$0xff] %v4068
      %4101 = vst [vmem:[%s202 + $0x28] sm:$0xff] %v4069
      %4102 = vst [vmem:[%s202 + $0x30] sm:$0xff] %v4070
      %4103 = vst [vmem:[%s202 + $0x38] sm:$0xff] %v4071
      %4104 = vst [vmem:[%s202 + $0x40] sm:$0xff] %v4072
      %4105 = vst [vmem:[%s202 + $0x48] sm:$0xff] %v4073
      %4106 = vst [vmem:[%s202 + $0x50] sm:$0xff] %v4074
      %4107 = vst [vmem:[%s202 + $0x58] sm:$0xff] %v4075
      %4108 = vst [vmem:[%s202 + $0x60] sm:$0xff] %v4076
      %4109 = vst [vmem:[%s202 + $0x68] sm:$0xff] %v4077
      %4110 = vst [vmem:[%s202 + $0x70] sm:$0xff] %v4078
      %4111 = vst [vmem:[%s202 + $0x78] sm:$0xff] %v4079
      %4112 = vst [vmem:[%s202 + $0x80] sm:$0xff] %v4080
      %4113 = vst [vmem:[%s202 + $0x88] sm:$0xff] %v4081
      %4114 = vst [vmem:[%s202 + $0x90] sm:$0xff] %v4082
      %4115 = vst [vmem:[%s202 + $0x98] sm:$0xff] %v4083
      %4116 = vst [vmem:[%s202 + $0xa0] sm:$0xff] %v4084
      %4117 = vst [vmem:[%s202 + $0xa8] sm:$0xff] %v4085
      %4118 = vst [vmem:[%s202 + $0xb0] sm:$0xff] %v4086
      %4119 = vst [vmem:[%s202 + $0xb8] sm:$0xff] %v4087
      %4120 = vst [vmem:[%s202 + $0xc0] sm:$0xff] %v4088
      %4121 = vst [vmem:[%s202 + $0xc8] sm:$0xff] %v4089
      %4122 = vst [vmem:[%s202 + $0xd0] sm:$0xff] %v4090
      %4123 = vst [vmem:[%s202 + $0xd8] sm:$0xff] %v4091
      %4124 = vst [vmem:[%s202 + $0xe0] sm:$0xff] %v4092
      %4125 = vst [vmem:[%s202 + $0xe8] sm:$0xff] %v4093
      %4126 = vst [vmem:[%s202 + $0xf0] sm:$0xff] %v4094
      %4127 = vst [vmem:[%s202 + $0xf8] sm:$0xff] %v4095
      %v4128 = vld [vmem:[%s3705] sm:$0xf]
      %v4129 = vld [vmem:[%s3705 + $0x4] sm:$0xf]
      %v4130 = vld [vmem:[%s3705 + $0x8] sm:$0x1]
      %v4131 = vld [vmem:[%s3705 + $0xc] sm:$0xf]
      %v4132 = vld [vmem:[%s3705 + $0x10] sm:$0xf]
      %v4133 = vld [vmem:[%s3705 + $0x14] sm:$0x1]
      %v4134 = vld [vmem:[%s3705 + $0x18] sm:$0xf]
      %v4135 = vld [vmem:[%s3705 + $0x1c] sm:$0xf]
      %v4136 = vld [vmem:[%s3705 + $0x20] sm:$0x1]
      %v4137 = vld [vmem:[%s3705 + $0x24] sm:$0xf]
      %v4138 = vld [vmem:[%s3705 + $0x28] sm:$0xf]
      %v4139 = vld [vmem:[%s3705 + $0x2c] sm:$0x1]
      %v4140 = vld [vmem:[%s3705 + $0x30] sm:$0xf]
      %v4141 = vld [vmem:[%s3705 + $0x34] sm:$0xf]
      %v4142 = vld [vmem:[%s3705 + $0x38] sm:$0x1]
      %v4143 = vld [vmem:[%s3705 + $0x3c] sm:$0xf]
      %v4144 = vld [vmem:[%s3705 + $0x40] sm:$0xf]
      %v4145 = vld [vmem:[%s3705 + $0x44] sm:$0x1]
      %v4146 = vld [vmem:[%s3705 + $0x48] sm:$0xf]
      %v4147 = vld [vmem:[%s3705 + $0x4c] sm:$0xf]
      %v4148 = vld [vmem:[%s3705 + $0x50] sm:$0x1]
      %v4149 = vld [vmem:[%s3705 + $0x54] sm:$0xf]
      %v4150 = vld [vmem:[%s3705 + $0x58] sm:$0xf]
      %v4151 = vld [vmem:[%s3705 + $0x5c] sm:$0x1]
      %v4152 = vld [vmem:[%s3705 + $0x60] sm:$0xf]
      %v4153 = vld [vmem:[%s3705 + $0x64] sm:$0xf]
      %v4154 = vld [vmem:[%s3705 + $0x68] sm:$0x1]
      %v4155 = vld [vmem:[%s3705 + $0x6c] sm:$0xf]
      %v4156 = vld [vmem:[%s3705 + $0x70] sm:$0xf]
      %v4157 = vld [vmem:[%s3705 + $0x74] sm:$0x1]
      %v4158 = vld [vmem:[%s3705 + $0x78] sm:$0xf]
      %v4159 = vld [vmem:[%s3705 + $0x7c] sm:$0xf]
      %v4160 = vld [vmem:[%s3705 + $0x80] sm:$0x1]
      %v4161 = vld [vmem:[%s3705 + $0x84] sm:$0xf]
      %v4162 = vld [vmem:[%s3705 + $0x88] sm:$0xf]
      %v4163 = vld [vmem:[%s3705 + $0x8c] sm:$0x1]
      %v4164 = vld [vmem:[%s3705 + $0x90] sm:$0xf]
      %v4165 = vld [vmem:[%s3705 + $0x94] sm:$0xf]
      %v4166 = vld [vmem:[%s3705 + $0x98] sm:$0x1]
      %v4167 = vld [vmem:[%s3705 + $0x9c] sm:$0xf]
      %v4168 = vld [vmem:[%s3705 + $0xa0] sm:$0xf]
      %v4169 = vld [vmem:[%s3705 + $0xa4] sm:$0x1]
      %v4170 = vld [vmem:[%s3705 + $0xa8] sm:$0xf]
      %v4171 = vld [vmem:[%s3705 + $0xac] sm:$0xf]
      %v4172 = vld [vmem:[%s3705 + $0xb0] sm:$0x1]
      %v4173 = vld [vmem:[%s3705 + $0xb4] sm:$0xf]
      %v4174 = vld [vmem:[%s3705 + $0xb8] sm:$0xf]
      %v4175 = vld [vmem:[%s3705 + $0xbc] sm:$0x1]
      %v4177 = vshrl.u32 %v4128, 16
      %v4179 = vrot.slane %v4177, 4
      %v4180 = vshll.u32 %v4128, 16
      %v4182 = vrot.slane %v4180, 5
      %v4183 = vor.u32 %v4179, %v4182
      %v4184 = vrot.slane %v4183, 4
      %v4186 = vshll.u32 %v4129, 16
      %v4188 = vrot.slane %v4186, 5
      %v4189 = vsel %vm614, %v4184, %v4188
      %v4190 = vshrl.u32 %v4129, 16
      %v4192 = vrot.slane %v4190, 4
      %v4193 = vor.u32 %v4192, %v4188
      %v4194 = vrot.slane %v4193, 4
      %v4196 = vshll.u32 %v4130, 16
      %v4198 = vrot.slane %v4196, 5
      %v4199 = vsel %vm614, %v4194, %v4198
      %v4201 = vshrl.u32 %v4131, 16
      %v4203 = vrot.slane %v4201, 4
      %v4204 = vshll.u32 %v4131, 16
      %v4206 = vrot.slane %v4204, 5
      %v4207 = vor.u32 %v4203, %v4206
      %v4208 = vrot.slane %v4207, 4
      %v4210 = vshll.u32 %v4132, 16
      %v4212 = vrot.slane %v4210, 5
      %v4213 = vsel %vm614, %v4208, %v4212
      %v4214 = vshrl.u32 %v4132, 16
      %v4216 = vrot.slane %v4214, 4
      %v4217 = vor.u32 %v4216, %v4212
      %v4218 = vrot.slane %v4217, 4
      %v4220 = vshll.u32 %v4133, 16
      %v4222 = vrot.slane %v4220, 5
      %v4223 = vsel %vm614, %v4218, %v4222
      %v4225 = vshrl.u32 %v4134, 16
      %v4227 = vrot.slane %v4225, 4
      %v4228 = vshll.u32 %v4134, 16
      %v4230 = vrot.slane %v4228, 5
      %v4231 = vor.u32 %v4227, %v4230
      %v4232 = vrot.slane %v4231, 4
      %v4234 = vshll.u32 %v4135, 16
      %v4236 = vrot.slane %v4234, 5
      %v4237 = vsel %vm614, %v4232, %v4236
      %v4238 = vshrl.u32 %v4135, 16
      %v4240 = vrot.slane %v4238, 4
      %v4241 = vor.u32 %v4240, %v4236
      %v4242 = vrot.slane %v4241, 4
      %v4244 = vshll.u32 %v4136, 16
      %v4246 = vrot.slane %v4244, 5
      %v4247 = vsel %vm614, %v4242, %v4246
      %v4249 = vshrl.u32 %v4137, 16
      %v4251 = vrot.slane %v4249, 4
      %v4252 = vshll.u32 %v4137, 16
      %v4254 = vrot.slane %v4252, 5
      %v4255 = vor.u32 %v4251, %v4254
      %v4256 = vrot.slane %v4255, 4
      %v4258 = vshll.u32 %v4138, 16
      %v4260 = vrot.slane %v4258, 5
      %v4261 = vsel %vm614, %v4256, %v4260
      %v4262 = vshrl.u32 %v4138, 16
      %v4264 = vrot.slane %v4262, 4
      %v4265 = vor.u32 %v4264, %v4260
      %v4266 = vrot.slane %v4265, 4
      %v4268 = vshll.u32 %v4139, 16
      %v4270 = vrot.slane %v4268, 5
      %v4271 = vsel %vm614, %v4266, %v4270
      %v4273 = vshrl.u32 %v4140, 16
      %v4275 = vrot.slane %v4273, 4
      %v4276 = vshll.u32 %v4140, 16
      %v4278 = vrot.slane %v4276, 5
      %v4279 = vor.u32 %v4275, %v4278
      %v4280 = vrot.slane %v4279, 4
      %v4282 = vshll.u32 %v4141, 16
      %v4284 = vrot.slane %v4282, 5
      %v4285 = vsel %vm614, %v4280, %v4284
      %v4286 = vshrl.u32 %v4141, 16
      %v4288 = vrot.slane %v4286, 4
      %v4289 = vor.u32 %v4288, %v4284
      %v4290 = vrot.slane %v4289, 4
      %v4292 = vshll.u32 %v4142, 16
      %v4294 = vrot.slane %v4292, 5
      %v4295 = vsel %vm614, %v4290, %v4294
      %v4297 = vshrl.u32 %v4143, 16
      %v4299 = vrot.slane %v4297, 4
      %v4300 = vshll.u32 %v4143, 16
      %v4302 = vrot.slane %v4300, 5
      %v4303 = vor.u32 %v4299, %v4302
      %v4304 = vrot.slane %v4303, 4
      %v4306 = vshll.u32 %v4144, 16
      %v4308 = vrot.slane %v4306, 5
      %v4309 = vsel %vm614, %v4304, %v4308
      %v4310 = vshrl.u32 %v4144, 16
      %v4312 = vrot.slane %v4310, 4
      %v4313 = vor.u32 %v4312, %v4308
      %v4314 = vrot.slane %v4313, 4
      %v4316 = vshll.u32 %v4145, 16
      %v4318 = vrot.slane %v4316, 5
      %v4319 = vsel %vm614, %v4314, %v4318
      %v4321 = vshrl.u32 %v4146, 16
      %v4323 = vrot.slane %v4321, 4
      %v4324 = vshll.u32 %v4146, 16
      %v4326 = vrot.slane %v4324, 5
      %v4327 = vor.u32 %v4323, %v4326
      %v4328 = vrot.slane %v4327, 4
      %v4330 = vshll.u32 %v4147, 16
      %v4332 = vrot.slane %v4330, 5
      %v4333 = vsel %vm614, %v4328, %v4332
      %v4334 = vshrl.u32 %v4147, 16
      %v4336 = vrot.slane %v4334, 4
      %v4337 = vor.u32 %v4336, %v4332
      %v4338 = vrot.slane %v4337, 4
      %v4340 = vshll.u32 %v4148, 16
      %v4342 = vrot.slane %v4340, 5
      %v4343 = vsel %vm614, %v4338, %v4342
      %v4345 = vshrl.u32 %v4149, 16
      %v4347 = vrot.slane %v4345, 4
      %v4348 = vshll.u32 %v4149, 16
      %v4350 = vrot.slane %v4348, 5
      %v4351 = vor.u32 %v4347, %v4350
      %v4352 = vrot.slane %v4351, 4
      %v4354 = vshll.u32 %v4150, 16
      %v4356 = vrot.slane %v4354, 5
      %v4357 = vsel %vm614, %v4352, %v4356
      %v4358 = vshrl.u32 %v4150, 16
      %v4360 = vrot.slane %v4358, 4
      %v4361 = vor.u32 %v4360, %v4356
      %v4362 = vrot.slane %v4361, 4
      %v4364 = vshll.u32 %v4151, 16
      %v4366 = vrot.slane %v4364, 5
      %v4367 = vsel %vm614, %v4362, %v4366
      %v4369 = vshrl.u32 %v4152, 16
      %v4371 = vrot.slane %v4369, 4
      %v4372 = vshll.u32 %v4152, 16
      %v4374 = vrot.slane %v4372, 5
      %v4375 = vor.u32 %v4371, %v4374
      %v4376 = vrot.slane %v4375, 4
      %v4378 = vshll.u32 %v4153, 16
      %v4380 = vrot.slane %v4378, 5
      %v4381 = vsel %vm614, %v4376, %v4380
      %v4382 = vshrl.u32 %v4153, 16
      %v4384 = vrot.slane %v4382, 4
      %v4385 = vor.u32 %v4384, %v4380
      %v4386 = vrot.slane %v4385, 4
      %v4388 = vshll.u32 %v4154, 16
      %v4390 = vrot.slane %v4388, 5
      %v4391 = vsel %vm614, %v4386, %v4390
      %v4393 = vshrl.u32 %v4155, 16
      %v4395 = vrot.slane %v4393, 4
      %v4396 = vshll.u32 %v4155, 16
      %v4398 = vrot.slane %v4396, 5
      %v4399 = vor.u32 %v4395, %v4398
      %v4400 = vrot.slane %v4399, 4
      %v4402 = vshll.u32 %v4156, 16
      %v4404 = vrot.slane %v4402, 5
      %v4405 = vsel %vm614, %v4400, %v4404
      %v4406 = vshrl.u32 %v4156, 16
      %v4408 = vrot.slane %v4406, 4
      %v4409 = vor.u32 %v4408, %v4404
      %v4410 = vrot.slane %v4409, 4
      %v4412 = vshll.u32 %v4157, 16
      %v4414 = vrot.slane %v4412, 5
      %v4415 = vsel %vm614, %v4410, %v4414
      %v4417 = vshrl.u32 %v4158, 16
      %v4419 = vrot.slane %v4417, 4
      %v4420 = vshll.u32 %v4158, 16
      %v4422 = vrot.slane %v4420, 5
      %v4423 = vor.u32 %v4419, %v4422
      %v4424 = vrot.slane %v4423, 4
      %v4426 = vshll.u32 %v4159, 16
      %v4428 = vrot.slane %v4426, 5
      %v4429 = vsel %vm614, %v4424, %v4428
      %v4430 = vshrl.u32 %v4159, 16
      %v4432 = vrot.slane %v4430, 4
      %v4433 = vor.u32 %v4432, %v4428
      %v4434 = vrot.slane %v4433, 4
      %v4436 = vshll.u32 %v4160, 16
      %v4438 = vrot.slane %v4436, 5
      %v4439 = vsel %vm614, %v4434, %v4438
      %v4441 = vshrl.u32 %v4161, 16
      %v4443 = vrot.slane %v4441, 4
      %v4444 = vshll.u32 %v4161, 16
      %v4446 = vrot.slane %v4444, 5
      %v4447 = vor.u32 %v4443, %v4446
      %v4448 = vrot.slane %v4447, 4
      %v4450 = vshll.u32 %v4162, 16
      %v4452 = vrot.slane %v4450, 5
      %v4453 = vsel %vm614, %v4448, %v4452
      %v4454 = vshrl.u32 %v4162, 16
      %v4456 = vrot.slane %v4454, 4
      %v4457 = vor.u32 %v4456, %v4452
      %v4458 = vrot.slane %v4457, 4
      %v4460 = vshll.u32 %v4163, 16
      %v4462 = vrot.slane %v4460, 5
      %v4463 = vsel %vm614, %v4458, %v4462
      %v4465 = vshrl.u32 %v4164, 16
      %v4467 = vrot.slane %v4465, 4
      %v4468 = vshll.u32 %v4164, 16
      %v4470 = vrot.slane %v4468, 5
      %v4471 = vor.u32 %v4467, %v4470
      %v4472 = vrot.slane %v4471, 4
      %v4474 = vshll.u32 %v4165, 16
      %v4476 = vrot.slane %v4474, 5
      %v4477 = vsel %vm614, %v4472, %v4476
      %v4478 = vshrl.u32 %v4165, 16
      %v4480 = vrot.slane %v4478, 4
      %v4481 = vor.u32 %v4480, %v4476
      %v4482 = vrot.slane %v4481, 4
      %v4484 = vshll.u32 %v4166, 16
      %v4486 = vrot.slane %v4484, 5
      %v4487 = vsel %vm614, %v4482, %v4486
      %v4489 = vshrl.u32 %v4167, 16
      %v4491 = vrot.slane %v4489, 4
      %v4492 = vshll.u32 %v4167, 16
      %v4494 = vrot.slane %v4492, 5
      %v4495 = vor.u32 %v4491, %v4494
      %v4496 = vrot.slane %v4495, 4
      %v4498 = vshll.u32 %v4168, 16
      %v4500 = vrot.slane %v4498, 5
      %v4501 = vsel %vm614, %v4496, %v4500
      %v4502 = vshrl.u32 %v4168, 16
      %v4504 = vrot.slane %v4502, 4
      %v4505 = vor.u32 %v4504, %v4500
      %v4506 = vrot.slane %v4505, 4
      %v4508 = vshll.u32 %v4169, 16
      %v4510 = vrot.slane %v4508, 5
      %v4511 = vsel %vm614, %v4506, %v4510
      %v4513 = vshrl.u32 %v4170, 16
      %v4515 = vrot.slane %v4513, 4
      %v4516 = vshll.u32 %v4170, 16
      %v4518 = vrot.slane %v4516, 5
      %v4519 = vor.u32 %v4515, %v4518
      %v4520 = vrot.slane %v4519, 4
      %v4522 = vshll.u32 %v4171, 16
      %v4524 = vrot.slane %v4522, 5
      %v4525 = vsel %vm614, %v4520, %v4524
      %v4526 = vshrl.u32 %v4171, 16
      %v4528 = vrot.slane %v4526, 4
      %v4529 = vor.u32 %v4528, %v4524
      %v4530 = vrot.slane %v4529, 4
      %v4532 = vshll.u32 %v4172, 16
      %v4534 = vrot.slane %v4532, 5
      %v4535 = vsel %vm614, %v4530, %v4534
      %v4537 = vshrl.u32 %v4173, 16
      %v4539 = vrot.slane %v4537, 4
      %v4540 = vshll.u32 %v4173, 16
      %v4542 = vrot.slane %v4540, 5
      %v4543 = vor.u32 %v4539, %v4542
      %v4544 = vrot.slane %v4543, 4
      %v4546 = vshll.u32 %v4174, 16
      %v4548 = vrot.slane %v4546, 5
      %v4549 = vsel %vm614, %v4544, %v4548
      %v4550 = vshrl.u32 %v4174, 16
      %v4552 = vrot.slane %v4550, 4
      %v4553 = vor.u32 %v4552, %v4548
      %v4554 = vrot.slane %v4553, 4
      %v4556 = vshll.u32 %v4175, 16
      %v4558 = vrot.slane %v4556, 5
      %v4559 = vsel %vm614, %v4554, %v4558
      %s4560 = scalar_lea.vmem %s1, 14
      %v4561 = vld [vmem:[%s4560] sm:$0x3]
      %v4562 = vunpack.c.l.b16 %v4189
      %v4563 = vunpack.c.l.b16 %v4199
      %v4564 = vunpack.c.l.b16 %v4213
      %v4565 = vunpack.c.l.b16 %v4223
      %v4566 = vunpack.c.l.b16 %v4237
      %v4567 = vunpack.c.l.b16 %v4247
      %v4568 = vunpack.c.l.b16 %v4261
      %v4569 = vunpack.c.l.b16 %v4271
      %v4570 = vunpack.c.l.b16 %v4285
      %v4571 = vunpack.c.l.b16 %v4295
      %v4572 = vunpack.c.l.b16 %v4309
      %v4573 = vunpack.c.l.b16 %v4319
      %v4574 = vunpack.c.l.b16 %v4333
      %v4575 = vunpack.c.l.b16 %v4343
      %v4576 = vunpack.c.l.b16 %v4357
      %v4577 = vunpack.c.l.b16 %v4367
      %v4578 = vunpack.c.l.b16 %v4381
      %v4579 = vunpack.c.l.b16 %v4391
      %v4580 = vunpack.c.l.b16 %v4405
      %v4581 = vunpack.c.l.b16 %v4415
      %v4582 = vunpack.c.l.b16 %v4429
      %v4583 = vunpack.c.l.b16 %v4439
      %v4584 = vunpack.c.l.b16 %v4453
      %v4585 = vunpack.c.l.b16 %v4463
      %v4586 = vunpack.c.l.b16 %v4477
      %v4587 = vunpack.c.l.b16 %v4487
      %v4588 = vunpack.c.l.b16 %v4501
      %v4589 = vunpack.c.l.b16 %v4511
      %v4590 = vunpack.c.l.b16 %v4525
      %v4591 = vunpack.c.l.b16 %v4535
      %v4592 = vunpack.c.l.b16 %v4549
      %v4593 = vunpack.c.l.b16 %v4559
      %v4594 = vpack.c.b16 %v4563, %v4562
      %v4595 = vpack.c.b16 %v4565, %v4564
      %v4596 = vpack.c.b16 %v4567, %v4566
      %v4597 = vpack.c.b16 %v4569, %v4568
      %v4598 = vpack.c.b16 %v4571, %v4570
      %v4599 = vpack.c.b16 %v4573, %v4572
      %v4600 = vpack.c.b16 %v4575, %v4574
      %v4601 = vpack.c.b16 %v4577, %v4576
      %v4602 = vpack.c.b16 %v4579, %v4578
      %v4603 = vpack.c.b16 %v4581, %v4580
      %v4604 = vpack.c.b16 %v4583, %v4582
      %v4605 = vpack.c.b16 %v4585, %v4584
      %v4606 = vpack.c.b16 %v4587, %v4586
      %v4607 = vpack.c.b16 %v4589, %v4588
      %v4608 = vpack.c.b16 %v4591, %v4590
      %v4609 = vpack.c.b16 %v4593, %v4592
      %v4611 = vsel %vm318, %v4594, 0
      %v4614 = vsel %vm318, %v4595, 0
      %v4617 = vsel %vm318, %v4596, 0
      %v4620 = vsel %vm318, %v4597, 0
      %v4623 = vsel %vm318, %v4598, 0
      %v4626 = vsel %vm318, %v4599, 0
      %v4629 = vsel %vm318, %v4600, 0
      %v4632 = vsel %vm318, %v4601, 0
      %v4635 = vsel %vm318, %v4602, 0
      %v4638 = vsel %vm318, %v4603, 0
      %v4641 = vsel %vm318, %v4604, 0
      %v4644 = vsel %vm318, %v4605, 0
      %v4647 = vsel %vm318, %v4606, 0
      %v4650 = vsel %vm318, %v4607, 0
      %v4653 = vsel %vm318, %v4608, 0
      %v4656 = vsel %vm318, %v4609, 0
      %v4659 = vsel %vm367, %v4561, 0
      %4661 = vmatprep.subr.bf16.mxu0 0
      %4662 = vmatpush1.bf16.msra.mxu0 0
      %4663 = vmatprep.subr.bf16.mxu0 0
      %4664 = vmatpush1.bf16.msra.mxu0 0
      %4665 = vmatprep.subr.bf16.mxu0 0
      %4666 = vmatpush1.bf16.msra.mxu0 0
      %4667 = vmatprep.subr.bf16.mxu0 0
      %4668 = vmatpush1.bf16.msra.mxu0 0
      %4669 = vmatprep.subr.bf16.mxu0 0
      %4670 = vmatpush1.bf16.msra.mxu0 0
      %4671 = vmatprep.subr.bf16.mxu0 0
      %4672 = vmatpush1.bf16.msra.mxu0 0
      %4673 = vmatprep.subr.bf16.mxu0 0
      %4674 = vmatpush1.bf16.msra.mxu0 0
      %4675 = vmatprep.subr.bf16.mxu0 0
      %4676 = vmatpush1.bf16.msra.mxu0 %v4659
      %4677 = vmatprep.subr.bf16.mxu0 0
      %4678 = vmatpush2.bf16.msra.mxu0 0
      %4679 = vmatprep.subr.bf16.mxu0 0
      %4680 = vmatpush2.bf16.msra.mxu0 0
      %4681 = vmatprep.subr.bf16.mxu0 0
      %4682 = vmatpush2.bf16.msra.mxu0 0
      %4683 = vmatprep.subr.bf16.mxu0 0
      %4684 = vmatpush2.bf16.msra.mxu0 0
      %4685 = vmatprep.subr.bf16.mxu0 0
      %4686 = vmatpush2.bf16.msra.mxu0 0
      %4687 = vmatprep.subr.bf16.mxu0 0
      %4688 = vmatpush2.bf16.msra.mxu0 0
      %4689 = vmatprep.subr.bf16.mxu0 0
      %4690 = vmatpush2.bf16.msra.mxu0 0
      %4691 = vmatprep.subr.bf16.mxu0 0
      %4692 = vmatpush2.bf16.msra.mxu0 0
      %4693 = vmatprep.mubr.bf16.mxu0 0
      %4694 = vmatmul.mubr.bf16.gmra.mxu0 %v4611
      %v4695 = vpop.f32.mrf.mxu0
      %v4696 = vadd.f32 0.0, %v4695
      %v4697 = vpop.f32.mrf.mxu0
      %v4698 = vpop.f32.mrf.mxu0
      %v4699 = vadd.f32 0.0, %v4698
      %v4700 = vpop.f32.mrf.mxu0
      %4701 = vmatprep.mubr.bf16.mxu0 0
      %4702 = vmatmul.mubr.bf16.gmra.mxu0 %v4614
      %v4703 = vpop.f32.mrf.mxu0
      %v4704 = vadd.f32 0.0, %v4703
      %v4705 = vpop.f32.mrf.mxu0
      %v4706 = vpop.f32.mrf.mxu0
      %v4707 = vadd.f32 0.0, %v4706
      %v4708 = vpop.f32.mrf.mxu0
      %4709 = vmatprep.mubr.bf16.mxu0 0
      %4710 = vmatmul.mubr.bf16.gmra.mxu0 %v4617
      %v4711 = vpop.f32.mrf.mxu0
      %v4712 = vadd.f32 0.0, %v4711
      %v4713 = vpop.f32.mrf.mxu0
      %v4714 = vpop.f32.mrf.mxu0
      %v4715 = vadd.f32 0.0, %v4714
      %v4716 = vpop.f32.mrf.mxu0
      %4717 = vmatprep.mubr.bf16.mxu0 0
      %4718 = vmatmul.mubr.bf16.gmra.mxu0 %v4620
      %v4719 = vpop.f32.mrf.mxu0
      %v4720 = vadd.f32 0.0, %v4719
      %v4721 = vpop.f32.mrf.mxu0
      %v4722 = vpop.f32.mrf.mxu0
      %v4723 = vadd.f32 0.0, %v4722
      %v4724 = vpop.f32.mrf.mxu0
      %4725 = vmatprep.mubr.bf16.mxu0 0
      %4726 = vmatmul.mubr.bf16.gmra.mxu0 %v4623
      %v4727 = vpop.f32.mrf.mxu0
      %v4728 = vadd.f32 0.0, %v4727
      %v4729 = vpop.f32.mrf.mxu0
      %v4730 = vpop.f32.mrf.mxu0
      %v4731 = vadd.f32 0.0, %v4730
      %v4732 = vpop.f32.mrf.mxu0
      %4733 = vmatprep.mubr.bf16.mxu0 0
      %4734 = vmatmul.mubr.bf16.gmra.mxu0 %v4626
      %v4735 = vpop.f32.mrf.mxu0
      %v4736 = vadd.f32 0.0, %v4735
      %v4737 = vpop.f32.mrf.mxu0
      %v4738 = vpop.f32.mrf.mxu0
      %v4739 = vadd.f32 0.0, %v4738
      %v4740 = vpop.f32.mrf.mxu0
      %4741 = vmatprep.mubr.bf16.mxu0 0
      %4742 = vmatmul.mubr.bf16.gmra.mxu0 %v4629
      %v4743 = vpop.f32.mrf.mxu0
      %v4744 = vadd.f32 0.0, %v4743
      %v4745 = vpop.f32.mrf.mxu0
      %v4746 = vpop.f32.mrf.mxu0
      %v4747 = vadd.f32 0.0, %v4746
      %v4748 = vpop.f32.mrf.mxu0
      %4749 = vmatprep.mubr.bf16.mxu0 0
      %4750 = vmatmul.mubr.bf16.gmra.mxu0 %v4632
      %v4751 = vpop.f32.mrf.mxu0
      %v4752 = vadd.f32 0.0, %v4751
      %v4753 = vpop.f32.mrf.mxu0
      %v4754 = vpop.f32.mrf.mxu0
      %v4755 = vadd.f32 0.0, %v4754
      %v4756 = vpop.f32.mrf.mxu0
      %4757 = vmatprep.mubr.bf16.mxu0 0
      %4758 = vmatmul.mubr.bf16.gmra.mxu0 %v4635
      %v4759 = vpop.f32.mrf.mxu0
      %v4760 = vadd.f32 0.0, %v4759
      %v4761 = vpop.f32.mrf.mxu0
      %v4762 = vpop.f32.mrf.mxu0
      %v4763 = vadd.f32 0.0, %v4762
      %v4764 = vpop.f32.mrf.mxu0
      %4765 = vmatprep.mubr.bf16.mxu0 0
      %4766 = vmatmul.mubr.bf16.gmra.mxu0 %v4638
      %v4767 = vpop.f32.mrf.mxu0
      %v4768 = vadd.f32 0.0, %v4767
      %v4769 = vpop.f32.mrf.mxu0
      %v4770 = vpop.f32.mrf.mxu0
      %v4771 = vadd.f32 0.0, %v4770
      %v4772 = vpop.f32.mrf.mxu0
      %4773 = vmatprep.mubr.bf16.mxu0 0
      %4774 = vmatmul.mubr.bf16.gmra.mxu0 %v4641
      %v4775 = vpop.f32.mrf.mxu0
      %v4776 = vadd.f32 0.0, %v4775
      %v4777 = vpop.f32.mrf.mxu0
      %v4778 = vpop.f32.mrf.mxu0
      %v4779 = vadd.f32 0.0, %v4778
      %v4780 = vpop.f32.mrf.mxu0
      %4781 = vmatprep.mubr.bf16.mxu0 0
      %4782 = vmatmul.mubr.bf16.gmra.mxu0 %v4644
      %v4783 = vpop.f32.mrf.mxu0
      %v4784 = vadd.f32 0.0, %v4783
      %v4785 = vpop.f32.mrf.mxu0
      %v4786 = vpop.f32.mrf.mxu0
      %v4787 = vadd.f32 0.0, %v4786
      %v4788 = vpop.f32.mrf.mxu0
      %4789 = vmatprep.mubr.bf16.mxu0 0
      %4790 = vmatmul.mubr.bf16.gmra.mxu0 %v4647
      %v4791 = vpop.f32.mrf.mxu0
      %v4792 = vadd.f32 0.0, %v4791
      %v4793 = vpop.f32.mrf.mxu0
      %v4794 = vpop.f32.mrf.mxu0
      %v4795 = vadd.f32 0.0, %v4794
      %v4796 = vpop.f32.mrf.mxu0
      %4797 = vmatprep.mubr.bf16.mxu0 0
      %4798 = vmatmul.mubr.bf16.gmra.mxu0 %v4650
      %v4799 = vpop.f32.mrf.mxu0
      %v4800 = vadd.f32 0.0, %v4799
      %v4801 = vpop.f32.mrf.mxu0
      %v4802 = vpop.f32.mrf.mxu0
      %v4803 = vadd.f32 0.0, %v4802
      %v4804 = vpop.f32.mrf.mxu0
      %4805 = vmatprep.mubr.bf16.mxu0 0
      %4806 = vmatmul.mubr.bf16.gmra.mxu0 %v4653
      %v4807 = vpop.f32.mrf.mxu0
      %v4808 = vadd.f32 0.0, %v4807
      %v4809 = vpop.f32.mrf.mxu0
      %v4810 = vpop.f32.mrf.mxu0
      %v4811 = vadd.f32 0.0, %v4810
      %v4812 = vpop.f32.mrf.mxu0
      %4813 = vmatprep.mubr.bf16.mxu0 0
      %4814 = vmatmul.mubr.bf16.gmra.mxu0 %v4656
      %v4815 = vpop.f32.mrf.mxu0
      %v4816 = vadd.f32 0.0, %v4815
      %v4817 = vpop.f32.mrf.mxu0
      %v4818 = vpop.f32.mrf.mxu0
      %v4819 = vadd.f32 0.0, %v4818
      %v4820 = vpop.f32.mrf.mxu0
      %4821 = vdwg.mxu0
      %v4822 = vld [vmem:[%s202] sm:$0xff]
      %v4823 = vld [vmem:[%s202 + $0x8] sm:$0xff]
      %v4824 = vld [vmem:[%s202 + $0x10] sm:$0xff]
      %v4825 = vld [vmem:[%s202 + $0x18] sm:$0xff]
      %v4826 = vld [vmem:[%s202 + $0x20] sm:$0xff]
      %v4827 = vld [vmem:[%s202 + $0x28] sm:$0xff]
      %v4828 = vld [vmem:[%s202 + $0x30] sm:$0xff]
      %v4829 = vld [vmem:[%s202 + $0x38] sm:$0xff]
      %v4830 = vld [vmem:[%s202 + $0x40] sm:$0xff]
      %v4831 = vld [vmem:[%s202 + $0x48] sm:$0xff]
      %v4832 = vld [vmem:[%s202 + $0x50] sm:$0xff]
      %v4833 = vld [vmem:[%s202 + $0x58] sm:$0xff]
      %v4834 = vld [vmem:[%s202 + $0x60] sm:$0xff]
      %v4835 = vld [vmem:[%s202 + $0x68] sm:$0xff]
      %v4836 = vld [vmem:[%s202 + $0x70] sm:$0xff]
      %v4837 = vld [vmem:[%s202 + $0x78] sm:$0xff]
      %v4838 = vld [vmem:[%s202 + $0x80] sm:$0xff]
      %v4839 = vld [vmem:[%s202 + $0x88] sm:$0xff]
      %v4840 = vld [vmem:[%s202 + $0x90] sm:$0xff]
      %v4841 = vld [vmem:[%s202 + $0x98] sm:$0xff]
      %v4842 = vld [vmem:[%s202 + $0xa0] sm:$0xff]
      %v4843 = vld [vmem:[%s202 + $0xa8] sm:$0xff]
      %v4844 = vld [vmem:[%s202 + $0xb0] sm:$0xff]
      %v4845 = vld [vmem:[%s202 + $0xb8] sm:$0xff]
      %v4846 = vld [vmem:[%s202 + $0xc0] sm:$0xff]
      %v4847 = vld [vmem:[%s202 + $0xc8] sm:$0xff]
      %v4848 = vld [vmem:[%s202 + $0xd0] sm:$0xff]
      %v4849 = vld [vmem:[%s202 + $0xd8] sm:$0xff]
      %v4850 = vld [vmem:[%s202 + $0xe0] sm:$0xff]
      %v4851 = vld [vmem:[%s202 + $0xe8] sm:$0xff]
      %v4852 = vld [vmem:[%s202 + $0xf0] sm:$0xff]
      %v4853 = vld [vmem:[%s202 + $0xf8] sm:$0xff]
      %v4854 = vadd.f32 %v4822, %v4696
      %v4855 = vadd.f32 %v4823, %v4699
      %v4856 = vadd.f32 %v4824, %v4704
      %v4857 = vadd.f32 %v4825, %v4707
      %v4858 = vadd.f32 %v4826, %v4712
      %v4859 = vadd.f32 %v4827, %v4715
      %v4860 = vadd.f32 %v4828, %v4720
      %v4861 = vadd.f32 %v4829, %v4723
      %v4862 = vadd.f32 %v4830, %v4728
      %v4863 = vadd.f32 %v4831, %v4731
      %v4864 = vadd.f32 %v4832, %v4736
      %v4865 = vadd.f32 %v4833, %v4739
      %v4866 = vadd.f32 %v4834, %v4744
      %v4867 = vadd.f32 %v4835, %v4747
      %v4868 = vadd.f32 %v4836, %v4752
      %v4869 = vadd.f32 %v4837, %v4755
      %v4870 = vadd.f32 %v4838, %v4760
      %v4871 = vadd.f32 %v4839, %v4763
      %v4872 = vadd.f32 %v4840, %v4768
      %v4873 = vadd.f32 %v4841, %v4771
      %v4874 = vadd.f32 %v4842, %v4776
      %v4875 = vadd.f32 %v4843, %v4779
      %v4876 = vadd.f32 %v4844, %v4784
      %v4877 = vadd.f32 %v4845, %v4787
      %v4878 = vadd.f32 %v4846, %v4792
      %v4879 = vadd.f32 %v4847, %v4795
      %v4880 = vadd.f32 %v4848, %v4800
      %v4881 = vadd.f32 %v4849, %v4803
      %v4882 = vadd.f32 %v4850, %v4808
      %v4883 = vadd.f32 %v4851, %v4811
      %v4884 = vadd.f32 %v4852, %v4816
      %v4885 = vadd.f32 %v4853, %v4819
      %4886 = vst [vmem:[%s202] sm:$0xff] %v4854
      %4887 = vst [vmem:[%s202 + $0x8] sm:$0xff] %v4855
      %4888 = vst [vmem:[%s202 + $0x10] sm:$0xff] %v4856
      %4889 = vst [vmem:[%s202 + $0x18] sm:$0xff] %v4857
      %4890 = vst [vmem:[%s202 + $0x20] sm:$0xff] %v4858
      %4891 = vst [vmem:[%s202 + $0x28] sm:$0xff] %v4859
      %4892 = vst [vmem:[%s202 + $0x30] sm:$0xff] %v4860
      %4893 = vst [vmem:[%s202 + $0x38] sm:$0xff] %v4861
      %4894 = vst [vmem:[%s202 + $0x40] sm:$0xff] %v4862
      %4895 = vst [vmem:[%s202 + $0x48] sm:$0xff] %v4863
      %4896 = vst [vmem:[%s202 + $0x50] sm:$0xff] %v4864
      %4897 = vst [vmem:[%s202 + $0x58] sm:$0xff] %v4865
      %4898 = vst [vmem:[%s202 + $0x60] sm:$0xff] %v4866
      %4899 = vst [vmem:[%s202 + $0x68] sm:$0xff] %v4867
      %4900 = vst [vmem:[%s202 + $0x70] sm:$0xff] %v4868
      %4901 = vst [vmem:[%s202 + $0x78] sm:$0xff] %v4869
      %4902 = vst [vmem:[%s202 + $0x80] sm:$0xff] %v4870
      %4903 = vst [vmem:[%s202 + $0x88] sm:$0xff] %v4871
      %4904 = vst [vmem:[%s202 + $0x90] sm:$0xff] %v4872
      %4905 = vst [vmem:[%s202 + $0x98] sm:$0xff] %v4873
      %4906 = vst [vmem:[%s202 + $0xa0] sm:$0xff] %v4874
      %4907 = vst [vmem:[%s202 + $0xa8] sm:$0xff] %v4875
      %4908 = vst [vmem:[%s202 + $0xb0] sm:$0xff] %v4876
      %4909 = vst [vmem:[%s202 + $0xb8] sm:$0xff] %v4877
      %4910 = vst [vmem:[%s202 + $0xc0] sm:$0xff] %v4878
      %4911 = vst [vmem:[%s202 + $0xc8] sm:$0xff] %v4879
      %4912 = vst [vmem:[%s202 + $0xd0] sm:$0xff] %v4880
      %4913 = vst [vmem:[%s202 + $0xd8] sm:$0xff] %v4881
      %4914 = vst [vmem:[%s202 + $0xe0] sm:$0xff] %v4882
      %4915 = vst [vmem:[%s202 + $0xe8] sm:$0xff] %v4883
      %4916 = vst [vmem:[%s202 + $0xf0] sm:$0xff] %v4884
      %4917 = vst [vmem:[%s202 + $0xf8] sm:$0xff] %v4885
      %v4918 = vld [vmem:[%s3705] sm:$0xe]
      %v4919 = vld [vmem:[%s3705 + $0x4] sm:$0xf]
      %v4920 = vld [vmem:[%s3705 + $0x8] sm:$0x1]
      %v4921 = vld [vmem:[%s3705 + $0xc] sm:$0xe]
      %v4922 = vld [vmem:[%s3705 + $0x10] sm:$0xf]
      %v4923 = vld [vmem:[%s3705 + $0x14] sm:$0x1]
      %v4924 = vld [vmem:[%s3705 + $0x18] sm:$0xe]
      %v4925 = vld [vmem:[%s3705 + $0x1c] sm:$0xf]
      %v4926 = vld [vmem:[%s3705 + $0x20] sm:$0x1]
      %v4927 = vld [vmem:[%s3705 + $0x24] sm:$0xe]
      %v4928 = vld [vmem:[%s3705 + $0x28] sm:$0xf]
      %v4929 = vld [vmem:[%s3705 + $0x2c] sm:$0x1]
      %v4930 = vld [vmem:[%s3705 + $0x30] sm:$0xe]
      %v4931 = vld [vmem:[%s3705 + $0x34] sm:$0xf]
      %v4932 = vld [vmem:[%s3705 + $0x38] sm:$0x1]
      %v4933 = vld [vmem:[%s3705 + $0x3c] sm:$0xe]
      %v4934 = vld [vmem:[%s3705 + $0x40] sm:$0xf]
      %v4935 = vld [vmem:[%s3705 + $0x44] sm:$0x1]
      %v4936 = vld [vmem:[%s3705 + $0x48] sm:$0xe]
      %v4937 = vld [vmem:[%s3705 + $0x4c] sm:$0xf]
      %v4938 = vld [vmem:[%s3705 + $0x50] sm:$0x1]
      %v4939 = vld [vmem:[%s3705 + $0x54] sm:$0xe]
      %v4940 = vld [vmem:[%s3705 + $0x58] sm:$0xf]
      %v4941 = vld [vmem:[%s3705 + $0x5c] sm:$0x1]
      %v4942 = vld [vmem:[%s3705 + $0x60] sm:$0xe]
      %v4943 = vld [vmem:[%s3705 + $0x64] sm:$0xf]
      %v4944 = vld [vmem:[%s3705 + $0x68] sm:$0x1]
      %v4945 = vld [vmem:[%s3705 + $0x6c] sm:$0xe]
      %v4946 = vld [vmem:[%s3705 + $0x70] sm:$0xf]
      %v4947 = vld [vmem:[%s3705 + $0x74] sm:$0x1]
      %v4948 = vld [vmem:[%s3705 + $0x78] sm:$0xe]
      %v4949 = vld [vmem:[%s3705 + $0x7c] sm:$0xf]
      %v4950 = vld [vmem:[%s3705 + $0x80] sm:$0x1]
      %v4951 = vld [vmem:[%s3705 + $0x84] sm:$0xe]
      %v4952 = vld [vmem:[%s3705 + $0x88] sm:$0xf]
      %v4953 = vld [vmem:[%s3705 + $0x8c] sm:$0x1]
      %v4954 = vld [vmem:[%s3705 + $0x90] sm:$0xe]
      %v4955 = vld [vmem:[%s3705 + $0x94] sm:$0xf]
      %v4956 = vld [vmem:[%s3705 + $0x98] sm:$0x1]
      %v4957 = vld [vmem:[%s3705 + $0x9c] sm:$0xe]
      %v4958 = vld [vmem:[%s3705 + $0xa0] sm:$0xf]
      %v4959 = vld [vmem:[%s3705 + $0xa4] sm:$0x1]
      %v4960 = vld [vmem:[%s3705 + $0xa8] sm:$0xe]
      %v4961 = vld [vmem:[%s3705 + $0xac] sm:$0xf]
      %v4962 = vld [vmem:[%s3705 + $0xb0] sm:$0x1]
      %v4963 = vld [vmem:[%s3705 + $0xb4] sm:$0xe]
      %v4964 = vld [vmem:[%s3705 + $0xb8] sm:$0xf]
      %v4965 = vld [vmem:[%s3705 + $0xbc] sm:$0x1]
      %v5014 = vrot.slane %v4918, 5
      %v5015 = vrot.slane %v5014, 4
      %v5016 = vrot.slane %v4919, 5
      %v5017 = vsel %vm1455, %v5015, %v5016
      %v5018 = vrot.slane %v5016, 4
      %v5019 = vrot.slane %v4920, 5
      %v5020 = vsel %vm1455, %v5018, %v5019
      %v5021 = vrot.slane %v4921, 5
      %v5022 = vrot.slane %v5021, 4
      %v5023 = vrot.slane %v4922, 5
      %v5024 = vsel %vm1455, %v5022, %v5023
      %v5025 = vrot.slane %v5023, 4
      %v5026 = vrot.slane %v4923, 5
      %v5027 = vsel %vm1455, %v5025, %v5026
      %v5028 = vrot.slane %v4924, 5
      %v5029 = vrot.slane %v5028, 4
      %v5030 = vrot.slane %v4925, 5
      %v5031 = vsel %vm1455, %v5029, %v5030
      %v5032 = vrot.slane %v5030, 4
      %v5033 = vrot.slane %v4926, 5
      %v5034 = vsel %vm1455, %v5032, %v5033
      %v5035 = vrot.slane %v4927, 5
      %v5036 = vrot.slane %v5035, 4
      %v5037 = vrot.slane %v4928, 5
      %v5038 = vsel %vm1455, %v5036, %v5037
      %v5039 = vrot.slane %v5037, 4
      %v5040 = vrot.slane %v4929, 5
      %v5041 = vsel %vm1455, %v5039, %v5040
      %v5042 = vrot.slane %v4930, 5
      %v5043 = vrot.slane %v5042, 4
      %v5044 = vrot.slane %v4931, 5
      %v5045 = vsel %vm1455, %v5043, %v5044
      %v5046 = vrot.slane %v5044, 4
      %v5047 = vrot.slane %v4932, 5
      %v5048 = vsel %vm1455, %v5046, %v5047
      %v5049 = vrot.slane %v4933, 5
      %v5050 = vrot.slane %v5049, 4
      %v5051 = vrot.slane %v4934, 5
      %v5052 = vsel %vm1455, %v5050, %v5051
      %v5053 = vrot.slane %v5051, 4
      %v5054 = vrot.slane %v4935, 5
      %v5055 = vsel %vm1455, %v5053, %v5054
      %v5056 = vrot.slane %v4936, 5
      %v5057 = vrot.slane %v5056, 4
      %v5058 = vrot.slane %v4937, 5
      %v5059 = vsel %vm1455, %v5057, %v5058
      %v5060 = vrot.slane %v5058, 4
      %v5061 = vrot.slane %v4938, 5
      %v5062 = vsel %vm1455, %v5060, %v5061
      %v5063 = vrot.slane %v4939, 5
      %v5064 = vrot.slane %v5063, 4
      %v5065 = vrot.slane %v4940, 5
      %v5066 = vsel %vm1455, %v5064, %v5065
      %v5067 = vrot.slane %v5065, 4
      %v5068 = vrot.slane %v4941, 5
      %v5069 = vsel %vm1455, %v5067, %v5068
      %v5070 = vrot.slane %v4942, 5
      %v5071 = vrot.slane %v5070, 4
      %v5072 = vrot.slane %v4943, 5
      %v5073 = vsel %vm1455, %v5071, %v5072
      %v5074 = vrot.slane %v5072, 4
      %v5075 = vrot.slane %v4944, 5
      %v5076 = vsel %vm1455, %v5074, %v5075
      %v5077 = vrot.slane %v4945, 5
      %v5078 = vrot.slane %v5077, 4
      %v5079 = vrot.slane %v4946, 5
      %v5080 = vsel %vm1455, %v5078, %v5079
      %v5081 = vrot.slane %v5079, 4
      %v5082 = vrot.slane %v4947, 5
      %v5083 = vsel %vm1455, %v5081, %v5082
      %v5084 = vrot.slane %v4948, 5
      %v5085 = vrot.slane %v5084, 4
      %v5086 = vrot.slane %v4949, 5
      %v5087 = vsel %vm1455, %v5085, %v5086
      %v5088 = vrot.slane %v5086, 4
      %v5089 = vrot.slane %v4950, 5
      %v5090 = vsel %vm1455, %v5088, %v5089
      %v5091 = vrot.slane %v4951, 5
      %v5092 = vrot.slane %v5091, 4
      %v5093 = vrot.slane %v4952, 5
      %v5094 = vsel %vm1455, %v5092, %v5093
      %v5095 = vrot.slane %v5093, 4
      %v5096 = vrot.slane %v4953, 5
      %v5097 = vsel %vm1455, %v5095, %v5096
      %v5098 = vrot.slane %v4954, 5
      %v5099 = vrot.slane %v5098, 4
      %v5100 = vrot.slane %v4955, 5
      %v5101 = vsel %vm1455, %v5099, %v5100
      %v5102 = vrot.slane %v5100, 4
      %v5103 = vrot.slane %v4956, 5
      %v5104 = vsel %vm1455, %v5102, %v5103
      %v5105 = vrot.slane %v4957, 5
      %v5106 = vrot.slane %v5105, 4
      %v5107 = vrot.slane %v4958, 5
      %v5108 = vsel %vm1455, %v5106, %v5107
      %v5109 = vrot.slane %v5107, 4
      %v5110 = vrot.slane %v4959, 5
      %v5111 = vsel %vm1455, %v5109, %v5110
      %v5112 = vrot.slane %v4960, 5
      %v5113 = vrot.slane %v5112, 4
      %v5114 = vrot.slane %v4961, 5
      %v5115 = vsel %vm1455, %v5113, %v5114
      %v5116 = vrot.slane %v5114, 4
      %v5117 = vrot.slane %v4962, 5
      %v5118 = vsel %vm1455, %v5116, %v5117
      %v5119 = vrot.slane %v4963, 5
      %v5120 = vrot.slane %v5119, 4
      %v5121 = vrot.slane %v4964, 5
      %v5122 = vsel %vm1455, %v5120, %v5121
      %v5123 = vrot.slane %v5121, 4
      %v5124 = vrot.slane %v4965, 5
      %v5125 = vsel %vm1455, %v5123, %v5124
      %s5126 = scalar_lea.vmem %s1, 16
      %v5127 = vld [vmem:[%s5126] sm:$0x3]
      %v5128 = vunpack.c.l.b16 %v5017
      %v5129 = vunpack.c.l.b16 %v5020
      %v5130 = vunpack.c.l.b16 %v5024
      %v5131 = vunpack.c.l.b16 %v5027
      %v5132 = vunpack.c.l.b16 %v5031
      %v5133 = vunpack.c.l.b16 %v5034
      %v5134 = vunpack.c.l.b16 %v5038
      %v5135 = vunpack.c.l.b16 %v5041
      %v5136 = vunpack.c.l.b16 %v5045
      %v5137 = vunpack.c.l.b16 %v5048
      %v5138 = vunpack.c.l.b16 %v5052
      %v5139 = vunpack.c.l.b16 %v5055
      %v5140 = vunpack.c.l.b16 %v5059
      %v5141 = vunpack.c.l.b16 %v5062
      %v5142 = vunpack.c.l.b16 %v5066
      %v5143 = vunpack.c.l.b16 %v5069
      %v5144 = vunpack.c.l.b16 %v5073
      %v5145 = vunpack.c.l.b16 %v5076
      %v5146 = vunpack.c.l.b16 %v5080
      %v5147 = vunpack.c.l.b16 %v5083
      %v5148 = vunpack.c.l.b16 %v5087
      %v5149 = vunpack.c.l.b16 %v5090
      %v5150 = vunpack.c.l.b16 %v5094
      %v5151 = vunpack.c.l.b16 %v5097
      %v5152 = vunpack.c.l.b16 %v5101
      %v5153 = vunpack.c.l.b16 %v5104
      %v5154 = vunpack.c.l.b16 %v5108
      %v5155 = vunpack.c.l.b16 %v5111
      %v5156 = vunpack.c.l.b16 %v5115
      %v5157 = vunpack.c.l.b16 %v5118
      %v5158 = vunpack.c.l.b16 %v5122
      %v5159 = vunpack.c.l.b16 %v5125
      %v5160 = vpack.c.b16 %v5129, %v5128
      %v5161 = vpack.c.b16 %v5131, %v5130
      %v5162 = vpack.c.b16 %v5133, %v5132
      %v5163 = vpack.c.b16 %v5135, %v5134
      %v5164 = vpack.c.b16 %v5137, %v5136
      %v5165 = vpack.c.b16 %v5139, %v5138
      %v5166 = vpack.c.b16 %v5141, %v5140
      %v5167 = vpack.c.b16 %v5143, %v5142
      %v5168 = vpack.c.b16 %v5145, %v5144
      %v5169 = vpack.c.b16 %v5147, %v5146
      %v5170 = vpack.c.b16 %v5149, %v5148
      %v5171 = vpack.c.b16 %v5151, %v5150
      %v5172 = vpack.c.b16 %v5153, %v5152
      %v5173 = vpack.c.b16 %v5155, %v5154
      %v5174 = vpack.c.b16 %v5157, %v5156
      %v5175 = vpack.c.b16 %v5159, %v5158
      %v5177 = vsel %vm318, %v5160, 0
      %v5180 = vsel %vm318, %v5161, 0
      %v5183 = vsel %vm318, %v5162, 0
      %v5186 = vsel %vm318, %v5163, 0
      %v5189 = vsel %vm318, %v5164, 0
      %v5192 = vsel %vm318, %v5165, 0
      %v5195 = vsel %vm318, %v5166, 0
      %v5198 = vsel %vm318, %v5167, 0
      %v5201 = vsel %vm318, %v5168, 0
      %v5204 = vsel %vm318, %v5169, 0
      %v5207 = vsel %vm318, %v5170, 0
      %v5210 = vsel %vm318, %v5171, 0
      %v5213 = vsel %vm318, %v5172, 0
      %v5216 = vsel %vm318, %v5173, 0
      %v5219 = vsel %vm318, %v5174, 0
      %v5222 = vsel %vm318, %v5175, 0
      %v5225 = vsel %vm367, %v5127, 0
      %5227 = vmatprep.subr.bf16.mxu0 0
      %5228 = vmatpush1.bf16.msra.mxu0 0
      %5229 = vmatprep.subr.bf16.mxu0 0
      %5230 = vmatpush1.bf16.msra.mxu0 0
      %5231 = vmatprep.subr.bf16.mxu0 0
      %5232 = vmatpush1.bf16.msra.mxu0 0
      %5233 = vmatprep.subr.bf16.mxu0 0
      %5234 = vmatpush1.bf16.msra.mxu0 0
      %5235 = vmatprep.subr.bf16.mxu0 0
      %5236 = vmatpush1.bf16.msra.mxu0 0
      %5237 = vmatprep.subr.bf16.mxu0 0
      %5238 = vmatpush1.bf16.msra.mxu0 0
      %5239 = vmatprep.subr.bf16.mxu0 0
      %5240 = vmatpush1.bf16.msra.mxu0 0
      %5241 = vmatprep.subr.bf16.mxu0 0
      %5242 = vmatpush1.bf16.msra.mxu0 %v5225
      %5243 = vmatprep.subr.bf16.mxu0 0
      %5244 = vmatpush2.bf16.msra.mxu0 0
      %5245 = vmatprep.subr.bf16.mxu0 0
      %5246 = vmatpush2.bf16.msra.mxu0 0
      %5247 = vmatprep.subr.bf16.mxu0 0
      %5248 = vmatpush2.bf16.msra.mxu0 0
      %5249 = vmatprep.subr.bf16.mxu0 0
      %5250 = vmatpush2.bf16.msra.mxu0 0
      %5251 = vmatprep.subr.bf16.mxu0 0
      %5252 = vmatpush2.bf16.msra.mxu0 0
      %5253 = vmatprep.subr.bf16.mxu0 0
      %5254 = vmatpush2.bf16.msra.mxu0 0
      %5255 = vmatprep.subr.bf16.mxu0 0
      %5256 = vmatpush2.bf16.msra.mxu0 0
      %5257 = vmatprep.subr.bf16.mxu0 0
      %5258 = vmatpush2.bf16.msra.mxu0 0
      %5259 = vmatprep.mubr.bf16.mxu0 0
      %5260 = vmatmul.mubr.bf16.gmra.mxu0 %v5177
      %v5261 = vpop.f32.mrf.mxu0
      %v5262 = vadd.f32 0.0, %v5261
      %v5263 = vpop.f32.mrf.mxu0
      %v5264 = vpop.f32.mrf.mxu0
      %v5265 = vadd.f32 0.0, %v5264
      %v5266 = vpop.f32.mrf.mxu0
      %5267 = vmatprep.mubr.bf16.mxu0 0
      %5268 = vmatmul.mubr.bf16.gmra.mxu0 %v5180
      %v5269 = vpop.f32.mrf.mxu0
      %v5270 = vadd.f32 0.0, %v5269
      %v5271 = vpop.f32.mrf.mxu0
      %v5272 = vpop.f32.mrf.mxu0
      %v5273 = vadd.f32 0.0, %v5272
      %v5274 = vpop.f32.mrf.mxu0
      %5275 = vmatprep.mubr.bf16.mxu0 0
      %5276 = vmatmul.mubr.bf16.gmra.mxu0 %v5183
      %v5277 = vpop.f32.mrf.mxu0
      %v5278 = vadd.f32 0.0, %v5277
      %v5279 = vpop.f32.mrf.mxu0
      %v5280 = vpop.f32.mrf.mxu0
      %v5281 = vadd.f32 0.0, %v5280
      %v5282 = vpop.f32.mrf.mxu0
      %5283 = vmatprep.mubr.bf16.mxu0 0
      %5284 = vmatmul.mubr.bf16.gmra.mxu0 %v5186
      %v5285 = vpop.f32.mrf.mxu0
      %v5286 = vadd.f32 0.0, %v5285
      %v5287 = vpop.f32.mrf.mxu0
      %v5288 = vpop.f32.mrf.mxu0
      %v5289 = vadd.f32 0.0, %v5288
      %v5290 = vpop.f32.mrf.mxu0
      %5291 = vmatprep.mubr.bf16.mxu0 0
      %5292 = vmatmul.mubr.bf16.gmra.mxu0 %v5189
      %v5293 = vpop.f32.mrf.mxu0
      %v5294 = vadd.f32 0.0, %v5293
      %v5295 = vpop.f32.mrf.mxu0
      %v5296 = vpop.f32.mrf.mxu0
      %v5297 = vadd.f32 0.0, %v5296
      %v5298 = vpop.f32.mrf.mxu0
      %5299 = vmatprep.mubr.bf16.mxu0 0
      %5300 = vmatmul.mubr.bf16.gmra.mxu0 %v5192
      %v5301 = vpop.f32.mrf.mxu0
      %v5302 = vadd.f32 0.0, %v5301
      %v5303 = vpop.f32.mrf.mxu0
      %v5304 = vpop.f32.mrf.mxu0
      %v5305 = vadd.f32 0.0, %v5304
      %v5306 = vpop.f32.mrf.mxu0
      %5307 = vmatprep.mubr.bf16.mxu0 0
      %5308 = vmatmul.mubr.bf16.gmra.mxu0 %v5195
      %v5309 = vpop.f32.mrf.mxu0
      %v5310 = vadd.f32 0.0, %v5309
      %v5311 = vpop.f32.mrf.mxu0
      %v5312 = vpop.f32.mrf.mxu0
      %v5313 = vadd.f32 0.0, %v5312
      %v5314 = vpop.f32.mrf.mxu0
      %5315 = vmatprep.mubr.bf16.mxu0 0
      %5316 = vmatmul.mubr.bf16.gmra.mxu0 %v5198
      %v5317 = vpop.f32.mrf.mxu0
      %v5318 = vadd.f32 0.0, %v5317
      %v5319 = vpop.f32.mrf.mxu0
      %v5320 = vpop.f32.mrf.mxu0
      %v5321 = vadd.f32 0.0, %v5320
      %v5322 = vpop.f32.mrf.mxu0
      %5323 = vmatprep.mubr.bf16.mxu0 0
      %5324 = vmatmul.mubr.bf16.gmra.mxu0 %v5201
      %v5325 = vpop.f32.mrf.mxu0
      %v5326 = vadd.f32 0.0, %v5325
      %v5327 = vpop.f32.mrf.mxu0
      %v5328 = vpop.f32.mrf.mxu0
      %v5329 = vadd.f32 0.0, %v5328
      %v5330 = vpop.f32.mrf.mxu0
      %5331 = vmatprep.mubr.bf16.mxu0 0
      %5332 = vmatmul.mubr.bf16.gmra.mxu0 %v5204
      %v5333 = vpop.f32.mrf.mxu0
      %v5334 = vadd.f32 0.0, %v5333
      %v5335 = vpop.f32.mrf.mxu0
      %v5336 = vpop.f32.mrf.mxu0
      %v5337 = vadd.f32 0.0, %v5336
      %v5338 = vpop.f32.mrf.mxu0
      %5339 = vmatprep.mubr.bf16.mxu0 0
      %5340 = vmatmul.mubr.bf16.gmra.mxu0 %v5207
      %v5341 = vpop.f32.mrf.mxu0
      %v5342 = vadd.f32 0.0, %v5341
      %v5343 = vpop.f32.mrf.mxu0
      %v5344 = vpop.f32.mrf.mxu0
      %v5345 = vadd.f32 0.0, %v5344
      %v5346 = vpop.f32.mrf.mxu0
      %5347 = vmatprep.mubr.bf16.mxu0 0
      %5348 = vmatmul.mubr.bf16.gmra.mxu0 %v5210
      %v5349 = vpop.f32.mrf.mxu0
      %v5350 = vadd.f32 0.0, %v5349
      %v5351 = vpop.f32.mrf.mxu0
      %v5352 = vpop.f32.mrf.mxu0
      %v5353 = vadd.f32 0.0, %v5352
      %v5354 = vpop.f32.mrf.mxu0
      %5355 = vmatprep.mubr.bf16.mxu0 0
      %5356 = vmatmul.mubr.bf16.gmra.mxu0 %v5213
      %v5357 = vpop.f32.mrf.mxu0
      %v5358 = vadd.f32 0.0, %v5357
      %v5359 = vpop.f32.mrf.mxu0
      %v5360 = vpop.f32.mrf.mxu0
      %v5361 = vadd.f32 0.0, %v5360
      %v5362 = vpop.f32.mrf.mxu0
      %5363 = vmatprep.mubr.bf16.mxu0 0
      %5364 = vmatmul.mubr.bf16.gmra.mxu0 %v5216
      %v5365 = vpop.f32.mrf.mxu0
      %v5366 = vadd.f32 0.0, %v5365
      %v5367 = vpop.f32.mrf.mxu0
      %v5368 = vpop.f32.mrf.mxu0
      %v5369 = vadd.f32 0.0, %v5368
      %v5370 = vpop.f32.mrf.mxu0
      %5371 = vmatprep.mubr.bf16.mxu0 0
      %5372 = vmatmul.mubr.bf16.gmra.mxu0 %v5219
      %v5373 = vpop.f32.mrf.mxu0
      %v5374 = vadd.f32 0.0, %v5373
      %v5375 = vpop.f32.mrf.mxu0
      %v5376 = vpop.f32.mrf.mxu0
      %v5377 = vadd.f32 0.0, %v5376
      %v5378 = vpop.f32.mrf.mxu0
      %5379 = vmatprep.mubr.bf16.mxu0 0
      %5380 = vmatmul.mubr.bf16.gmra.mxu0 %v5222
      %v5381 = vpop.f32.mrf.mxu0
      %v5382 = vadd.f32 0.0, %v5381
      %v5383 = vpop.f32.mrf.mxu0
      %v5384 = vpop.f32.mrf.mxu0
      %v5385 = vadd.f32 0.0, %v5384
      %v5386 = vpop.f32.mrf.mxu0
      %5387 = vdwg.mxu0
      %v5388 = vld [vmem:[%s202] sm:$0xff]
      %v5389 = vld [vmem:[%s202 + $0x8] sm:$0xff]
      %v5390 = vld [vmem:[%s202 + $0x10] sm:$0xff]
      %v5391 = vld [vmem:[%s202 + $0x18] sm:$0xff]
      %v5392 = vld [vmem:[%s202 + $0x20] sm:$0xff]
      %v5393 = vld [vmem:[%s202 + $0x28] sm:$0xff]
      %v5394 = vld [vmem:[%s202 + $0x30] sm:$0xff]
      %v5395 = vld [vmem:[%s202 + $0x38] sm:$0xff]
      %v5396 = vld [vmem:[%s202 + $0x40] sm:$0xff]
      %v5397 = vld [vmem:[%s202 + $0x48] sm:$0xff]
      %v5398 = vld [vmem:[%s202 + $0x50] sm:$0xff]
      %v5399 = vld [vmem:[%s202 + $0x58] sm:$0xff]
      %v5400 = vld [vmem:[%s202 + $0x60] sm:$0xff]
      %v5401 = vld [vmem:[%s202 + $0x68] sm:$0xff]
      %v5402 = vld [vmem:[%s202 + $0x70] sm:$0xff]
      %v5403 = vld [vmem:[%s202 + $0x78] sm:$0xff]
      %v5404 = vld [vmem:[%s202 + $0x80] sm:$0xff]
      %v5405 = vld [vmem:[%s202 + $0x88] sm:$0xff]
      %v5406 = vld [vmem:[%s202 + $0x90] sm:$0xff]
      %v5407 = vld [vmem:[%s202 + $0x98] sm:$0xff]
      %v5408 = vld [vmem:[%s202 + $0xa0] sm:$0xff]
      %v5409 = vld [vmem:[%s202 + $0xa8] sm:$0xff]
      %v5410 = vld [vmem:[%s202 + $0xb0] sm:$0xff]
      %v5411 = vld [vmem:[%s202 + $0xb8] sm:$0xff]
      %v5412 = vld [vmem:[%s202 + $0xc0] sm:$0xff]
      %v5413 = vld [vmem:[%s202 + $0xc8] sm:$0xff]
      %v5414 = vld [vmem:[%s202 + $0xd0] sm:$0xff]
      %v5415 = vld [vmem:[%s202 + $0xd8] sm:$0xff]
      %v5416 = vld [vmem:[%s202 + $0xe0] sm:$0xff]
      %v5417 = vld [vmem:[%s202 + $0xe8] sm:$0xff]
      %v5418 = vld [vmem:[%s202 + $0xf0] sm:$0xff]
      %v5419 = vld [vmem:[%s202 + $0xf8] sm:$0xff]
      %v5420 = vadd.f32 %v5388, %v5262
      %v5421 = vadd.f32 %v5389, %v5265
      %v5422 = vadd.f32 %v5390, %v5270
      %v5423 = vadd.f32 %v5391, %v5273
      %v5424 = vadd.f32 %v5392, %v5278
      %v5425 = vadd.f32 %v5393, %v5281
      %v5426 = vadd.f32 %v5394, %v5286
      %v5427 = vadd.f32 %v5395, %v5289
      %v5428 = vadd.f32 %v5396, %v5294
      %v5429 = vadd.f32 %v5397, %v5297
      %v5430 = vadd.f32 %v5398, %v5302
      %v5431 = vadd.f32 %v5399, %v5305
      %v5432 = vadd.f32 %v5400, %v5310
      %v5433 = vadd.f32 %v5401, %v5313
      %v5434 = vadd.f32 %v5402, %v5318
      %v5435 = vadd.f32 %v5403, %v5321
      %v5436 = vadd.f32 %v5404, %v5326
      %v5437 = vadd.f32 %v5405, %v5329
      %v5438 = vadd.f32 %v5406, %v5334
      %v5439 = vadd.f32 %v5407, %v5337
      %v5440 = vadd.f32 %v5408, %v5342
      %v5441 = vadd.f32 %v5409, %v5345
      %v5442 = vadd.f32 %v5410, %v5350
      %v5443 = vadd.f32 %v5411, %v5353
      %v5444 = vadd.f32 %v5412, %v5358
      %v5445 = vadd.f32 %v5413, %v5361
      %v5446 = vadd.f32 %v5414, %v5366
      %v5447 = vadd.f32 %v5415, %v5369
      %v5448 = vadd.f32 %v5416, %v5374
      %v5449 = vadd.f32 %v5417, %v5377
      %v5450 = vadd.f32 %v5418, %v5382
      %v5451 = vadd.f32 %v5419, %v5385
      %5452 = vst [vmem:[%s202] sm:$0xff] %v5420
      %5453 = vst [vmem:[%s202 + $0x8] sm:$0xff] %v5421
      %5454 = vst [vmem:[%s202 + $0x10] sm:$0xff] %v5422
      %5455 = vst [vmem:[%s202 + $0x18] sm:$0xff] %v5423
      %5456 = vst [vmem:[%s202 + $0x20] sm:$0xff] %v5424
      %5457 = vst [vmem:[%s202 + $0x28] sm:$0xff] %v5425
      %5458 = vst [vmem:[%s202 + $0x30] sm:$0xff] %v5426
      %5459 = vst [vmem:[%s202 + $0x38] sm:$0xff] %v5427
      %5460 = vst [vmem:[%s202 + $0x40] sm:$0xff] %v5428
      %5461 = vst [vmem:[%s202 + $0x48] sm:$0xff] %v5429
      %5462 = vst [vmem:[%s202 + $0x50] sm:$0xff] %v5430
      %5463 = vst [vmem:[%s202 + $0x58] sm:$0xff] %v5431
      %5464 = vst [vmem:[%s202 + $0x60] sm:$0xff] %v5432
      %5465 = vst [vmem:[%s202 + $0x68] sm:$0xff] %v5433
      %5466 = vst [vmem:[%s202 + $0x70] sm:$0xff] %v5434
      %5467 = vst [vmem:[%s202 + $0x78] sm:$0xff] %v5435
      %5468 = vst [vmem:[%s202 + $0x80] sm:$0xff] %v5436
      %5469 = vst [vmem:[%s202 + $0x88] sm:$0xff] %v5437
      %5470 = vst [vmem:[%s202 + $0x90] sm:$0xff] %v5438
      %5471 = vst [vmem:[%s202 + $0x98] sm:$0xff] %v5439
      %5472 = vst [vmem:[%s202 + $0xa0] sm:$0xff] %v5440
      %5473 = vst [vmem:[%s202 + $0xa8] sm:$0xff] %v5441
      %5474 = vst [vmem:[%s202 + $0xb0] sm:$0xff] %v5442
      %5475 = vst [vmem:[%s202 + $0xb8] sm:$0xff] %v5443
      %5476 = vst [vmem:[%s202 + $0xc0] sm:$0xff] %v5444
      %5477 = vst [vmem:[%s202 + $0xc8] sm:$0xff] %v5445
      %5478 = vst [vmem:[%s202 + $0xd0] sm:$0xff] %v5446
      %5479 = vst [vmem:[%s202 + $0xd8] sm:$0xff] %v5447
      %5480 = vst [vmem:[%s202 + $0xe0] sm:$0xff] %v5448
      %5481 = vst [vmem:[%s202 + $0xe8] sm:$0xff] %v5449
      %5482 = vst [vmem:[%s202 + $0xf0] sm:$0xff] %v5450
      %5483 = vst [vmem:[%s202 + $0xf8] sm:$0xff] %v5451
      %v5484 = vld [vmem:[%s202] sm:$0xff]
      %v5485 = vld [vmem:[%s202 + $0x8] sm:$0xff]
      %v5486 = vld [vmem:[%s202 + $0x10] sm:$0xff]
      %v5487 = vld [vmem:[%s202 + $0x18] sm:$0xff]
      %v5488 = vld [vmem:[%s202 + $0x20] sm:$0xff]
      %v5489 = vld [vmem:[%s202 + $0x28] sm:$0xff]
      %v5490 = vld [vmem:[%s202 + $0x30] sm:$0xff]
      %v5491 = vld [vmem:[%s202 + $0x38] sm:$0xff]
      %v5492 = vld [vmem:[%s202 + $0x40] sm:$0xff]
      %v5493 = vld [vmem:[%s202 + $0x48] sm:$0xff]
      %v5494 = vld [vmem:[%s202 + $0x50] sm:$0xff]
      %v5495 = vld [vmem:[%s202 + $0x58] sm:$0xff]
      %v5496 = vld [vmem:[%s202 + $0x60] sm:$0xff]
      %v5497 = vld [vmem:[%s202 + $0x68] sm:$0xff]
      %v5498 = vld [vmem:[%s202 + $0x70] sm:$0xff]
      %v5499 = vld [vmem:[%s202 + $0x78] sm:$0xff]
      %v5500 = vld [vmem:[%s202 + $0x80] sm:$0xff]
      %v5501 = vld [vmem:[%s202 + $0x88] sm:$0xff]
      %v5502 = vld [vmem:[%s202 + $0x90] sm:$0xff]
      %v5503 = vld [vmem:[%s202 + $0x98] sm:$0xff]
      %v5504 = vld [vmem:[%s202 + $0xa0] sm:$0xff]
      %v5505 = vld [vmem:[%s202 + $0xa8] sm:$0xff]
      %v5506 = vld [vmem:[%s202 + $0xb0] sm:$0xff]
      %v5507 = vld [vmem:[%s202 + $0xb8] sm:$0xff]
      %v5508 = vld [vmem:[%s202 + $0xc0] sm:$0xff]
      %v5509 = vld [vmem:[%s202 + $0xc8] sm:$0xff]
      %v5510 = vld [vmem:[%s202 + $0xd0] sm:$0xff]
      %v5511 = vld [vmem:[%s202 + $0xd8] sm:$0xff]
      %v5512 = vld [vmem:[%s202 + $0xe0] sm:$0xff]
      %v5513 = vld [vmem:[%s202 + $0xe8] sm:$0xff]
      %v5514 = vld [vmem:[%s202 + $0xf0] sm:$0xff]
      %v5515 = vld [vmem:[%s202 + $0xf8] sm:$0xff]
      %v5516 = vld [vmem:[%s2] sm:$0x1]
      %v5518 = vlaneseq
      %v5519 = vshrl.u32 %v5518, 7
      %v5520 = vsub.s32 0, %v5519
      %v5521 = vrot.slane %v5516, %v5520
      %v5523 = vmul.f32 %v5484, %v5521
      %v5524 = vmul.f32 %v5485, %v5521
      %v5525 = vmul.f32 %v5486, %v5521
      %v5526 = vmul.f32 %v5487, %v5521
      %v5527 = vmul.f32 %v5488, %v5521
      %v5528 = vmul.f32 %v5489, %v5521
      %v5529 = vmul.f32 %v5490, %v5521
      %v5530 = vmul.f32 %v5491, %v5521
      %v5531 = vmul.f32 %v5492, %v5521
      %v5532 = vmul.f32 %v5493, %v5521
      %v5533 = vmul.f32 %v5494, %v5521
      %v5534 = vmul.f32 %v5495, %v5521
      %v5535 = vmul.f32 %v5496, %v5521
      %v5536 = vmul.f32 %v5497, %v5521
      %v5537 = vmul.f32 %v5498, %v5521
      %v5538 = vmul.f32 %v5499, %v5521
      %v5539 = vmul.f32 %v5500, %v5521
      %v5540 = vmul.f32 %v5501, %v5521
      %v5541 = vmul.f32 %v5502, %v5521
      %v5542 = vmul.f32 %v5503, %v5521
      %v5543 = vmul.f32 %v5504, %v5521
      %v5544 = vmul.f32 %v5505, %v5521
      %v5545 = vmul.f32 %v5506, %v5521
      %v5546 = vmul.f32 %v5507, %v5521
      %v5547 = vmul.f32 %v5508, %v5521
      %v5548 = vmul.f32 %v5509, %v5521
      %v5549 = vmul.f32 %v5510, %v5521
      %v5550 = vmul.f32 %v5511, %v5521
      %v5551 = vmul.f32 %v5512, %v5521
      %v5552 = vmul.f32 %v5513, %v5521
      %v5553 = vmul.f32 %v5514, %v5521
      %v5554 = vmul.f32 %v5515, %v5521
      %v5555 = vld [vmem:[%s3] sm:$0x1]
      %v5557 = vlaneseq
      %v5558 = vshrl.u32 %v5557, 7
      %v5559 = vsub.s32 0, %v5558
      %v5560 = vrot.slane %v5555, %v5559
      %v5562 = vadd.f32 %v5523, %v5560
      %v5563 = vadd.f32 %v5524, %v5560
      %v5564 = vadd.f32 %v5525, %v5560
      %v5565 = vadd.f32 %v5526, %v5560
      %v5566 = vadd.f32 %v5527, %v5560
      %v5567 = vadd.f32 %v5528, %v5560
      %v5568 = vadd.f32 %v5529, %v5560
      %v5569 = vadd.f32 %v5530, %v5560
      %v5570 = vadd.f32 %v5531, %v5560
      %v5571 = vadd.f32 %v5532, %v5560
      %v5572 = vadd.f32 %v5533, %v5560
      %v5573 = vadd.f32 %v5534, %v5560
      %v5574 = vadd.f32 %v5535, %v5560
      %v5575 = vadd.f32 %v5536, %v5560
      %v5576 = vadd.f32 %v5537, %v5560
      %v5577 = vadd.f32 %v5538, %v5560
      %v5578 = vadd.f32 %v5539, %v5560
      %v5579 = vadd.f32 %v5540, %v5560
      %v5580 = vadd.f32 %v5541, %v5560
      %v5581 = vadd.f32 %v5542, %v5560
      %v5582 = vadd.f32 %v5543, %v5560
      %v5583 = vadd.f32 %v5544, %v5560
      %v5584 = vadd.f32 %v5545, %v5560
      %v5585 = vadd.f32 %v5546, %v5560
      %v5586 = vadd.f32 %v5547, %v5560
      %v5587 = vadd.f32 %v5548, %v5560
      %v5588 = vadd.f32 %v5549, %v5560
      %v5589 = vadd.f32 %v5550, %v5560
      %v5590 = vadd.f32 %v5551, %v5560
      %v5591 = vadd.f32 %v5552, %v5560
      %v5592 = vadd.f32 %v5553, %v5560
      %v5593 = vadd.f32 %v5554, %v5560
      %v5594 = vmax.f32 %v5562, 0.0
      %v5595 = vmax.f32 %v5563, 0.0
      %v5596 = vmax.f32 %v5564, 0.0
      %v5597 = vmax.f32 %v5565, 0.0
      %v5598 = vmax.f32 %v5566, 0.0
      %v5599 = vmax.f32 %v5567, 0.0
      %v5600 = vmax.f32 %v5568, 0.0
      %v5601 = vmax.f32 %v5569, 0.0
      %v5602 = vmax.f32 %v5570, 0.0
      %v5603 = vmax.f32 %v5571, 0.0
      %v5604 = vmax.f32 %v5572, 0.0
      %v5605 = vmax.f32 %v5573, 0.0
      %v5606 = vmax.f32 %v5574, 0.0
      %v5607 = vmax.f32 %v5575, 0.0
      %v5608 = vmax.f32 %v5576, 0.0
      %v5609 = vmax.f32 %v5577, 0.0
      %v5610 = vmax.f32 %v5578, 0.0
      %v5611 = vmax.f32 %v5579, 0.0
      %v5612 = vmax.f32 %v5580, 0.0
      %v5613 = vmax.f32 %v5581, 0.0
      %v5614 = vmax.f32 %v5582, 0.0
      %v5615 = vmax.f32 %v5583, 0.0
      %v5616 = vmax.f32 %v5584, 0.0
      %v5617 = vmax.f32 %v5585, 0.0
      %v5618 = vmax.f32 %v5586, 0.0
      %v5619 = vmax.f32 %v5587, 0.0
      %v5620 = vmax.f32 %v5588, 0.0
      %v5621 = vmax.f32 %v5589, 0.0
      %v5622 = vmax.f32 %v5590, 0.0
      %v5623 = vmax.f32 %v5591, 0.0
      %v5624 = vmax.f32 %v5592, 0.0
      %v5625 = vmax.f32 %v5593, 0.0
      %5626 = vst [vmem:[%s202] sm:$0xff] %v5594
      %5627 = vst [vmem:[%s202 + $0x8] sm:$0xff] %v5595
      %5628 = vst [vmem:[%s202 + $0x10] sm:$0xff] %v5596
      %5629 = vst [vmem:[%s202 + $0x18] sm:$0xff] %v5597
      %5630 = vst [vmem:[%s202 + $0x20] sm:$0xff] %v5598
      %5631 = vst [vmem:[%s202 + $0x28] sm:$0xff] %v5599
      %5632 = vst [vmem:[%s202 + $0x30] sm:$0xff] %v5600
      %5633 = vst [vmem:[%s202 + $0x38] sm:$0xff] %v5601
      %5634 = vst [vmem:[%s202 + $0x40] sm:$0xff] %v5602
      %5635 = vst [vmem:[%s202 + $0x48] sm:$0xff] %v5603
      %5636 = vst [vmem:[%s202 + $0x50] sm:$0xff] %v5604
      %5637 = vst [vmem:[%s202 + $0x58] sm:$0xff] %v5605
      %5638 = vst [vmem:[%s202 + $0x60] sm:$0xff] %v5606
      %5639 = vst [vmem:[%s202 + $0x68] sm:$0xff] %v5607
      %5640 = vst [vmem:[%s202 + $0x70] sm:$0xff] %v5608
      %5641 = vst [vmem:[%s202 + $0x78] sm:$0xff] %v5609
      %5642 = vst [vmem:[%s202 + $0x80] sm:$0xff] %v5610
      %5643 = vst [vmem:[%s202 + $0x88] sm:$0xff] %v5611
      %5644 = vst [vmem:[%s202 + $0x90] sm:$0xff] %v5612
      %5645 = vst [vmem:[%s202 + $0x98] sm:$0xff] %v5613
      %5646 = vst [vmem:[%s202 + $0xa0] sm:$0xff] %v5614
      %5647 = vst [vmem:[%s202 + $0xa8] sm:$0xff] %v5615
      %5648 = vst [vmem:[%s202 + $0xb0] sm:$0xff] %v5616
      %5649 = vst [vmem:[%s202 + $0xb8] sm:$0xff] %v5617
      %5650 = vst [vmem:[%s202 + $0xc0] sm:$0xff] %v5618
      %5651 = vst [vmem:[%s202 + $0xc8] sm:$0xff] %v5619
      %5652 = vst [vmem:[%s202 + $0xd0] sm:$0xff] %v5620
      %5653 = vst [vmem:[%s202 + $0xd8] sm:$0xff] %v5621
      %5654 = vst [vmem:[%s202 + $0xe0] sm:$0xff] %v5622
      %5655 = vst [vmem:[%s202 + $0xe8] sm:$0xff] %v5623
      %5656 = vst [vmem:[%s202 + $0xf0] sm:$0xff] %v5624
      %5657 = vst [vmem:[%s202 + $0xf8] sm:$0xff] %v5625
      %s5658 = smul.u32 32, %s15
      %p5659 = scmp.lt.s32.totalorder %s5658, 63
      %s5660 = scalar_select %p5659, %s5658, 63
      %s5661 = smul.addr %s5660, 8
      %s5662 = scalar_lea.vmem %s4, %s5661
      // Predicated region
      $region37: #{conv_block_forward.3} parent=35 // pred_check
        %p5663 = pneg %p122
      $region38: #{conv_block_forward.3} parent=35 // pred_check_branch
        %5665 = sbr.rel (%p5663) target = $region40
      $region39: #{conv_block_forward.3} parent=35 // pred_region
        %s5666 = smul.u32 32, %s15
      $region40: #{conv_block_forward.3} parent=35 // pred_fallthru
        _
    $region36: #{conv_block_forward.3} parent=5 // pred_fallthru
      _
    %p5667 = scmp.le.s32.totalorder 2, %s10
    // Predicated region
    $region41: #{conv_block_forward.3} parent=5 // pred_check
      %p5668 = pneg %p5667
    $region42: #{conv_block_forward.3} parent=5 // pred_check_branch
      %5670 = sbr.rel (%p5668) target = $region44
    $region43: #{conv_block_forward.3} parent=5 // pred_region
      %s5671 = ssub.s32 %s10, 2
      // Predicated region
      $region45: #{conv_block_forward.3} parent=43 // pred_check
        %p5672 = pneg %p128
      $region46: #{conv_block_forward.3} parent=43 // pred_check_branch
        %5674 = sbr.rel (%p5672) target = $region48
      $region47: #{conv_block_forward.3} parent=43 // pred_region
        %s5675 = smul.u32 32, %s16
        %p5676 = scmp.lt.s32.totalorder %s5675, 63
        %s5677 = scalar_select %p5676, %s5675, 63
        %s5678 = smul.addr %s5677, 8
        %s5679 = scalar_lea.vmem %s4, %s5678
      $region48: #{conv_block_forward.3} parent=43 // pred_fallthru
        _
    $region44: #{conv_block_forward.3} parent=5 // pred_fallthru
      _
  $region6: #{conv_block_forward.3} parent=0 // loop_footer
    %s14 = sadd.s32 1, %s10
  $region7: #{conv_block_forward.3} parent=0 // loop_footer_branch
    %9 = sbr.rel target = $region3
  $region8: #{conv_block_forward.3} parent=0 // loop_exit
    _

</llo_original>
